<compile_context>
chip_gen: v5e
topology: v5e:2x2
jax: 0.10.0
libtpu: 0.0.40
codegen_flags: <defaults>
</compile_context>

<pallas_src>
import jax
import jax.numpy as jnp
from jax import lax
from jax.experimental import pallas as pl
from jax.experimental.pallas import tpu as pltpu

EPS = 1e-5  # nn.BatchNorm2d default eps


def _bottleneck_se_kernel(
    slab_ref,   # (B, (H+2)*(W+2), 9*Cin)  bf16  conv1 im2col slab over the padded output grid
    xc_ref,     # (B, H*W, Cin)            bf16  raw input (for the 1x1-conv shortcut)
    mask_ref,   # (H+2, W+2, 1)            f32   1.0 in the interior, 0.0 on the padding ring
    w1_ref,     # (9*Cin, Cout)            bf16  conv1 weights with BN1 scale folded in
    w2_ref,     # (9, Cout, Cout)          bf16  conv2 weights with BN2 scale folded in
    wsc_ref,    # (Cin, Cout)              bf16  shortcut 1x1 weights with BN scale folded in
    sew1_ref,   # (Cout, Cse)              bf16  SE fc1
    sew2_ref,   # (Cse, Cout)              bf16  SE fc2
    vec_ref,    # (5, Cout) f32 rows: [bn1 shift, bn2 shift, shortcut-bn shift, se_b1 (padded), se_b2]
    o_ref,      # (B, H, W, Cout)          f32
    pad_ref,    # VMEM scratch (B, H+2, W+2, Cout) bf16 : zero-padded conv1 activation
):
    B, H, W, Cout = o_ref.shape
    Hp, Wp = H + 2, W + 2
    Cin = xc_ref.shape[-1]
    Cse = sew1_ref.shape[1]
    M = B * H * W
    Mp = B * Hp * Wp

    # ---- conv1 (+BN1 scale folded) + shift + ReLU : one im2col matmul, K = 9*Cin ----
    slab = slab_ref[...].reshape(Mp, slab_ref.shape[-1])
    h1 = jnp.dot(slab, w1_ref[...], preferred_element_type=jnp.float32)
    h1 = jnp.maximum(h1 + vec_ref[0:1, :], 0.0).reshape(B, Hp, Wp, Cout)

    # Zero the 1-wide padding ring (standard zero padding for conv2) and store the whole padded
    # activation with a single aligned block write into VMEM scratch (no per-step zero fill,
    # no sublane-unaligned interior store).
    pad_ref[...] = (h1 * mask_ref[...]).astype(jnp.bfloat16)

    # ---- conv2 (+BN2 scale folded): 9 shifted-tap matmuls, M=B*H*W, K=Cout, f32 accumulation ----
    acc = jnp.zeros((M, Cout), jnp.float32)
    for ky in range(3):
        for kx in range(3):
            tap = pad_ref[:, ky:ky + H, kx:kx + W, :].reshape(M, Cout)
            acc = acc + jnp.dot(tap, w2_ref[ky * 3 + kx],
                                preferred_element_type=jnp.float32)
    h2 = (acc + vec_ref[1:2, :]).reshape(B, H * W, Cout)

    # ---- Squeeze-and-Excitation: global avg pool -> fc -> ReLU -> fc -> sigmoid -> rescale ----
    pooled = jnp.mean(h2, axis=1)                                     # (B, Cout)
    z = jnp.maximum(
        jnp.dot(pooled.astype(jnp.bfloat16), sew1_ref[...],
                preferred_element_type=jnp.float32) + vec_ref[3:4, 0:Cse], 0.0)
    gate = jax.nn.sigmoid(
        jnp.dot(z.astype(jnp.bfloat16), sew2_ref[...],
                preferred_element_type=jnp.float32) + vec_ref[4:5, :])  # (B, Cout)
    h2 = h2 * gate[:, None, :]

    # ---- shortcut: 1x1 conv (+BN scale folded) + shift ----
    res = jnp.dot(xc_ref[...].reshape(M, Cin), wsc_ref[...],
                  preferred_element_type=jnp.float32) + vec_ref[2:3, :]

    # ---- residual add + final ReLU; lane-dense store (Cout == 128 lanes) ----
    out = jnp.maximum(h2 + res.reshape(B, H * W, Cout), 0.0)
    o_ref[...] = out.reshape(B, H, W, Cout).astype(o_ref.dtype)


def bottleneck_se_forward(x_nhwc, p, *, block_b=4):
    N, H, W, Cin = x_nhwc.shape
    Cout = p["w1"].shape[-1]
    Cse = p["se_w1"].shape[-1]
    Hp, Wp = H + 2, W + 2
    B = block_b if N % block_b == 0 else 1

    def fold(g, b, m, v):  # eval-mode BN -> per-channel (scale, shift)
        s = g / jnp.sqrt(v + EPS)
        return s, b - m * s

    s1, sh1 = fold(p["g1"], p["b1"], p["m1"], p["v1"])
    s2, sh2 = fold(p["g2"], p["b2"], p["m2"], p["v2"])
    ssc, shsc = fold(p["gsc"], p["bsc"], p["msc"], p["vsc"])

    # conv1 im2col slab over the zero-padded output domain (Hp x Wp positions) -- layout plumbing
    # done once on the XLA side so the kernel runs conv1 as a single long-K matmul.
    xp2 = jnp.pad(x_nhwc, ((0, 0), (2, 2), (2, 2), (0, 0)))
    taps = [xp2[:, ky:ky + Hp, kx:kx + Wp, :] for ky in range(3) for kx in range(3)]
    slab = jnp.concatenate(taps, axis=-1).reshape(N, Hp * Wp, 9 * Cin).astype(jnp.bfloat16)
    xc = x_nhwc.reshape(N, H * W, Cin).astype(jnp.bfloat16)

    # BN scales folded into the conv weights (per output channel); bf16 MXU operands.
    w1eff = (p["w1"].reshape(9 * Cin, Cout) * s1[None, :]).astype(jnp.bfloat16)
    w2eff = (p["w2"] * s2[None, None, None, :]).reshape(9, Cout, Cout).astype(jnp.bfloat16)
    wsceff = (p["wsc"] * ssc[None, :]).astype(jnp.bfloat16)
    sew1 = p["se_w1"].astype(jnp.bfloat16)
    sew2 = p["se_w2"].astype(jnp.bfloat16)

    # All per-channel shifts/biases merged into one replicated (5, Cout) f32 array.
    seb1_pad = jnp.zeros((Cout,), jnp.float32).at[:Cse].set(p["se_b1"])
    vecs = jnp.stack([sh1, sh2, shsc, seb1_pad, p["se_b2"]], axis=0)

    # Interior mask for the conv2 zero-padding ring.
    ring_mask = jnp.zeros((Hp, Wp, 1), jnp.float32).at[1:1 + H, 1:1 + W, :].set(1.0)

    def rep(shape):  # parameter replicated across the batch-block grid
        return pl.BlockSpec(shape, lambda n: (0,) * len(shape))

    grid_spec = pltpu.PrefetchScalarGridSpec(
        num_scalar_prefetch=0,
        grid=(N // B,),
        in_specs=[
            pl.BlockSpec((B, Hp * Wp, 9 * Cin), lambda n: (n, 0, 0)),
            pl.BlockSpec((B, H * W, Cin), lambda n: (n, 0, 0)),
            rep((Hp, Wp, 1)),
            rep((9 * Cin, Cout)),
            rep((9, Cout, Cout)),
            rep((Cin, Cout)),
            rep((Cout, Cse)),
            rep((Cse, Cout)),
            rep((5, Cout)),
        ],
        out_specs=pl.BlockSpec((B, H, W, Cout), lambda n: (n, 0, 0, 0)),
        scratch_shapes=[pltpu.VMEM((B, Hp, Wp, Cout), jnp.bfloat16)],
    )
    return pl.pallas_call(
        _bottleneck_se_kernel,
        out_shape=jax.ShapeDtypeStruct((N, H, W, Cout), x_nhwc.dtype),
        grid_spec=grid_spec,
        # Batch blocks are fully independent (no cross-step scratch carry), so the grid can shard
        # across v7x's two TensorCores; a no-op on single-TC v5e/v6e.
        compiler_params=pltpu.CompilerParams(dimension_semantics=("parallel",)),
    )(slab, xc, ring_mask, w1eff, w2eff, wsceff, sew1, sew2, vecs)


def reference_forward(x_nhwc, p):
    """Pure-JAX reference mirroring the PyTorch forward (eval-mode BN, f32 everywhere)."""
    dn = ("NHWC", "HWIO", "NHWC")

    def bn(y, g, b, m, v):
        return g * (y - m) / jnp.sqrt(v + EPS) + b

    h = lax.conv_general_dilated(x_nhwc, p["w1"], (1, 1), "SAME", dimension_numbers=dn)
    h = jnp.maximum(bn(h, p["g1"], p["b1"], p["m1"], p["v1"]), 0.0)
    h = lax.conv_general_dilated(h, p["w2"], (1, 1), "SAME", dimension_numbers=dn)
    h = bn(h, p["g2"], p["b2"], p["m2"], p["v2"])
    pooled = h.mean(axis=(1, 2))
    z = jnp.maximum(pooled @ p["se_w1"] + p["se_b1"], 0.0)
    gate = jax.nn.sigmoid(z @ p["se_w2"] + p["se_b2"])
    h = h * gate[:, None, None, :]
    res = lax.conv_general_dilated(x_nhwc, p["wsc"][None, None], (1, 1), "SAME",
                                   dimension_numbers=dn)
    res = bn(res, p["gsc"], p["bsc"], p["msc"], p["vsc"])
    return jnp.maximum(h + res, 0.0)


if __name__ == "__main__":
    # BottleneckSE(in_planes=8, out_planes=128, ratio=16), stride=1, relu, preactivate=False.
    # in_planes != out_planes*expansion, so the 1x1-conv shortcut branch is active.
    # out_planes=128 fills the 128-lane vreg exactly -> lane-dense loads/stores.
    N, H, W = 8, 8, 8
    Cin, Cout, ratio = 8, 128, 16
    Cse = Cout // ratio

    key = jax.random.PRNGKey(0)
    ks = jax.random.split(key, 20)
    f32 = jnp.float32
    p = dict(
        w1=0.1 * jax.random.normal(ks[0], (3, 3, Cin, Cout), f32),
        g1=1.0 + 0.1 * jax.random.normal(ks[1], (Cout,), f32),
        b1=0.1 * jax.random.normal(ks[2], (Cout,), f32),
        m1=0.1 * jax.random.normal(ks[3], (Cout,), f32),
        v1=1.0 + 0.1 * jax.random.uniform(ks[4], (Cout,), f32),
        w2=0.1 * jax.random.normal(ks[5], (3, 3, Cout, Cout), f32),
        g2=1.0 + 0.1 * jax.random.normal(ks[6], (Cout,), f32),
        b2=0.1 * jax.random.normal(ks[7], (Cout,), f32),
        m2=0.1 * jax.random.normal(ks[8], (Cout,), f32),
        v2=1.0 + 0.1 * jax.random.uniform(ks[9], (Cout,), f32),
        wsc=0.1 * jax.random.normal(ks[10], (Cin, Cout), f32),
        gsc=1.0 + 0.1 * jax.random.normal(ks[11], (Cout,), f32),
        bsc=0.1 * jax.random.normal(ks[12], (Cout,), f32),
        msc=0.1 * jax.random.normal(ks[13], (Cout,), f32),
        vsc=1.0 + 0.1 * jax.random.uniform(ks[14], (Cout,), f32),
        se_w1=0.2 * jax.random.normal(ks[15], (Cout, Cse), f32),
        se_b1=0.1 * jax.random.normal(ks[16], (Cse,), f32),
        se_w2=0.2 * jax.random.normal(ks[17], (Cse, Cout), f32),
        se_b2=0.1 * jax.random.normal(ks[18], (Cout,), f32),
    )

    x_nchw = jax.random.normal(ks[19], (N, Cin, H, W), f32)   # PyTorch-style NCHW input
    x_nhwc = jnp.transpose(x_nchw, (0, 2, 3, 1))              # kernel layout

    out = jax.block_until_ready(bottleneck_se_forward(x_nhwc, p))
    ref = jax.block_until_ready(reference_forward(x_nhwc, p))

    assert out.shape == (N, H, W, Cout), out.shape
    max_err = float(jnp.max(jnp.abs(out - ref)))
    # Tolerance accounts for bf16 MXU operands (accumulation is f32).
    assert jnp.allclose(out, ref, atol=5e-2, rtol=5e-2), f"max abs err {max_err}"
    print("KERNEL_OK")
</pallas_src>

<mosaic_0001>
module attributes {stable_mosaic.version = 11 : i64} {
  func.func @_bottleneck_se_kernel(%arg0: i32, %arg1: memref<4x100x72xbf16, #tpu.memory_space<vmem>>, %arg2: memref<4x64x8xbf16, #tpu.memory_space<vmem>>, %arg3: memref<10x10x1xf32, #tpu.memory_space<vmem>>, %arg4: memref<72x128xbf16, #tpu.memory_space<vmem>>, %arg5: memref<9x128x128xbf16, #tpu.memory_space<vmem>>, %arg6: memref<8x128xbf16, #tpu.memory_space<vmem>>, %arg7: memref<128x8xbf16, #tpu.memory_space<vmem>>, %arg8: memref<8x128xbf16, #tpu.memory_space<vmem>>, %arg9: memref<5x128xf32, #tpu.memory_space<vmem>>, %arg10: memref<4x8x8x128xf32, #tpu.memory_space<vmem>>, %arg11: memref<4x10x10x128xbf16, #tpu.memory_space<vmem>>) attributes {dimension_semantics = [#tpu.dimension_semantics<parallel>], iteration_bounds = array<i64: 2>, scalar_prefetch = 0 : i64, scratch_operands = 1 : i64, tpu.core_type = #tpu.core_type<tc>, window_params = [{transform_indices = @transform_0, window_bounds = array<i64: 4, 100, 72>}, {transform_indices = @transform_1, window_bounds = array<i64: 4, 64, 8>}, {pipeline_mode = #tpu.pipeline_mode<synchronous>, transform_indices = @transform_2, window_bounds = array<i64: 10, 10, 1>}, {pipeline_mode = #tpu.pipeline_mode<synchronous>, transform_indices = @transform_3, window_bounds = array<i64: 72, 128>}, {pipeline_mode = #tpu.pipeline_mode<synchronous>, transform_indices = @transform_4, window_bounds = array<i64: 9, 128, 128>}, {pipeline_mode = #tpu.pipeline_mode<synchronous>, transform_indices = @transform_5, window_bounds = array<i64: 8, 128>}, {pipeline_mode = #tpu.pipeline_mode<synchronous>, transform_indices = @transform_6, window_bounds = array<i64: 128, 8>}, {pipeline_mode = #tpu.pipeline_mode<synchronous>, transform_indices = @transform_7, window_bounds = array<i64: 8, 128>}, {pipeline_mode = #tpu.pipeline_mode<synchronous>, transform_indices = @transform_8, window_bounds = array<i64: 5, 128>}, {transform_indices = @transform_9, window_bounds = array<i64: 4, 8, 8, 128>}]} {
    %c0 = arith.constant 0 : index
    %c0_0 = arith.constant 0 : index
    %c0_1 = arith.constant 0 : index
    %0 = vector.load %arg1[%c0, %c0_0, %c0_1] : memref<4x100x72xbf16, #tpu.memory_space<vmem>>, vector<4x100x72xbf16>
    %1 = vector.shape_cast %0 : vector<4x100x72xbf16> to vector<400x72xbf16>
    %c0_2 = arith.constant 0 : index
    %c0_3 = arith.constant 0 : index
    %2 = vector.load %arg4[%c0_2, %c0_3] : memref<72x128xbf16, #tpu.memory_space<vmem>>, vector<72x128xbf16>
    %cst = arith.constant dense<0.000000e+00> : vector<400x128xf32>
    %3 = tpu.matmul %1, %2, %cst {dimension_numbers = #tpu.dot_dimension_numbers<[1], [0], [0], [1], [0, 0, 1, 1], [], []>} : vector<400x72xbf16>, vector<72x128xbf16>, vector<400x128xf32> -> vector<400x128xf32>
    %c0_4 = arith.constant 0 : index
    %c0_5 = arith.constant 0 : index
    %4 = vector.load %arg9[%c0_4, %c0_5] : memref<5x128xf32, #tpu.memory_space<vmem>>, vector<1x128xf32>
    %5 = vector.broadcast %4 : vector<1x128xf32> to vector<400x128xf32>
    %6 = arith.addf %3, %5 : vector<400x128xf32>
    %cst_6 = arith.constant 0.000000e+00 : f32
    %7 = vector.broadcast %cst_6 : f32 to vector<400x128xf32>
    %8 = arith.maximumf %6, %7 : vector<400x128xf32>
    %9 = vector.shape_cast %8 : vector<400x128xf32> to vector<4x10x10x128xf32>
    %c0_7 = arith.constant 0 : index
    %c0_8 = arith.constant 0 : index
    %c0_9 = arith.constant 0 : index
    %10 = vector.load %arg3[%c0_7, %c0_8, %c0_9] : memref<10x10x1xf32, #tpu.memory_space<vmem>>, vector<10x10x1xf32>
    %11 = vector.shape_cast %10 : vector<10x10x1xf32> to vector<1x10x10x1xf32>
    %12 = vector.broadcast %11 : vector<1x10x10x1xf32> to vector<4x10x10x128xf32>
    %13 = arith.mulf %9, %12 : vector<4x10x10x128xf32>
    %14 = arith.truncf %13 : vector<4x10x10x128xf32> to vector<4x10x10x128xbf16>
    %c0_10 = arith.constant 0 : index
    %c0_11 = arith.constant 0 : index
    %c0_12 = arith.constant 0 : index
    %c0_13 = arith.constant 0 : index
    %15 = vector.load %arg11[%c0_10, %c0_11, %c0_12, %c0_13] : memref<4x10x10x128xbf16, #tpu.memory_space<vmem>>, vector<4x10x10x128xbf16>
    tpu.vector_store %arg11[%c0_10, %c0_11, %c0_12, %c0_13], %14 {strides = array<i32>} : memref<4x10x10x128xbf16, #tpu.memory_space<vmem>>, vector<4x10x10x128xbf16>,
    %cst_14 = arith.constant 0.000000e+00 : f32
    %16 = vector.broadcast %cst_14 : f32 to vector<256x128xf32>
    %c0_15 = arith.constant 0 : index
    %c0_16 = arith.constant 0 : index
    %c0_17 = arith.constant 0 : index
    %c0_18 = arith.constant 0 : index
    %17 = vector.load %arg11[%c0_15, %c0_16, %c0_17, %c0_18] : memref<4x10x10x128xbf16, #tpu.memory_space<vmem>>, vector<4x8x8x128xbf16>
    %18 = vector.shape_cast %17 : vector<4x8x8x128xbf16> to vector<256x128xbf16>
    %c0_19 = arith.constant 0 : index
    %c0_20 = arith.constant 0 : index
    %c0_21 = arith.constant 0 : index
    %19 = vector.load %arg5[%c0_19, %c0_20, %c0_21] : memref<9x128x128xbf16, #tpu.memory_space<vmem>>, vector<1x128x128xbf16>
    %20 = vector.shape_cast %19 : vector<1x128x128xbf16> to vector<128x128xbf16>
    %cst_22 = arith.constant dense<0.000000e+00> : vector<256x128xf32>
    %21 = tpu.matmul %18, %20, %cst_22 {dimension_numbers = #tpu.dot_dimension_numbers<[1], [0], [0], [1], [0, 0, 1, 1], [], []>} : vector<256x128xbf16>, vector<128x128xbf16>, vector<256x128xf32> -> vector<256x128xf32>
    %22 = arith.addf %16, %21 : vector<256x128xf32>
    %c0_23 = arith.constant 0 : index
    %c0_24 = arith.constant 0 : index
    %c1 = arith.constant 1 : index
    %c0_25 = arith.constant 0 : index
    %23 = vector.load %arg11[%c0_23, %c0_24, %c1, %c0_25] : memref<4x10x10x128xbf16, #tpu.memory_space<vmem>>, vector<4x8x8x128xbf16>
    %24 = vector.shape_cast %23 : vector<4x8x8x128xbf16> to vector<256x128xbf16>
    %c1_26 = arith.constant 1 : index
    %c0_27 = arith.constant 0 : index
    %c0_28 = arith.constant 0 : index
    %25 = vector.load %arg5[%c1_26, %c0_27, %c0_28] : memref<9x128x128xbf16, #tpu.memory_space<vmem>>, vector<1x128x128xbf16>
    %26 = vector.shape_cast %25 : vector<1x128x128xbf16> to vector<128x128xbf16>
    %cst_29 = arith.constant dense<0.000000e+00> : vector<256x128xf32>
    %27 = tpu.matmul %24, %26, %cst_29 {dimension_numbers = #tpu.dot_dimension_numbers<[1], [0], [0], [1], [0, 0, 1, 1], [], []>} : vector<256x128xbf16>, vector<128x128xbf16>, vector<256x128xf32> -> vector<256x128xf32>
    %28 = arith.addf %22, %27 : vector<256x128xf32>
    %c0_30 = arith.constant 0 : index
    %c0_31 = arith.constant 0 : index
    %c2 = arith.constant 2 : index
    %c0_32 = arith.constant 0 : index
    %29 = vector.load %arg11[%c0_30, %c0_31, %c2, %c0_32] : memref<4x10x10x128xbf16, #tpu.memory_space<vmem>>, vector<4x8x8x128xbf16>
    %30 = vector.shape_cast %29 : vector<4x8x8x128xbf16> to vector<256x128xbf16>
    %c2_33 = arith.constant 2 : index
    %c0_34 = arith.constant 0 : index
    %c0_35 = arith.constant 0 : index
    %31 = vector.load %arg5[%c2_33, %c0_34, %c0_35] : memref<9x128x128xbf16, #tpu.memory_space<vmem>>, vector<1x128x128xbf16>
    %32 = vector.shape_cast %31 : vector<1x128x128xbf16> to vector<128x128xbf16>
    %cst_36 = arith.constant dense<0.000000e+00> : vector<256x128xf32>
    %33 = tpu.matmul %30, %32, %cst_36 {dimension_numbers = #tpu.dot_dimension_numbers<[1], [0], [0], [1], [0, 0, 1, 1], [], []>} : vector<256x128xbf16>, vector<128x128xbf16>, vector<256x128xf32> -> vector<256x128xf32>
    %34 = arith.addf %28, %33 : vector<256x128xf32>
    %c0_37 = arith.constant 0 : index
    %c1_38 = arith.constant 1 : index
    %c0_39 = arith.constant 0 : index
    %c0_40 = arith.constant 0 : index
    %35 = vector.load %arg11[%c0_37, %c1_38, %c0_39, %c0_40] : memref<4x10x10x128xbf16, #tpu.memory_space<vmem>>, vector<4x8x8x128xbf16>
    %36 = vector.shape_cast %35 : vector<4x8x8x128xbf16> to vector<256x128xbf16>
    %c3 = arith.constant 3 : index
    %c0_41 = arith.constant 0 : index
    %c0_42 = arith.constant 0 : index
    %37 = vector.load %arg5[%c3, %c0_41, %c0_42] : memref<9x128x128xbf16, #tpu.memory_space<vmem>>, vector<1x128x128xbf16>
    %38 = vector.shape_cast %37 : vector<1x128x128xbf16> to vector<128x128xbf16>
    %cst_43 = arith.constant dense<0.000000e+00> : vector<256x128xf32>
    %39 = tpu.matmul %36, %38, %cst_43 {dimension_numbers = #tpu.dot_dimension_numbers<[1], [0], [0], [1], [0, 0, 1, 1], [], []>} : vector<256x128xbf16>, vector<128x128xbf16>, vector<256x128xf32> -> vector<256x128xf32>
    %40 = arith.addf %34, %39 : vector<256x128xf32>
    %c0_44 = arith.constant 0 : index
    %c1_45 = arith.constant 1 : index
    %c1_46 = arith.constant 1 : index
    %c0_47 = arith.constant 0 : index
    %41 = vector.load %arg11[%c0_44, %c1_45, %c1_46, %c0_47] : memref<4x10x10x128xbf16, #tpu.memory_space<vmem>>, vector<4x8x8x128xbf16>
    %42 = vector.shape_cast %41 : vector<4x8x8x128xbf16> to vector<256x128xbf16>
    %c4 = arith.constant 4 : index
    %c0_48 = arith.constant 0 : index
    %c0_49 = arith.constant 0 : index
    %43 = vector.load %arg5[%c4, %c0_48, %c0_49] : memref<9x128x128xbf16, #tpu.memory_space<vmem>>, vector<1x128x128xbf16>
    %44 = vector.shape_cast %43 : vector<1x128x128xbf16> to vector<128x128xbf16>
    %cst_50 = arith.constant dense<0.000000e+00> : vector<256x128xf32>
    %45 = tpu.matmul %42, %44, %cst_50 {dimension_numbers = #tpu.dot_dimension_numbers<[1], [0], [0], [1], [0, 0, 1, 1], [], []>} : vector<256x128xbf16>, vector<128x128xbf16>, vector<256x128xf32> -> vector<256x128xf32>
    %46 = arith.addf %40, %45 : vector<256x128xf32>
    %c0_51 = arith.constant 0 : index
    %c1_52 = arith.constant 1 : index
    %c2_53 = arith.constant 2 : index
    %c0_54 = arith.constant 0 : index
    %47 = vector.load %arg11[%c0_51, %c1_52, %c2_53, %c0_54] : memref<4x10x10x128xbf16, #tpu.memory_space<vmem>>, vector<4x8x8x128xbf16>
    %48 = vector.shape_cast %47 : vector<4x8x8x128xbf16> to vector<256x128xbf16>
    %c5 = arith.constant 5 : index
    %c0_55 = arith.constant 0 : index
    %c0_56 = arith.constant 0 : index
    %49 = vector.load %arg5[%c5, %c0_55, %c0_56] : memref<9x128x128xbf16, #tpu.memory_space<vmem>>, vector<1x128x128xbf16>
    %50 = vector.shape_cast %49 : vector<1x128x128xbf16> to vector<128x128xbf16>
    %cst_57 = arith.constant dense<0.000000e+00> : vector<256x128xf32>
    %51 = tpu.matmul %48, %50, %cst_57 {dimension_numbers = #tpu.dot_dimension_numbers<[1], [0], [0], [1], [0, 0, 1, 1], [], []>} : vector<256x128xbf16>, vector<128x128xbf16>, vector<256x128xf32> -> vector<256x128xf32>
    %52 = arith.addf %46, %51 : vector<256x128xf32>
    %c0_58 = arith.constant 0 : index
    %c2_59 = arith.constant 2 : index
    %c0_60 = arith.constant 0 : index
    %c0_61 = arith.constant 0 : index
    %53 = vector.load %arg11[%c0_58, %c2_59, %c0_60, %c0_61] : memref<4x10x10x128xbf16, #tpu.memory_space<vmem>>, vector<4x8x8x128xbf16>
    %54 = vector.shape_cast %53 : vector<4x8x8x128xbf16> to vector<256x128xbf16>
    %c6 = arith.constant 6 : index
    %c0_62 = arith.constant 0 : index
    %c0_63 = arith.constant 0 : index
    %55 = vector.load %arg5[%c6, %c0_62, %c0_63] : memref<9x128x128xbf16, #tpu.memory_space<vmem>>, vector<1x128x128xbf16>
    %56 = vector.shape_cast %55 : vector<1x128x128xbf16> to vector<128x128xbf16>
    %cst_64 = arith.constant dense<0.000000e+00> : vector<256x128xf32>
    %57 = tpu.matmul %54, %56, %cst_64 {dimension_numbers = #tpu.dot_dimension_numbers<[1], [0], [0], [1], [0, 0, 1, 1], [], []>} : vector<256x128xbf16>, vector<128x128xbf16>, vector<256x128xf32> -> vector<256x128xf32>
    %58 = arith.addf %52, %57 : vector<256x128xf32>
    %c0_65 = arith.constant 0 : index
    %c2_66 = arith.constant 2 : index
    %c1_67 = arith.constant 1 : index
    %c0_68 = arith.constant 0 : index
    %59 = vector.load %arg11[%c0_65, %c2_66, %c1_67, %c0_68] : memref<4x10x10x128xbf16, #tpu.memory_space<vmem>>, vector<4x8x8x128xbf16>
    %60 = vector.shape_cast %59 : vector<4x8x8x128xbf16> to vector<256x128xbf16>
    %c7 = arith.constant 7 : index
    %c0_69 = arith.constant 0 : index
    %c0_70 = arith.constant 0 : index
    %61 = vector.load %arg5[%c7, %c0_69, %c0_70] : memref<9x128x128xbf16, #tpu.memory_space<vmem>>, vector<1x128x128xbf16>
    %62 = vector.shape_cast %61 : vector<1x128x128xbf16> to vector<128x128xbf16>
    %cst_71 = arith.constant dense<0.000000e+00> : vector<256x128xf32>
    %63 = tpu.matmul %60, %62, %cst_71 {dimension_numbers = #tpu.dot_dimension_numbers<[1], [0], [0], [1], [0, 0, 1, 1], [], []>} : vector<256x128xbf16>, vector<128x128xbf16>, vector<256x128xf32> -> vector<256x128xf32>
    %64 = arith.addf %58, %63 : vector<256x128xf32>
    %c0_72 = arith.constant 0 : index
    %c2_73 = arith.constant 2 : index
    %c2_74 = arith.constant 2 : index
    %c0_75 = arith.constant 0 : index
    %65 = vector.load %arg11[%c0_72, %c2_73, %c2_74, %c0_75] : memref<4x10x10x128xbf16, #tpu.memory_space<vmem>>, vector<4x8x8x128xbf16>
    %66 = vector.shape_cast %65 : vector<4x8x8x128xbf16> to vector<256x128xbf16>
    %c8 = arith.constant 8 : index
    %c0_76 = arith.constant 0 : index
    %c0_77 = arith.constant 0 : index
    %67 = vector.load %arg5[%c8, %c0_76, %c0_77] : memref<9x128x128xbf16, #tpu.memory_space<vmem>>, vector<1x128x128xbf16>
    %68 = vector.shape_cast %67 : vector<1x128x128xbf16> to vector<128x128xbf16>
    %cst_78 = arith.constant dense<0.000000e+00> : vector<256x128xf32>
    %69 = tpu.matmul %66, %68, %cst_78 {dimension_numbers = #tpu.dot_dimension_numbers<[1], [0], [0], [1], [0, 0, 1, 1], [], []>} : vector<256x128xbf16>, vector<128x128xbf16>, vector<256x128xf32> -> vector<256x128xf32>
    %70 = arith.addf %64, %69 : vector<256x128xf32>
    %c1_79 = arith.constant 1 : index
    %c0_80 = arith.constant 0 : index
    %71 = vector.load %arg9[%c1_79, %c0_80] : memref<5x128xf32, #tpu.memory_space<vmem>>, vector<1x128xf32>
    %72 = vector.broadcast %71 : vector<1x128xf32> to vector<256x128xf32>
    %73 = arith.addf %70, %72 : vector<256x128xf32>
    %74 = vector.shape_cast %73 : vector<256x128xf32> to vector<4x64x128xf32>
    %cst_81 = arith.constant dense<0.000000e+00> : vector<4x128xf32>
    %75 = vector.multi_reduction <add>, %74, %cst_81 [1] : vector<4x64x128xf32> to vector<4x128xf32>
    %cst_82 = arith.constant 6.400000e+01 : f32
    %76 = vector.broadcast %cst_82 : f32 to vector<4x128xf32>
    %77 = arith.divf %75, %76 : vector<4x128xf32>
    %78 = arith.truncf %77 : vector<4x128xf32> to vector<4x128xbf16>
    %c0_83 = arith.constant 0 : index
    %c0_84 = arith.constant 0 : index
    %79 = vector.load %arg7[%c0_83, %c0_84] : memref<128x8xbf16, #tpu.memory_space<vmem>>, vector<128x8xbf16>
    %cst_85 = arith.constant dense<0.000000e+00> : vector<4x8xf32>
    %80 = tpu.matmul %78, %79, %cst_85 {dimension_numbers = #tpu.dot_dimension_numbers<[1], [0], [0], [1], [0, 0, 1, 1], [], []>} : vector<4x128xbf16>, vector<128x8xbf16>, vector<4x8xf32> -> vector<4x8xf32>
    %c3_86 = arith.constant 3 : index
    %c0_87 = arith.constant 0 : index
    %81 = vector.load %arg9[%c3_86, %c0_87] : memref<5x128xf32, #tpu.memory_space<vmem>>, vector<1x8xf32>
    %82 = vector.broadcast %81 : vector<1x8xf32> to vector<4x8xf32>
    %83 = arith.addf %80, %82 : vector<4x8xf32>
    %cst_88 = arith.constant 0.000000e+00 : f32
    %84 = vector.broadcast %cst_88 : f32 to vector<4x8xf32>
    %85 = arith.maximumf %83, %84 : vector<4x8xf32>
    %86 = arith.truncf %85 : vector<4x8xf32> to vector<4x8xbf16>
    %c0_89 = arith.constant 0 : index
    %c0_90 = arith.constant 0 : index
    %87 = vector.load %arg8[%c0_89, %c0_90] : memref<8x128xbf16, #tpu.memory_space<vmem>>, vector<8x128xbf16>
    %cst_91 = arith.constant dense<0.000000e+00> : vector<4x128xf32>
    %88 = tpu.matmul %86, %87, %cst_91 {dimension_numbers = #tpu.dot_dimension_numbers<[1], [0], [0], [1], [0, 0, 1, 1], [], []>} : vector<4x8xbf16>, vector<8x128xbf16>, vector<4x128xf32> -> vector<4x128xf32>
    %c4_92 = arith.constant 4 : index
    %c0_93 = arith.constant 0 : index
    %89 = vector.load %arg9[%c4_92, %c0_93] : memref<5x128xf32, #tpu.memory_space<vmem>>, vector<1x128xf32>
    %90 = vector.broadcast %89 : vector<1x128xf32> to vector<4x128xf32>
    %91 = arith.addf %88, %90 : vector<4x128xf32>
    %92 = arith.negf %91 : vector<4x128xf32>
    %93 = math.exp %92 : vector<4x128xf32>
    %cst_94 = arith.constant 1.000000e+00 : f32
    %94 = vector.broadcast %cst_94 : f32 to vector<4x128xf32>
    %95 = arith.addf %94, %93 : vector<4x128xf32>
    %96 = arith.divf %94, %95 : vector<4x128xf32>
    %97 = vector.shape_cast %96 : vector<4x128xf32> to vector<4x1x128xf32>
    %98 = vector.broadcast %97 : vector<4x1x128xf32> to vector<4x64x128xf32>
    %99 = arith.mulf %74, %98 : vector<4x64x128xf32>
    %c0_95 = arith.constant 0 : index
    %c0_96 = arith.constant 0 : index
    %c0_97 = arith.constant 0 : index
    %100 = vector.load %arg2[%c0_95, %c0_96, %c0_97] : memref<4x64x8xbf16, #tpu.memory_space<vmem>>, vector<4x64x8xbf16>
    %101 = vector.shape_cast %100 : vector<4x64x8xbf16> to vector<256x8xbf16>
    %c0_98 = arith.constant 0 : index
    %c0_99 = arith.constant 0 : index
    %102 = vector.load %arg6[%c0_98, %c0_99] : memref<8x128xbf16, #tpu.memory_space<vmem>>, vector<8x128xbf16>
    %cst_100 = arith.constant dense<0.000000e+00> : vector<256x128xf32>
    %103 = tpu.matmul %101, %102, %cst_100 {dimension_numbers = #tpu.dot_dimension_numbers<[1], [0], [0], [1], [0, 0, 1, 1], [], []>} : vector<256x8xbf16>, vector<8x128xbf16>, vector<256x128xf32> -> vector<256x128xf32>
    %c2_101 = arith.constant 2 : index
    %c0_102 = arith.constant 0 : index
    %104 = vector.load %arg9[%c2_101, %c0_102] : memref<5x128xf32, #tpu.memory_space<vmem>>, vector<1x128xf32>
    %105 = vector.broadcast %104 : vector<1x128xf32> to vector<256x128xf32>
    %106 = arith.addf %103, %105 : vector<256x128xf32>
    %107 = vector.shape_cast %106 : vector<256x128xf32> to vector<4x64x128xf32>
    %108 = arith.addf %99, %107 : vector<4x64x128xf32>
    %cst_103 = arith.constant 0.000000e+00 : f32
    %109 = vector.broadcast %cst_103 : f32 to vector<4x64x128xf32>
    %110 = arith.maximumf %108, %109 : vector<4x64x128xf32>
    %111 = vector.shape_cast %110 : vector<4x64x128xf32> to vector<4x8x8x128xf32>
    %c0_104 = arith.constant 0 : index
    %c0_105 = arith.constant 0 : index
    %c0_106 = arith.constant 0 : index
    %c0_107 = arith.constant 0 : index
    %112 = vector.load %arg10[%c0_104, %c0_105, %c0_106, %c0_107] : memref<4x8x8x128xf32, #tpu.memory_space<vmem>>, vector<4x8x8x128xf32>
    tpu.vector_store %arg10[%c0_104, %c0_105, %c0_106, %c0_107], %111 {strides = array<i32>} : memref<4x8x8x128xf32, #tpu.memory_space<vmem>>, vector<4x8x8x128xf32>,
    return
  }
  func.func @transform_0(%arg0: i32) -> (i32, i32, i32) {
    %c0_i32 = arith.constant 0 : i32
    %c0_i32_0 = arith.constant 0 : i32
    %c0_i32_1 = arith.constant 0 : i32
    return %arg0, %c0_i32, %c0_i32_0 : i32, i32, i32
  }
  func.func @transform_1(%arg0: i32) -> (i32, i32, i32) {
    %c0_i32 = arith.constant 0 : i32
    %c0_i32_0 = arith.constant 0 : i32
    %c0_i32_1 = arith.constant 0 : i32
    return %arg0, %c0_i32, %c0_i32_0 : i32, i32, i32
  }
  func.func @transform_2(%arg0: i32) -> (i32, i32, i32) {
    %c0_i32 = arith.constant 0 : i32
    %c0_i32_0 = arith.constant 0 : i32
    %c0_i32_1 = arith.constant 0 : i32
    %c0_i32_2 = arith.constant 0 : i32
    return %c0_i32, %c0_i32_0, %c0_i32_1 : i32, i32, i32
  }
  func.func @transform_3(%arg0: i32) -> (i32, i32) {
    %c0_i32 = arith.constant 0 : i32
    %c0_i32_0 = arith.constant 0 : i32
    %c0_i32_1 = arith.constant 0 : i32
    return %c0_i32, %c0_i32_0 : i32, i32
  }
  func.func @transform_4(%arg0: i32) -> (i32, i32, i32) {
    %c0_i32 = arith.constant 0 : i32
    %c0_i32_0 = arith.constant 0 : i32
    %c0_i32_1 = arith.constant 0 : i32
    %c0_i32_2 = arith.constant 0 : i32
    return %c0_i32, %c0_i32_0, %c0_i32_1 : i32, i32, i32
  }
  func.func @transform_5(%arg0: i32) -> (i32, i32) {
    %c0_i32 = arith.constant 0 : i32
    %c0_i32_0 = arith.constant 0 : i32
    %c0_i32_1 = arith.constant 0 : i32
    return %c0_i32, %c0_i32_0 : i32, i32
  }
  func.func @transform_6(%arg0: i32) -> (i32, i32) {
    %c0_i32 = arith.constant 0 : i32
    %c0_i32_0 = arith.constant 0 : i32
    %c0_i32_1 = arith.constant 0 : i32
    return %c0_i32, %c0_i32_0 : i32, i32
  }
  func.func @transform_7(%arg0: i32) -> (i32, i32) {
    %c0_i32 = arith.constant 0 : i32
    %c0_i32_0 = arith.constant 0 : i32
    %c0_i32_1 = arith.constant 0 : i32
    return %c0_i32, %c0_i32_0 : i32, i32
  }
  func.func @transform_8(%arg0: i32) -> (i32, i32) {
    %c0_i32 = arith.constant 0 : i32
    %c0_i32_0 = arith.constant 0 : i32
    %c0_i32_1 = arith.constant 0 : i32
    return %c0_i32, %c0_i32_0 : i32, i32
  }
  func.func @transform_9(%arg0: i32) -> (i32, i32, i32, i32) {
    %c0_i32 = arith.constant 0 : i32
    %c0_i32_0 = arith.constant 0 : i32
    %c0_i32_1 = arith.constant 0 : i32
    %c0_i32_2 = arith.constant 0 : i32
    return %arg0, %c0_i32, %c0_i32_0, %c0_i32_1 : i32, i32, i32, i32
  }
}

</mosaic_0001>

<llo_original>
// kernel: tpu_custom_call.1
$region0: #{tpu_custom_call.1}
  #allocation0 [shape = 'u32[]', space=smem, size = 0x4, offset = 0x4, fixed_abs, tag = 'smem constant byte address 0x4 - core index']
  #allocation1 [shape = 'u32[72,128]{1,0:T(1,128)}', space=vmem, size = 0x9000, scoped, tag = 'internal scratch']
  #allocation2 [shape = 'bf16[4,10,10,128]{3,2,1,0:T(8,128)(2,1)}', space=vmem, size = 0x28000, scoped, tag = 'scratch operand']
  %s0 = inlined_call_operand.vmem [shape: bf16[8,100,72], index: 0, kind: input, shape index: {}]
  %s1 = inlined_call_operand.vmem [shape: bf16[8,64,8], index: 1, kind: input, shape index: {}]
  %s2 = inlined_call_operand.vmem [shape: f32[10,10,1], index: 2, kind: input, shape index: {}]
  %s3 = inlined_call_operand.vmem [shape: bf16[72,128], index: 3, kind: input, shape index: {}]
  %s4 = inlined_call_operand.vmem [shape: bf16[9,128,128], index: 4, kind: input, shape index: {}]
  %s5 = inlined_call_operand.vmem [shape: bf16[8,128], index: 5, kind: input, shape index: {}]
  %s6 = inlined_call_operand.vmem [shape: bf16[128,8], index: 6, kind: input, shape index: {}]
  %s7 = inlined_call_operand.vmem [shape: bf16[8,128], index: 7, kind: input, shape index: {}]
  %s8 = inlined_call_operand.vmem [shape: f32[5,128], index: 8, kind: input, shape index: {}]
  %s9 = inlined_call_operand.hbm [shape: f32[8,8,8,128], index: 9, kind: output, shape index: {}]
  %s10 = sld [smem:[#allocation0]]
  $region69: #{tpu_custom_call.1} parent=0
    _
  %s12 = ssub.s32 1, %s10
  %s13 = scalar_select 0, %s12, %s10
  $region1: #{tpu_custom_call.1} parent=0
    #allocation3 [shape = 'u8[262144]{0}', space=vmem, size = 0x40000, scoped, tag = 'output window, operand 0']
    #allocation4 [shape = 's32[2]{0}', space=sflag, size = 0x8, scoped, tag = 'scoped memory for tpu_custom_call.1']
    %14 = vsyncpa [#allocation4], 0
    %s15 = scalar_lea.sflag [#allocation4], 1
    %16 = vsyncpa %s15, 0
    loop: start=0, step=1, limit=4
    $region2: #{tpu_custom_call.1} parent=1 // loop_pre_header
      _
    $region3: #{tpu_custom_call.1} parent=1 // loop_header
      %s18 = sphi 0, %s22
      %p19 = scmp.ge.s32.totalorder %s18, 4
      %s28 = sphi 0, %s30
      %s31 = sphi 0, %s28
      %s32 = sphi 0, %s31
      %s48 = sphi 0, %s32
      %s54 = sphi 0, %s56
      %s57 = sphi 0, %s54
      %s58 = sphi 0, %s57
      %s74 = sphi 0, %s58
      %s78 = sphi 0, %s78
      %s80 = sphi 0, %s78
      %s81 = sphi 0, %s80
      %s95 = sphi 0, %s81
      %s99 = sphi 0, %s99
      %s101 = sphi 0, %s99
      %s102 = sphi 0, %s101
      %s116 = sphi 0, %s102
      %s120 = sphi 0, %s120
      %s122 = sphi 0, %s120
      %s123 = sphi 0, %s122
      %s137 = sphi 0, %s123
      %s141 = sphi 0, %s141
      %s143 = sphi 0, %s141
      %s144 = sphi 0, %s143
      %s158 = sphi 0, %s144
      %s162 = sphi 0, %s162
      %s164 = sphi 0, %s162
      %s165 = sphi 0, %s164
      %s179 = sphi 0, %s165
      %s183 = sphi 0, %s183
      %s185 = sphi 0, %s183
      %s186 = sphi 0, %s185
      %s200 = sphi 0, %s186
      %s204 = sphi 0, %s204
      %s206 = sphi 0, %s204
      %s207 = sphi 0, %s206
      %s221 = sphi 0, %s207
      %s227 = sphi 0, %s229
      %s230 = sphi 0, %s227
      %s231 = sphi 0, %s230
      %s247 = sphi 0, %s231
    $region4: #{tpu_custom_call.1} parent=1 // loop_header_branch
      %21 = sbr.rel (%p19) target = $region8
    $region5: #{tpu_custom_call.1} parent=1 // loop_body
      %s23 = ssub.s32 %s18, 1
      %s24 = ssub.s32 %s18, 2
      %s25 = sadd.s32 %s18, 1
      %s26 = ssub.s32 %s18, %s25
      %p27 = scmp.eq.s32.totalorder %s26, 0
      %s29 = sadd.s32 %s28, 1
      %s30 = scalar_select %p27, %s28, %s29
      %p33 = pneg %p27
      %p34 = scmp.eq.s32.totalorder %s18, 1
      %p35 = por %p33, %p34
      %p36 = scmp.ne.s32.totalorder %s28, %s31
      %p37 = scmp.eq.s32.totalorder %s18, 0
      %p38 = por %p36, %p37
      %p39 = scmp.ne.s32.totalorder %s28, %s31
      %p40 = scmp.eq.s32.totalorder %s23, 1
      %p41 = por %p39, %p40
      %p42 = scmp.ne.s32.totalorder %s31, %s32
      %p43 = scmp.eq.s32.totalorder %s23, 0
      %p44 = por %p42, %p43
      %p45 = scmp.ne.s32.totalorder %s31, %s32
      %p46 = scmp.eq.s32.totalorder %s24, 1
      %p47 = por %p45, %p46
      %p49 = scmp.ne.s32.totalorder %s32, %s48
      %p50 = scmp.eq.s32.totalorder %s24, 0
      %p51 = por %p49, %p50
      %s52 = ssub.s32 %s18, %s25
      %p53 = scmp.eq.s32.totalorder %s52, 0
      %s55 = sadd.s32 %s54, 1
      %s56 = scalar_select %p53, %s54, %s55
      %p59 = pneg %p53
      %p60 = scmp.eq.s32.totalorder %s18, 1
      %p61 = por %p59, %p60
      %p62 = scmp.ne.s32.totalorder %s54, %s57
      %p63 = scmp.eq.s32.totalorder %s18, 0
      %p64 = por %p62, %p63
      %p65 = scmp.ne.s32.totalorder %s54, %s57
      %p66 = scmp.eq.s32.totalorder %s23, 1
      %p67 = por %p65, %p66
      %p68 = scmp.ne.s32.totalorder %s57, %s58
      %p69 = scmp.eq.s32.totalorder %s23, 0
      %p70 = por %p68, %p69
      %p71 = scmp.ne.s32.totalorder %s57, %s58
      %p72 = scmp.eq.s32.totalorder %s24, 1
      %p73 = por %p71, %p72
      %p75 = scmp.ne.s32.totalorder %s58, %s74
      %p76 = scmp.eq.s32.totalorder %s24, 0
      %p77 = por %p75, %p76
      %s79 = sadd.s32 %s78, 1
      %p82 = scmp.eq.s32.totalorder %s18, 1
      %p83 = scmp.ne.s32.totalorder %s78, %s80
      %p84 = scmp.eq.s32.totalorder %s18, 0
      %p85 = por %p83, %p84
      %p86 = scmp.ne.s32.totalorder %s78, %s80
      %p87 = scmp.eq.s32.totalorder %s23, 1
      %p88 = por %p86, %p87
      %p89 = scmp.ne.s32.totalorder %s80, %s81
      %p90 = scmp.eq.s32.totalorder %s23, 0
      %p91 = por %p89, %p90
      %p92 = scmp.ne.s32.totalorder %s80, %s81
      %p93 = scmp.eq.s32.totalorder %s24, 1
      %p94 = por %p92, %p93
      %p96 = scmp.ne.s32.totalorder %s81, %s95
      %p97 = scmp.eq.s32.totalorder %s24, 0
      %p98 = por %p96, %p97
      %s100 = sadd.s32 %s99, 1
      %p103 = scmp.eq.s32.totalorder %s18, 1
      %p104 = scmp.ne.s32.totalorder %s99, %s101
      %p105 = scmp.eq.s32.totalorder %s18, 0
      %p106 = por %p104, %p105
      %p107 = scmp.ne.s32.totalorder %s99, %s101
      %p108 = scmp.eq.s32.totalorder %s23, 1
      %p109 = por %p107, %p108
      %p110 = scmp.ne.s32.totalorder %s101, %s102
      %p111 = scmp.eq.s32.totalorder %s23, 0
      %p112 = por %p110, %p111
      %p113 = scmp.ne.s32.totalorder %s101, %s102
      %p114 = scmp.eq.s32.totalorder %s24, 1
      %p115 = por %p113, %p114
      %p117 = scmp.ne.s32.totalorder %s102, %s116
      %p118 = scmp.eq.s32.totalorder %s24, 0
      %p119 = por %p117, %p118
      %s121 = sadd.s32 %s120, 1
      %p124 = scmp.eq.s32.totalorder %s18, 1
      %p125 = scmp.ne.s32.totalorder %s120, %s122
      %p126 = scmp.eq.s32.totalorder %s18, 0
      %p127 = por %p125, %p126
      %p128 = scmp.ne.s32.totalorder %s120, %s122
      %p129 = scmp.eq.s32.totalorder %s23, 1
      %p130 = por %p128, %p129
      %p131 = scmp.ne.s32.totalorder %s122, %s123
      %p132 = scmp.eq.s32.totalorder %s23, 0
      %p133 = por %p131, %p132
      %p134 = scmp.ne.s32.totalorder %s122, %s123
      %p135 = scmp.eq.s32.totalorder %s24, 1
      %p136 = por %p134, %p135
      %p138 = scmp.ne.s32.totalorder %s123, %s137
      %p139 = scmp.eq.s32.totalorder %s24, 0
      %p140 = por %p138, %p139
      %s142 = sadd.s32 %s141, 1
      %p145 = scmp.eq.s32.totalorder %s18, 1
      %p146 = scmp.ne.s32.totalorder %s141, %s143
      %p147 = scmp.eq.s32.totalorder %s18, 0
      %p148 = por %p146, %p147
      %p149 = scmp.ne.s32.totalorder %s141, %s143
      %p150 = scmp.eq.s32.totalorder %s23, 1
      %p151 = por %p149, %p150
      %p152 = scmp.ne.s32.totalorder %s143, %s144
      %p153 = scmp.eq.s32.totalorder %s23, 0
      %p154 = por %p152, %p153
      %p155 = scmp.ne.s32.totalorder %s143, %s144
      %p156 = scmp.eq.s32.totalorder %s24, 1
      %p157 = por %p155, %p156
      %p159 = scmp.ne.s32.totalorder %s144, %s158
      %p160 = scmp.eq.s32.totalorder %s24, 0
      %p161 = por %p159, %p160
      %s163 = sadd.s32 %s162, 1
      %p166 = scmp.eq.s32.totalorder %s18, 1
      %p167 = scmp.ne.s32.totalorder %s162, %s164
      %p168 = scmp.eq.s32.totalorder %s18, 0
      %p169 = por %p167, %p168
      %p170 = scmp.ne.s32.totalorder %s162, %s164
      %p171 = scmp.eq.s32.totalorder %s23, 1
      %p172 = por %p170, %p171
      %p173 = scmp.ne.s32.totalorder %s164, %s165
      %p174 = scmp.eq.s32.totalorder %s23, 0
      %p175 = por %p173, %p174
      %p176 = scmp.ne.s32.totalorder %s164, %s165
      %p177 = scmp.eq.s32.totalorder %s24, 1
      %p178 = por %p176, %p177
      %p180 = scmp.ne.s32.totalorder %s165, %s179
      %p181 = scmp.eq.s32.totalorder %s24, 0
      %p182 = por %p180, %p181
      %s184 = sadd.s32 %s183, 1
      %p187 = scmp.eq.s32.totalorder %s18, 1
      %p188 = scmp.ne.s32.totalorder %s183, %s185
      %p189 = scmp.eq.s32.totalorder %s18, 0
      %p190 = por %p188, %p189
      %p191 = scmp.ne.s32.totalorder %s183, %s185
      %p192 = scmp.eq.s32.totalorder %s23, 1
      %p193 = por %p191, %p192
      %p194 = scmp.ne.s32.totalorder %s185, %s186
      %p195 = scmp.eq.s32.totalorder %s23, 0
      %p196 = por %p194, %p195
      %p197 = scmp.ne.s32.totalorder %s185, %s186
      %p198 = scmp.eq.s32.totalorder %s24, 1
      %p199 = por %p197, %p198
      %p201 = scmp.ne.s32.totalorder %s186, %s200
      %p202 = scmp.eq.s32.totalorder %s24, 0
      %p203 = por %p201, %p202
      %s205 = sadd.s32 %s204, 1
      %p208 = scmp.eq.s32.totalorder %s18, 1
      %p209 = scmp.ne.s32.totalorder %s204, %s206
      %p210 = scmp.eq.s32.totalorder %s18, 0
      %p211 = por %p209, %p210
      %p212 = scmp.ne.s32.totalorder %s204, %s206
      %p213 = scmp.eq.s32.totalorder %s23, 1
      %p214 = por %p212, %p213
      %p215 = scmp.ne.s32.totalorder %s206, %s207
      %p216 = scmp.eq.s32.totalorder %s23, 0
      %p217 = por %p215, %p216
      %p218 = scmp.ne.s32.totalorder %s206, %s207
      %p219 = scmp.eq.s32.totalorder %s24, 1
      %p220 = por %p218, %p219
      %p222 = scmp.ne.s32.totalorder %s207, %s221
      %p223 = scmp.eq.s32.totalorder %s24, 0
      %p224 = por %p222, %p223
      %s225 = ssub.s32 %s18, %s25
      %p226 = scmp.eq.s32.totalorder %s225, 0
      %s228 = sadd.s32 %s227, 1
      %s229 = scalar_select %p226, %s227, %s228
      %p232 = pneg %p226
      %p233 = scmp.eq.s32.totalorder %s18, 1
      %p234 = por %p232, %p233
      %p235 = scmp.ne.s32.totalorder %s227, %s230
      %p236 = scmp.eq.s32.totalorder %s18, 0
      %p237 = por %p235, %p236
      %p238 = scmp.ne.s32.totalorder %s227, %s230
      %p239 = scmp.eq.s32.totalorder %s23, 1
      %p240 = por %p238, %p239
      %p241 = scmp.ne.s32.totalorder %s230, %s231
      %p242 = scmp.eq.s32.totalorder %s23, 0
      %p243 = por %p241, %p242
      %p244 = scmp.ne.s32.totalorder %s230, %s231
      %p245 = scmp.eq.s32.totalorder %s24, 1
      %p246 = por %p244, %p245
      %p248 = scmp.ne.s32.totalorder %s231, %s247
      %p249 = scmp.eq.s32.totalorder %s24, 0
      %p250 = por %p248, %p249
      %p251 = scmp.le.s32.totalorder 1, %s18
      %p252 = scmp.lt.s32.totalorder %s18, 3
      %p253 = pnand %p251, %p252
      %p254 = pneg %p253
      // Predicated region
      $region9: #{tpu_custom_call.1} parent=5 // pred_check
        _
      $region10: #{tpu_custom_call.1} parent=5 // pred_check_branch
        %256 = sbr.rel (%p253) target = $region12
      $region11: #{tpu_custom_call.1} parent=5 // pred_region
        %s257 = ssub.s32 %s18, 1
        // Predicated region
        $region13: #{tpu_custom_call.1} parent=11 // pred_check
          %p258 = pneg %p91
        $region14: #{tpu_custom_call.1} parent=11 // pred_check_branch
          %260 = sbr.rel (%p258) target = $region16
        $region15: #{tpu_custom_call.1} parent=11 // pred_region
          _
        $region16: #{tpu_custom_call.1} parent=11 // pred_fallthru
          _
        // Predicated region
        $region17: #{tpu_custom_call.1} parent=11 // pred_check
          %p261 = pneg %p112
        $region18: #{tpu_custom_call.1} parent=11 // pred_check_branch
          %263 = sbr.rel (%p261) target = $region20
        $region19: #{tpu_custom_call.1} parent=11 // pred_region
          _
        $region20: #{tpu_custom_call.1} parent=11 // pred_fallthru
          _
        // Predicated region
        $region21: #{tpu_custom_call.1} parent=11 // pred_check
          %p264 = pneg %p133
        $region22: #{tpu_custom_call.1} parent=11 // pred_check_branch
          %266 = sbr.rel (%p264) target = $region24
        $region23: #{tpu_custom_call.1} parent=11 // pred_region
          _
        $region24: #{tpu_custom_call.1} parent=11 // pred_fallthru
          _
        // Predicated region
        $region25: #{tpu_custom_call.1} parent=11 // pred_check
          %p267 = pneg %p154
        $region26: #{tpu_custom_call.1} parent=11 // pred_check_branch
          %269 = sbr.rel (%p267) target = $region28
        $region27: #{tpu_custom_call.1} parent=11 // pred_region
          _
        $region28: #{tpu_custom_call.1} parent=11 // pred_fallthru
          _
        // Predicated region
        $region29: #{tpu_custom_call.1} parent=11 // pred_check
          %p270 = pneg %p175
        $region30: #{tpu_custom_call.1} parent=11 // pred_check_branch
          %272 = sbr.rel (%p270) target = $region32
        $region31: #{tpu_custom_call.1} parent=11 // pred_region
          _
        $region32: #{tpu_custom_call.1} parent=11 // pred_fallthru
          _
        // Predicated region
        $region33: #{tpu_custom_call.1} parent=11 // pred_check
          %p273 = pneg %p196
        $region34: #{tpu_custom_call.1} parent=11 // pred_check_branch
          %275 = sbr.rel (%p273) target = $region36
        $region35: #{tpu_custom_call.1} parent=11 // pred_region
          _
        $region36: #{tpu_custom_call.1} parent=11 // pred_fallthru
          _
        // Predicated region
        $region37: #{tpu_custom_call.1} parent=11 // pred_check
          %p276 = pneg %p217
        $region38: #{tpu_custom_call.1} parent=11 // pred_check_branch
          %278 = sbr.rel (%p276) target = $region40
        $region39: #{tpu_custom_call.1} parent=11 // pred_region
          _
        $region40: #{tpu_custom_call.1} parent=11 // pred_fallthru
          _
      $region12: #{tpu_custom_call.1} parent=5 // pred_fallthru
        _
      %p279 = scmp.lt.s32.totalorder %s18, 2
      // Predicated region
      $region41: #{tpu_custom_call.1} parent=5 // pred_check
        %p280 = pneg %p279
      $region42: #{tpu_custom_call.1} parent=5 // pred_check_branch
        %282 = sbr.rel (%p280) target = $region44
      $region43: #{tpu_custom_call.1} parent=5 // pred_region
        // Predicated region
        $region45: #{tpu_custom_call.1} parent=43 // pred_check
          %p283 = pneg %p38
        $region46: #{tpu_custom_call.1} parent=43 // pred_check_branch
          %285 = sbr.rel (%p283) target = $region48
        $region47: #{tpu_custom_call.1} parent=43 // pred_region
          %s286 = smul.u32 4, %s18
          %p287 = scmp.lt.s32.totalorder %s286, 7
          %s288 = scalar_select %p287, %s286, 7
          %s289 = smul.addr %s288, 13
          %s290 = smul.addr %s289, 4
          %s291 = scalar_lea.vmem %s0, %s290
          %s292 = smul.u32 4, %s18
        $region48: #{tpu_custom_call.1} parent=43 // pred_fallthru
          _
        // Predicated region
        $region49: #{tpu_custom_call.1} parent=43 // pred_check
          %p293 = pneg %p64
        $region50: #{tpu_custom_call.1} parent=43 // pred_check_branch
          %295 = sbr.rel (%p293) target = $region52
        $region51: #{tpu_custom_call.1} parent=43 // pred_region
          %s296 = smul.u32 4, %s18
          %p297 = scmp.lt.s32.totalorder %s296, 7
          %s298 = scalar_select %p297, %s296, 7
          %s299 = smul.addr %s298, 8
          %s300 = smul.addr %s299, 4
          %s301 = scalar_lea.vmem %s1, %s300
          %s302 = smul.u32 4, %s18
        $region52: #{tpu_custom_call.1} parent=43 // pred_fallthru
          _
      $region44: #{tpu_custom_call.1} parent=5 // pred_fallthru
        _
      %p303 = scmp.le.s32.totalorder 1, %s18
      %p304 = scmp.lt.s32.totalorder %s18, 3
      %p305 = pnand %p303, %p304
      %p306 = pneg %p305
      // Predicated region
      $region53: #{tpu_custom_call.1} parent=5 // pred_check
        _
      $region54: #{tpu_custom_call.1} parent=5 // pred_check_branch
        %308 = sbr.rel (%p305) target = $region56
      $region55: #{tpu_custom_call.1} parent=5 // pred_region
        %s309 = ssub.s32 %s18, 1
        %s310 = smul.u32 4, %s23
        %p311 = scmp.lt.s32.totalorder %s310, 7
        %s312 = scalar_select %p311, %s310, 7
        %s313 = smul.addr %s312, 13
        %s314 = smul.addr %s313, 4
        %s315 = scalar_lea.vmem %s0, %s314
        %p316 = pneg %p44
        %p317 = pneg %p41
        %s318 = smul.u32 4, %s23
        %p319 = scmp.lt.s32.totalorder %s318, 7
        %s320 = scalar_select %p319, %s318, 7
        %s321 = smul.addr %s320, 8
        %s322 = smul.addr %s321, 4
        %s323 = scalar_lea.vmem %s1, %s322
        %p324 = pneg %p70
        %p325 = pneg %p67
        %p326 = pneg %p91
        %p327 = pneg %p88
        %p328 = pneg %p112
        %p329 = pneg %p109
        %p330 = pneg %p133
        %p331 = pneg %p130
        %p332 = pneg %p154
        %p333 = pneg %p151
        %p334 = pneg %p175
        %p335 = pneg %p172
        %p336 = pneg %p196
        %p337 = pneg %p193
        %p338 = pneg %p217
        %p339 = pneg %p214
        %p340 = pneg %p243
        %p341 = pneg %p240
        %s342 = sand.u32 %s230, 1
        %s343 = scalar_lea.sflag [#allocation4], %s342
        %s344 = sand.u32 %s230, 1
        %s345 = smul.addr %s344, 256
        %s346 = scalar_lea.vmem [#allocation3], %s345
        %s347 = smul.u32 4, %s23
        %p348 = scmp.lt.s32.totalorder %s347, 7
        %s349 = scalar_select %p348, %s347, 7
        %s350 = smul.addr %s349, 13
        %s351 = smul.addr %s350, 4
        %s352 = scalar_lea.vmem %s0, %s351
        %s353 = smul.u32 4, %s23
        %s354 = smul.u32 4, %s23
        %p355 = scmp.lt.s32.totalorder %s354, 7
        %s356 = scalar_select %p355, %s354, 7
        %s357 = smul.addr %s356, 8
        %s358 = smul.addr %s357, 4
        %s359 = scalar_lea.vmem %s1, %s358
        %s360 = smul.u32 4, %s23
        %s361 = smul.u32 4, %s23
        %v363 = vld [vmem:[%s352] sm:$0xf]
        %v364 = vld [vmem:[%s352 + $0x4] sm:$0xf]
        %v365 = vld [vmem:[%s352 + $0x8] sm:$0xf]
        %v366 = vld [vmem:[%s352 + $0xc] sm:$0xf]
        %v367 = vld [vmem:[%s352 + $0x10] sm:$0xf]
        %v368 = vld [vmem:[%s352 + $0x14] sm:$0xf]
        %v369 = vld [vmem:[%s352 + $0x18] sm:$0xf]
        %v370 = vld [vmem:[%s352 + $0x1c] sm:$0xf]
        %v371 = vld [vmem:[%s352 + $0x20] sm:$0xf]
        %v372 = vld [vmem:[%s352 + $0x24] sm:$0xf]
        %v373 = vld [vmem:[%s352 + $0x28] sm:$0xf]
        %v374 = vld [vmem:[%s352 + $0x2c] sm:$0xf]
        %v375 = vld [vmem:[%s352 + $0x30] sm:$0x3]
        %v376 = vld [vmem:[%s352 + $0x34] sm:$0xf]
        %v377 = vld [vmem:[%s352 + $0x38] sm:$0xf]
        %v378 = vld [vmem:[%s352 + $0x3c] sm:$0xf]
        %v379 = vld [vmem:[%s352 + $0x40] sm:$0xf]
        %v380 = vld [vmem:[%s352 + $0x44] sm:$0xf]
        %v381 = vld [vmem:[%s352 + $0x48] sm:$0xf]
        %v382 = vld [vmem:[%s352 + $0x4c] sm:$0xf]
        %v383 = vld [vmem:[%s352 + $0x50] sm:$0xf]
        %v384 = vld [vmem:[%s352 + $0x54] sm:$0xf]
        %v385 = vld [vmem:[%s352 + $0x58] sm:$0xf]
        %v386 = vld [vmem:[%s352 + $0x5c] sm:$0xf]
        %v387 = vld [vmem:[%s352 + $0x60] sm:$0xf]
        %v388 = vld [vmem:[%s352 + $0x64] sm:$0x3]
        %v389 = vld [vmem:[%s352 + $0x68] sm:$0xf]
        %v390 = vld [vmem:[%s352 + $0x6c] sm:$0xf]
        %v391 = vld [vmem:[%s352 + $0x70] sm:$0xf]
        %v392 = vld [vmem:[%s352 + $0x74] sm:$0xf]
        %v393 = vld [vmem:[%s352 + $0x78] sm:$0xf]
        %v394 = vld [vmem:[%s352 + $0x7c] sm:$0xf]
        %v395 = vld [vmem:[%s352 + $0x80] sm:$0xf]
        %v396 = vld [vmem:[%s352 + $0x84] sm:$0xf]
        %v397 = vld [vmem:[%s352 + $0x88] sm:$0xf]
        %v398 = vld [vmem:[%s352 + $0x8c] sm:$0xf]
        %v399 = vld [vmem:[%s352 + $0x90] sm:$0xf]
        %v400 = vld [vmem:[%s352 + $0x94] sm:$0xf]
        %v401 = vld [vmem:[%s352 + $0x98] sm:$0x3]
        %v402 = vld [vmem:[%s352 + $0x9c] sm:$0xf]
        %v403 = vld [vmem:[%s352 + $0xa0] sm:$0xf]
        %v404 = vld [vmem:[%s352 + $0xa4] sm:$0xf]
        %v405 = vld [vmem:[%s352 + $0xa8] sm:$0xf]
        %v406 = vld [vmem:[%s352 + $0xac] sm:$0xf]
        %v407 = vld [vmem:[%s352 + $0xb0] sm:$0xf]
        %v408 = vld [vmem:[%s352 + $0xb4] sm:$0xf]
        %v409 = vld [vmem:[%s352 + $0xb8] sm:$0xf]
        %v410 = vld [vmem:[%s352 + $0xbc] sm:$0xf]
        %v411 = vld [vmem:[%s352 + $0xc0] sm:$0xf]
        %v412 = vld [vmem:[%s352 + $0xc4] sm:$0xf]
        %v413 = vld [vmem:[%s352 + $0xc8] sm:$0xf]
        %v414 = vld [vmem:[%s352 + $0xcc] sm:$0x3]
        %v467 = vrot.slane %v363, 2
        %v468 = vrot.slane %v364, 2
        %v469 = vrot.slane %v365, 2
        %v470 = vrot.slane %v366, 2
        %v471 = vrot.slane %v367, 2
        %v472 = vrot.slane %v368, 2
        %v473 = vrot.slane %v369, 2
        %v474 = vrot.slane %v370, 2
        %v475 = vrot.slane %v371, 2
        %v476 = vrot.slane %v372, 2
        %v477 = vrot.slane %v373, 2
        %v478 = vrot.slane %v374, 2
        %v479 = vrot.slane %v375, 2
        %v480 = vrot.slane %v376, 2
        %v481 = vrot.slane %v377, 2
        %v482 = vrot.slane %v378, 2
        %v483 = vrot.slane %v379, 2
        %v484 = vrot.slane %v380, 2
        %v485 = vrot.slane %v381, 2
        %v486 = vrot.slane %v382, 2
        %v487 = vrot.slane %v383, 2
        %v488 = vrot.slane %v384, 2
        %v489 = vrot.slane %v385, 2
        %v490 = vrot.slane %v386, 2
        %v491 = vrot.slane %v387, 2
        %v492 = vrot.slane %v388, 2
        %v493 = vrot.slane %v389, 2
        %v494 = vrot.slane %v390, 2
        %v495 = vrot.slane %v391, 2
        %v496 = vrot.slane %v392, 2
        %v497 = vrot.slane %v393, 2
        %v498 = vrot.slane %v394, 2
        %v499 = vrot.slane %v395, 2
        %v500 = vrot.slane %v396, 2
        %v501 = vrot.slane %v397, 2
        %v502 = vrot.slane %v398, 2
        %v503 = vrot.slane %v399, 2
        %v504 = vrot.slane %v400, 2
        %v505 = vrot.slane %v401, 2
        %v506 = vrot.slane %v402, 2
        %v507 = vrot.slane %v403, 2
        %v508 = vrot.slane %v404, 2
        %v509 = vrot.slane %v405, 2
        %v510 = vrot.slane %v406, 2
        %v511 = vrot.slane %v407, 2
        %v512 = vrot.slane %v408, 2
        %v513 = vrot.slane %v409, 2
        %v514 = vrot.slane %v410, 2
        %v515 = vrot.slane %v411, 2
        %v516 = vrot.slane %v412, 2
        %v517 = vrot.slane %v413, 2
        %v518 = vrot.slane %v414, 2
        %vm519 = vcmask 1041408
        %v522 = vsel %vm519, %v363, %v467
        %vm523 = vcmask 1043458
        %v524 = vsel %vm523, %v363, %v467
        %v526 = vrot.slane %v524, 2
        %v529 = vsel %vm519, %v364, %v468
        %v530 = vsel %vm523, %v364, %v468
        %v532 = vrot.slane %v530, 2
        %v535 = vsel %vm519, %v365, %v469
        %v536 = vsel %vm523, %v365, %v469
        %v538 = vrot.slane %v536, 2
        %v541 = vsel %vm519, %v366, %v470
        %v542 = vsel %vm523, %v366, %v470
        %v544 = vrot.slane %v542, 2
        %v547 = vsel %vm519, %v367, %v471
        %v548 = vsel %vm523, %v367, %v471
        %v550 = vrot.slane %v548, 2
        %v553 = vsel %vm519, %v368, %v472
        %v554 = vsel %vm523, %v368, %v472
        %v556 = vrot.slane %v554, 2
        %v559 = vsel %vm519, %v369, %v473
        %v560 = vsel %vm523, %v369, %v473
        %v562 = vrot.slane %v560, 2
        %v565 = vsel %vm519, %v370, %v474
        %v566 = vsel %vm523, %v370, %v474
        %v568 = vrot.slane %v566, 2
        %v571 = vsel %vm519, %v371, %v475
        %v572 = vsel %vm523, %v371, %v475
        %v574 = vrot.slane %v572, 2
        %v577 = vsel %vm519, %v372, %v476
        %v578 = vsel %vm523, %v372, %v476
        %v580 = vrot.slane %v578, 2
        %v583 = vsel %vm519, %v373, %v477
        %v584 = vsel %vm523, %v373, %v477
        %v586 = vrot.slane %v584, 2
        %v589 = vsel %vm519, %v374, %v478
        %v590 = vsel %vm523, %v374, %v478
        %v592 = vrot.slane %v590, 2
        %v595 = vsel %vm519, %v375, %v479
        %v598 = vsel %vm519, %v376, %v480
        %v599 = vsel %vm523, %v376, %v480
        %v601 = vrot.slane %v599, 2
        %v604 = vsel %vm519, %v377, %v481
        %v605 = vsel %vm523, %v377, %v481
        %v607 = vrot.slane %v605, 2
        %v610 = vsel %vm519, %v378, %v482
        %v611 = vsel %vm523, %v378, %v482
        %v613 = vrot.slane %v611, 2
        %v616 = vsel %vm519, %v379, %v483
        %v617 = vsel %vm523, %v379, %v483
        %v619 = vrot.slane %v617, 2
        %v622 = vsel %vm519, %v380, %v484
        %v623 = vsel %vm523, %v380, %v484
        %v625 = vrot.slane %v623, 2
        %v628 = vsel %vm519, %v381, %v485
        %v629 = vsel %vm523, %v381, %v485
        %v631 = vrot.slane %v629, 2
        %v634 = vsel %vm519, %v382, %v486
        %v635 = vsel %vm523, %v382, %v486
        %v637 = vrot.slane %v635, 2
        %v640 = vsel %vm519, %v383, %v487
        %v641 = vsel %vm523, %v383, %v487
        %v643 = vrot.slane %v641, 2
        %v646 = vsel %vm519, %v384, %v488
        %v647 = vsel %vm523, %v384, %v488
        %v649 = vrot.slane %v647, 2
        %v652 = vsel %vm519, %v385, %v489
        %v653 = vsel %vm523, %v385, %v489
        %v655 = vrot.slane %v653, 2
        %v658 = vsel %vm519, %v386, %v490
        %v659 = vsel %vm523, %v386, %v490
        %v661 = vrot.slane %v659, 2
        %v664 = vsel %vm519, %v387, %v491
        %v665 = vsel %vm523, %v387, %v491
        %v667 = vrot.slane %v665, 2
        %v670 = vsel %vm519, %v388, %v492
        %v673 = vsel %vm519, %v389, %v493
        %v674 = vsel %vm523, %v389, %v493
        %v676 = vrot.slane %v674, 2
        %v679 = vsel %vm519, %v390, %v494
        %v680 = vsel %vm523, %v390, %v494
        %v682 = vrot.slane %v680, 2
        %v685 = vsel %vm519, %v391, %v495
        %v686 = vsel %vm523, %v391, %v495
        %v688 = vrot.slane %v686, 2
        %v691 = vsel %vm519, %v392, %v496
        %v692 = vsel %vm523, %v392, %v496
        %v694 = vrot.slane %v692, 2
        %v697 = vsel %vm519, %v393, %v497
        %v698 = vsel %vm523, %v393, %v497
        %v700 = vrot.slane %v698, 2
        %v703 = vsel %vm519, %v394, %v498
        %v704 = vsel %vm523, %v394, %v498
        %v706 = vrot.slane %v704, 2
        %v709 = vsel %vm519, %v395, %v499
        %v710 = vsel %vm523, %v395, %v499
        %v712 = vrot.slane %v710, 2
        %v715 = vsel %vm519, %v396, %v500
        %v716 = vsel %vm523, %v396, %v500
        %v718 = vrot.slane %v716, 2
        %v721 = vsel %vm519, %v397, %v501
        %v722 = vsel %vm523, %v397, %v501
        %v724 = vrot.slane %v722, 2
        %v727 = vsel %vm519, %v398, %v502
        %v728 = vsel %vm523, %v398, %v502
        %v730 = vrot.slane %v728, 2
        %v733 = vsel %vm519, %v399, %v503
        %v734 = vsel %vm523, %v399, %v503
        %v736 = vrot.slane %v734, 2
        %v739 = vsel %vm519, %v400, %v504
        %v740 = vsel %vm523, %v400, %v504
        %v742 = vrot.slane %v740, 2
        %v745 = vsel %vm519, %v401, %v505
        %v748 = vsel %vm519, %v402, %v506
        %v749 = vsel %vm523, %v402, %v506
        %v751 = vrot.slane %v749, 2
        %v754 = vsel %vm519, %v403, %v507
        %v755 = vsel %vm523, %v403, %v507
        %v757 = vrot.slane %v755, 2
        %v760 = vsel %vm519, %v404, %v508
        %v761 = vsel %vm523, %v404, %v508
        %v763 = vrot.slane %v761, 2
        %v766 = vsel %vm519, %v405, %v509
        %v767 = vsel %vm523, %v405, %v509
        %v769 = vrot.slane %v767, 2
        %v772 = vsel %vm519, %v406, %v510
        %v773 = vsel %vm523, %v406, %v510
        %v775 = vrot.slane %v773, 2
        %v778 = vsel %vm519, %v407, %v511
        %v779 = vsel %vm523, %v407, %v511
        %v781 = vrot.slane %v779, 2
        %v784 = vsel %vm519, %v408, %v512
        %v785 = vsel %vm523, %v408, %v512
        %v787 = vrot.slane %v785, 2
        %v790 = vsel %vm519, %v409, %v513
        %v791 = vsel %vm523, %v409, %v513
        %v793 = vrot.slane %v791, 2
        %v796 = vsel %vm519, %v410, %v514
        %v797 = vsel %vm523, %v410, %v514
        %v799 = vrot.slane %v797, 2
        %v802 = vsel %vm519, %v411, %v515
        %v803 = vsel %vm523, %v411, %v515
        %v805 = vrot.slane %v803, 2
        %v808 = vsel %vm519, %v412, %v516
        %v809 = vsel %vm523, %v412, %v516
        %v811 = vrot.slane %v809, 2
        %v814 = vsel %vm519, %v413, %v517
        %v815 = vsel %vm523, %v413, %v517
        %v817 = vrot.slane %v815, 2
        %v820 = vsel %vm519, %v414, %v518
        %v821 = vld [vmem:[%s3] sm:$0xf]
        %v822 = vld [vmem:[%s3 + $0x4] sm:$0xf]
        %v823 = vld [vmem:[%s3 + $0x8] sm:$0xf]
        %v824 = vld [vmem:[%s3 + $0xc] sm:$0xf]
        %v825 = vld [vmem:[%s3 + $0x10] sm:$0xf]
        %v826 = vld [vmem:[%s3 + $0x14] sm:$0xf]
        %v827 = vld [vmem:[%s3 + $0x18] sm:$0xf]
        %v828 = vld [vmem:[%s3 + $0x1c] sm:$0xf]
        %v829 = vld [vmem:[%s3 + $0x20] sm:$0xf]
        %v830 = vld [vmem:[%s8] sm:$0x1]
        %v831 = vperm.slane %v830, 0
        %832 = vst [vmem:[#allocation1] ss:$4 sm:$0xff] %v522
        %s834 = scalar_lea.vmem [#allocation1], 1
        %835 = vst [vmem:[%s834] ss:$4 sm:$0xff] %v526
        %s836 = scalar_lea.vmem [#allocation1], 2
        %837 = vst [vmem:[%s836] ss:$4 sm:$0xff] %v529
        %s839 = scalar_lea.vmem [#allocation1], 3
        %840 = vst [vmem:[%s839] ss:$4 sm:$0xff] %v532
        %s841 = scalar_lea.vmem [#allocation1], 32
        %842 = vst [vmem:[%s841] ss:$4 sm:$0xff] %v535
        %s844 = scalar_lea.vmem [#allocation1], 33
        %845 = vst [vmem:[%s844] ss:$4 sm:$0xff] %v538
        %s846 = scalar_lea.vmem [#allocation1], 34
        %847 = vst [vmem:[%s846] ss:$4 sm:$0xff] %v541
        %s849 = scalar_lea.vmem [#allocation1], 35
        %850 = vst [vmem:[%s849] ss:$4 sm:$0xff] %v544
        %v851 = vld.sshfl [vmem:[#allocation1] sm:$0xff pattern:$0x73625140]
        %v852 = vld.sshfl [vmem:[#allocation1 + $0x20] sm:$0xff pattern:$0x73625140]
        %853 = vst [vmem:[#allocation1] ss:$4 sm:$0xff] %v547
        %855 = vst [vmem:[%s834] ss:$4 sm:$0xff] %v550
        %856 = vst [vmem:[%s836] ss:$4 sm:$0xff] %v553
        %858 = vst [vmem:[%s839] ss:$4 sm:$0xff] %v556
        %859 = vst [vmem:[%s841] ss:$4 sm:$0xff] %v559
        %861 = vst [vmem:[%s844] ss:$4 sm:$0xff] %v562
        %862 = vst [vmem:[%s846] ss:$4 sm:$0xff] %v565
        %864 = vst [vmem:[%s849] ss:$4 sm:$0xff] %v568
        %v865 = vld.sshfl [vmem:[#allocation1] sm:$0xff pattern:$0x73625140]
        %v866 = vld.sshfl [vmem:[#allocation1 + $0x20] sm:$0xff pattern:$0x73625140]
        %867 = vst [vmem:[#allocation1] ss:$4 sm:$0xff] %v571
        %869 = vst [vmem:[%s834] ss:$4 sm:$0xff] %v574
        %870 = vst [vmem:[%s836] ss:$4 sm:$0xff] %v577
        %872 = vst [vmem:[%s839] ss:$4 sm:$0xff] %v580
        %873 = vst [vmem:[%s841] ss:$4 sm:$0xff] %v583
        %875 = vst [vmem:[%s844] ss:$4 sm:$0xff] %v586
        %876 = vst [vmem:[%s846] ss:$4 sm:$0xff] %v589
        %878 = vst [vmem:[%s849] ss:$4 sm:$0xff] %v592
        %v879 = vld.sshfl [vmem:[#allocation1] sm:$0xff pattern:$0x73625140]
        %v880 = vld.sshfl [vmem:[#allocation1 + $0x20] sm:$0xff pattern:$0x73625140]
        %881 = vst [vmem:[#allocation1] ss:$4 sm:$0xff] %v595
        %882 = vst [vmem:[%s834] ss:$4 sm:$0xff] %v598
        %884 = vst [vmem:[%s836] ss:$4 sm:$0xff] %v601
        %885 = vst [vmem:[%s839] ss:$4 sm:$0xff] %v604
        %887 = vst [vmem:[%s841] ss:$4 sm:$0xff] %v607
        %888 = vst [vmem:[%s844] ss:$4 sm:$0xff] %v610
        %890 = vst [vmem:[%s846] ss:$4 sm:$0xff] %v613
        %891 = vst [vmem:[%s849] ss:$4 sm:$0xff] %v616
        %v892 = vld.sshfl [vmem:[#allocation1] sm:$0xff pattern:$0x73625140]
        %v893 = vld.sshfl [vmem:[#allocation1 + $0x20] sm:$0xff pattern:$0x73625140]
        %895 = vst [vmem:[#allocation1] ss:$4 sm:$0xff] %v619
        %896 = vst [vmem:[%s834] ss:$4 sm:$0xff] %v622
        %898 = vst [vmem:[%s836] ss:$4 sm:$0xff] %v625
        %899 = vst [vmem:[%s839] ss:$4 sm:$0xff] %v628
        %901 = vst [vmem:[%s841] ss:$4 sm:$0xff] %v631
        %902 = vst [vmem:[%s844] ss:$4 sm:$0xff] %v634
        %904 = vst [vmem:[%s846] ss:$4 sm:$0xff] %v637
        %905 = vst [vmem:[%s849] ss:$4 sm:$0xff] %v640
        %v906 = vld.sshfl [vmem:[#allocation1] sm:$0xff pattern:$0x73625140]
        %v907 = vld.sshfl [vmem:[#allocation1 + $0x20] sm:$0xff pattern:$0x73625140]
        %909 = vst [vmem:[#allocation1] ss:$4 sm:$0xff] %v643
        %910 = vst [vmem:[%s834] ss:$4 sm:$0xff] %v646
        %912 = vst [vmem:[%s836] ss:$4 sm:$0xff] %v649
        %913 = vst [vmem:[%s839] ss:$4 sm:$0xff] %v652
        %915 = vst [vmem:[%s841] ss:$4 sm:$0xff] %v655
        %916 = vst [vmem:[%s844] ss:$4 sm:$0xff] %v658
        %918 = vst [vmem:[%s846] ss:$4 sm:$0xff] %v661
        %919 = vst [vmem:[%s849] ss:$4 sm:$0xff] %v664
        %v920 = vld.sshfl [vmem:[#allocation1] sm:$0xff pattern:$0x73625140]
        %v921 = vld.sshfl [vmem:[#allocation1 + $0x20] sm:$0xff pattern:$0x73625140]
        %923 = vst [vmem:[#allocation1] ss:$4 sm:$0xff] %v667
        %924 = vst [vmem:[%s834] ss:$4 sm:$0xff] %v670
        %925 = vst [vmem:[%s836] ss:$4 sm:$0xff] %v673
        %927 = vst [vmem:[%s839] ss:$4 sm:$0xff] %v676
        %928 = vst [vmem:[%s841] ss:$4 sm:$0xff] %v679
        %930 = vst [vmem:[%s844] ss:$4 sm:$0xff] %v682
        %931 = vst [vmem:[%s846] ss:$4 sm:$0xff] %v685
        %933 = vst [vmem:[%s849] ss:$4 sm:$0xff] %v688
        %v934 = vld.sshfl [vmem:[#allocation1] sm:$0xff pattern:$0x73625140]
        %v935 = vld.sshfl [vmem:[#allocation1 + $0x20] sm:$0xff pattern:$0x73625140]
        %936 = vst [vmem:[#allocation1] ss:$4 sm:$0xff] %v691
        %938 = vst [vmem:[%s834] ss:$4 sm:$0xff] %v694
        %939 = vst [vmem:[%s836] ss:$4 sm:$0xff] %v697
        %941 = vst [vmem:[%s839] ss:$4 sm:$0xff] %v700
        %942 = vst [vmem:[%s841] ss:$4 sm:$0xff] %v703
        %944 = vst [vmem:[%s844] ss:$4 sm:$0xff] %v706
        %945 = vst [vmem:[%s846] ss:$4 sm:$0xff] %v709
        %947 = vst [vmem:[%s849] ss:$4 sm:$0xff] %v712
        %v948 = vld.sshfl [vmem:[#allocation1] sm:$0xff pattern:$0x73625140]
        %v949 = vld.sshfl [vmem:[#allocation1 + $0x20] sm:$0xff pattern:$0x73625140]
        %950 = vst [vmem:[#allocation1] ss:$4 sm:$0xff] %v715
        %952 = vst [vmem:[%s834] ss:$4 sm:$0xff] %v718
        %953 = vst [vmem:[%s836] ss:$4 sm:$0xff] %v721
        %955 = vst [vmem:[%s839] ss:$4 sm:$0xff] %v724
        %956 = vst [vmem:[%s841] ss:$4 sm:$0xff] %v727
        %958 = vst [vmem:[%s844] ss:$4 sm:$0xff] %v730
        %959 = vst [vmem:[%s846] ss:$4 sm:$0xff] %v733
        %961 = vst [vmem:[%s849] ss:$4 sm:$0xff] %v736
        %v962 = vld.sshfl [vmem:[#allocation1] sm:$0xff pattern:$0x73625140]
        %v963 = vld.sshfl [vmem:[#allocation1 + $0x20] sm:$0xff pattern:$0x73625140]
        %964 = vst [vmem:[#allocation1] ss:$4 sm:$0xff] %v739
        %966 = vst [vmem:[%s834] ss:$4 sm:$0xff] %v742
        %967 = vst [vmem:[%s836] ss:$4 sm:$0xff] %v745
        %968 = vst [vmem:[%s839] ss:$4 sm:$0xff] %v748
        %970 = vst [vmem:[%s841] ss:$4 sm:$0xff] %v751
        %971 = vst [vmem:[%s844] ss:$4 sm:$0xff] %v754
        %973 = vst [vmem:[%s846] ss:$4 sm:$0xff] %v757
        %974 = vst [vmem:[%s849] ss:$4 sm:$0xff] %v760
        %v975 = vld.sshfl [vmem:[#allocation1] sm:$0xff pattern:$0x73625140]
        %v976 = vld.sshfl [vmem:[#allocation1 + $0x20] sm:$0xff pattern:$0x73625140]
        %978 = vst [vmem:[#allocation1] ss:$4 sm:$0xff] %v763
        %979 = vst [vmem:[%s834] ss:$4 sm:$0xff] %v766
        %981 = vst [vmem:[%s836] ss:$4 sm:$0xff] %v769
        %982 = vst [vmem:[%s839] ss:$4 sm:$0xff] %v772
        %984 = vst [vmem:[%s841] ss:$4 sm:$0xff] %v775
        %985 = vst [vmem:[%s844] ss:$4 sm:$0xff] %v778
        %987 = vst [vmem:[%s846] ss:$4 sm:$0xff] %v781
        %988 = vst [vmem:[%s849] ss:$4 sm:$0xff] %v784
        %v989 = vld.sshfl [vmem:[#allocation1] sm:$0xff pattern:$0x73625140]
        %v990 = vld.sshfl [vmem:[#allocation1 + $0x20] sm:$0xff pattern:$0x73625140]
        %992 = vst [vmem:[#allocation1] ss:$4 sm:$0xff] %v787
        %993 = vst [vmem:[%s834] ss:$4 sm:$0xff] %v790
        %995 = vst [vmem:[%s836] ss:$4 sm:$0xff] %v793
        %996 = vst [vmem:[%s839] ss:$4 sm:$0xff] %v796
        %998 = vst [vmem:[%s841] ss:$4 sm:$0xff] %v799
        %999 = vst [vmem:[%s844] ss:$4 sm:$0xff] %v802
        %1001 = vst [vmem:[%s846] ss:$4 sm:$0xff] %v805
        %1002 = vst [vmem:[%s849] ss:$4 sm:$0xff] %v808
        %v1003 = vld.sshfl [vmem:[#allocation1] sm:$0xff pattern:$0x73625140]
        %v1004 = vld.sshfl [vmem:[#allocation1 + $0x20] sm:$0xff pattern:$0x73625140]
        %1006 = vst [vmem:[#allocation1] ss:$4 sm:$0xff] %v811
        %1007 = vst [vmem:[%s834] ss:$4 sm:$0xff] %v814
        %1009 = vst [vmem:[%s836] ss:$4 sm:$0xff] %v817
        %1010 = vst [vmem:[%s839] ss:$4 sm:$0xff] %v820
        %v1011 = vld.sshfl [vmem:[#allocation1] sm:$0xff pattern:$0x73625140]
        %v1021 = vunpack.c.l.b16 %v821
        %v1022 = vunpack.c.l.b16 %v822
        %v1023 = vunpack.c.l.b16 %v823
        %v1024 = vunpack.c.l.b16 %v824
        %v1025 = vunpack.c.l.b16 %v825
        %v1026 = vunpack.c.l.b16 %v826
        %v1027 = vunpack.c.l.b16 %v827
        %v1028 = vunpack.c.l.b16 %v828
        %v1029 = vunpack.c.l.b16 %v829
        %v1030 = vpack.c.b16 %v1022, %v1021
        %v1031 = vpack.c.b16 %v1024, %v1023
        %v1032 = vpack.c.b16 %v1026, %v1025
        %v1033 = vpack.c.b16 %v1028, %v1027
        %v1034 = vpack.c.b16 %v1029, %v1029
        %vm1039 = vcmask 588800
        %v1040 = vsel %vm1039, %v851, 0
        %v1042 = vsel %vm1039, %v852, 0
        %v1044 = vsel %vm1039, %v865, 0
        %v1046 = vsel %vm1039, %v866, 0
        %v1048 = vsel %vm1039, %v879, 0
        %v1050 = vsel %vm1039, %v880, 0
        %v1052 = vsel %vm1039, %v892, 0
        %v1054 = vsel %vm1039, %v893, 0
        %v1056 = vsel %vm1039, %v906, 0
        %v1058 = vsel %vm1039, %v907, 0
        %v1060 = vsel %vm1039, %v920, 0
        %v1062 = vsel %vm1039, %v921, 0
        %v1064 = vsel %vm1039, %v934, 0
        %v1066 = vsel %vm1039, %v935, 0
        %v1068 = vsel %vm1039, %v948, 0
        %v1070 = vsel %vm1039, %v949, 0
        %v1072 = vsel %vm1039, %v962, 0
        %v1074 = vsel %vm1039, %v963, 0
        %v1076 = vsel %vm1039, %v975, 0
        %v1078 = vsel %vm1039, %v976, 0
        %v1080 = vsel %vm1039, %v989, 0
        %v1082 = vsel %vm1039, %v990, 0
        %v1084 = vsel %vm1039, %v1003, 0
        %v1086 = vsel %vm1039, %v1004, 0
        %v1088 = vsel %vm1039, %v1011, 0
        %vm1090 = vcmask 1043456
        %v1092 = vsel %vm1090, %v1034, 0
        %1094 = vmatpush.bf16.msra.mxu0 0
        %1095 = vmatpush.bf16.msra.mxu0 0
        %1096 = vmatpush.bf16.msra.mxu0 0
        %1097 = vmatpush.bf16.msra.mxu0 %v1092
        %1098 = vmatpush.bf16.msra.mxu0 %v1033
        %1099 = vmatpush.bf16.msra.mxu0 %v1032
        %1100 = vmatpush.bf16.msra.mxu0 %v1031
        %1101 = vmatpush.bf16.msra.mxu0 %v1030
        %1102 = vmatmul.bf16.gmra.mxu0 %v1040
        %v1103 = vpop.f32.mrf.mxu0
        %v1104 = vadd.f32 %v831, %v1103
        %v1105 = vpop.f32.mrf.mxu0
        %v1106 = vadd.f32 %v831, %v1105
        %1107 = vmatmul.bf16.gmra.mxu0 %v1042
        %v1108 = vpop.f32.mrf.mxu0
        %v1109 = vadd.f32 %v831, %v1108
        %v1110 = vpop.f32.mrf.mxu0
        %v1111 = vadd.f32 %v831, %v1110
        %1112 = vmatmul.bf16.gmra.mxu0 %v1044
        %v1113 = vpop.f32.mrf.mxu0
        %v1114 = vadd.f32 %v831, %v1113
        %v1115 = vpop.f32.mrf.mxu0
        %v1116 = vadd.f32 %v831, %v1115
        %1117 = vmatmul.bf16.gmra.mxu0 %v1046
        %v1118 = vpop.f32.mrf.mxu0
        %v1119 = vadd.f32 %v831, %v1118
        %v1120 = vpop.f32.mrf.mxu0
        %v1121 = vadd.f32 %v831, %v1120
        %1122 = vmatmul.bf16.gmra.mxu0 %v1048
        %v1123 = vpop.f32.mrf.mxu0
        %v1124 = vadd.f32 %v831, %v1123
        %v1125 = vpop.f32.mrf.mxu0
        %v1126 = vadd.f32 %v831, %v1125
        %1127 = vmatmul.bf16.gmra.mxu0 %v1050
        %v1128 = vpop.f32.mrf.mxu0
        %v1129 = vadd.f32 %v831, %v1128
        %v1130 = vpop.f32.mrf.mxu0
        %v1131 = vadd.f32 %v831, %v1130
        %1132 = vmatmul.bf16.gmra.mxu0 %v1052
        %v1133 = vpop.f32.mrf.mxu0
        %v1134 = vadd.f32 %v831, %v1133
        %v1135 = vpop.f32.mrf.mxu0
        %v1136 = vadd.f32 %v831, %v1135
        %1137 = vmatmul.bf16.gmra.mxu0 %v1054
        %v1138 = vpop.f32.mrf.mxu0
        %v1139 = vadd.f32 %v831, %v1138
        %v1140 = vpop.f32.mrf.mxu0
        %v1141 = vadd.f32 %v831, %v1140
        %1142 = vmatmul.bf16.gmra.mxu0 %v1056
        %v1143 = vpop.f32.mrf.mxu0
        %v1144 = vadd.f32 %v831, %v1143
        %v1145 = vpop.f32.mrf.mxu0
        %v1146 = vadd.f32 %v831, %v1145
        %1147 = vmatmul.bf16.gmra.mxu0 %v1058
        %v1148 = vpop.f32.mrf.mxu0
        %v1149 = vadd.f32 %v831, %v1148
        %v1150 = vpop.f32.mrf.mxu0
        %v1151 = vadd.f32 %v831, %v1150
        %1152 = vmatmul.bf16.gmra.mxu0 %v1060
        %v1153 = vpop.f32.mrf.mxu0
        %v1154 = vadd.f32 %v831, %v1153
        %v1155 = vpop.f32.mrf.mxu0
        %v1156 = vadd.f32 %v831, %v1155
        %1157 = vmatmul.bf16.gmra.mxu0 %v1062
        %v1158 = vpop.f32.mrf.mxu0
        %v1159 = vadd.f32 %v831, %v1158
        %v1160 = vpop.f32.mrf.mxu0
        %v1161 = vadd.f32 %v831, %v1160
        %1162 = vmatmul.bf16.gmra.mxu0 %v1064
        %v1163 = vpop.f32.mrf.mxu0
        %v1164 = vadd.f32 %v831, %v1163
        %v1165 = vpop.f32.mrf.mxu0
        %v1166 = vadd.f32 %v831, %v1165
        %1167 = vmatmul.bf16.gmra.mxu0 %v1066
        %v1168 = vpop.f32.mrf.mxu0
        %v1169 = vadd.f32 %v831, %v1168
        %v1170 = vpop.f32.mrf.mxu0
        %v1171 = vadd.f32 %v831, %v1170
        %1172 = vmatmul.bf16.gmra.mxu0 %v1068
        %v1173 = vpop.f32.mrf.mxu0
        %v1174 = vadd.f32 %v831, %v1173
        %v1175 = vpop.f32.mrf.mxu0
        %v1176 = vadd.f32 %v831, %v1175
        %1177 = vmatmul.bf16.gmra.mxu0 %v1070
        %v1178 = vpop.f32.mrf.mxu0
        %v1179 = vadd.f32 %v831, %v1178
        %v1180 = vpop.f32.mrf.mxu0
        %v1181 = vadd.f32 %v831, %v1180
        %1182 = vmatmul.bf16.gmra.mxu0 %v1072
        %v1183 = vpop.f32.mrf.mxu0
        %v1184 = vadd.f32 %v831, %v1183
        %v1185 = vpop.f32.mrf.mxu0
        %v1186 = vadd.f32 %v831, %v1185
        %1187 = vmatmul.bf16.gmra.mxu0 %v1074
        %v1188 = vpop.f32.mrf.mxu0
        %v1189 = vadd.f32 %v831, %v1188
        %v1190 = vpop.f32.mrf.mxu0
        %v1191 = vadd.f32 %v831, %v1190
        %1192 = vmatmul.bf16.gmra.mxu0 %v1076
        %v1193 = vpop.f32.mrf.mxu0
        %v1194 = vadd.f32 %v831, %v1193
        %v1195 = vpop.f32.mrf.mxu0
        %v1196 = vadd.f32 %v831, %v1195
        %1197 = vmatmul.bf16.gmra.mxu0 %v1078
        %v1198 = vpop.f32.mrf.mxu0
        %v1199 = vadd.f32 %v831, %v1198
        %v1200 = vpop.f32.mrf.mxu0
        %v1201 = vadd.f32 %v831, %v1200
        %1202 = vmatmul.bf16.gmra.mxu0 %v1080
        %v1203 = vpop.f32.mrf.mxu0
        %v1204 = vadd.f32 %v831, %v1203
        %v1205 = vpop.f32.mrf.mxu0
        %v1206 = vadd.f32 %v831, %v1205
        %1207 = vmatmul.bf16.gmra.mxu0 %v1082
        %v1208 = vpop.f32.mrf.mxu0
        %v1209 = vadd.f32 %v831, %v1208
        %v1210 = vpop.f32.mrf.mxu0
        %v1211 = vadd.f32 %v831, %v1210
        %1212 = vmatmul.bf16.gmra.mxu0 %v1084
        %v1213 = vpop.f32.mrf.mxu0
        %v1214 = vadd.f32 %v831, %v1213
        %v1215 = vpop.f32.mrf.mxu0
        %v1216 = vadd.f32 %v831, %v1215
        %1217 = vmatmul.bf16.gmra.mxu0 %v1086
        %v1218 = vpop.f32.mrf.mxu0
        %v1219 = vadd.f32 %v831, %v1218
        %v1220 = vpop.f32.mrf.mxu0
        %v1221 = vadd.f32 %v831, %v1220
        %1222 = vmatmul.bf16.gmra.mxu0 %v1088
        %v1223 = vpop.f32.mrf.mxu0
        %v1224 = vadd.f32 %v831, %v1223
        %v1225 = vpop.f32.mrf.mxu0
        %v1226 = vadd.f32 %v831, %v1225
        %1227 = vdwg.mxu0
        %v1228 = vmax.f32 %v1104, 0.0
        %v1229 = vmax.f32 %v1106, 0.0
        %v1230 = vmax.f32 %v1109, 0.0
        %v1231 = vmax.f32 %v1111, 0.0
        %v1232 = vmax.f32 %v1114, 0.0
        %v1233 = vmax.f32 %v1116, 0.0
        %v1234 = vmax.f32 %v1119, 0.0
        %v1235 = vmax.f32 %v1121, 0.0
        %v1236 = vmax.f32 %v1124, 0.0
        %v1237 = vmax.f32 %v1126, 0.0
        %v1238 = vmax.f32 %v1129, 0.0
        %v1239 = vmax.f32 %v1131, 0.0
        %v1240 = vmax.f32 %v1134, 0.0
        %v1241 = vmax.f32 %v1136, 0.0
        %v1242 = vmax.f32 %v1139, 0.0
        %v1243 = vmax.f32 %v1141, 0.0
        %v1244 = vmax.f32 %v1144, 0.0
        %v1245 = vmax.f32 %v1146, 0.0
        %v1246 = vmax.f32 %v1149, 0.0
        %v1247 = vmax.f32 %v1151, 0.0
        %v1248 = vmax.f32 %v1154, 0.0
        %v1249 = vmax.f32 %v1156, 0.0
        %v1250 = vmax.f32 %v1159, 0.0
        %v1251 = vmax.f32 %v1161, 0.0
        %v1252 = vmax.f32 %v1164, 0.0
        %v1253 = vmax.f32 %v1166, 0.0
        %v1254 = vmax.f32 %v1169, 0.0
        %v1255 = vmax.f32 %v1171, 0.0
        %v1256 = vmax.f32 %v1174, 0.0
        %v1257 = vmax.f32 %v1176, 0.0
        %v1258 = vmax.f32 %v1179, 0.0
        %v1259 = vmax.f32 %v1181, 0.0
        %v1260 = vmax.f32 %v1184, 0.0
        %v1261 = vmax.f32 %v1186, 0.0
        %v1262 = vmax.f32 %v1189, 0.0
        %v1263 = vmax.f32 %v1191, 0.0
        %v1264 = vmax.f32 %v1194, 0.0
        %v1265 = vmax.f32 %v1196, 0.0
        %v1266 = vmax.f32 %v1199, 0.0
        %v1267 = vmax.f32 %v1201, 0.0
        %v1268 = vmax.f32 %v1204, 0.0
        %v1269 = vmax.f32 %v1206, 0.0
        %v1270 = vmax.f32 %v1209, 0.0
        %v1271 = vmax.f32 %v1211, 0.0
        %v1272 = vmax.f32 %v1214, 0.0
        %v1273 = vmax.f32 %v1216, 0.0
        %v1274 = vmax.f32 %v1219, 0.0
        %v1275 = vmax.f32 %v1221, 0.0
        %v1276 = vmax.f32 %v1224, 0.0
        %v1277 = vmax.f32 %v1226, 0.0
        %v1328 = vrot.slane %v1228, 2
        %v1329 = vrot.slane %v1228, 4
        %v1330 = vrot.slane %v1228, 6
        %v1331 = vrot.slane %v1229, 2
        %v1332 = vrot.slane %v1229, 4
        %v1333 = vrot.slane %v1229, 6
        %v1334 = vrot.slane %v1230, 2
        %v1335 = vrot.slane %v1230, 4
        %v1336 = vrot.slane %v1230, 6
        %v1337 = vrot.slane %v1231, 2
        %v1338 = vrot.slane %v1231, 4
        %v1339 = vrot.slane %v1231, 6
        %v1340 = vrot.slane %v1232, 2
        %v1341 = vrot.slane %v1232, 4
        %v1342 = vrot.slane %v1232, 6
        %v1343 = vrot.slane %v1233, 2
        %v1344 = vrot.slane %v1233, 4
        %v1345 = vrot.slane %v1233, 6
        %v1346 = vrot.slane %v1234, 2
        %v1347 = vrot.slane %v1234, 4
        %v1348 = vrot.slane %v1234, 6
        %v1349 = vrot.slane %v1235, 2
        %v1350 = vrot.slane %v1235, 4
        %v1351 = vrot.slane %v1235, 6
        %v1352 = vrot.slane %v1236, 2
        %v1353 = vrot.slane %v1236, 4
        %v1354 = vrot.slane %v1236, 6
        %v1355 = vrot.slane %v1237, 2
        %v1356 = vrot.slane %v1237, 4
        %v1357 = vrot.slane %v1237, 6
        %v1358 = vrot.slane %v1238, 2
        %v1359 = vrot.slane %v1238, 4
        %v1360 = vrot.slane %v1238, 6
        %v1361 = vrot.slane %v1239, 2
        %v1362 = vrot.slane %v1239, 4
        %v1363 = vrot.slane %v1239, 6
        %v1364 = vrot.slane %v1240, 2
        %v1365 = vrot.slane %v1240, 4
        %v1366 = vrot.slane %v1240, 6
        %v1367 = vrot.slane %v1241, 2
        %v1368 = vrot.slane %v1241, 4
        %v1369 = vrot.slane %v1241, 6
        %v1370 = vrot.slane %v1242, 2
        %v1371 = vrot.slane %v1242, 4
        %v1372 = vrot.slane %v1242, 6
        %v1373 = vrot.slane %v1243, 2
        %v1374 = vrot.slane %v1243, 4
        %v1375 = vrot.slane %v1243, 6
        %v1376 = vrot.slane %v1244, 2
        %v1377 = vrot.slane %v1244, 4
        %v1378 = vrot.slane %v1244, 6
        %v1379 = vrot.slane %v1245, 2
        %v1380 = vrot.slane %v1245, 4
        %v1381 = vrot.slane %v1245, 6
        %v1382 = vrot.slane %v1246, 2
        %v1383 = vrot.slane %v1246, 4
        %v1384 = vrot.slane %v1246, 6
        %v1385 = vrot.slane %v1247, 2
        %v1386 = vrot.slane %v1247, 4
        %v1387 = vrot.slane %v1247, 6
        %v1388 = vrot.slane %v1248, 2
        %v1389 = vrot.slane %v1248, 4
        %v1390 = vrot.slane %v1248, 6
        %v1391 = vrot.slane %v1249, 2
        %v1392 = vrot.slane %v1249, 4
        %v1393 = vrot.slane %v1249, 6
        %v1394 = vrot.slane %v1250, 2
        %v1395 = vrot.slane %v1250, 4
        %v1396 = vrot.slane %v1250, 6
        %v1397 = vrot.slane %v1251, 2
        %v1398 = vrot.slane %v1251, 4
        %v1399 = vrot.slane %v1251, 6
        %v1400 = vrot.slane %v1252, 2
        %v1401 = vrot.slane %v1252, 4
        %v1402 = vrot.slane %v1252, 6
        %v1403 = vrot.slane %v1253, 2
        %v1404 = vrot.slane %v1253, 4
        %v1405 = vrot.slane %v1253, 6
        %v1406 = vrot.slane %v1254, 2
        %v1407 = vrot.slane %v1254, 4
        %v1408 = vrot.slane %v1254, 6
        %v1409 = vrot.slane %v1255, 2
        %v1410 = vrot.slane %v1255, 4
        %v1411 = vrot.slane %v1255, 6
        %v1412 = vrot.slane %v1256, 2
        %v1413 = vrot.slane %v1256, 4
        %v1414 = vrot.slane %v1256, 6
        %v1415 = vrot.slane %v1257, 2
        %v1416 = vrot.slane %v1257, 4
        %v1417 = vrot.slane %v1257, 6
        %v1418 = vrot.slane %v1258, 2
        %v1419 = vrot.slane %v1258, 4
        %v1420 = vrot.slane %v1258, 6
        %v1421 = vrot.slane %v1259, 2
        %v1422 = vrot.slane %v1259, 4
        %v1423 = vrot.slane %v1259, 6
        %v1424 = vrot.slane %v1260, 2
        %v1425 = vrot.slane %v1260, 4
        %v1426 = vrot.slane %v1260, 6
        %v1427 = vrot.slane %v1261, 2
        %v1428 = vrot.slane %v1261, 4
        %v1429 = vrot.slane %v1261, 6
        %v1430 = vrot.slane %v1262, 2
        %v1431 = vrot.slane %v1262, 4
        %v1432 = vrot.slane %v1262, 6
        %v1433 = vrot.slane %v1263, 2
        %v1434 = vrot.slane %v1263, 4
        %v1435 = vrot.slane %v1263, 6
        %v1436 = vrot.slane %v1264, 2
        %v1437 = vrot.slane %v1264, 4
        %v1438 = vrot.slane %v1264, 6
        %v1439 = vrot.slane %v1265, 2
        %v1440 = vrot.slane %v1265, 4
        %v1441 = vrot.slane %v1265, 6
        %v1442 = vrot.slane %v1266, 2
        %v1443 = vrot.slane %v1266, 4
        %v1444 = vrot.slane %v1266, 6
        %v1445 = vrot.slane %v1267, 2
        %v1446 = vrot.slane %v1267, 4
        %v1447 = vrot.slane %v1267, 6
        %v1448 = vrot.slane %v1268, 2
        %v1449 = vrot.slane %v1268, 4
        %v1450 = vrot.slane %v1268, 6
        %v1451 = vrot.slane %v1269, 2
        %v1452 = vrot.slane %v1269, 4
        %v1453 = vrot.slane %v1269, 6
        %v1454 = vrot.slane %v1270, 2
        %v1455 = vrot.slane %v1270, 4
        %v1456 = vrot.slane %v1270, 6
        %v1457 = vrot.slane %v1271, 2
        %v1458 = vrot.slane %v1271, 4
        %v1459 = vrot.slane %v1271, 6
        %v1460 = vrot.slane %v1272, 2
        %v1461 = vrot.slane %v1272, 4
        %v1462 = vrot.slane %v1272, 6
        %v1463 = vrot.slane %v1273, 2
        %v1464 = vrot.slane %v1273, 4
        %v1465 = vrot.slane %v1273, 6
        %v1466 = vrot.slane %v1274, 2
        %v1467 = vrot.slane %v1274, 4
        %v1468 = vrot.slane %v1274, 6
        %v1469 = vrot.slane %v1275, 2
        %v1470 = vrot.slane %v1275, 4
        %v1471 = vrot.slane %v1275, 6
        %v1472 = vrot.slane %v1276, 2
        %v1473 = vrot.slane %v1276, 4
        %v1474 = vrot.slane %v1276, 6
        %v1475 = vrot.slane %v1277, 2
        %v1476 = vrot.slane %v1277, 4
        %v1477 = vrot.slane %v1277, 6
        %v1628 = vld [vmem:[%s2] sm:$0xff]
        %v1629 = vld [vmem:[%s2 + $0x8] sm:$0x3]
        %v1630 = vld [vmem:[%s2 + $0x10] sm:$0xff]
        %v1631 = vld [vmem:[%s2 + $0x18] sm:$0x3]
        %v1632 = vld [vmem:[%s2 + $0x20] sm:$0xff]
        %v1633 = vld [vmem:[%s2 + $0x28] sm:$0x3]
        %v1634 = vld [vmem:[%s2 + $0x30] sm:$0xff]
        %v1635 = vld [vmem:[%s2 + $0x38] sm:$0x3]
        %v1636 = vld [vmem:[%s2 + $0x40] sm:$0xff]
        %v1637 = vld [vmem:[%s2 + $0x48] sm:$0x3]
        %v1638 = vld [vmem:[%s2 + $0x50] sm:$0xff]
        %v1639 = vld [vmem:[%s2 + $0x58] sm:$0x3]
        %v1640 = vld [vmem:[%s2 + $0x60] sm:$0xff]
        %v1641 = vld [vmem:[%s2 + $0x68] sm:$0x3]
        %v1642 = vld [vmem:[%s2 + $0x70] sm:$0xff]
        %v1643 = vld [vmem:[%s2 + $0x78] sm:$0x3]
        %v1644 = vld [vmem:[%s2 + $0x80] sm:$0xff]
        %v1645 = vld [vmem:[%s2 + $0x88] sm:$0x3]
        %v1646 = vld [vmem:[%s2 + $0x90] sm:$0xff]
        %v1647 = vld [vmem:[%s2 + $0x98] sm:$0x3]
        %1649 = vset.pattern.permute.xlu0 0
        %1650 = vperm.xlu0 %1649, %v1628
        %v1651 = vpop.permute.xlu0 %1650
        %1653 = vset.pattern.permute.xlu0 0
        %1654 = vperm.xlu0 %1653, %v1629
        %v1655 = vpop.permute.xlu0 %1654
        %1657 = vset.pattern.permute.xlu0 0
        %1658 = vperm.xlu0 %1657, %v1630
        %v1659 = vpop.permute.xlu0 %1658
        %1661 = vset.pattern.permute.xlu0 0
        %1662 = vperm.xlu0 %1661, %v1631
        %v1663 = vpop.permute.xlu0 %1662
        %1665 = vset.pattern.permute.xlu0 0
        %1666 = vperm.xlu0 %1665, %v1632
        %v1667 = vpop.permute.xlu0 %1666
        %1669 = vset.pattern.permute.xlu0 0
        %1670 = vperm.xlu0 %1669, %v1633
        %v1671 = vpop.permute.xlu0 %1670
        %1673 = vset.pattern.permute.xlu0 0
        %1674 = vperm.xlu0 %1673, %v1634
        %v1675 = vpop.permute.xlu0 %1674
        %1677 = vset.pattern.permute.xlu0 0
        %1678 = vperm.xlu0 %1677, %v1635
        %v1679 = vpop.permute.xlu0 %1678
        %1681 = vset.pattern.permute.xlu0 0
        %1682 = vperm.xlu0 %1681, %v1636
        %v1683 = vpop.permute.xlu0 %1682
        %1685 = vset.pattern.permute.xlu0 0
        %1686 = vperm.xlu0 %1685, %v1637
        %v1687 = vpop.permute.xlu0 %1686
        %1689 = vset.pattern.permute.xlu0 0
        %1690 = vperm.xlu0 %1689, %v1638
        %v1691 = vpop.permute.xlu0 %1690
        %1693 = vset.pattern.permute.xlu0 0
        %1694 = vperm.xlu0 %1693, %v1639
        %v1695 = vpop.permute.xlu0 %1694
        %1697 = vset.pattern.permute.xlu0 0
        %1698 = vperm.xlu0 %1697, %v1640
        %v1699 = vpop.permute.xlu0 %1698
        %1701 = vset.pattern.permute.xlu0 0
        %1702 = vperm.xlu0 %1701, %v1641
        %v1703 = vpop.permute.xlu0 %1702
        %1705 = vset.pattern.permute.xlu0 0
        %1706 = vperm.xlu0 %1705, %v1642
        %v1707 = vpop.permute.xlu0 %1706
        %1709 = vset.pattern.permute.xlu0 0
        %1710 = vperm.xlu0 %1709, %v1643
        %v1711 = vpop.permute.xlu0 %1710
        %1713 = vset.pattern.permute.xlu0 0
        %1714 = vperm.xlu0 %1713, %v1644
        %v1715 = vpop.permute.xlu0 %1714
        %1717 = vset.pattern.permute.xlu0 0
        %1718 = vperm.xlu0 %1717, %v1645
        %v1719 = vpop.permute.xlu0 %1718
        %1721 = vset.pattern.permute.xlu0 0
        %1722 = vperm.xlu0 %1721, %v1646
        %v1723 = vpop.permute.xlu0 %1722
        %1725 = vset.pattern.permute.xlu0 0
        %1726 = vperm.xlu0 %1725, %v1647
        %v1727 = vpop.permute.xlu0 %1726
        %v1729 = vunpack.c.l.s4 269488144
        %v1730 = vunpack.c.0.s8 %v1729
        %v1731 = vperm.slane %v1651, %v1730
        %v1733 = vunpack.c.l.s4 842150450
        %v1734 = vunpack.c.0.s8 %v1733
        %v1735 = vperm.slane %v1651, %v1734
        %v1737 = vunpack.c.l.s4 1414812756
        %v1738 = vunpack.c.0.s8 %v1737
        %v1739 = vperm.slane %v1651, %v1738
        %v1741 = vunpack.c.l.s4 1987475062
        %v1742 = vunpack.c.0.s8 %v1741
        %v1743 = vperm.slane %v1651, %v1742
        %v1745 = vunpack.c.l.s4 269488144
        %v1746 = vunpack.c.0.s8 %v1745
        %v1747 = vperm.slane %v1655, %v1746
        %v1749 = vunpack.c.l.s4 269488144
        %v1750 = vunpack.c.0.s8 %v1749
        %v1751 = vperm.slane %v1659, %v1750
        %v1753 = vunpack.c.l.s4 842150450
        %v1754 = vunpack.c.0.s8 %v1753
        %v1755 = vperm.slane %v1659, %v1754
        %v1757 = vunpack.c.l.s4 1414812756
        %v1758 = vunpack.c.0.s8 %v1757
        %v1759 = vperm.slane %v1659, %v1758
        %v1761 = vunpack.c.l.s4 1987475062
        %v1762 = vunpack.c.0.s8 %v1761
        %v1763 = vperm.slane %v1659, %v1762
        %v1765 = vunpack.c.l.s4 269488144
        %v1766 = vunpack.c.0.s8 %v1765
        %v1767 = vperm.slane %v1663, %v1766
        %v1769 = vunpack.c.l.s4 269488144
        %v1770 = vunpack.c.0.s8 %v1769
        %v1771 = vperm.slane %v1667, %v1770
        %v1773 = vunpack.c.l.s4 842150450
        %v1774 = vunpack.c.0.s8 %v1773
        %v1775 = vperm.slane %v1667, %v1774
        %v1777 = vunpack.c.l.s4 1414812756
        %v1778 = vunpack.c.0.s8 %v1777
        %v1779 = vperm.slane %v1667, %v1778
        %v1781 = vunpack.c.l.s4 1987475062
        %v1782 = vunpack.c.0.s8 %v1781
        %v1783 = vperm.slane %v1667, %v1782
        %v1785 = vunpack.c.l.s4 269488144
        %v1786 = vunpack.c.0.s8 %v1785
        %v1787 = vperm.slane %v1671, %v1786
        %v1789 = vunpack.c.l.s4 269488144
        %v1790 = vunpack.c.0.s8 %v1789
        %v1791 = vperm.slane %v1675, %v1790
        %v1793 = vunpack.c.l.s4 842150450
        %v1794 = vunpack.c.0.s8 %v1793
        %v1795 = vperm.slane %v1675, %v1794
        %v1797 = vunpack.c.l.s4 1414812756
        %v1798 = vunpack.c.0.s8 %v1797
        %v1799 = vperm.slane %v1675, %v1798
        %v1801 = vunpack.c.l.s4 1987475062
        %v1802 = vunpack.c.0.s8 %v1801
        %v1803 = vperm.slane %v1675, %v1802
        %v1805 = vunpack.c.l.s4 269488144
        %v1806 = vunpack.c.0.s8 %v1805
        %v1807 = vperm.slane %v1679, %v1806
        %v1809 = vunpack.c.l.s4 269488144
        %v1810 = vunpack.c.0.s8 %v1809
        %v1811 = vperm.slane %v1683, %v1810
        %v1813 = vunpack.c.l.s4 842150450
        %v1814 = vunpack.c.0.s8 %v1813
        %v1815 = vperm.slane %v1683, %v1814
        %v1817 = vunpack.c.l.s4 1414812756
        %v1818 = vunpack.c.0.s8 %v1817
        %v1819 = vperm.slane %v1683, %v1818
        %v1821 = vunpack.c.l.s4 1987475062
        %v1822 = vunpack.c.0.s8 %v1821
        %v1823 = vperm.slane %v1683, %v1822
        %v1825 = vunpack.c.l.s4 269488144
        %v1826 = vunpack.c.0.s8 %v1825
        %v1827 = vperm.slane %v1687, %v1826
        %v1829 = vunpack.c.l.s4 269488144
        %v1830 = vunpack.c.0.s8 %v1829
        %v1831 = vperm.slane %v1691, %v1830
        %v1833 = vunpack.c.l.s4 842150450
        %v1834 = vunpack.c.0.s8 %v1833
        %v1835 = vperm.slane %v1691, %v1834
        %v1837 = vunpack.c.l.s4 1414812756
        %v1838 = vunpack.c.0.s8 %v1837
        %v1839 = vperm.slane %v1691, %v1838
        %v1841 = vunpack.c.l.s4 1987475062
        %v1842 = vunpack.c.0.s8 %v1841
        %v1843 = vperm.slane %v1691, %v1842
        %v1845 = vunpack.c.l.s4 269488144
        %v1846 = vunpack.c.0.s8 %v1845
        %v1847 = vperm.slane %v1695, %v1846
        %v1849 = vunpack.c.l.s4 269488144
        %v1850 = vunpack.c.0.s8 %v1849
        %v1851 = vperm.slane %v1699, %v1850
        %v1853 = vunpack.c.l.s4 842150450
        %v1854 = vunpack.c.0.s8 %v1853
        %v1855 = vperm.slane %v1699, %v1854
        %v1857 = vunpack.c.l.s4 1414812756
        %v1858 = vunpack.c.0.s8 %v1857
        %v1859 = vperm.slane %v1699, %v1858
        %v1861 = vunpack.c.l.s4 1987475062
        %v1862 = vunpack.c.0.s8 %v1861
        %v1863 = vperm.slane %v1699, %v1862
        %v1865 = vunpack.c.l.s4 269488144
        %v1866 = vunpack.c.0.s8 %v1865
        %v1867 = vperm.slane %v1703, %v1866
        %v1869 = vunpack.c.l.s4 269488144
        %v1870 = vunpack.c.0.s8 %v1869
        %v1871 = vperm.slane %v1707, %v1870
        %v1873 = vunpack.c.l.s4 842150450
        %v1874 = vunpack.c.0.s8 %v1873
        %v1875 = vperm.slane %v1707, %v1874
        %v1877 = vunpack.c.l.s4 1414812756
        %v1878 = vunpack.c.0.s8 %v1877
        %v1879 = vperm.slane %v1707, %v1878
        %v1881 = vunpack.c.l.s4 1987475062
        %v1882 = vunpack.c.0.s8 %v1881
        %v1883 = vperm.slane %v1707, %v1882
        %v1885 = vunpack.c.l.s4 269488144
        %v1886 = vunpack.c.0.s8 %v1885
        %v1887 = vperm.slane %v1711, %v1886
        %v1889 = vunpack.c.l.s4 269488144
        %v1890 = vunpack.c.0.s8 %v1889
        %v1891 = vperm.slane %v1715, %v1890
        %v1893 = vunpack.c.l.s4 842150450
        %v1894 = vunpack.c.0.s8 %v1893
        %v1895 = vperm.slane %v1715, %v1894
        %v1897 = vunpack.c.l.s4 1414812756
        %v1898 = vunpack.c.0.s8 %v1897
        %v1899 = vperm.slane %v1715, %v1898
        %v1901 = vunpack.c.l.s4 1987475062
        %v1902 = vunpack.c.0.s8 %v1901
        %v1903 = vperm.slane %v1715, %v1902
        %v1905 = vunpack.c.l.s4 269488144
        %v1906 = vunpack.c.0.s8 %v1905
        %v1907 = vperm.slane %v1719, %v1906
        %v1909 = vunpack.c.l.s4 269488144
        %v1910 = vunpack.c.0.s8 %v1909
        %v1911 = vperm.slane %v1723, %v1910
        %v1913 = vunpack.c.l.s4 842150450
        %v1914 = vunpack.c.0.s8 %v1913
        %v1915 = vperm.slane %v1723, %v1914
        %v1917 = vunpack.c.l.s4 1414812756
        %v1918 = vunpack.c.0.s8 %v1917
        %v1919 = vperm.slane %v1723, %v1918
        %v1921 = vunpack.c.l.s4 1987475062
        %v1922 = vunpack.c.0.s8 %v1921
        %v1923 = vperm.slane %v1723, %v1922
        %v1925 = vunpack.c.l.s4 269488144
        %v1926 = vunpack.c.0.s8 %v1925
        %v1927 = vperm.slane %v1727, %v1926
        %v1978 = vmul.f32 %v1228, %v1731
        %v1979 = vmul.f32 %v1328, %v1735
        %v1980 = vmul.f32 %v1329, %v1739
        %v1981 = vmul.f32 %v1330, %v1743
        %v1982 = vmul.f32 %v1229, %v1747
        %v1983 = vmul.f32 %v1331, %v1751
        %v1984 = vmul.f32 %v1332, %v1755
        %v1985 = vmul.f32 %v1333, %v1759
        %v1986 = vmul.f32 %v1230, %v1763
        %v1987 = vmul.f32 %v1334, %v1767
        %v1988 = vmul.f32 %v1335, %v1771
        %v1989 = vmul.f32 %v1336, %v1775
        %v1990 = vmul.f32 %v1231, %v1779
        %v1991 = vmul.f32 %v1337, %v1783
        %v1992 = vmul.f32 %v1338, %v1787
        %v1993 = vmul.f32 %v1339, %v1791
        %v1994 = vmul.f32 %v1232, %v1795
        %v1995 = vmul.f32 %v1340, %v1799
        %v1996 = vmul.f32 %v1341, %v1803
        %v1997 = vmul.f32 %v1342, %v1807
        %v1998 = vmul.f32 %v1233, %v1811
        %v1999 = vmul.f32 %v1343, %v1815
        %v2000 = vmul.f32 %v1344, %v1819
        %v2001 = vmul.f32 %v1345, %v1823
        %v2002 = vmul.f32 %v1234, %v1827
        %v2003 = vmul.f32 %v1346, %v1831
        %v2004 = vmul.f32 %v1347, %v1835
        %v2005 = vmul.f32 %v1348, %v1839
        %v2006 = vmul.f32 %v1235, %v1843
        %v2007 = vmul.f32 %v1349, %v1847
        %v2008 = vmul.f32 %v1350, %v1851
        %v2009 = vmul.f32 %v1351, %v1855
        %v2010 = vmul.f32 %v1236, %v1859
        %v2011 = vmul.f32 %v1352, %v1863
        %v2012 = vmul.f32 %v1353, %v1867
        %v2013 = vmul.f32 %v1354, %v1871
        %v2014 = vmul.f32 %v1237, %v1875
        %v2015 = vmul.f32 %v1355, %v1879
        %v2016 = vmul.f32 %v1356, %v1883
        %v2017 = vmul.f32 %v1357, %v1887
        %v2018 = vmul.f32 %v1238, %v1891
        %v2019 = vmul.f32 %v1358, %v1895
        %v2020 = vmul.f32 %v1359, %v1899
        %v2021 = vmul.f32 %v1360, %v1903
        %v2022 = vmul.f32 %v1239, %v1907
        %v2023 = vmul.f32 %v1361, %v1911
        %v2024 = vmul.f32 %v1362, %v1915
        %v2025 = vmul.f32 %v1363, %v1919
        %v2026 = vmul.f32 %v1240, %v1923
        %v2027 = vmul.f32 %v1364, %v1927
        %v2028 = vmul.f32 %v1365, %v1731
        %v2029 = vmul.f32 %v1366, %v1735
        %v2030 = vmul.f32 %v1241, %v1739
        %v2031 = vmul.f32 %v1367, %v1743
        %v2032 = vmul.f32 %v1368, %v1747
        %v2033 = vmul.f32 %v1369, %v1751
        %v2034 = vmul.f32 %v1242, %v1755
        %v2035 = vmul.f32 %v1370, %v1759
        %v2036 = vmul.f32 %v1371, %v1763
        %v2037 = vmul.f32 %v1372, %v1767
        %v2038 = vmul.f32 %v1243, %v1771
        %v2039 = vmul.f32 %v1373, %v1775
        %v2040 = vmul.f32 %v1374, %v1779
        %v2041 = vmul.f32 %v1375, %v1783
        %v2042 = vmul.f32 %v1244, %v1787
        %v2043 = vmul.f32 %v1376, %v1791
        %v2044 = vmul.f32 %v1377, %v1795
        %v2045 = vmul.f32 %v1378, %v1799
        %v2046 = vmul.f32 %v1245, %v1803
        %v2047 = vmul.f32 %v1379, %v1807
        %v2048 = vmul.f32 %v1380, %v1811
        %v2049 = vmul.f32 %v1381, %v1815
        %v2050 = vmul.f32 %v1246, %v1819
        %v2051 = vmul.f32 %v1382, %v1823
        %v2052 = vmul.f32 %v1383, %v1827
        %v2053 = vmul.f32 %v1384, %v1831
        %v2054 = vmul.f32 %v1247, %v1835
        %v2055 = vmul.f32 %v1385, %v1839
        %v2056 = vmul.f32 %v1386, %v1843
        %v2057 = vmul.f32 %v1387, %v1847
        %v2058 = vmul.f32 %v1248, %v1851
        %v2059 = vmul.f32 %v1388, %v1855
        %v2060 = vmul.f32 %v1389, %v1859
        %v2061 = vmul.f32 %v1390, %v1863
        %v2062 = vmul.f32 %v1249, %v1867
        %v2063 = vmul.f32 %v1391, %v1871
        %v2064 = vmul.f32 %v1392, %v1875
        %v2065 = vmul.f32 %v1393, %v1879
        %v2066 = vmul.f32 %v1250, %v1883
        %v2067 = vmul.f32 %v1394, %v1887
        %v2068 = vmul.f32 %v1395, %v1891
        %v2069 = vmul.f32 %v1396, %v1895
        %v2070 = vmul.f32 %v1251, %v1899
        %v2071 = vmul.f32 %v1397, %v1903
        %v2072 = vmul.f32 %v1398, %v1907
        %v2073 = vmul.f32 %v1399, %v1911
        %v2074 = vmul.f32 %v1252, %v1915
        %v2075 = vmul.f32 %v1400, %v1919
        %v2076 = vmul.f32 %v1401, %v1923
        %v2077 = vmul.f32 %v1402, %v1927
        %v2078 = vmul.f32 %v1253, %v1731
        %v2079 = vmul.f32 %v1403, %v1735
        %v2080 = vmul.f32 %v1404, %v1739
        %v2081 = vmul.f32 %v1405, %v1743
        %v2082 = vmul.f32 %v1254, %v1747
        %v2083 = vmul.f32 %v1406, %v1751
        %v2084 = vmul.f32 %v1407, %v1755
        %v2085 = vmul.f32 %v1408, %v1759
        %v2086 = vmul.f32 %v1255, %v1763
        %v2087 = vmul.f32 %v1409, %v1767
        %v2088 = vmul.f32 %v1410, %v1771
        %v2089 = vmul.f32 %v1411, %v1775
        %v2090 = vmul.f32 %v1256, %v1779
        %v2091 = vmul.f32 %v1412, %v1783
        %v2092 = vmul.f32 %v1413, %v1787
        %v2093 = vmul.f32 %v1414, %v1791
        %v2094 = vmul.f32 %v1257, %v1795
        %v2095 = vmul.f32 %v1415, %v1799
        %v2096 = vmul.f32 %v1416, %v1803
        %v2097 = vmul.f32 %v1417, %v1807
        %v2098 = vmul.f32 %v1258, %v1811
        %v2099 = vmul.f32 %v1418, %v1815
        %v2100 = vmul.f32 %v1419, %v1819
        %v2101 = vmul.f32 %v1420, %v1823
        %v2102 = vmul.f32 %v1259, %v1827
        %v2103 = vmul.f32 %v1421, %v1831
        %v2104 = vmul.f32 %v1422, %v1835
        %v2105 = vmul.f32 %v1423, %v1839
        %v2106 = vmul.f32 %v1260, %v1843
        %v2107 = vmul.f32 %v1424, %v1847
        %v2108 = vmul.f32 %v1425, %v1851
        %v2109 = vmul.f32 %v1426, %v1855
        %v2110 = vmul.f32 %v1261, %v1859
        %v2111 = vmul.f32 %v1427, %v1863
        %v2112 = vmul.f32 %v1428, %v1867
        %v2113 = vmul.f32 %v1429, %v1871
        %v2114 = vmul.f32 %v1262, %v1875
        %v2115 = vmul.f32 %v1430, %v1879
        %v2116 = vmul.f32 %v1431, %v1883
        %v2117 = vmul.f32 %v1432, %v1887
        %v2118 = vmul.f32 %v1263, %v1891
        %v2119 = vmul.f32 %v1433, %v1895
        %v2120 = vmul.f32 %v1434, %v1899
        %v2121 = vmul.f32 %v1435, %v1903
        %v2122 = vmul.f32 %v1264, %v1907
        %v2123 = vmul.f32 %v1436, %v1911
        %v2124 = vmul.f32 %v1437, %v1915
        %v2125 = vmul.f32 %v1438, %v1919
        %v2126 = vmul.f32 %v1265, %v1923
        %v2127 = vmul.f32 %v1439, %v1927
        %v2128 = vmul.f32 %v1440, %v1731
        %v2129 = vmul.f32 %v1441, %v1735
        %v2130 = vmul.f32 %v1266, %v1739
        %v2131 = vmul.f32 %v1442, %v1743
        %v2132 = vmul.f32 %v1443, %v1747
        %v2133 = vmul.f32 %v1444, %v1751
        %v2134 = vmul.f32 %v1267, %v1755
        %v2135 = vmul.f32 %v1445, %v1759
        %v2136 = vmul.f32 %v1446, %v1763
        %v2137 = vmul.f32 %v1447, %v1767
        %v2138 = vmul.f32 %v1268, %v1771
        %v2139 = vmul.f32 %v1448, %v1775
        %v2140 = vmul.f32 %v1449, %v1779
        %v2141 = vmul.f32 %v1450, %v1783
        %v2142 = vmul.f32 %v1269, %v1787
        %v2143 = vmul.f32 %v1451, %v1791
        %v2144 = vmul.f32 %v1452, %v1795
        %v2145 = vmul.f32 %v1453, %v1799
        %v2146 = vmul.f32 %v1270, %v1803
        %v2147 = vmul.f32 %v1454, %v1807
        %v2148 = vmul.f32 %v1455, %v1811
        %v2149 = vmul.f32 %v1456, %v1815
        %v2150 = vmul.f32 %v1271, %v1819
        %v2151 = vmul.f32 %v1457, %v1823
        %v2152 = vmul.f32 %v1458, %v1827
        %v2153 = vmul.f32 %v1459, %v1831
        %v2154 = vmul.f32 %v1272, %v1835
        %v2155 = vmul.f32 %v1460, %v1839
        %v2156 = vmul.f32 %v1461, %v1843
        %v2157 = vmul.f32 %v1462, %v1847
        %v2158 = vmul.f32 %v1273, %v1851
        %v2159 = vmul.f32 %v1463, %v1855
        %v2160 = vmul.f32 %v1464, %v1859
        %v2161 = vmul.f32 %v1465, %v1863
        %v2162 = vmul.f32 %v1274, %v1867
        %v2163 = vmul.f32 %v1466, %v1871
        %v2164 = vmul.f32 %v1467, %v1875
        %v2165 = vmul.f32 %v1468, %v1879
        %v2166 = vmul.f32 %v1275, %v1883
        %v2167 = vmul.f32 %v1469, %v1887
        %v2168 = vmul.f32 %v1470, %v1891
        %v2169 = vmul.f32 %v1471, %v1895
        %v2170 = vmul.f32 %v1276, %v1899
        %v2171 = vmul.f32 %v1472, %v1903
        %v2172 = vmul.f32 %v1473, %v1907
        %v2173 = vmul.f32 %v1474, %v1911
        %v2174 = vmul.f32 %v1277, %v1915
        %v2175 = vmul.f32 %v1475, %v1919
        %v2176 = vmul.f32 %v1476, %v1923
        %v2177 = vmul.f32 %v1477, %v1927
        %2378 = vst [vmem:[#allocation1] ss:$4 sm:$0xff] %v1978
        %s2379 = scalar_lea.vmem [#allocation1], 1
        %2380 = vst [vmem:[%s2379] ss:$4 sm:$0xff] %v1979
        %s2381 = scalar_lea.vmem [#allocation1], 2
        %2382 = vst [vmem:[%s2381] ss:$4 sm:$0xff] %v1980
        %s2383 = scalar_lea.vmem [#allocation1], 3
        %2384 = vst [vmem:[%s2383] ss:$4 sm:$0xff] %v1981
        %s2385 = scalar_lea.vmem [#allocation1], 32
        %2386 = vst [vmem:[%s2385] ss:$4 sm:$0xff] %v1982
        %v2387 = vld.sshfl [vmem:[#allocation1] sm:$0xff pattern:$0x73625140]
        %v2388 = vld.sshfl [vmem:[#allocation1 + $0x20] sm:$0xff pattern:$0x73625140]
        %2389 = vst [vmem:[#allocation1] ss:$4 sm:$0xff] %v1983
        %2390 = vst [vmem:[%s2379] ss:$4 sm:$0xff] %v1984
        %2391 = vst [vmem:[%s2381] ss:$4 sm:$0xff] %v1985
        %2392 = vst [vmem:[%s2383] ss:$4 sm:$0xff] %v1986
        %2393 = vst [vmem:[%s2385] ss:$4 sm:$0xff] %v1987
        %v2394 = vld.sshfl [vmem:[#allocation1] sm:$0xff pattern:$0x73625140]
        %v2395 = vld.sshfl [vmem:[#allocation1 + $0x20] sm:$0xff pattern:$0x73625140]
        %2396 = vst [vmem:[#allocation1] ss:$4 sm:$0xff] %v1988
        %2397 = vst [vmem:[%s2379] ss:$4 sm:$0xff] %v1989
        %2398 = vst [vmem:[%s2381] ss:$4 sm:$0xff] %v1990
        %2399 = vst [vmem:[%s2383] ss:$4 sm:$0xff] %v1991
        %2400 = vst [vmem:[%s2385] ss:$4 sm:$0xff] %v1992
        %v2401 = vld.sshfl [vmem:[#allocation1] sm:$0xff pattern:$0x73625140]
        %v2402 = vld.sshfl [vmem:[#allocation1 + $0x20] sm:$0xff pattern:$0x73625140]
        %2403 = vst [vmem:[#allocation1] ss:$4 sm:$0xff] %v1993
        %2404 = vst [vmem:[%s2379] ss:$4 sm:$0xff] %v1994
        %2405 = vst [vmem:[%s2381] ss:$4 sm:$0xff] %v1995
        %2406 = vst [vmem:[%s2383] ss:$4 sm:$0xff] %v1996
        %2407 = vst [vmem:[%s2385] ss:$4 sm:$0xff] %v1997
        %v2408 = vld.sshfl [vmem:[#allocation1] sm:$0xff pattern:$0x73625140]
        %v2409 = vld.sshfl [vmem:[#allocation1 + $0x20] sm:$0xff pattern:$0x73625140]
        %2410 = vst [vmem:[#allocation1] ss:$4 sm:$0xff] %v1998
        %2411 = vst [vmem:[%s2379] ss:$4 sm:$0xff] %v1999
        %2412 = vst [vmem:[%s2381] ss:$4 sm:$0xff] %v2000
        %2413 = vst [vmem:[%s2383] ss:$4 sm:$0xff] %v2001
        %2414 = vst [vmem:[%s2385] ss:$4 sm:$0xff] %v2002
        %v2415 = vld.sshfl [vmem:[#allocation1] sm:$0xff pattern:$0x73625140]
        %v2416 = vld.sshfl [vmem:[#allocation1 + $0x20] sm:$0xff pattern:$0x73625140]
        %2417 = vst [vmem:[#allocation1] ss:$4 sm:$0xff] %v2003
        %2418 = vst [vmem:[%s2379] ss:$4 sm:$0xff] %v2004
        %2419 = vst [vmem:[%s2381] ss:$4 sm:$0xff] %v2005
        %2420 = vst [vmem:[%s2383] ss:$4 sm:$0xff] %v2006
        %2421 = vst [vmem:[%s2385] ss:$4 sm:$0xff] %v2007
        %v2422 = vld.sshfl [vmem:[#allocation1] sm:$0xff pattern:$0x73625140]
        %v2423 = vld.sshfl [vmem:[#allocation1 + $0x20] sm:$0xff pattern:$0x73625140]
        %2424 = vst [vmem:[#allocation1] ss:$4 sm:$0xff] %v2008
        %2425 = vst [vmem:[%s2379] ss:$4 sm:$0xff] %v2009
        %2426 = vst [vmem:[%s2381] ss:$4 sm:$0xff] %v2010
        %2427 = vst [vmem:[%s2383] ss:$4 sm:$0xff] %v2011
        %2428 = vst [vmem:[%s2385] ss:$4 sm:$0xff] %v2012
        %v2429 = vld.sshfl [vmem:[#allocation1] sm:$0xff pattern:$0x73625140]
        %v2430 = vld.sshfl [vmem:[#allocation1 + $0x20] sm:$0xff pattern:$0x73625140]
        %2431 = vst [vmem:[#allocation1] ss:$4 sm:$0xff] %v2013
        %2432 = vst [vmem:[%s2379] ss:$4 sm:$0xff] %v2014
        %2433 = vst [vmem:[%s2381] ss:$4 sm:$0xff] %v2015
        %2434 = vst [vmem:[%s2383] ss:$4 sm:$0xff] %v2016
        %2435 = vst [vmem:[%s2385] ss:$4 sm:$0xff] %v2017
        %v2436 = vld.sshfl [vmem:[#allocation1] sm:$0xff pattern:$0x73625140]
        %v2437 = vld.sshfl [vmem:[#allocation1 + $0x20] sm:$0xff pattern:$0x73625140]
        %2438 = vst [vmem:[#allocation1] ss:$4 sm:$0xff] %v2018
        %2439 = vst [vmem:[%s2379] ss:$4 sm:$0xff] %v2019
        %2440 = vst [vmem:[%s2381] ss:$4 sm:$0xff] %v2020
        %2441 = vst [vmem:[%s2383] ss:$4 sm:$0xff] %v2021
        %2442 = vst [vmem:[%s2385] ss:$4 sm:$0xff] %v2022
        %v2443 = vld.sshfl [vmem:[#allocation1] sm:$0xff pattern:$0x73625140]
        %v2444 = vld.sshfl [vmem:[#allocation1 + $0x20] sm:$0xff pattern:$0x73625140]
        %2445 = vst [vmem:[#allocation1] ss:$4 sm:$0xff] %v2023
        %2446 = vst [vmem:[%s2379] ss:$4 sm:$0xff] %v2024
        %2447 = vst [vmem:[%s2381] ss:$4 sm:$0xff] %v2025
        %2448 = vst [vmem:[%s2383] ss:$4 sm:$0xff] %v2026
        %2449 = vst [vmem:[%s2385] ss:$4 sm:$0xff] %v2027
        %v2450 = vld.sshfl [vmem:[#allocation1] sm:$0xff pattern:$0x73625140]
        %v2451 = vld.sshfl [vmem:[#allocation1 + $0x20] sm:$0xff pattern:$0x73625140]
        %2452 = vst [vmem:[#allocation1] ss:$4 sm:$0xff] %v2028
        %2453 = vst [vmem:[%s2379] ss:$4 sm:$0xff] %v2029
        %2454 = vst [vmem:[%s2381] ss:$4 sm:$0xff] %v2030
        %2455 = vst [vmem:[%s2383] ss:$4 sm:$0xff] %v2031
        %2456 = vst [vmem:[%s2385] ss:$4 sm:$0xff] %v2032
        %v2457 = vld.sshfl [vmem:[#allocation1] sm:$0xff pattern:$0x73625140]
        %v2458 = vld.sshfl [vmem:[#allocation1 + $0x20] sm:$0xff pattern:$0x73625140]
        %2459 = vst [vmem:[#allocation1] ss:$4 sm:$0xff] %v2033
        %2460 = vst [vmem:[%s2379] ss:$4 sm:$0xff] %v2034
        %2461 = vst [vmem:[%s2381] ss:$4 sm:$0xff] %v2035
        %2462 = vst [vmem:[%s2383] ss:$4 sm:$0xff] %v2036
        %2463 = vst [vmem:[%s2385] ss:$4 sm:$0xff] %v2037
        %v2464 = vld.sshfl [vmem:[#allocation1] sm:$0xff pattern:$0x73625140]
        %v2465 = vld.sshfl [vmem:[#allocation1 + $0x20] sm:$0xff pattern:$0x73625140]
        %2466 = vst [vmem:[#allocation1] ss:$4 sm:$0xff] %v2038
        %2467 = vst [vmem:[%s2379] ss:$4 sm:$0xff] %v2039
        %2468 = vst [vmem:[%s2381] ss:$4 sm:$0xff] %v2040
        %2469 = vst [vmem:[%s2383] ss:$4 sm:$0xff] %v2041
        %2470 = vst [vmem:[%s2385] ss:$4 sm:$0xff] %v2042
        %v2471 = vld.sshfl [vmem:[#allocation1] sm:$0xff pattern:$0x73625140]
        %v2472 = vld.sshfl [vmem:[#allocation1 + $0x20] sm:$0xff pattern:$0x73625140]
        %2473 = vst [vmem:[#allocation1] ss:$4 sm:$0xff] %v2043
        %2474 = vst [vmem:[%s2379] ss:$4 sm:$0xff] %v2044
        %2475 = vst [vmem:[%s2381] ss:$4 sm:$0xff] %v2045
        %2476 = vst [vmem:[%s2383] ss:$4 sm:$0xff] %v2046
        %2477 = vst [vmem:[%s2385] ss:$4 sm:$0xff] %v2047
        %v2478 = vld.sshfl [vmem:[#allocation1] sm:$0xff pattern:$0x73625140]
        %v2479 = vld.sshfl [vmem:[#allocation1 + $0x20] sm:$0xff pattern:$0x73625140]
        %2480 = vst [vmem:[#allocation1] ss:$4 sm:$0xff] %v2048
        %2481 = vst [vmem:[%s2379] ss:$4 sm:$0xff] %v2049
        %2482 = vst [vmem:[%s2381] ss:$4 sm:$0xff] %v2050
        %2483 = vst [vmem:[%s2383] ss:$4 sm:$0xff] %v2051
        %2484 = vst [vmem:[%s2385] ss:$4 sm:$0xff] %v2052
        %v2485 = vld.sshfl [vmem:[#allocation1] sm:$0xff pattern:$0x73625140]
        %v2486 = vld.sshfl [vmem:[#allocation1 + $0x20] sm:$0xff pattern:$0x73625140]
        %2487 = vst [vmem:[#allocation1] ss:$4 sm:$0xff] %v2053
        %2488 = vst [vmem:[%s2379] ss:$4 sm:$0xff] %v2054
        %2489 = vst [vmem:[%s2381] ss:$4 sm:$0xff] %v2055
        %2490 = vst [vmem:[%s2383] ss:$4 sm:$0xff] %v2056
        %2491 = vst [vmem:[%s2385] ss:$4 sm:$0xff] %v2057
        %v2492 = vld.sshfl [vmem:[#allocation1] sm:$0xff pattern:$0x73625140]
        %v2493 = vld.sshfl [vmem:[#allocation1 + $0x20] sm:$0xff pattern:$0x73625140]
        %2494 = vst [vmem:[#allocation1] ss:$4 sm:$0xff] %v2058
        %2495 = vst [vmem:[%s2379] ss:$4 sm:$0xff] %v2059
        %2496 = vst [vmem:[%s2381] ss:$4 sm:$0xff] %v2060
        %2497 = vst [vmem:[%s2383] ss:$4 sm:$0xff] %v2061
        %2498 = vst [vmem:[%s2385] ss:$4 sm:$0xff] %v2062
        %v2499 = vld.sshfl [vmem:[#allocation1] sm:$0xff pattern:$0x73625140]
        %v2500 = vld.sshfl [vmem:[#allocation1 + $0x20] sm:$0xff pattern:$0x73625140]
        %2501 = vst [vmem:[#allocation1] ss:$4 sm:$0xff] %v2063
        %2502 = vst [vmem:[%s2379] ss:$4 sm:$0xff] %v2064
        %2503 = vst [vmem:[%s2381] ss:$4 sm:$0xff] %v2065
        %2504 = vst [vmem:[%s2383] ss:$4 sm:$0xff] %v2066
        %2505 = vst [vmem:[%s2385] ss:$4 sm:$0xff] %v2067
        %v2506 = vld.sshfl [vmem:[#allocation1] sm:$0xff pattern:$0x73625140]
        %v2507 = vld.sshfl [vmem:[#allocation1 + $0x20] sm:$0xff pattern:$0x73625140]
        %2508 = vst [vmem:[#allocation1] ss:$4 sm:$0xff] %v2068
        %2509 = vst [vmem:[%s2379] ss:$4 sm:$0xff] %v2069
        %2510 = vst [vmem:[%s2381] ss:$4 sm:$0xff] %v2070
        %2511 = vst [vmem:[%s2383] ss:$4 sm:$0xff] %v2071
        %2512 = vst [vmem:[%s2385] ss:$4 sm:$0xff] %v2072
        %v2513 = vld.sshfl [vmem:[#allocation1] sm:$0xff pattern:$0x73625140]
        %v2514 = vld.sshfl [vmem:[#allocation1 + $0x20] sm:$0xff pattern:$0x73625140]
        %2515 = vst [vmem:[#allocation1] ss:$4 sm:$0xff] %v2073
        %2516 = vst [vmem:[%s2379] ss:$4 sm:$0xff] %v2074
        %2517 = vst [vmem:[%s2381] ss:$4 sm:$0xff] %v2075
        %2518 = vst [vmem:[%s2383] ss:$4 sm:$0xff] %v2076
        %2519 = vst [vmem:[%s2385] ss:$4 sm:$0xff] %v2077
        %v2520 = vld.sshfl [vmem:[#allocation1] sm:$0xff pattern:$0x73625140]
        %v2521 = vld.sshfl [vmem:[#allocation1 + $0x20] sm:$0xff pattern:$0x73625140]
        %2522 = vst [vmem:[#allocation1] ss:$4 sm:$0xff] %v2078
        %2523 = vst [vmem:[%s2379] ss:$4 sm:$0xff] %v2079
        %2524 = vst [vmem:[%s2381] ss:$4 sm:$0xff] %v2080
        %2525 = vst [vmem:[%s2383] ss:$4 sm:$0xff] %v2081
        %2526 = vst [vmem:[%s2385] ss:$4 sm:$0xff] %v2082
        %v2527 = vld.sshfl [vmem:[#allocation1] sm:$0xff pattern:$0x73625140]
        %v2528 = vld.sshfl [vmem:[#allocation1 + $0x20] sm:$0xff pattern:$0x73625140]
        %2529 = vst [vmem:[#allocation1] ss:$4 sm:$0xff] %v2083
        %2530 = vst [vmem:[%s2379] ss:$4 sm:$0xff] %v2084
        %2531 = vst [vmem:[%s2381] ss:$4 sm:$0xff] %v2085
        %2532 = vst [vmem:[%s2383] ss:$4 sm:$0xff] %v2086
        %2533 = vst [vmem:[%s2385] ss:$4 sm:$0xff] %v2087
        %v2534 = vld.sshfl [vmem:[#allocation1] sm:$0xff pattern:$0x73625140]
        %v2535 = vld.sshfl [vmem:[#allocation1 + $0x20] sm:$0xff pattern:$0x73625140]
        %2536 = vst [vmem:[#allocation1] ss:$4 sm:$0xff] %v2088
        %2537 = vst [vmem:[%s2379] ss:$4 sm:$0xff] %v2089
        %2538 = vst [vmem:[%s2381] ss:$4 sm:$0xff] %v2090
        %2539 = vst [vmem:[%s2383] ss:$4 sm:$0xff] %v2091
        %2540 = vst [vmem:[%s2385] ss:$4 sm:$0xff] %v2092
        %v2541 = vld.sshfl [vmem:[#allocation1] sm:$0xff pattern:$0x73625140]
        %v2542 = vld.sshfl [vmem:[#allocation1 + $0x20] sm:$0xff pattern:$0x73625140]
        %2543 = vst [vmem:[#allocation1] ss:$4 sm:$0xff] %v2093
        %2544 = vst [vmem:[%s2379] ss:$4 sm:$0xff] %v2094
        %2545 = vst [vmem:[%s2381] ss:$4 sm:$0xff] %v2095
        %2546 = vst [vmem:[%s2383] ss:$4 sm:$0xff] %v2096
        %2547 = vst [vmem:[%s2385] ss:$4 sm:$0xff] %v2097
        %v2548 = vld.sshfl [vmem:[#allocation1] sm:$0xff pattern:$0x73625140]
        %v2549 = vld.sshfl [vmem:[#allocation1 + $0x20] sm:$0xff pattern:$0x73625140]
        %2550 = vst [vmem:[#allocation1] ss:$4 sm:$0xff] %v2098
        %2551 = vst [vmem:[%s2379] ss:$4 sm:$0xff] %v2099
        %2552 = vst [vmem:[%s2381] ss:$4 sm:$0xff] %v2100
        %2553 = vst [vmem:[%s2383] ss:$4 sm:$0xff] %v2101
        %2554 = vst [vmem:[%s2385] ss:$4 sm:$0xff] %v2102
        %v2555 = vld.sshfl [vmem:[#allocation1] sm:$0xff pattern:$0x73625140]
        %v2556 = vld.sshfl [vmem:[#allocation1 + $0x20] sm:$0xff pattern:$0x73625140]
        %2557 = vst [vmem:[#allocation1] ss:$4 sm:$0xff] %v2103
        %2558 = vst [vmem:[%s2379] ss:$4 sm:$0xff] %v2104
        %2559 = vst [vmem:[%s2381] ss:$4 sm:$0xff] %v2105
        %2560 = vst [vmem:[%s2383] ss:$4 sm:$0xff] %v2106
        %2561 = vst [vmem:[%s2385] ss:$4 sm:$0xff] %v2107
        %v2562 = vld.sshfl [vmem:[#allocation1] sm:$0xff pattern:$0x73625140]
        %v2563 = vld.sshfl [vmem:[#allocation1 + $0x20] sm:$0xff pattern:$0x73625140]
        %2564 = vst [vmem:[#allocation1] ss:$4 sm:$0xff] %v2108
        %2565 = vst [vmem:[%s2379] ss:$4 sm:$0xff] %v2109
        %2566 = vst [vmem:[%s2381] ss:$4 sm:$0xff] %v2110
        %2567 = vst [vmem:[%s2383] ss:$4 sm:$0xff] %v2111
        %2568 = vst [vmem:[%s2385] ss:$4 sm:$0xff] %v2112
        %v2569 = vld.sshfl [vmem:[#allocation1] sm:$0xff pattern:$0x73625140]
        %v2570 = vld.sshfl [vmem:[#allocation1 + $0x20] sm:$0xff pattern:$0x73625140]
        %2571 = vst [vmem:[#allocation1] ss:$4 sm:$0xff] %v2113
        %2572 = vst [vmem:[%s2379] ss:$4 sm:$0xff] %v2114
        %2573 = vst [vmem:[%s2381] ss:$4 sm:$0xff] %v2115
        %2574 = vst [vmem:[%s2383] ss:$4 sm:$0xff] %v2116
        %2575 = vst [vmem:[%s2385] ss:$4 sm:$0xff] %v2117
        %v2576 = vld.sshfl [vmem:[#allocation1] sm:$0xff pattern:$0x73625140]
        %v2577 = vld.sshfl [vmem:[#allocation1 + $0x20] sm:$0xff pattern:$0x73625140]
        %2578 = vst [vmem:[#allocation1] ss:$4 sm:$0xff] %v2118
        %2579 = vst [vmem:[%s2379] ss:$4 sm:$0xff] %v2119
        %2580 = vst [vmem:[%s2381] ss:$4 sm:$0xff] %v2120
        %2581 = vst [vmem:[%s2383] ss:$4 sm:$0xff] %v2121
        %2582 = vst [vmem:[%s2385] ss:$4 sm:$0xff] %v2122
        %v2583 = vld.sshfl [vmem:[#allocation1] sm:$0xff pattern:$0x73625140]
        %v2584 = vld.sshfl [vmem:[#allocation1 + $0x20] sm:$0xff pattern:$0x73625140]
        %2585 = vst [vmem:[#allocation1] ss:$4 sm:$0xff] %v2123
        %2586 = vst [vmem:[%s2379] ss:$4 sm:$0xff] %v2124
        %2587 = vst [vmem:[%s2381] ss:$4 sm:$0xff] %v2125
        %2588 = vst [vmem:[%s2383] ss:$4 sm:$0xff] %v2126
        %2589 = vst [vmem:[%s2385] ss:$4 sm:$0xff] %v2127
        %v2590 = vld.sshfl [vmem:[#allocation1] sm:$0xff pattern:$0x73625140]
        %v2591 = vld.sshfl [vmem:[#allocation1 + $0x20] sm:$0xff pattern:$0x73625140]
        %2592 = vst [vmem:[#allocation1] ss:$4 sm:$0xff] %v2128
        %2593 = vst [vmem:[%s2379] ss:$4 sm:$0xff] %v2129
        %2594 = vst [vmem:[%s2381] ss:$4 sm:$0xff] %v2130
        %2595 = vst [vmem:[%s2383] ss:$4 sm:$0xff] %v2131
        %2596 = vst [vmem:[%s2385] ss:$4 sm:$0xff] %v2132
        %v2597 = vld.sshfl [vmem:[#allocation1] sm:$0xff pattern:$0x73625140]
        %v2598 = vld.sshfl [vmem:[#allocation1 + $0x20] sm:$0xff pattern:$0x73625140]
        %2599 = vst [vmem:[#allocation1] ss:$4 sm:$0xff] %v2133
        %2600 = vst [vmem:[%s2379] ss:$4 sm:$0xff] %v2134
        %2601 = vst [vmem:[%s2381] ss:$4 sm:$0xff] %v2135
        %2602 = vst [vmem:[%s2383] ss:$4 sm:$0xff] %v2136
        %2603 = vst [vmem:[%s2385] ss:$4 sm:$0xff] %v2137
        %v2604 = vld.sshfl [vmem:[#allocation1] sm:$0xff pattern:$0x73625140]
        %v2605 = vld.sshfl [vmem:[#allocation1 + $0x20] sm:$0xff pattern:$0x73625140]
        %2606 = vst [vmem:[#allocation1] ss:$4 sm:$0xff] %v2138
        %2607 = vst [vmem:[%s2379] ss:$4 sm:$0xff] %v2139
        %2608 = vst [vmem:[%s2381] ss:$4 sm:$0xff] %v2140
        %2609 = vst [vmem:[%s2383] ss:$4 sm:$0xff] %v2141
        %2610 = vst [vmem:[%s2385] ss:$4 sm:$0xff] %v2142
        %v2611 = vld.sshfl [vmem:[#allocation1] sm:$0xff pattern:$0x73625140]
        %v2612 = vld.sshfl [vmem:[#allocation1 + $0x20] sm:$0xff pattern:$0x73625140]
        %2613 = vst [vmem:[#allocation1] ss:$4 sm:$0xff] %v2143
        %2614 = vst [vmem:[%s2379] ss:$4 sm:$0xff] %v2144
        %2615 = vst [vmem:[%s2381] ss:$4 sm:$0xff] %v2145
        %2616 = vst [vmem:[%s2383] ss:$4 sm:$0xff] %v2146
        %2617 = vst [vmem:[%s2385] ss:$4 sm:$0xff] %v2147
        %v2618 = vld.sshfl [vmem:[#allocation1] sm:$0xff pattern:$0x73625140]
        %v2619 = vld.sshfl [vmem:[#allocation1 + $0x20] sm:$0xff pattern:$0x73625140]
        %2620 = vst [vmem:[#allocation1] ss:$4 sm:$0xff] %v2148
        %2621 = vst [vmem:[%s2379] ss:$4 sm:$0xff] %v2149
        %2622 = vst [vmem:[%s2381] ss:$4 sm:$0xff] %v2150
        %2623 = vst [vmem:[%s2383] ss:$4 sm:$0xff] %v2151
        %2624 = vst [vmem:[%s2385] ss:$4 sm:$0xff] %v2152
        %v2625 = vld.sshfl [vmem:[#allocation1] sm:$0xff pattern:$0x73625140]
        %v2626 = vld.sshfl [vmem:[#allocation1 + $0x20] sm:$0xff pattern:$0x73625140]
        %2627 = vst [vmem:[#allocation1] ss:$4 sm:$0xff] %v2153
        %2628 = vst [vmem:[%s2379] ss:$4 sm:$0xff] %v2154
        %2629 = vst [vmem:[%s2381] ss:$4 sm:$0xff] %v2155
        %2630 = vst [vmem:[%s2383] ss:$4 sm:$0xff] %v2156
        %2631 = vst [vmem:[%s2385] ss:$4 sm:$0xff] %v2157
        %v2632 = vld.sshfl [vmem:[#allocation1] sm:$0xff pattern:$0x73625140]
        %v2633 = vld.sshfl [vmem:[#allocation1 + $0x20] sm:$0xff pattern:$0x73625140]
        %2634 = vst [vmem:[#allocation1] ss:$4 sm:$0xff] %v2158
        %2635 = vst [vmem:[%s2379] ss:$4 sm:$0xff] %v2159
        %2636 = vst [vmem:[%s2381] ss:$4 sm:$0xff] %v2160
        %2637 = vst [vmem:[%s2383] ss:$4 sm:$0xff] %v2161
        %2638 = vst [vmem:[%s2385] ss:$4 sm:$0xff] %v2162
        %v2639 = vld.sshfl [vmem:[#allocation1] sm:$0xff pattern:$0x73625140]
        %v2640 = vld.sshfl [vmem:[#allocation1 + $0x20] sm:$0xff pattern:$0x73625140]
        %2641 = vst [vmem:[#allocation1] ss:$4 sm:$0xff] %v2163
        %2642 = vst [vmem:[%s2379] ss:$4 sm:$0xff] %v2164
        %2643 = vst [vmem:[%s2381] ss:$4 sm:$0xff] %v2165
        %2644 = vst [vmem:[%s2383] ss:$4 sm:$0xff] %v2166
        %2645 = vst [vmem:[%s2385] ss:$4 sm:$0xff] %v2167
        %v2646 = vld.sshfl [vmem:[#allocation1] sm:$0xff pattern:$0x73625140]
        %v2647 = vld.sshfl [vmem:[#allocation1 + $0x20] sm:$0xff pattern:$0x73625140]
        %2648 = vst [vmem:[#allocation1] ss:$4 sm:$0xff] %v2168
        %2649 = vst [vmem:[%s2379] ss:$4 sm:$0xff] %v2169
        %2650 = vst [vmem:[%s2381] ss:$4 sm:$0xff] %v2170
        %2651 = vst [vmem:[%s2383] ss:$4 sm:$0xff] %v2171
        %2652 = vst [vmem:[%s2385] ss:$4 sm:$0xff] %v2172
        %v2653 = vld.sshfl [vmem:[#allocation1] sm:$0xff pattern:$0x73625140]
        %v2654 = vld.sshfl [vmem:[#allocation1 + $0x20] sm:$0xff pattern:$0x73625140]
        %2655 = vst [vmem:[#allocation1] ss:$4 sm:$0xff] %v2173
        %2656 = vst [vmem:[%s2379] ss:$4 sm:$0xff] %v2174
        %2657 = vst [vmem:[%s2381] ss:$4 sm:$0xff] %v2175
        %2658 = vst [vmem:[%s2383] ss:$4 sm:$0xff] %v2176
        %2659 = vst [vmem:[%s2385] ss:$4 sm:$0xff] %v2177
        %v2660 = vld.sshfl [vmem:[#allocation1] sm:$0xff pattern:$0x73625140]
        %v2661 = vld.sshfl [vmem:[#allocation1 + $0x20] sm:$0xff pattern:$0x73625140]
        %v2742 = vpack.c.bf16 %v2387, %v2387
        %v2743 = vpack.c.bf16 %v2388, %v2388
        %v2744 = vpack.c.bf16 %v2394, %v2394
        %v2745 = vpack.c.bf16 %v2395, %v2395
        %v2746 = vpack.c.bf16 %v2401, %v2401
        %v2747 = vpack.c.bf16 %v2402, %v2402
        %v2748 = vpack.c.bf16 %v2408, %v2408
        %v2749 = vpack.c.bf16 %v2409, %v2409
        %v2750 = vpack.c.bf16 %v2415, %v2415
        %v2751 = vpack.c.bf16 %v2416, %v2416
        %v2752 = vpack.c.bf16 %v2422, %v2422
        %v2753 = vpack.c.bf16 %v2423, %v2423
        %v2754 = vpack.c.bf16 %v2429, %v2429
        %v2755 = vpack.c.bf16 %v2430, %v2430
        %v2756 = vpack.c.bf16 %v2436, %v2436
        %v2757 = vpack.c.bf16 %v2437, %v2437
        %v2758 = vpack.c.bf16 %v2443, %v2443
        %v2759 = vpack.c.bf16 %v2444, %v2444
        %v2760 = vpack.c.bf16 %v2450, %v2450
        %v2761 = vpack.c.bf16 %v2451, %v2451
        %v2762 = vpack.c.bf16 %v2457, %v2457
        %v2763 = vpack.c.bf16 %v2458, %v2458
        %v2764 = vpack.c.bf16 %v2464, %v2464
        %v2765 = vpack.c.bf16 %v2465, %v2465
        %v2766 = vpack.c.bf16 %v2471, %v2471
        %v2767 = vpack.c.bf16 %v2472, %v2472
        %v2768 = vpack.c.bf16 %v2478, %v2478
        %v2769 = vpack.c.bf16 %v2479, %v2479
        %v2770 = vpack.c.bf16 %v2485, %v2485
        %v2771 = vpack.c.bf16 %v2486, %v2486
        %v2772 = vpack.c.bf16 %v2492, %v2492
        %v2773 = vpack.c.bf16 %v2493, %v2493
        %v2774 = vpack.c.bf16 %v2499, %v2499
        %v2775 = vpack.c.bf16 %v2500, %v2500
        %v2776 = vpack.c.bf16 %v2506, %v2506
        %v2777 = vpack.c.bf16 %v2507, %v2507
        %v2778 = vpack.c.bf16 %v2513, %v2513
        %v2779 = vpack.c.bf16 %v2514, %v2514
        %v2780 = vpack.c.bf16 %v2520, %v2520
        %v2781 = vpack.c.bf16 %v2521, %v2521
        %v2782 = vpack.c.bf16 %v2527, %v2527
        %v2783 = vpack.c.bf16 %v2528, %v2528
        %v2784 = vpack.c.bf16 %v2534, %v2534
        %v2785 = vpack.c.bf16 %v2535, %v2535
        %v2786 = vpack.c.bf16 %v2541, %v2541
        %v2787 = vpack.c.bf16 %v2542, %v2542
        %v2788 = vpack.c.bf16 %v2548, %v2548
        %v2789 = vpack.c.bf16 %v2549, %v2549
        %v2790 = vpack.c.bf16 %v2555, %v2555
        %v2791 = vpack.c.bf16 %v2556, %v2556
        %v2792 = vpack.c.bf16 %v2562, %v2562
        %v2793 = vpack.c.bf16 %v2563, %v2563
        %v2794 = vpack.c.bf16 %v2569, %v2569
        %v2795 = vpack.c.bf16 %v2570, %v2570
        %v2796 = vpack.c.bf16 %v2576, %v2576
        %v2797 = vpack.c.bf16 %v2577, %v2577
        %v2798 = vpack.c.bf16 %v2583, %v2583
        %v2799 = vpack.c.bf16 %v2584, %v2584
        %v2800 = vpack.c.bf16 %v2590, %v2590
        %v2801 = vpack.c.bf16 %v2591, %v2591
        %v2802 = vpack.c.bf16 %v2597, %v2597
        %v2803 = vpack.c.bf16 %v2598, %v2598
        %v2804 = vpack.c.bf16 %v2604, %v2604
        %v2805 = vpack.c.bf16 %v2605, %v2605
        %v2806 = vpack.c.bf16 %v2611, %v2611
        %v2807 = vpack.c.bf16 %v2612, %v2612
        %v2808 = vpack.c.bf16 %v2618, %v2618
        %v2809 = vpack.c.bf16 %v2619, %v2619
        %v2810 = vpack.c.bf16 %v2625, %v2625
        %v2811 = vpack.c.bf16 %v2626, %v2626
        %v2812 = vpack.c.bf16 %v2632, %v2632
        %v2813 = vpack.c.bf16 %v2633, %v2633
        %v2814 = vpack.c.bf16 %v2639, %v2639
        %v2815 = vpack.c.bf16 %v2640, %v2640
        %v2816 = vpack.c.bf16 %v2646, %v2646
        %v2817 = vpack.c.bf16 %v2647, %v2647
        %v2818 = vpack.c.bf16 %v2653, %v2653
        %v2819 = vpack.c.bf16 %v2654, %v2654
        %v2820 = vpack.c.bf16 %v2660, %v2660
        %v2821 = vpack.c.bf16 %v2661, %v2661
        %2822 = vst [vmem:[#allocation2] sm:$0xf] %v2742
        %2823 = vst [vmem:[#allocation2 + $0x4] sm:$0x1] %v2743
        %2824 = vst [vmem:[#allocation2 + $0x8] sm:$0xf] %v2744
        %2825 = vst [vmem:[#allocation2 + $0xc] sm:$0x1] %v2745
        %2826 = vst [vmem:[#allocation2 + $0x10] sm:$0xf] %v2746
        %2827 = vst [vmem:[#allocation2 + $0x14] sm:$0x1] %v2747
        %2828 = vst [vmem:[#allocation2 + $0x18] sm:$0xf] %v2748
        %2829 = vst [vmem:[#allocation2 + $0x1c] sm:$0x1] %v2749
        %2830 = vst [vmem:[#allocation2 + $0x20] sm:$0xf] %v2750
        %2831 = vst [vmem:[#allocation2 + $0x24] sm:$0x1] %v2751
        %2832 = vst [vmem:[#allocation2 + $0x28] sm:$0xf] %v2752
        %2833 = vst [vmem:[#allocation2 + $0x2c] sm:$0x1] %v2753
        %2834 = vst [vmem:[#allocation2 + $0x30] sm:$0xf] %v2754
        %2835 = vst [vmem:[#allocation2 + $0x34] sm:$0x1] %v2755
        %2836 = vst [vmem:[#allocation2 + $0x38] sm:$0xf] %v2756
        %2837 = vst [vmem:[#allocation2 + $0x3c] sm:$0x1] %v2757
        %2838 = vst [vmem:[#allocation2 + $0x40] sm:$0xf] %v2758
        %2839 = vst [vmem:[#allocation2 + $0x44] sm:$0x1] %v2759
        %2840 = vst [vmem:[#allocation2 + $0x48] sm:$0xf] %v2760
        %2841 = vst [vmem:[#allocation2 + $0x4c] sm:$0x1] %v2761
        %2842 = vst [vmem:[#allocation2 + $0x50] sm:$0xf] %v2762
        %2843 = vst [vmem:[#allocation2 + $0x54] sm:$0x1] %v2763
        %2844 = vst [vmem:[#allocation2 + $0x58] sm:$0xf] %v2764
        %2845 = vst [vmem:[#allocation2 + $0x5c] sm:$0x1] %v2765
        %2846 = vst [vmem:[#allocation2 + $0x60] sm:$0xf] %v2766
        %2847 = vst [vmem:[#allocation2 + $0x64] sm:$0x1] %v2767
        %2848 = vst [vmem:[#allocation2 + $0x68] sm:$0xf] %v2768
        %2849 = vst [vmem:[#allocation2 + $0x6c] sm:$0x1] %v2769
        %2850 = vst [vmem:[#allocation2 + $0x70] sm:$0xf] %v2770
        %2851 = vst [vmem:[#allocation2 + $0x74] sm:$0x1] %v2771
        %2852 = vst [vmem:[#allocation2 + $0x78] sm:$0xf] %v2772
        %2853 = vst [vmem:[#allocation2 + $0x7c] sm:$0x1] %v2773
        %2854 = vst [vmem:[#allocation2 + $0x80] sm:$0xf] %v2774
        %2855 = vst [vmem:[#allocation2 + $0x84] sm:$0x1] %v2775
        %2856 = vst [vmem:[#allocation2 + $0x88] sm:$0xf] %v2776
        %2857 = vst [vmem:[#allocation2 + $0x8c] sm:$0x1] %v2777
        %2858 = vst [vmem:[#allocation2 + $0x90] sm:$0xf] %v2778
        %2859 = vst [vmem:[#allocation2 + $0x94] sm:$0x1] %v2779
        %2860 = vst [vmem:[#allocation2 + $0x98] sm:$0xf] %v2780
        %2861 = vst [vmem:[#allocation2 + $0x9c] sm:$0x1] %v2781
        %2862 = vst [vmem:[#allocation2 + $0xa0] sm:$0xf] %v2782
        %2863 = vst [vmem:[#allocation2 + $0xa4] sm:$0x1] %v2783
        %2864 = vst [vmem:[#allocation2 + $0xa8] sm:$0xf] %v2784
        %2865 = vst [vmem:[#allocation2 + $0xac] sm:$0x1] %v2785
        %2866 = vst [vmem:[#allocation2 + $0xb0] sm:$0xf] %v2786
        %2867 = vst [vmem:[#allocation2 + $0xb4] sm:$0x1] %v2787
        %2868 = vst [vmem:[#allocation2 + $0xb8] sm:$0xf] %v2788
        %2869 = vst [vmem:[#allocation2 + $0xbc] sm:$0x1] %v2789
        %2870 = vst [vmem:[#allocation2 + $0xc0] sm:$0xf] %v2790
        %2871 = vst [vmem:[#allocation2 + $0xc4] sm:$0x1] %v2791
        %2872 = vst [vmem:[#allocation2 + $0xc8] sm:$0xf] %v2792
        %2873 = vst [vmem:[#allocation2 + $0xcc] sm:$0x1] %v2793
        %2874 = vst [vmem:[#allocation2 + $0xd0] sm:$0xf] %v2794
        %2875 = vst [vmem:[#allocation2 + $0xd4] sm:$0x1] %v2795
        %2876 = vst [vmem:[#allocation2 + $0xd8] sm:$0xf] %v2796
        %2877 = vst [vmem:[#allocation2 + $0xdc] sm:$0x1] %v2797
        %2878 = vst [vmem:[#allocation2 + $0xe0] sm:$0xf] %v2798
        %2879 = vst [vmem:[#allocation2 + $0xe4] sm:$0x1] %v2799
        %2880 = vst [vmem:[#allocation2 + $0xe8] sm:$0xf] %v2800
        %2881 = vst [vmem:[#allocation2 + $0xec] sm:$0x1] %v2801
        %2882 = vst [vmem:[#allocation2 + $0xf0] sm:$0xf] %v2802
        %2883 = vst [vmem:[#allocation2 + $0xf4] sm:$0x1] %v2803
        %2884 = vst [vmem:[#allocation2 + $0xf8] sm:$0xf] %v2804
        %2885 = vst [vmem:[#allocation2 + $0xfc] sm:$0x1] %v2805
        %2886 = vst [vmem:[#allocation2 + $0x100] sm:$0xf] %v2806
        %2887 = vst [vmem:[#allocation2 + $0x104] sm:$0x1] %v2807
        %2888 = vst [vmem:[#allocation2 + $0x108] sm:$0xf] %v2808
        %2889 = vst [vmem:[#allocation2 + $0x10c] sm:$0x1] %v2809
        %2890 = vst [vmem:[#allocation2 + $0x110] sm:$0xf] %v2810
        %2891 = vst [vmem:[#allocation2 + $0x114] sm:$0x1] %v2811
        %2892 = vst [vmem:[#allocation2 + $0x118] sm:$0xf] %v2812
        %2893 = vst [vmem:[#allocation2 + $0x11c] sm:$0x1] %v2813
        %2894 = vst [vmem:[#allocation2 + $0x120] sm:$0xf] %v2814
        %2895 = vst [vmem:[#allocation2 + $0x124] sm:$0x1] %v2815
        %2896 = vst [vmem:[#allocation2 + $0x128] sm:$0xf] %v2816
        %2897 = vst [vmem:[#allocation2 + $0x12c] sm:$0x1] %v2817
        %2898 = vst [vmem:[#allocation2 + $0x130] sm:$0xf] %v2818
        %2899 = vst [vmem:[#allocation2 + $0x134] sm:$0x1] %v2819
        %2900 = vst [vmem:[#allocation2 + $0x138] sm:$0xf] %v2820
        %2901 = vst [vmem:[#allocation2 + $0x13c] sm:$0x1] %v2821
        %v2902 = vld [vmem:[#allocation2] sm:$0xf]
        %v2903 = vld [vmem:[#allocation2 + $0x8] sm:$0xf]
        %v2904 = vld [vmem:[#allocation2 + $0x10] sm:$0xf]
        %v2905 = vld [vmem:[#allocation2 + $0x18] sm:$0xf]
        %v2906 = vld [vmem:[#allocation2 + $0x20] sm:$0xf]
        %v2907 = vld [vmem:[#allocation2 + $0x28] sm:$0xf]
        %v2908 = vld [vmem:[#allocation2 + $0x30] sm:$0xf]
        %v2909 = vld [vmem:[#allocation2 + $0x38] sm:$0xf]
        %v2910 = vld [vmem:[#allocation2 + $0x50] sm:$0xf]
        %v2911 = vld [vmem:[#allocation2 + $0x58] sm:$0xf]
        %v2912 = vld [vmem:[#allocation2 + $0x60] sm:$0xf]
        %v2913 = vld [vmem:[#allocation2 + $0x68] sm:$0xf]
        %v2914 = vld [vmem:[#allocation2 + $0x70] sm:$0xf]
        %v2915 = vld [vmem:[#allocation2 + $0x78] sm:$0xf]
        %v2916 = vld [vmem:[#allocation2 + $0x80] sm:$0xf]
        %v2917 = vld [vmem:[#allocation2 + $0x88] sm:$0xf]
        %v2918 = vld [vmem:[#allocation2 + $0xa0] sm:$0xf]
        %v2919 = vld [vmem:[#allocation2 + $0xa8] sm:$0xf]
        %v2920 = vld [vmem:[#allocation2 + $0xb0] sm:$0xf]
        %v2921 = vld [vmem:[#allocation2 + $0xb8] sm:$0xf]
        %v2922 = vld [vmem:[#allocation2 + $0xc0] sm:$0xf]
        %v2923 = vld [vmem:[#allocation2 + $0xc8] sm:$0xf]
        %v2924 = vld [vmem:[#allocation2 + $0xd0] sm:$0xf]
        %v2925 = vld [vmem:[#allocation2 + $0xd8] sm:$0xf]
        %v2926 = vld [vmem:[#allocation2 + $0xf0] sm:$0xf]
        %v2927 = vld [vmem:[#allocation2 + $0xf8] sm:$0xf]
        %v2928 = vld [vmem:[#allocation2 + $0x100] sm:$0xf]
        %v2929 = vld [vmem:[#allocation2 + $0x108] sm:$0xf]
        %v2930 = vld [vmem:[#allocation2 + $0x110] sm:$0xf]
        %v2931 = vld [vmem:[#allocation2 + $0x118] sm:$0xf]
        %v2932 = vld [vmem:[#allocation2 + $0x120] sm:$0xf]
        %v2933 = vld [vmem:[#allocation2 + $0x128] sm:$0xf]
        %v2934 = vld [vmem:[%s4] sm:$0xf]
        %v2935 = vld [vmem:[%s4 + $0x4] sm:$0xf]
        %v2936 = vld [vmem:[%s4 + $0x8] sm:$0xf]
        %v2937 = vld [vmem:[%s4 + $0xc] sm:$0xf]
        %v2938 = vld [vmem:[%s4 + $0x10] sm:$0xf]
        %v2939 = vld [vmem:[%s4 + $0x14] sm:$0xf]
        %v2940 = vld [vmem:[%s4 + $0x18] sm:$0xf]
        %v2941 = vld [vmem:[%s4 + $0x1c] sm:$0xf]
        %v2942 = vld [vmem:[%s4 + $0x20] sm:$0xf]
        %v2943 = vld [vmem:[%s4 + $0x24] sm:$0xf]
        %v2944 = vld [vmem:[%s4 + $0x28] sm:$0xf]
        %v2945 = vld [vmem:[%s4 + $0x2c] sm:$0xf]
        %v2946 = vld [vmem:[%s4 + $0x30] sm:$0xf]
        %v2947 = vld [vmem:[%s4 + $0x34] sm:$0xf]
        %v2948 = vld [vmem:[%s4 + $0x38] sm:$0xf]
        %v2949 = vld [vmem:[%s4 + $0x3c] sm:$0xf]
        %v2950 = vld [vmem:[#allocation2 + $0x4] sm:$0x1]
        %v2951 = vld [vmem:[#allocation2 + $0xc] sm:$0x1]
        %v2952 = vld [vmem:[#allocation2 + $0x14] sm:$0x1]
        %v2953 = vld [vmem:[#allocation2 + $0x1c] sm:$0x1]
        %v2954 = vld [vmem:[#allocation2 + $0x24] sm:$0x1]
        %v2955 = vld [vmem:[#allocation2 + $0x2c] sm:$0x1]
        %v2956 = vld [vmem:[#allocation2 + $0x34] sm:$0x1]
        %v2957 = vld [vmem:[#allocation2 + $0x3c] sm:$0x1]
        %v2958 = vld [vmem:[#allocation2 + $0x54] sm:$0x1]
        %v2959 = vld [vmem:[#allocation2 + $0x5c] sm:$0x1]
        %v2960 = vld [vmem:[#allocation2 + $0x64] sm:$0x1]
        %v2961 = vld [vmem:[#allocation2 + $0x6c] sm:$0x1]
        %v2962 = vld [vmem:[#allocation2 + $0x74] sm:$0x1]
        %v2963 = vld [vmem:[#allocation2 + $0x7c] sm:$0x1]
        %v2964 = vld [vmem:[#allocation2 + $0x84] sm:$0x1]
        %v2965 = vld [vmem:[#allocation2 + $0x8c] sm:$0x1]
        %v2966 = vld [vmem:[#allocation2 + $0xa4] sm:$0x1]
        %v2967 = vld [vmem:[#allocation2 + $0xac] sm:$0x1]
        %v2968 = vld [vmem:[#allocation2 + $0xb4] sm:$0x1]
        %v2969 = vld [vmem:[#allocation2 + $0xbc] sm:$0x1]
        %v2970 = vld [vmem:[#allocation2 + $0xc4] sm:$0x1]
        %v2971 = vld [vmem:[#allocation2 + $0xcc] sm:$0x1]
        %v2972 = vld [vmem:[#allocation2 + $0xd4] sm:$0x1]
        %v2973 = vld [vmem:[#allocation2 + $0xdc] sm:$0x1]
        %v2974 = vld [vmem:[#allocation2 + $0xf4] sm:$0x1]
        %v2975 = vld [vmem:[#allocation2 + $0xfc] sm:$0x1]
        %v2976 = vld [vmem:[#allocation2 + $0x104] sm:$0x1]
        %v2977 = vld [vmem:[#allocation2 + $0x10c] sm:$0x1]
        %v2978 = vld [vmem:[#allocation2 + $0x114] sm:$0x1]
        %v2979 = vld [vmem:[#allocation2 + $0x11c] sm:$0x1]
        %v2980 = vld [vmem:[#allocation2 + $0x124] sm:$0x1]
        %v2981 = vld [vmem:[#allocation2 + $0x12c] sm:$0x1]
        %vm2982 = vsmask.f32 3328
        %vm2983 = vsmask.f32 7440
        %vm2984 = vmor %vm2982, %vm2983
        %v2986 = vshrl.u32 %v2902, 16
        %v2988 = vrot.slane %v2986, 4
        %v2989 = vshll.u32 %v2902, 16
        %v2991 = vrot.slane %v2989, 5
        %v2992 = vor.u32 %v2988, %v2991
        %v2993 = vrot.slane %v2992, 4
        %v2995 = vshll.u32 %v2950, 16
        %v2997 = vrot.slane %v2995, 5
        %v2998 = vsel %vm2984, %v2993, %v2997
        %v3000 = vshrl.u32 %v2903, 16
        %v3002 = vrot.slane %v3000, 4
        %v3003 = vshll.u32 %v2903, 16
        %v3005 = vrot.slane %v3003, 5
        %v3006 = vor.u32 %v3002, %v3005
        %v3007 = vrot.slane %v3006, 4
        %v3009 = vshll.u32 %v2951, 16
        %v3011 = vrot.slane %v3009, 5
        %v3012 = vsel %vm2984, %v3007, %v3011
        %v3014 = vshrl.u32 %v2904, 16
        %v3016 = vrot.slane %v3014, 4
        %v3017 = vshll.u32 %v2904, 16
        %v3019 = vrot.slane %v3017, 5
        %v3020 = vor.u32 %v3016, %v3019
        %v3021 = vrot.slane %v3020, 4
        %v3023 = vshll.u32 %v2952, 16
        %v3025 = vrot.slane %v3023, 5
        %v3026 = vsel %vm2984, %v3021, %v3025
        %v3028 = vshrl.u32 %v2905, 16
        %v3030 = vrot.slane %v3028, 4
        %v3031 = vshll.u32 %v2905, 16
        %v3033 = vrot.slane %v3031, 5
        %v3034 = vor.u32 %v3030, %v3033
        %v3035 = vrot.slane %v3034, 4
        %v3037 = vshll.u32 %v2953, 16
        %v3039 = vrot.slane %v3037, 5
        %v3040 = vsel %vm2984, %v3035, %v3039
        %v3042 = vshrl.u32 %v2906, 16
        %v3044 = vrot.slane %v3042, 4
        %v3045 = vshll.u32 %v2906, 16
        %v3047 = vrot.slane %v3045, 5
        %v3048 = vor.u32 %v3044, %v3047
        %v3049 = vrot.slane %v3048, 4
        %v3051 = vshll.u32 %v2954, 16
        %v3053 = vrot.slane %v3051, 5
        %v3054 = vsel %vm2984, %v3049, %v3053
        %v3056 = vshrl.u32 %v2907, 16
        %v3058 = vrot.slane %v3056, 4
        %v3059 = vshll.u32 %v2907, 16
        %v3061 = vrot.slane %v3059, 5
        %v3062 = vor.u32 %v3058, %v3061
        %v3063 = vrot.slane %v3062, 4
        %v3065 = vshll.u32 %v2955, 16
        %v3067 = vrot.slane %v3065, 5
        %v3068 = vsel %vm2984, %v3063, %v3067
        %v3070 = vshrl.u32 %v2908, 16
        %v3072 = vrot.slane %v3070, 4
        %v3073 = vshll.u32 %v2908, 16
        %v3075 = vrot.slane %v3073, 5
        %v3076 = vor.u32 %v3072, %v3075
        %v3077 = vrot.slane %v3076, 4
        %v3079 = vshll.u32 %v2956, 16
        %v3081 = vrot.slane %v3079, 5
        %v3082 = vsel %vm2984, %v3077, %v3081
        %v3084 = vshrl.u32 %v2909, 16
        %v3086 = vrot.slane %v3084, 4
        %v3087 = vshll.u32 %v2909, 16
        %v3089 = vrot.slane %v3087, 5
        %v3090 = vor.u32 %v3086, %v3089
        %v3091 = vrot.slane %v3090, 4
        %v3093 = vshll.u32 %v2957, 16
        %v3095 = vrot.slane %v3093, 5
        %v3096 = vsel %vm2984, %v3091, %v3095
        %v3098 = vshrl.u32 %v2910, 16
        %v3100 = vrot.slane %v3098, 4
        %v3101 = vshll.u32 %v2910, 16
        %v3103 = vrot.slane %v3101, 5
        %v3104 = vor.u32 %v3100, %v3103
        %v3105 = vrot.slane %v3104, 4
        %v3107 = vshll.u32 %v2958, 16
        %v3109 = vrot.slane %v3107, 5
        %v3110 = vsel %vm2984, %v3105, %v3109
        %v3112 = vshrl.u32 %v2911, 16
        %v3114 = vrot.slane %v3112, 4
        %v3115 = vshll.u32 %v2911, 16
        %v3117 = vrot.slane %v3115, 5
        %v3118 = vor.u32 %v3114, %v3117
        %v3119 = vrot.slane %v3118, 4
        %v3121 = vshll.u32 %v2959, 16
        %v3123 = vrot.slane %v3121, 5
        %v3124 = vsel %vm2984, %v3119, %v3123
        %v3126 = vshrl.u32 %v2912, 16
        %v3128 = vrot.slane %v3126, 4
        %v3129 = vshll.u32 %v2912, 16
        %v3131 = vrot.slane %v3129, 5
        %v3132 = vor.u32 %v3128, %v3131
        %v3133 = vrot.slane %v3132, 4
        %v3135 = vshll.u32 %v2960, 16
        %v3137 = vrot.slane %v3135, 5
        %v3138 = vsel %vm2984, %v3133, %v3137
        %v3140 = vshrl.u32 %v2913, 16
        %v3142 = vrot.slane %v3140, 4
        %v3143 = vshll.u32 %v2913, 16
        %v3145 = vrot.slane %v3143, 5
        %v3146 = vor.u32 %v3142, %v3145
        %v3147 = vrot.slane %v3146, 4
        %v3149 = vshll.u32 %v2961, 16
        %v3151 = vrot.slane %v3149, 5
        %v3152 = vsel %vm2984, %v3147, %v3151
        %v3154 = vshrl.u32 %v2914, 16
        %v3156 = vrot.slane %v3154, 4
        %v3157 = vshll.u32 %v2914, 16
        %v3159 = vrot.slane %v3157, 5
        %v3160 = vor.u32 %v3156, %v3159
        %v3161 = vrot.slane %v3160, 4
        %v3163 = vshll.u32 %v2962, 16
        %v3165 = vrot.slane %v3163, 5
        %v3166 = vsel %vm2984, %v3161, %v3165
        %v3168 = vshrl.u32 %v2915, 16
        %v3170 = vrot.slane %v3168, 4
        %v3171 = vshll.u32 %v2915, 16
        %v3173 = vrot.slane %v3171, 5
        %v3174 = vor.u32 %v3170, %v3173
        %v3175 = vrot.slane %v3174, 4
        %v3177 = vshll.u32 %v2963, 16
        %v3179 = vrot.slane %v3177, 5
        %v3180 = vsel %vm2984, %v3175, %v3179
        %v3182 = vshrl.u32 %v2916, 16
        %v3184 = vrot.slane %v3182, 4
        %v3185 = vshll.u32 %v2916, 16
        %v3187 = vrot.slane %v3185, 5
        %v3188 = vor.u32 %v3184, %v3187
        %v3189 = vrot.slane %v3188, 4
        %v3191 = vshll.u32 %v2964, 16
        %v3193 = vrot.slane %v3191, 5
        %v3194 = vsel %vm2984, %v3189, %v3193
        %v3196 = vshrl.u32 %v2917, 16
        %v3198 = vrot.slane %v3196, 4
        %v3199 = vshll.u32 %v2917, 16
        %v3201 = vrot.slane %v3199, 5
        %v3202 = vor.u32 %v3198, %v3201
        %v3203 = vrot.slane %v3202, 4
        %v3205 = vshll.u32 %v2965, 16
        %v3207 = vrot.slane %v3205, 5
        %v3208 = vsel %vm2984, %v3203, %v3207
        %v3210 = vshrl.u32 %v2918, 16
        %v3212 = vrot.slane %v3210, 4
        %v3213 = vshll.u32 %v2918, 16
        %v3215 = vrot.slane %v3213, 5
        %v3216 = vor.u32 %v3212, %v3215
        %v3217 = vrot.slane %v3216, 4
        %v3219 = vshll.u32 %v2966, 16
        %v3221 = vrot.slane %v3219, 5
        %v3222 = vsel %vm2984, %v3217, %v3221
        %v3224 = vshrl.u32 %v2919, 16
        %v3226 = vrot.slane %v3224, 4
        %v3227 = vshll.u32 %v2919, 16
        %v3229 = vrot.slane %v3227, 5
        %v3230 = vor.u32 %v3226, %v3229
        %v3231 = vrot.slane %v3230, 4
        %v3233 = vshll.u32 %v2967, 16
        %v3235 = vrot.slane %v3233, 5
        %v3236 = vsel %vm2984, %v3231, %v3235
        %v3238 = vshrl.u32 %v2920, 16
        %v3240 = vrot.slane %v3238, 4
        %v3241 = vshll.u32 %v2920, 16
        %v3243 = vrot.slane %v3241, 5
        %v3244 = vor.u32 %v3240, %v3243
        %v3245 = vrot.slane %v3244, 4
        %v3247 = vshll.u32 %v2968, 16
        %v3249 = vrot.slane %v3247, 5
        %v3250 = vsel %vm2984, %v3245, %v3249
        %v3252 = vshrl.u32 %v2921, 16
        %v3254 = vrot.slane %v3252, 4
        %v3255 = vshll.u32 %v2921, 16
        %v3257 = vrot.slane %v3255, 5
        %v3258 = vor.u32 %v3254, %v3257
        %v3259 = vrot.slane %v3258, 4
        %v3261 = vshll.u32 %v2969, 16
        %v3263 = vrot.slane %v3261, 5
        %v3264 = vsel %vm2984, %v3259, %v3263
        %v3266 = vshrl.u32 %v2922, 16
        %v3268 = vrot.slane %v3266, 4
        %v3269 = vshll.u32 %v2922, 16
        %v3271 = vrot.slane %v3269, 5
        %v3272 = vor.u32 %v3268, %v3271
        %v3273 = vrot.slane %v3272, 4
        %v3275 = vshll.u32 %v2970, 16
        %v3277 = vrot.slane %v3275, 5
        %v3278 = vsel %vm2984, %v3273, %v3277
        %v3280 = vshrl.u32 %v2923, 16
        %v3282 = vrot.slane %v3280, 4
        %v3283 = vshll.u32 %v2923, 16
        %v3285 = vrot.slane %v3283, 5
        %v3286 = vor.u32 %v3282, %v3285
        %v3287 = vrot.slane %v3286, 4
        %v3289 = vshll.u32 %v2971, 16
        %v3291 = vrot.slane %v3289, 5
        %v3292 = vsel %vm2984, %v3287, %v3291
        %v3294 = vshrl.u32 %v2924, 16
        %v3296 = vrot.slane %v3294, 4
        %v3297 = vshll.u32 %v2924, 16
        %v3299 = vrot.slane %v3297, 5
        %v3300 = vor.u32 %v3296, %v3299
        %v3301 = vrot.slane %v3300, 4
        %v3303 = vshll.u32 %v2972, 16
        %v3305 = vrot.slane %v3303, 5
        %v3306 = vsel %vm2984, %v3301, %v3305
        %v3308 = vshrl.u32 %v2925, 16
        %v3310 = vrot.slane %v3308, 4
        %v3311 = vshll.u32 %v2925, 16
        %v3313 = vrot.slane %v3311, 5
        %v3314 = vor.u32 %v3310, %v3313
        %v3315 = vrot.slane %v3314, 4
        %v3317 = vshll.u32 %v2973, 16
        %v3319 = vrot.slane %v3317, 5
        %v3320 = vsel %vm2984, %v3315, %v3319
        %v3322 = vshrl.u32 %v2926, 16
        %v3324 = vrot.slane %v3322, 4
        %v3325 = vshll.u32 %v2926, 16
        %v3327 = vrot.slane %v3325, 5
        %v3328 = vor.u32 %v3324, %v3327
        %v3329 = vrot.slane %v3328, 4
        %v3331 = vshll.u32 %v2974, 16
        %v3333 = vrot.slane %v3331, 5
        %v3334 = vsel %vm2984, %v3329, %v3333
        %v3336 = vshrl.u32 %v2927, 16
        %v3338 = vrot.slane %v3336, 4
        %v3339 = vshll.u32 %v2927, 16
        %v3341 = vrot.slane %v3339, 5
        %v3342 = vor.u32 %v3338, %v3341
        %v3343 = vrot.slane %v3342, 4
        %v3345 = vshll.u32 %v2975, 16
        %v3347 = vrot.slane %v3345, 5
        %v3348 = vsel %vm2984, %v3343, %v3347
        %v3350 = vshrl.u32 %v2928, 16
        %v3352 = vrot.slane %v3350, 4
        %v3353 = vshll.u32 %v2928, 16
        %v3355 = vrot.slane %v3353, 5
        %v3356 = vor.u32 %v3352, %v3355
        %v3357 = vrot.slane %v3356, 4
        %v3359 = vshll.u32 %v2976, 16
        %v3361 = vrot.slane %v3359, 5
        %v3362 = vsel %vm2984, %v3357, %v3361
        %v3364 = vshrl.u32 %v2929, 16
        %v3366 = vrot.slane %v3364, 4
        %v3367 = vshll.u32 %v2929, 16
        %v3369 = vrot.slane %v3367, 5
        %v3370 = vor.u32 %v3366, %v3369
        %v3371 = vrot.slane %v3370, 4
        %v3373 = vshll.u32 %v2977, 16
        %v3375 = vrot.slane %v3373, 5
        %v3376 = vsel %vm2984, %v3371, %v3375
        %v3378 = vshrl.u32 %v2930, 16
        %v3380 = vrot.slane %v3378, 4
        %v3381 = vshll.u32 %v2930, 16
        %v3383 = vrot.slane %v3381, 5
        %v3384 = vor.u32 %v3380, %v3383
        %v3385 = vrot.slane %v3384, 4
        %v3387 = vshll.u32 %v2978, 16
        %v3389 = vrot.slane %v3387, 5
        %v3390 = vsel %vm2984, %v3385, %v3389
        %v3392 = vshrl.u32 %v2931, 16
        %v3394 = vrot.slane %v3392, 4
        %v3395 = vshll.u32 %v2931, 16
        %v3397 = vrot.slane %v3395, 5
        %v3398 = vor.u32 %v3394, %v3397
        %v3399 = vrot.slane %v3398, 4
        %v3401 = vshll.u32 %v2979, 16
        %v3403 = vrot.slane %v3401, 5
        %v3404 = vsel %vm2984, %v3399, %v3403
        %v3406 = vshrl.u32 %v2932, 16
        %v3408 = vrot.slane %v3406, 4
        %v3409 = vshll.u32 %v2932, 16
        %v3411 = vrot.slane %v3409, 5
        %v3412 = vor.u32 %v3408, %v3411
        %v3413 = vrot.slane %v3412, 4
        %v3415 = vshll.u32 %v2980, 16
        %v3417 = vrot.slane %v3415, 5
        %v3418 = vsel %vm2984, %v3413, %v3417
        %v3420 = vshrl.u32 %v2933, 16
        %v3422 = vrot.slane %v3420, 4
        %v3423 = vshll.u32 %v2933, 16
        %v3425 = vrot.slane %v3423, 5
        %v3426 = vor.u32 %v3422, %v3425
        %v3427 = vrot.slane %v3426, 4
        %v3429 = vshll.u32 %v2981, 16
        %v3431 = vrot.slane %v3429, 5
        %v3432 = vsel %vm2984, %v3427, %v3431
        %s3433 = scalar_lea.vmem %s4, 64
        %v3434 = vld [vmem:[%s3433] sm:$0xf]
        %v3435 = vld [vmem:[%s3433 + $0x4] sm:$0xf]
        %v3436 = vld [vmem:[%s3433 + $0x8] sm:$0xf]
        %v3437 = vld [vmem:[%s3433 + $0xc] sm:$0xf]
        %v3438 = vld [vmem:[%s3433 + $0x10] sm:$0xf]
        %v3439 = vld [vmem:[%s3433 + $0x14] sm:$0xf]
        %v3440 = vld [vmem:[%s3433 + $0x18] sm:$0xf]
        %v3441 = vld [vmem:[%s3433 + $0x1c] sm:$0xf]
        %v3442 = vld [vmem:[%s3433 + $0x20] sm:$0xf]
        %v3443 = vld [vmem:[%s3433 + $0x24] sm:$0xf]
        %v3444 = vld [vmem:[%s3433 + $0x28] sm:$0xf]
        %v3445 = vld [vmem:[%s3433 + $0x2c] sm:$0xf]
        %v3446 = vld [vmem:[%s3433 + $0x30] sm:$0xf]
        %v3447 = vld [vmem:[%s3433 + $0x34] sm:$0xf]
        %v3448 = vld [vmem:[%s3433 + $0x38] sm:$0xf]
        %v3449 = vld [vmem:[%s3433 + $0x3c] sm:$0xf]
        %v3450 = vunpack.c.l.b16 %v2998
        %v3451 = vunpack.c.l.b16 %v3012
        %v3452 = vunpack.c.l.b16 %v3026
        %v3453 = vunpack.c.l.b16 %v3040
        %v3454 = vunpack.c.l.b16 %v3054
        %v3455 = vunpack.c.l.b16 %v3068
        %v3456 = vunpack.c.l.b16 %v3082
        %v3457 = vunpack.c.l.b16 %v3096
        %v3458 = vunpack.c.l.b16 %v3110
        %v3459 = vunpack.c.l.b16 %v3124
        %v3460 = vunpack.c.l.b16 %v3138
        %v3461 = vunpack.c.l.b16 %v3152
        %v3462 = vunpack.c.l.b16 %v3166
        %v3463 = vunpack.c.l.b16 %v3180
        %v3464 = vunpack.c.l.b16 %v3194
        %v3465 = vunpack.c.l.b16 %v3208
        %v3466 = vunpack.c.l.b16 %v3222
        %v3467 = vunpack.c.l.b16 %v3236
        %v3468 = vunpack.c.l.b16 %v3250
        %v3469 = vunpack.c.l.b16 %v3264
        %v3470 = vunpack.c.l.b16 %v3278
        %v3471 = vunpack.c.l.b16 %v3292
        %v3472 = vunpack.c.l.b16 %v3306
        %v3473 = vunpack.c.l.b16 %v3320
        %v3474 = vunpack.c.l.b16 %v3334
        %v3475 = vunpack.c.l.b16 %v3348
        %v3476 = vunpack.c.l.b16 %v3362
        %v3477 = vunpack.c.l.b16 %v3376
        %v3478 = vunpack.c.l.b16 %v3390
        %v3479 = vunpack.c.l.b16 %v3404
        %v3480 = vunpack.c.l.b16 %v3418
        %v3481 = vunpack.c.l.b16 %v3432
        %v3482 = vpack.c.b16 %v3451, %v3450
        %v3483 = vpack.c.b16 %v3453, %v3452
        %v3484 = vpack.c.b16 %v3455, %v3454
        %v3485 = vpack.c.b16 %v3457, %v3456
        %v3486 = vpack.c.b16 %v3459, %v3458
        %v3487 = vpack.c.b16 %v3461, %v3460
        %v3488 = vpack.c.b16 %v3463, %v3462
        %v3489 = vpack.c.b16 %v3465, %v3464
        %v3490 = vpack.c.b16 %v3467, %v3466
        %v3491 = vpack.c.b16 %v3469, %v3468
        %v3492 = vpack.c.b16 %v3471, %v3470
        %v3493 = vpack.c.b16 %v3473, %v3472
        %v3494 = vpack.c.b16 %v3475, %v3474
        %v3495 = vpack.c.b16 %v3477, %v3476
        %v3496 = vpack.c.b16 %v3479, %v3478
        %v3497 = vpack.c.b16 %v3481, %v3480
        %v3530 = vunpack.c.l.b16 %v3434
        %v3531 = vunpack.c.l.b16 %v3435
        %v3532 = vunpack.c.l.b16 %v3436
        %v3533 = vunpack.c.l.b16 %v3437
        %v3534 = vunpack.c.l.b16 %v3438
        %v3535 = vunpack.c.l.b16 %v3439
        %v3536 = vunpack.c.l.b16 %v3440
        %v3537 = vunpack.c.l.b16 %v3441
        %v3538 = vunpack.c.l.b16 %v3442
        %v3539 = vunpack.c.l.b16 %v3443
        %v3540 = vunpack.c.l.b16 %v3444
        %v3541 = vunpack.c.l.b16 %v3445
        %v3542 = vunpack.c.l.b16 %v3446
        %v3543 = vunpack.c.l.b16 %v3447
        %v3544 = vunpack.c.l.b16 %v3448
        %v3545 = vunpack.c.l.b16 %v3449
        %v3546 = vpack.c.b16 %v3531, %v3530
        %v3547 = vpack.c.b16 %v3533, %v3532
        %v3548 = vpack.c.b16 %v3535, %v3534
        %v3549 = vpack.c.b16 %v3537, %v3536
        %v3550 = vpack.c.b16 %v3539, %v3538
        %v3551 = vpack.c.b16 %v3541, %v3540
        %v3552 = vpack.c.b16 %v3543, %v3542
        %v3553 = vpack.c.b16 %v3545, %v3544
        %3562 = vmatpush.bf16.msra.mxu0 %v3553
        %3563 = vmatpush.bf16.msra.mxu0 %v3552
        %3564 = vmatpush.bf16.msra.mxu0 %v3551
        %3565 = vmatpush.bf16.msra.mxu0 %v3550
        %3566 = vmatpush.bf16.msra.mxu0 %v3549
        %3567 = vmatpush.bf16.msra.mxu0 %v3548
        %3568 = vmatpush.bf16.msra.mxu0 %v3547
        %3569 = vmatpush.bf16.msra.mxu0 %v3546
        %3570 = vmatmul.bf16.gmra.mxu0 %v3482
        %v3571 = vpop.f32.mrf.mxu0
        %v3572 = vadd.f32 0.0, %v3571
        %v3573 = vpop.f32.mrf.mxu0
        %v3574 = vadd.f32 0.0, %v3573
        %3575 = vmatmul.bf16.gmra.mxu0 %v3483
        %v3576 = vpop.f32.mrf.mxu0
        %v3577 = vadd.f32 0.0, %v3576
        %v3578 = vpop.f32.mrf.mxu0
        %v3579 = vadd.f32 0.0, %v3578
        %3580 = vmatmul.bf16.gmra.mxu0 %v3484
        %v3581 = vpop.f32.mrf.mxu0
        %v3582 = vadd.f32 0.0, %v3581
        %v3583 = vpop.f32.mrf.mxu0
        %v3584 = vadd.f32 0.0, %v3583
        %3585 = vmatmul.bf16.gmra.mxu0 %v3485
        %v3586 = vpop.f32.mrf.mxu0
        %v3587 = vadd.f32 0.0, %v3586
        %v3588 = vpop.f32.mrf.mxu0
        %v3589 = vadd.f32 0.0, %v3588
        %3590 = vmatmul.bf16.gmra.mxu0 %v3486
        %v3591 = vpop.f32.mrf.mxu0
        %v3592 = vadd.f32 0.0, %v3591
        %v3593 = vpop.f32.mrf.mxu0
        %v3594 = vadd.f32 0.0, %v3593
        %3595 = vmatmul.bf16.gmra.mxu0 %v3487
        %v3596 = vpop.f32.mrf.mxu0
        %v3597 = vadd.f32 0.0, %v3596
        %v3598 = vpop.f32.mrf.mxu0
        %v3599 = vadd.f32 0.0, %v3598
        %3600 = vmatmul.bf16.gmra.mxu0 %v3488
        %v3601 = vpop.f32.mrf.mxu0
        %v3602 = vadd.f32 0.0, %v3601
        %v3603 = vpop.f32.mrf.mxu0
        %v3604 = vadd.f32 0.0, %v3603
        %3605 = vmatmul.bf16.gmra.mxu0 %v3489
        %v3606 = vpop.f32.mrf.mxu0
        %v3607 = vadd.f32 0.0, %v3606
        %v3608 = vpop.f32.mrf.mxu0
        %v3609 = vadd.f32 0.0, %v3608
        %3610 = vmatmul.bf16.gmra.mxu0 %v3490
        %v3611 = vpop.f32.mrf.mxu0
        %v3612 = vadd.f32 0.0, %v3611
        %v3613 = vpop.f32.mrf.mxu0
        %v3614 = vadd.f32 0.0, %v3613
        %3615 = vmatmul.bf16.gmra.mxu0 %v3491
        %v3616 = vpop.f32.mrf.mxu0
        %v3617 = vadd.f32 0.0, %v3616
        %v3618 = vpop.f32.mrf.mxu0
        %v3619 = vadd.f32 0.0, %v3618
        %3620 = vmatmul.bf16.gmra.mxu0 %v3492
        %v3621 = vpop.f32.mrf.mxu0
        %v3622 = vadd.f32 0.0, %v3621
        %v3623 = vpop.f32.mrf.mxu0
        %v3624 = vadd.f32 0.0, %v3623
        %3625 = vmatmul.bf16.gmra.mxu0 %v3493
        %v3626 = vpop.f32.mrf.mxu0
        %v3627 = vadd.f32 0.0, %v3626
        %v3628 = vpop.f32.mrf.mxu0
        %v3629 = vadd.f32 0.0, %v3628
        %3630 = vmatmul.bf16.gmra.mxu0 %v3494
        %v3631 = vpop.f32.mrf.mxu0
        %v3632 = vadd.f32 0.0, %v3631
        %v3633 = vpop.f32.mrf.mxu0
        %v3634 = vadd.f32 0.0, %v3633
        %3635 = vmatmul.bf16.gmra.mxu0 %v3495
        %v3636 = vpop.f32.mrf.mxu0
        %v3637 = vadd.f32 0.0, %v3636
        %v3638 = vpop.f32.mrf.mxu0
        %v3639 = vadd.f32 0.0, %v3638
        %3640 = vmatmul.bf16.gmra.mxu0 %v3496
        %v3641 = vpop.f32.mrf.mxu0
        %v3642 = vadd.f32 0.0, %v3641
        %v3643 = vpop.f32.mrf.mxu0
        %v3644 = vadd.f32 0.0, %v3643
        %3645 = vmatmul.bf16.gmra.mxu0 %v3497
        %v3646 = vpop.f32.mrf.mxu0
        %v3647 = vadd.f32 0.0, %v3646
        %v3648 = vpop.f32.mrf.mxu0
        %v3649 = vadd.f32 0.0, %v3648
        %3650 = vdwg.mxu0
        %v3683 = vunpack.c.l.b16 %v2902
        %v3684 = vunpack.c.l.b16 %v2903
        %v3685 = vunpack.c.l.b16 %v2904
        %v3686 = vunpack.c.l.b16 %v2905
        %v3687 = vunpack.c.l.b16 %v2906
        %v3688 = vunpack.c.l.b16 %v2907
        %v3689 = vunpack.c.l.b16 %v2908
        %v3690 = vunpack.c.l.b16 %v2909
        %v3691 = vunpack.c.l.b16 %v2910
        %v3692 = vunpack.c.l.b16 %v2911
        %v3693 = vunpack.c.l.b16 %v2912
        %v3694 = vunpack.c.l.b16 %v2913
        %v3695 = vunpack.c.l.b16 %v2914
        %v3696 = vunpack.c.l.b16 %v2915
        %v3697 = vunpack.c.l.b16 %v2916
        %v3698 = vunpack.c.l.b16 %v2917
        %v3699 = vunpack.c.l.b16 %v2918
        %v3700 = vunpack.c.l.b16 %v2919
        %v3701 = vunpack.c.l.b16 %v2920
        %v3702 = vunpack.c.l.b16 %v2921
        %v3703 = vunpack.c.l.b16 %v2922
        %v3704 = vunpack.c.l.b16 %v2923
        %v3705 = vunpack.c.l.b16 %v2924
        %v3706 = vunpack.c.l.b16 %v2925
        %v3707 = vunpack.c.l.b16 %v2926
        %v3708 = vunpack.c.l.b16 %v2927
        %v3709 = vunpack.c.l.b16 %v2928
        %v3710 = vunpack.c.l.b16 %v2929
        %v3711 = vunpack.c.l.b16 %v2930
        %v3712 = vunpack.c.l.b16 %v2931
        %v3713 = vunpack.c.l.b16 %v2932
        %v3714 = vunpack.c.l.b16 %v2933
        %v3715 = vpack.c.b16 %v3684, %v3683
        %v3716 = vpack.c.b16 %v3686, %v3685
        %v3717 = vpack.c.b16 %v3688, %v3687
        %v3718 = vpack.c.b16 %v3690, %v3689
        %v3719 = vpack.c.b16 %v3692, %v3691
        %v3720 = vpack.c.b16 %v3694, %v3693
        %v3721 = vpack.c.b16 %v3696, %v3695
        %v3722 = vpack.c.b16 %v3698, %v3697
        %v3723 = vpack.c.b16 %v3700, %v3699
        %v3724 = vpack.c.b16 %v3702, %v3701
        %v3725 = vpack.c.b16 %v3704, %v3703
        %v3726 = vpack.c.b16 %v3706, %v3705
        %v3727 = vpack.c.b16 %v3708, %v3707
        %v3728 = vpack.c.b16 %v3710, %v3709
        %v3729 = vpack.c.b16 %v3712, %v3711
        %v3730 = vpack.c.b16 %v3714, %v3713
        %v3763 = vunpack.c.l.b16 %v2934
        %v3764 = vunpack.c.l.b16 %v2935
        %v3765 = vunpack.c.l.b16 %v2936
        %v3766 = vunpack.c.l.b16 %v2937
        %v3767 = vunpack.c.l.b16 %v2938
        %v3768 = vunpack.c.l.b16 %v2939
        %v3769 = vunpack.c.l.b16 %v2940
        %v3770 = vunpack.c.l.b16 %v2941
        %v3771 = vunpack.c.l.b16 %v2942
        %v3772 = vunpack.c.l.b16 %v2943
        %v3773 = vunpack.c.l.b16 %v2944
        %v3774 = vunpack.c.l.b16 %v2945
        %v3775 = vunpack.c.l.b16 %v2946
        %v3776 = vunpack.c.l.b16 %v2947
        %v3777 = vunpack.c.l.b16 %v2948
        %v3778 = vunpack.c.l.b16 %v2949
        %v3779 = vpack.c.b16 %v3764, %v3763
        %v3780 = vpack.c.b16 %v3766, %v3765
        %v3781 = vpack.c.b16 %v3768, %v3767
        %v3782 = vpack.c.b16 %v3770, %v3769
        %v3783 = vpack.c.b16 %v3772, %v3771
        %v3784 = vpack.c.b16 %v3774, %v3773
        %v3785 = vpack.c.b16 %v3776, %v3775
        %v3786 = vpack.c.b16 %v3778, %v3777
        %3795 = vmatpush.bf16.msra.mxu0 %v3786
        %3796 = vmatpush.bf16.msra.mxu0 %v3785
        %3797 = vmatpush.bf16.msra.mxu0 %v3784
        %3798 = vmatpush.bf16.msra.mxu0 %v3783
        %3799 = vmatpush.bf16.msra.mxu0 %v3782
        %3800 = vmatpush.bf16.msra.mxu0 %v3781
        %3801 = vmatpush.bf16.msra.mxu0 %v3780
        %3802 = vmatpush.bf16.msra.mxu0 %v3779
        %3803 = vmatmul.bf16.gmra.mxu0 %v3715
        %v3804 = vpop.f32.mrf.mxu0
        %v3805 = vadd.f32 %v3572, %v3804
        %v3806 = vpop.f32.mrf.mxu0
        %v3807 = vadd.f32 %v3574, %v3806
        %3808 = vmatmul.bf16.gmra.mxu0 %v3716
        %v3809 = vpop.f32.mrf.mxu0
        %v3810 = vadd.f32 %v3577, %v3809
        %v3811 = vpop.f32.mrf.mxu0
        %v3812 = vadd.f32 %v3579, %v3811
        %3813 = vmatmul.bf16.gmra.mxu0 %v3717
        %v3814 = vpop.f32.mrf.mxu0
        %v3815 = vadd.f32 %v3582, %v3814
        %v3816 = vpop.f32.mrf.mxu0
        %v3817 = vadd.f32 %v3584, %v3816
        %3818 = vmatmul.bf16.gmra.mxu0 %v3718
        %v3819 = vpop.f32.mrf.mxu0
        %v3820 = vadd.f32 %v3587, %v3819
        %v3821 = vpop.f32.mrf.mxu0
        %v3822 = vadd.f32 %v3589, %v3821
        %3823 = vmatmul.bf16.gmra.mxu0 %v3719
        %v3824 = vpop.f32.mrf.mxu0
        %v3825 = vadd.f32 %v3592, %v3824
        %v3826 = vpop.f32.mrf.mxu0
        %v3827 = vadd.f32 %v3594, %v3826
        %3828 = vmatmul.bf16.gmra.mxu0 %v3720
        %v3829 = vpop.f32.mrf.mxu0
        %v3830 = vadd.f32 %v3597, %v3829
        %v3831 = vpop.f32.mrf.mxu0
        %v3832 = vadd.f32 %v3599, %v3831
        %3833 = vmatmul.bf16.gmra.mxu0 %v3721
        %v3834 = vpop.f32.mrf.mxu0
        %v3835 = vadd.f32 %v3602, %v3834
        %v3836 = vpop.f32.mrf.mxu0
        %v3837 = vadd.f32 %v3604, %v3836
        %3838 = vmatmul.bf16.gmra.mxu0 %v3722
        %v3839 = vpop.f32.mrf.mxu0
        %v3840 = vadd.f32 %v3607, %v3839
        %v3841 = vpop.f32.mrf.mxu0
        %v3842 = vadd.f32 %v3609, %v3841
        %3843 = vmatmul.bf16.gmra.mxu0 %v3723
        %v3844 = vpop.f32.mrf.mxu0
        %v3845 = vadd.f32 %v3612, %v3844
        %v3846 = vpop.f32.mrf.mxu0
        %v3847 = vadd.f32 %v3614, %v3846
        %3848 = vmatmul.bf16.gmra.mxu0 %v3724
        %v3849 = vpop.f32.mrf.mxu0
        %v3850 = vadd.f32 %v3617, %v3849
        %v3851 = vpop.f32.mrf.mxu0
        %v3852 = vadd.f32 %v3619, %v3851
        %3853 = vmatmul.bf16.gmra.mxu0 %v3725
        %v3854 = vpop.f32.mrf.mxu0
        %v3855 = vadd.f32 %v3622, %v3854
        %v3856 = vpop.f32.mrf.mxu0
        %v3857 = vadd.f32 %v3624, %v3856
        %3858 = vmatmul.bf16.gmra.mxu0 %v3726
        %v3859 = vpop.f32.mrf.mxu0
        %v3860 = vadd.f32 %v3627, %v3859
        %v3861 = vpop.f32.mrf.mxu0
        %v3862 = vadd.f32 %v3629, %v3861
        %3863 = vmatmul.bf16.gmra.mxu0 %v3727
        %v3864 = vpop.f32.mrf.mxu0
        %v3865 = vadd.f32 %v3632, %v3864
        %v3866 = vpop.f32.mrf.mxu0
        %v3867 = vadd.f32 %v3634, %v3866
        %3868 = vmatmul.bf16.gmra.mxu0 %v3728
        %v3869 = vpop.f32.mrf.mxu0
        %v3870 = vadd.f32 %v3637, %v3869
        %v3871 = vpop.f32.mrf.mxu0
        %v3872 = vadd.f32 %v3639, %v3871
        %3873 = vmatmul.bf16.gmra.mxu0 %v3729
        %v3874 = vpop.f32.mrf.mxu0
        %v3875 = vadd.f32 %v3642, %v3874
        %v3876 = vpop.f32.mrf.mxu0
        %v3877 = vadd.f32 %v3644, %v3876
        %3878 = vmatmul.bf16.gmra.mxu0 %v3730
        %v3879 = vpop.f32.mrf.mxu0
        %v3880 = vadd.f32 %v3647, %v3879
        %v3881 = vpop.f32.mrf.mxu0
        %v3882 = vadd.f32 %v3649, %v3881
        %3883 = vdwg.mxu0
        %v3884 = vld [vmem:[#allocation2] sm:$0xe]
        %v3885 = vld [vmem:[#allocation2 + $0x8] sm:$0xe]
        %v3886 = vld [vmem:[#allocation2 + $0x10] sm:$0xe]
        %v3887 = vld [vmem:[#allocation2 + $0x18] sm:$0xe]
        %v3888 = vld [vmem:[#allocation2 + $0x20] sm:$0xe]
        %v3889 = vld [vmem:[#allocation2 + $0x28] sm:$0xe]
        %v3890 = vld [vmem:[#allocation2 + $0x30] sm:$0xe]
        %v3891 = vld [vmem:[#allocation2 + $0x38] sm:$0xe]
        %v3892 = vld [vmem:[#allocation2 + $0x50] sm:$0xe]
        %v3893 = vld [vmem:[#allocation2 + $0x58] sm:$0xe]
        %v3894 = vld [vmem:[#allocation2 + $0x60] sm:$0xe]
        %v3895 = vld [vmem:[#allocation2 + $0x68] sm:$0xe]
        %v3896 = vld [vmem:[#allocation2 + $0x70] sm:$0xe]
        %v3897 = vld [vmem:[#allocation2 + $0x78] sm:$0xe]
        %v3898 = vld [vmem:[#allocation2 + $0x80] sm:$0xe]
        %v3899 = vld [vmem:[#allocation2 + $0x88] sm:$0xe]
        %v3900 = vld [vmem:[#allocation2 + $0xa0] sm:$0xe]
        %v3901 = vld [vmem:[#allocation2 + $0xa8] sm:$0xe]
        %v3902 = vld [vmem:[#allocation2 + $0xb0] sm:$0xe]
        %v3903 = vld [vmem:[#allocation2 + $0xb8] sm:$0xe]
        %v3904 = vld [vmem:[#allocation2 + $0xc0] sm:$0xe]
        %v3905 = vld [vmem:[#allocation2 + $0xc8] sm:$0xe]
        %v3906 = vld [vmem:[#allocation2 + $0xd0] sm:$0xe]
        %v3907 = vld [vmem:[#allocation2 + $0xd8] sm:$0xe]
        %v3908 = vld [vmem:[#allocation2 + $0xf0] sm:$0xe]
        %v3909 = vld [vmem:[#allocation2 + $0xf8] sm:$0xe]
        %v3910 = vld [vmem:[#allocation2 + $0x100] sm:$0xe]
        %v3911 = vld [vmem:[#allocation2 + $0x108] sm:$0xe]
        %v3912 = vld [vmem:[#allocation2 + $0x110] sm:$0xe]
        %v3913 = vld [vmem:[#allocation2 + $0x118] sm:$0xe]
        %v3914 = vld [vmem:[#allocation2 + $0x120] sm:$0xe]
        %v3915 = vld [vmem:[#allocation2 + $0x128] sm:$0xe]
        %vm3980 = vcmask 1042432
        %vm3981 = vcmask 1046532
        %vm3982 = vmor %vm3980, %vm3981
        %v3983 = vrot.slane %v3884, 5
        %v3984 = vrot.slane %v3983, 4
        %v3985 = vrot.slane %v2950, 5
        %v3986 = vsel %vm3982, %v3984, %v3985
        %v3987 = vrot.slane %v3885, 5
        %v3988 = vrot.slane %v3987, 4
        %v3989 = vrot.slane %v2951, 5
        %v3990 = vsel %vm3982, %v3988, %v3989
        %v3991 = vrot.slane %v3886, 5
        %v3992 = vrot.slane %v3991, 4
        %v3993 = vrot.slane %v2952, 5
        %v3994 = vsel %vm3982, %v3992, %v3993
        %v3995 = vrot.slane %v3887, 5
        %v3996 = vrot.slane %v3995, 4
        %v3997 = vrot.slane %v2953, 5
        %v3998 = vsel %vm3982, %v3996, %v3997
        %v3999 = vrot.slane %v3888, 5
        %v4000 = vrot.slane %v3999, 4
        %v4001 = vrot.slane %v2954, 5
        %v4002 = vsel %vm3982, %v4000, %v4001
        %v4003 = vrot.slane %v3889, 5
        %v4004 = vrot.slane %v4003, 4
        %v4005 = vrot.slane %v2955, 5
        %v4006 = vsel %vm3982, %v4004, %v4005
        %v4007 = vrot.slane %v3890, 5
        %v4008 = vrot.slane %v4007, 4
        %v4009 = vrot.slane %v2956, 5
        %v4010 = vsel %vm3982, %v4008, %v4009
        %v4011 = vrot.slane %v3891, 5
        %v4012 = vrot.slane %v4011, 4
        %v4013 = vrot.slane %v2957, 5
        %v4014 = vsel %vm3982, %v4012, %v4013
        %v4015 = vrot.slane %v3892, 5
        %v4016 = vrot.slane %v4015, 4
        %v4017 = vrot.slane %v2958, 5
        %v4018 = vsel %vm3982, %v4016, %v4017
        %v4019 = vrot.slane %v3893, 5
        %v4020 = vrot.slane %v4019, 4
        %v4021 = vrot.slane %v2959, 5
        %v4022 = vsel %vm3982, %v4020, %v4021
        %v4023 = vrot.slane %v3894, 5
        %v4024 = vrot.slane %v4023, 4
        %v4025 = vrot.slane %v2960, 5
        %v4026 = vsel %vm3982, %v4024, %v4025
        %v4027 = vrot.slane %v3895, 5
        %v4028 = vrot.slane %v4027, 4
        %v4029 = vrot.slane %v2961, 5
        %v4030 = vsel %vm3982, %v4028, %v4029
        %v4031 = vrot.slane %v3896, 5
        %v4032 = vrot.slane %v4031, 4
        %v4033 = vrot.slane %v2962, 5
        %v4034 = vsel %vm3982, %v4032, %v4033
        %v4035 = vrot.slane %v3897, 5
        %v4036 = vrot.slane %v4035, 4
        %v4037 = vrot.slane %v2963, 5
        %v4038 = vsel %vm3982, %v4036, %v4037
        %v4039 = vrot.slane %v3898, 5
        %v4040 = vrot.slane %v4039, 4
        %v4041 = vrot.slane %v2964, 5
        %v4042 = vsel %vm3982, %v4040, %v4041
        %v4043 = vrot.slane %v3899, 5
        %v4044 = vrot.slane %v4043, 4
        %v4045 = vrot.slane %v2965, 5
        %v4046 = vsel %vm3982, %v4044, %v4045
        %v4047 = vrot.slane %v3900, 5
        %v4048 = vrot.slane %v4047, 4
        %v4049 = vrot.slane %v2966, 5
        %v4050 = vsel %vm3982, %v4048, %v4049
        %v4051 = vrot.slane %v3901, 5
        %v4052 = vrot.slane %v4051, 4
        %v4053 = vrot.slane %v2967, 5
        %v4054 = vsel %vm3982, %v4052, %v4053
        %v4055 = vrot.slane %v3902, 5
        %v4056 = vrot.slane %v4055, 4
        %v4057 = vrot.slane %v2968, 5
        %v4058 = vsel %vm3982, %v4056, %v4057
        %v4059 = vrot.slane %v3903, 5
        %v4060 = vrot.slane %v4059, 4
        %v4061 = vrot.slane %v2969, 5
        %v4062 = vsel %vm3982, %v4060, %v4061
        %v4063 = vrot.slane %v3904, 5
        %v4064 = vrot.slane %v4063, 4
        %v4065 = vrot.slane %v2970, 5
        %v4066 = vsel %vm3982, %v4064, %v4065
        %v4067 = vrot.slane %v3905, 5
        %v4068 = vrot.slane %v4067, 4
        %v4069 = vrot.slane %v2971, 5
        %v4070 = vsel %vm3982, %v4068, %v4069
        %v4071 = vrot.slane %v3906, 5
        %v4072 = vrot.slane %v4071, 4
        %v4073 = vrot.slane %v2972, 5
        %v4074 = vsel %vm3982, %v4072, %v4073
        %v4075 = vrot.slane %v3907, 5
        %v4076 = vrot.slane %v4075, 4
        %v4077 = vrot.slane %v2973, 5
        %v4078 = vsel %vm3982, %v4076, %v4077
        %v4079 = vrot.slane %v3908, 5
        %v4080 = vrot.slane %v4079, 4
        %v4081 = vrot.slane %v2974, 5
        %v4082 = vsel %vm3982, %v4080, %v4081
        %v4083 = vrot.slane %v3909, 5
        %v4084 = vrot.slane %v4083, 4
        %v4085 = vrot.slane %v2975, 5
        %v4086 = vsel %vm3982, %v4084, %v4085
        %v4087 = vrot.slane %v3910, 5
        %v4088 = vrot.slane %v4087, 4
        %v4089 = vrot.slane %v2976, 5
        %v4090 = vsel %vm3982, %v4088, %v4089
        %v4091 = vrot.slane %v3911, 5
        %v4092 = vrot.slane %v4091, 4
        %v4093 = vrot.slane %v2977, 5
        %v4094 = vsel %vm3982, %v4092, %v4093
        %v4095 = vrot.slane %v3912, 5
        %v4096 = vrot.slane %v4095, 4
        %v4097 = vrot.slane %v2978, 5
        %v4098 = vsel %vm3982, %v4096, %v4097
        %v4099 = vrot.slane %v3913, 5
        %v4100 = vrot.slane %v4099, 4
        %v4101 = vrot.slane %v2979, 5
        %v4102 = vsel %vm3982, %v4100, %v4101
        %v4103 = vrot.slane %v3914, 5
        %v4104 = vrot.slane %v4103, 4
        %v4105 = vrot.slane %v2980, 5
        %v4106 = vsel %vm3982, %v4104, %v4105
        %v4107 = vrot.slane %v3915, 5
        %v4108 = vrot.slane %v4107, 4
        %v4109 = vrot.slane %v2981, 5
        %v4110 = vsel %vm3982, %v4108, %v4109
        %s4111 = scalar_lea.vmem %s4, 128
        %v4112 = vld [vmem:[%s4111] sm:$0xf]
        %v4113 = vld [vmem:[%s4111 + $0x4] sm:$0xf]
        %v4114 = vld [vmem:[%s4111 + $0x8] sm:$0xf]
        %v4115 = vld [vmem:[%s4111 + $0xc] sm:$0xf]
        %v4116 = vld [vmem:[%s4111 + $0x10] sm:$0xf]
        %v4117 = vld [vmem:[%s4111 + $0x14] sm:$0xf]
        %v4118 = vld [vmem:[%s4111 + $0x18] sm:$0xf]
        %v4119 = vld [vmem:[%s4111 + $0x1c] sm:$0xf]
        %v4120 = vld [vmem:[%s4111 + $0x20] sm:$0xf]
        %v4121 = vld [vmem:[%s4111 + $0x24] sm:$0xf]
        %v4122 = vld [vmem:[%s4111 + $0x28] sm:$0xf]
        %v4123 = vld [vmem:[%s4111 + $0x2c] sm:$0xf]
        %v4124 = vld [vmem:[%s4111 + $0x30] sm:$0xf]
        %v4125 = vld [vmem:[%s4111 + $0x34] sm:$0xf]
        %v4126 = vld [vmem:[%s4111 + $0x38] sm:$0xf]
        %v4127 = vld [vmem:[%s4111 + $0x3c] sm:$0xf]
        %v4128 = vunpack.c.l.b16 %v3986
        %v4129 = vunpack.c.l.b16 %v3990
        %v4130 = vunpack.c.l.b16 %v3994
        %v4131 = vunpack.c.l.b16 %v3998
        %v4132 = vunpack.c.l.b16 %v4002
        %v4133 = vunpack.c.l.b16 %v4006
        %v4134 = vunpack.c.l.b16 %v4010
        %v4135 = vunpack.c.l.b16 %v4014
        %v4136 = vunpack.c.l.b16 %v4018
        %v4137 = vunpack.c.l.b16 %v4022
        %v4138 = vunpack.c.l.b16 %v4026
        %v4139 = vunpack.c.l.b16 %v4030
        %v4140 = vunpack.c.l.b16 %v4034
        %v4141 = vunpack.c.l.b16 %v4038
        %v4142 = vunpack.c.l.b16 %v4042
        %v4143 = vunpack.c.l.b16 %v4046
        %v4144 = vunpack.c.l.b16 %v4050
        %v4145 = vunpack.c.l.b16 %v4054
        %v4146 = vunpack.c.l.b16 %v4058
        %v4147 = vunpack.c.l.b16 %v4062
        %v4148 = vunpack.c.l.b16 %v4066
        %v4149 = vunpack.c.l.b16 %v4070
        %v4150 = vunpack.c.l.b16 %v4074
        %v4151 = vunpack.c.l.b16 %v4078
        %v4152 = vunpack.c.l.b16 %v4082
        %v4153 = vunpack.c.l.b16 %v4086
        %v4154 = vunpack.c.l.b16 %v4090
        %v4155 = vunpack.c.l.b16 %v4094
        %v4156 = vunpack.c.l.b16 %v4098
        %v4157 = vunpack.c.l.b16 %v4102
        %v4158 = vunpack.c.l.b16 %v4106
        %v4159 = vunpack.c.l.b16 %v4110
        %v4160 = vpack.c.b16 %v4129, %v4128
        %v4161 = vpack.c.b16 %v4131, %v4130
        %v4162 = vpack.c.b16 %v4133, %v4132
        %v4163 = vpack.c.b16 %v4135, %v4134
        %v4164 = vpack.c.b16 %v4137, %v4136
        %v4165 = vpack.c.b16 %v4139, %v4138
        %v4166 = vpack.c.b16 %v4141, %v4140
        %v4167 = vpack.c.b16 %v4143, %v4142
        %v4168 = vpack.c.b16 %v4145, %v4144
        %v4169 = vpack.c.b16 %v4147, %v4146
        %v4170 = vpack.c.b16 %v4149, %v4148
        %v4171 = vpack.c.b16 %v4151, %v4150
        %v4172 = vpack.c.b16 %v4153, %v4152
        %v4173 = vpack.c.b16 %v4155, %v4154
        %v4174 = vpack.c.b16 %v4157, %v4156
        %v4175 = vpack.c.b16 %v4159, %v4158
        %v4208 = vunpack.c.l.b16 %v4112
        %v4209 = vunpack.c.l.b16 %v4113
        %v4210 = vunpack.c.l.b16 %v4114
        %v4211 = vunpack.c.l.b16 %v4115
        %v4212 = vunpack.c.l.b16 %v4116
        %v4213 = vunpack.c.l.b16 %v4117
        %v4214 = vunpack.c.l.b16 %v4118
        %v4215 = vunpack.c.l.b16 %v4119
        %v4216 = vunpack.c.l.b16 %v4120
        %v4217 = vunpack.c.l.b16 %v4121
        %v4218 = vunpack.c.l.b16 %v4122
        %v4219 = vunpack.c.l.b16 %v4123
        %v4220 = vunpack.c.l.b16 %v4124
        %v4221 = vunpack.c.l.b16 %v4125
        %v4222 = vunpack.c.l.b16 %v4126
        %v4223 = vunpack.c.l.b16 %v4127
        %v4224 = vpack.c.b16 %v4209, %v4208
        %v4225 = vpack.c.b16 %v4211, %v4210
        %v4226 = vpack.c.b16 %v4213, %v4212
        %v4227 = vpack.c.b16 %v4215, %v4214
        %v4228 = vpack.c.b16 %v4217, %v4216
        %v4229 = vpack.c.b16 %v4219, %v4218
        %v4230 = vpack.c.b16 %v4221, %v4220
        %v4231 = vpack.c.b16 %v4223, %v4222
        %4240 = vmatpush.bf16.msra.mxu0 %v4231
        %4241 = vmatpush.bf16.msra.mxu0 %v4230
        %4242 = vmatpush.bf16.msra.mxu0 %v4229
        %4243 = vmatpush.bf16.msra.mxu0 %v4228
        %4244 = vmatpush.bf16.msra.mxu0 %v4227
        %4245 = vmatpush.bf16.msra.mxu0 %v4226
        %4246 = vmatpush.bf16.msra.mxu0 %v4225
        %4247 = vmatpush.bf16.msra.mxu0 %v4224
        %4248 = vmatmul.bf16.gmra.mxu0 %v4160
        %v4249 = vpop.f32.mrf.mxu0
        %v4250 = vadd.f32 0.0, %v4249
        %v4251 = vpop.f32.mrf.mxu0
        %v4252 = vadd.f32 0.0, %v4251
        %4253 = vmatmul.bf16.gmra.mxu0 %v4161
        %v4254 = vpop.f32.mrf.mxu0
        %v4255 = vadd.f32 0.0, %v4254
        %v4256 = vpop.f32.mrf.mxu0
        %v4257 = vadd.f32 0.0, %v4256
        %4258 = vmatmul.bf16.gmra.mxu0 %v4162
        %v4259 = vpop.f32.mrf.mxu0
        %v4260 = vadd.f32 0.0, %v4259
        %v4261 = vpop.f32.mrf.mxu0
        %v4262 = vadd.f32 0.0, %v4261
        %4263 = vmatmul.bf16.gmra.mxu0 %v4163
        %v4264 = vpop.f32.mrf.mxu0
        %v4265 = vadd.f32 0.0, %v4264
        %v4266 = vpop.f32.mrf.mxu0
        %v4267 = vadd.f32 0.0, %v4266
        %4268 = vmatmul.bf16.gmra.mxu0 %v4164
        %v4269 = vpop.f32.mrf.mxu0
        %v4270 = vadd.f32 0.0, %v4269
        %v4271 = vpop.f32.mrf.mxu0
        %v4272 = vadd.f32 0.0, %v4271
        %4273 = vmatmul.bf16.gmra.mxu0 %v4165
        %v4274 = vpop.f32.mrf.mxu0
        %v4275 = vadd.f32 0.0, %v4274
        %v4276 = vpop.f32.mrf.mxu0
        %v4277 = vadd.f32 0.0, %v4276
        %4278 = vmatmul.bf16.gmra.mxu0 %v4166
        %v4279 = vpop.f32.mrf.mxu0
        %v4280 = vadd.f32 0.0, %v4279
        %v4281 = vpop.f32.mrf.mxu0
        %v4282 = vadd.f32 0.0, %v4281
        %4283 = vmatmul.bf16.gmra.mxu0 %v4167
        %v4284 = vpop.f32.mrf.mxu0
        %v4285 = vadd.f32 0.0, %v4284
        %v4286 = vpop.f32.mrf.mxu0
        %v4287 = vadd.f32 0.0, %v4286
        %4288 = vmatmul.bf16.gmra.mxu0 %v4168
        %v4289 = vpop.f32.mrf.mxu0
        %v4290 = vadd.f32 0.0, %v4289
        %v4291 = vpop.f32.mrf.mxu0
        %v4292 = vadd.f32 0.0, %v4291
        %4293 = vmatmul.bf16.gmra.mxu0 %v4169
        %v4294 = vpop.f32.mrf.mxu0
        %v4295 = vadd.f32 0.0, %v4294
        %v4296 = vpop.f32.mrf.mxu0
        %v4297 = vadd.f32 0.0, %v4296
        %4298 = vmatmul.bf16.gmra.mxu0 %v4170
        %v4299 = vpop.f32.mrf.mxu0
        %v4300 = vadd.f32 0.0, %v4299
        %v4301 = vpop.f32.mrf.mxu0
        %v4302 = vadd.f32 0.0, %v4301
        %4303 = vmatmul.bf16.gmra.mxu0 %v4171
        %v4304 = vpop.f32.mrf.mxu0
        %v4305 = vadd.f32 0.0, %v4304
        %v4306 = vpop.f32.mrf.mxu0
        %v4307 = vadd.f32 0.0, %v4306
        %4308 = vmatmul.bf16.gmra.mxu0 %v4172
        %v4309 = vpop.f32.mrf.mxu0
        %v4310 = vadd.f32 0.0, %v4309
        %v4311 = vpop.f32.mrf.mxu0
        %v4312 = vadd.f32 0.0, %v4311
        %4313 = vmatmul.bf16.gmra.mxu0 %v4173
        %v4314 = vpop.f32.mrf.mxu0
        %v4315 = vadd.f32 0.0, %v4314
        %v4316 = vpop.f32.mrf.mxu0
        %v4317 = vadd.f32 0.0, %v4316
        %4318 = vmatmul.bf16.gmra.mxu0 %v4174
        %v4319 = vpop.f32.mrf.mxu0
        %v4320 = vadd.f32 0.0, %v4319
        %v4321 = vpop.f32.mrf.mxu0
        %v4322 = vadd.f32 0.0, %v4321
        %4323 = vmatmul.bf16.gmra.mxu0 %v4175
        %v4324 = vpop.f32.mrf.mxu0
        %v4325 = vadd.f32 0.0, %v4324
        %v4326 = vpop.f32.mrf.mxu0
        %v4327 = vadd.f32 0.0, %v4326
        %4328 = vdwg.mxu0
        %v4329 = vadd.f32 %v3805, %v4250
        %v4330 = vadd.f32 %v3807, %v4252
        %v4331 = vadd.f32 %v3810, %v4255
        %v4332 = vadd.f32 %v3812, %v4257
        %v4333 = vadd.f32 %v3815, %v4260
        %v4334 = vadd.f32 %v3817, %v4262
        %v4335 = vadd.f32 %v3820, %v4265
        %v4336 = vadd.f32 %v3822, %v4267
        %v4337 = vadd.f32 %v3825, %v4270
        %v4338 = vadd.f32 %v3827, %v4272
        %v4339 = vadd.f32 %v3830, %v4275
        %v4340 = vadd.f32 %v3832, %v4277
        %v4341 = vadd.f32 %v3835, %v4280
        %v4342 = vadd.f32 %v3837, %v4282
        %v4343 = vadd.f32 %v3840, %v4285
        %v4344 = vadd.f32 %v3842, %v4287
        %v4345 = vadd.f32 %v3845, %v4290
        %v4346 = vadd.f32 %v3847, %v4292
        %v4347 = vadd.f32 %v3850, %v4295
        %v4348 = vadd.f32 %v3852, %v4297
        %v4349 = vadd.f32 %v3855, %v4300
        %v4350 = vadd.f32 %v3857, %v4302
        %v4351 = vadd.f32 %v3860, %v4305
        %v4352 = vadd.f32 %v3862, %v4307
        %v4353 = vadd.f32 %v3865, %v4310
        %v4354 = vadd.f32 %v3867, %v4312
        %v4355 = vadd.f32 %v3870, %v4315
        %v4356 = vadd.f32 %v3872, %v4317
        %v4357 = vadd.f32 %v3875, %v4320
        %v4358 = vadd.f32 %v3877, %v4322
        %v4359 = vadd.f32 %v3880, %v4325
        %v4360 = vadd.f32 %v3882, %v4327
        %s4361 = scalar_lea.vmem [#allocation2], 8
        %v4362 = vld [vmem:[%s4361] sm:$0xf]
        %v4363 = vld [vmem:[%s4361 + $0x8] sm:$0xf]
        %v4364 = vld [vmem:[%s4361 + $0x10] sm:$0xf]
        %v4365 = vld [vmem:[%s4361 + $0x18] sm:$0xf]
        %v4366 = vld [vmem:[%s4361 + $0x20] sm:$0xf]
        %v4367 = vld [vmem:[%s4361 + $0x28] sm:$0xf]
        %v4368 = vld [vmem:[%s4361 + $0x30] sm:$0xf]
        %v4369 = vld [vmem:[%s4361 + $0x38] sm:$0xf]
        %v4370 = vld [vmem:[%s4361 + $0x50] sm:$0xf]
        %v4371 = vld [vmem:[%s4361 + $0x58] sm:$0xf]
        %v4372 = vld [vmem:[%s4361 + $0x60] sm:$0xf]
        %v4373 = vld [vmem:[%s4361 + $0x68] sm:$0xf]
        %v4374 = vld [vmem:[%s4361 + $0x70] sm:$0xf]
        %v4375 = vld [vmem:[%s4361 + $0x78] sm:$0xf]
        %v4376 = vld [vmem:[%s4361 + $0x80] sm:$0xf]
        %v4377 = vld [vmem:[%s4361 + $0x88] sm:$0xf]
        %v4378 = vld [vmem:[%s4361 + $0xa0] sm:$0xf]
        %v4379 = vld [vmem:[%s4361 + $0xa8] sm:$0xf]
        %v4380 = vld [vmem:[%s4361 + $0xb0] sm:$0xf]
        %v4381 = vld [vmem:[%s4361 + $0xb8] sm:$0xf]
        %v4382 = vld [vmem:[%s4361 + $0xc0] sm:$0xf]
        %v4383 = vld [vmem:[%s4361 + $0xc8] sm:$0xf]
        %v4384 = vld [vmem:[%s4361 + $0xd0] sm:$0xf]
        %v4385 = vld [vmem:[%s4361 + $0xd8] sm:$0xf]
        %v4386 = vld [vmem:[%s4361 + $0xf0] sm:$0xf]
        %v4387 = vld [vmem:[%s4361 + $0xf8] sm:$0xf]
        %v4388 = vld [vmem:[%s4361 + $0x100] sm:$0xf]
        %v4389 = vld [vmem:[%s4361 + $0x108] sm:$0xf]
        %v4390 = vld [vmem:[%s4361 + $0x110] sm:$0xf]
        %v4391 = vld [vmem:[%s4361 + $0x118] sm:$0xf]
        %v4392 = vld [vmem:[%s4361 + $0x120] sm:$0xf]
        %v4393 = vld [vmem:[%s4361 + $0x128] sm:$0xf]
        %s4394 = scalar_lea.vmem %s4, 192
        %v4395 = vld [vmem:[%s4394] sm:$0xf]
        %v4396 = vld [vmem:[%s4394 + $0x4] sm:$0xf]
        %v4397 = vld [vmem:[%s4394 + $0x8] sm:$0xf]
        %v4398 = vld [vmem:[%s4394 + $0xc] sm:$0xf]
        %v4399 = vld [vmem:[%s4394 + $0x10] sm:$0xf]
        %v4400 = vld [vmem:[%s4394 + $0x14] sm:$0xf]
        %v4401 = vld [vmem:[%s4394 + $0x18] sm:$0xf]
        %v4402 = vld [vmem:[%s4394 + $0x1c] sm:$0xf]
        %v4403 = vld [vmem:[%s4394 + $0x20] sm:$0xf]
        %v4404 = vld [vmem:[%s4394 + $0x24] sm:$0xf]
        %v4405 = vld [vmem:[%s4394 + $0x28] sm:$0xf]
        %v4406 = vld [vmem:[%s4394 + $0x2c] sm:$0xf]
        %v4407 = vld [vmem:[%s4394 + $0x30] sm:$0xf]
        %v4408 = vld [vmem:[%s4394 + $0x34] sm:$0xf]
        %v4409 = vld [vmem:[%s4394 + $0x38] sm:$0xf]
        %v4410 = vld [vmem:[%s4394 + $0x3c] sm:$0xf]
        %v4443 = vunpack.c.l.b16 %v4362
        %v4444 = vunpack.c.l.b16 %v4363
        %v4445 = vunpack.c.l.b16 %v4364
        %v4446 = vunpack.c.l.b16 %v4365
        %v4447 = vunpack.c.l.b16 %v4366
        %v4448 = vunpack.c.l.b16 %v4367
        %v4449 = vunpack.c.l.b16 %v4368
        %v4450 = vunpack.c.l.b16 %v4369
        %v4451 = vunpack.c.l.b16 %v4370
        %v4452 = vunpack.c.l.b16 %v4371
        %v4453 = vunpack.c.l.b16 %v4372
        %v4454 = vunpack.c.l.b16 %v4373
        %v4455 = vunpack.c.l.b16 %v4374
        %v4456 = vunpack.c.l.b16 %v4375
        %v4457 = vunpack.c.l.b16 %v4376
        %v4458 = vunpack.c.l.b16 %v4377
        %v4459 = vunpack.c.l.b16 %v4378
        %v4460 = vunpack.c.l.b16 %v4379
        %v4461 = vunpack.c.l.b16 %v4380
        %v4462 = vunpack.c.l.b16 %v4381
        %v4463 = vunpack.c.l.b16 %v4382
        %v4464 = vunpack.c.l.b16 %v4383
        %v4465 = vunpack.c.l.b16 %v4384
        %v4466 = vunpack.c.l.b16 %v4385
        %v4467 = vunpack.c.l.b16 %v4386
        %v4468 = vunpack.c.l.b16 %v4387
        %v4469 = vunpack.c.l.b16 %v4388
        %v4470 = vunpack.c.l.b16 %v4389
        %v4471 = vunpack.c.l.b16 %v4390
        %v4472 = vunpack.c.l.b16 %v4391
        %v4473 = vunpack.c.l.b16 %v4392
        %v4474 = vunpack.c.l.b16 %v4393
        %v4475 = vpack.c.b16 %v4444, %v4443
        %v4476 = vpack.c.b16 %v4446, %v4445
        %v4477 = vpack.c.b16 %v4448, %v4447
        %v4478 = vpack.c.b16 %v4450, %v4449
        %v4479 = vpack.c.b16 %v4452, %v4451
        %v4480 = vpack.c.b16 %v4454, %v4453
        %v4481 = vpack.c.b16 %v4456, %v4455
        %v4482 = vpack.c.b16 %v4458, %v4457
        %v4483 = vpack.c.b16 %v4460, %v4459
        %v4484 = vpack.c.b16 %v4462, %v4461
        %v4485 = vpack.c.b16 %v4464, %v4463
        %v4486 = vpack.c.b16 %v4466, %v4465
        %v4487 = vpack.c.b16 %v4468, %v4467
        %v4488 = vpack.c.b16 %v4470, %v4469
        %v4489 = vpack.c.b16 %v4472, %v4471
        %v4490 = vpack.c.b16 %v4474, %v4473
        %v4523 = vunpack.c.l.b16 %v4395
        %v4524 = vunpack.c.l.b16 %v4396
        %v4525 = vunpack.c.l.b16 %v4397
        %v4526 = vunpack.c.l.b16 %v4398
        %v4527 = vunpack.c.l.b16 %v4399
        %v4528 = vunpack.c.l.b16 %v4400
        %v4529 = vunpack.c.l.b16 %v4401
        %v4530 = vunpack.c.l.b16 %v4402
        %v4531 = vunpack.c.l.b16 %v4403
        %v4532 = vunpack.c.l.b16 %v4404
        %v4533 = vunpack.c.l.b16 %v4405
        %v4534 = vunpack.c.l.b16 %v4406
        %v4535 = vunpack.c.l.b16 %v4407
        %v4536 = vunpack.c.l.b16 %v4408
        %v4537 = vunpack.c.l.b16 %v4409
        %v4538 = vunpack.c.l.b16 %v4410
        %v4539 = vpack.c.b16 %v4524, %v4523
        %v4540 = vpack.c.b16 %v4526, %v4525
        %v4541 = vpack.c.b16 %v4528, %v4527
        %v4542 = vpack.c.b16 %v4530, %v4529
        %v4543 = vpack.c.b16 %v4532, %v4531
        %v4544 = vpack.c.b16 %v4534, %v4533
        %v4545 = vpack.c.b16 %v4536, %v4535
        %v4546 = vpack.c.b16 %v4538, %v4537
        %4555 = vmatpush.bf16.msra.mxu0 %v4546
        %4556 = vmatpush.bf16.msra.mxu0 %v4545
        %4557 = vmatpush.bf16.msra.mxu0 %v4544
        %4558 = vmatpush.bf16.msra.mxu0 %v4543
        %4559 = vmatpush.bf16.msra.mxu0 %v4542
        %4560 = vmatpush.bf16.msra.mxu0 %v4541
        %4561 = vmatpush.bf16.msra.mxu0 %v4540
        %4562 = vmatpush.bf16.msra.mxu0 %v4539
        %4563 = vmatmul.bf16.gmra.mxu0 %v4475
        %v4564 = vpop.f32.mrf.mxu0
        %v4565 = vadd.f32 0.0, %v4564
        %v4566 = vpop.f32.mrf.mxu0
        %v4567 = vadd.f32 0.0, %v4566
        %4568 = vmatmul.bf16.gmra.mxu0 %v4476
        %v4569 = vpop.f32.mrf.mxu0
        %v4570 = vadd.f32 0.0, %v4569
        %v4571 = vpop.f32.mrf.mxu0
        %v4572 = vadd.f32 0.0, %v4571
        %4573 = vmatmul.bf16.gmra.mxu0 %v4477
        %v4574 = vpop.f32.mrf.mxu0
        %v4575 = vadd.f32 0.0, %v4574
        %v4576 = vpop.f32.mrf.mxu0
        %v4577 = vadd.f32 0.0, %v4576
        %4578 = vmatmul.bf16.gmra.mxu0 %v4478
        %v4579 = vpop.f32.mrf.mxu0
        %v4580 = vadd.f32 0.0, %v4579
        %v4581 = vpop.f32.mrf.mxu0
        %v4582 = vadd.f32 0.0, %v4581
        %4583 = vmatmul.bf16.gmra.mxu0 %v4479
        %v4584 = vpop.f32.mrf.mxu0
        %v4585 = vadd.f32 0.0, %v4584
        %v4586 = vpop.f32.mrf.mxu0
        %v4587 = vadd.f32 0.0, %v4586
        %4588 = vmatmul.bf16.gmra.mxu0 %v4480
        %v4589 = vpop.f32.mrf.mxu0
        %v4590 = vadd.f32 0.0, %v4589
        %v4591 = vpop.f32.mrf.mxu0
        %v4592 = vadd.f32 0.0, %v4591
        %4593 = vmatmul.bf16.gmra.mxu0 %v4481
        %v4594 = vpop.f32.mrf.mxu0
        %v4595 = vadd.f32 0.0, %v4594
        %v4596 = vpop.f32.mrf.mxu0
        %v4597 = vadd.f32 0.0, %v4596
        %4598 = vmatmul.bf16.gmra.mxu0 %v4482
        %v4599 = vpop.f32.mrf.mxu0
        %v4600 = vadd.f32 0.0, %v4599
        %v4601 = vpop.f32.mrf.mxu0
        %v4602 = vadd.f32 0.0, %v4601
        %4603 = vmatmul.bf16.gmra.mxu0 %v4483
        %v4604 = vpop.f32.mrf.mxu0
        %v4605 = vadd.f32 0.0, %v4604
        %v4606 = vpop.f32.mrf.mxu0
        %v4607 = vadd.f32 0.0, %v4606
        %4608 = vmatmul.bf16.gmra.mxu0 %v4484
        %v4609 = vpop.f32.mrf.mxu0
        %v4610 = vadd.f32 0.0, %v4609
        %v4611 = vpop.f32.mrf.mxu0
        %v4612 = vadd.f32 0.0, %v4611
        %4613 = vmatmul.bf16.gmra.mxu0 %v4485
        %v4614 = vpop.f32.mrf.mxu0
        %v4615 = vadd.f32 0.0, %v4614
        %v4616 = vpop.f32.mrf.mxu0
        %v4617 = vadd.f32 0.0, %v4616
        %4618 = vmatmul.bf16.gmra.mxu0 %v4486
        %v4619 = vpop.f32.mrf.mxu0
        %v4620 = vadd.f32 0.0, %v4619
        %v4621 = vpop.f32.mrf.mxu0
        %v4622 = vadd.f32 0.0, %v4621
        %4623 = vmatmul.bf16.gmra.mxu0 %v4487
        %v4624 = vpop.f32.mrf.mxu0
        %v4625 = vadd.f32 0.0, %v4624
        %v4626 = vpop.f32.mrf.mxu0
        %v4627 = vadd.f32 0.0, %v4626
        %4628 = vmatmul.bf16.gmra.mxu0 %v4488
        %v4629 = vpop.f32.mrf.mxu0
        %v4630 = vadd.f32 0.0, %v4629
        %v4631 = vpop.f32.mrf.mxu0
        %v4632 = vadd.f32 0.0, %v4631
        %4633 = vmatmul.bf16.gmra.mxu0 %v4489
        %v4634 = vpop.f32.mrf.mxu0
        %v4635 = vadd.f32 0.0, %v4634
        %v4636 = vpop.f32.mrf.mxu0
        %v4637 = vadd.f32 0.0, %v4636
        %4638 = vmatmul.bf16.gmra.mxu0 %v4490
        %v4639 = vpop.f32.mrf.mxu0
        %v4640 = vadd.f32 0.0, %v4639
        %v4641 = vpop.f32.mrf.mxu0
        %v4642 = vadd.f32 0.0, %v4641
        %4643 = vdwg.mxu0
        %v4644 = vadd.f32 %v4329, %v4565
        %v4645 = vadd.f32 %v4330, %v4567
        %v4646 = vadd.f32 %v4331, %v4570
        %v4647 = vadd.f32 %v4332, %v4572
        %v4648 = vadd.f32 %v4333, %v4575
        %v4649 = vadd.f32 %v4334, %v4577
        %v4650 = vadd.f32 %v4335, %v4580
        %v4651 = vadd.f32 %v4336, %v4582
        %v4652 = vadd.f32 %v4337, %v4585
        %v4653 = vadd.f32 %v4338, %v4587
        %v4654 = vadd.f32 %v4339, %v4590
        %v4655 = vadd.f32 %v4340, %v4592
        %v4656 = vadd.f32 %v4341, %v4595
        %v4657 = vadd.f32 %v4342, %v4597
        %v4658 = vadd.f32 %v4343, %v4600
        %v4659 = vadd.f32 %v4344, %v4602
        %v4660 = vadd.f32 %v4345, %v4605
        %v4661 = vadd.f32 %v4346, %v4607
        %v4662 = vadd.f32 %v4347, %v4610
        %v4663 = vadd.f32 %v4348, %v4612
        %v4664 = vadd.f32 %v4349, %v4615
        %v4665 = vadd.f32 %v4350, %v4617
        %v4666 = vadd.f32 %v4351, %v4620
        %v4667 = vadd.f32 %v4352, %v4622
        %v4668 = vadd.f32 %v4353, %v4625
        %v4669 = vadd.f32 %v4354, %v4627
        %v4670 = vadd.f32 %v4355, %v4630
        %v4671 = vadd.f32 %v4356, %v4632
        %v4672 = vadd.f32 %v4357, %v4635
        %v4673 = vadd.f32 %v4358, %v4637
        %v4674 = vadd.f32 %v4359, %v4640
        %v4675 = vadd.f32 %v4360, %v4642
        %v4676 = vld [vmem:[%s4361] sm:$0xf]
        %v4677 = vld [vmem:[%s4361 + $0x4] sm:$0x1]
        %v4678 = vld [vmem:[%s4361 + $0x8] sm:$0xf]
        %v4679 = vld [vmem:[%s4361 + $0xc] sm:$0x1]
        %v4680 = vld [vmem:[%s4361 + $0x10] sm:$0xf]
        %v4681 = vld [vmem:[%s4361 + $0x14] sm:$0x1]
        %v4682 = vld [vmem:[%s4361 + $0x18] sm:$0xf]
        %v4683 = vld [vmem:[%s4361 + $0x1c] sm:$0x1]
        %v4684 = vld [vmem:[%s4361 + $0x20] sm:$0xf]
        %v4685 = vld [vmem:[%s4361 + $0x24] sm:$0x1]
        %v4686 = vld [vmem:[%s4361 + $0x28] sm:$0xf]
        %v4687 = vld [vmem:[%s4361 + $0x2c] sm:$0x1]
        %v4688 = vld [vmem:[%s4361 + $0x30] sm:$0xf]
        %v4689 = vld [vmem:[%s4361 + $0x34] sm:$0x1]
        %v4690 = vld [vmem:[%s4361 + $0x38] sm:$0xf]
        %v4691 = vld [vmem:[%s4361 + $0x3c] sm:$0x1]
        %v4692 = vld [vmem:[%s4361 + $0x50] sm:$0xf]
        %v4693 = vld [vmem:[%s4361 + $0x54] sm:$0x1]
        %v4694 = vld [vmem:[%s4361 + $0x58] sm:$0xf]
        %v4695 = vld [vmem:[%s4361 + $0x5c] sm:$0x1]
        %v4696 = vld [vmem:[%s4361 + $0x60] sm:$0xf]
        %v4697 = vld [vmem:[%s4361 + $0x64] sm:$0x1]
        %v4698 = vld [vmem:[%s4361 + $0x68] sm:$0xf]
        %v4699 = vld [vmem:[%s4361 + $0x6c] sm:$0x1]
        %v4700 = vld [vmem:[%s4361 + $0x70] sm:$0xf]
        %v4701 = vld [vmem:[%s4361 + $0x74] sm:$0x1]
        %v4702 = vld [vmem:[%s4361 + $0x78] sm:$0xf]
        %v4703 = vld [vmem:[%s4361 + $0x7c] sm:$0x1]
        %v4704 = vld [vmem:[%s4361 + $0x80] sm:$0xf]
        %v4705 = vld [vmem:[%s4361 + $0x84] sm:$0x1]
        %v4706 = vld [vmem:[%s4361 + $0x88] sm:$0xf]
        %v4707 = vld [vmem:[%s4361 + $0x8c] sm:$0x1]
        %v4708 = vld [vmem:[%s4361 + $0xa0] sm:$0xf]
        %v4709 = vld [vmem:[%s4361 + $0xa4] sm:$0x1]
        %v4710 = vld [vmem:[%s4361 + $0xa8] sm:$0xf]
        %v4711 = vld [vmem:[%s4361 + $0xac] sm:$0x1]
        %v4712 = vld [vmem:[%s4361 + $0xb0] sm:$0xf]
        %v4713 = vld [vmem:[%s4361 + $0xb4] sm:$0x1]
        %v4714 = vld [vmem:[%s4361 + $0xb8] sm:$0xf]
        %v4715 = vld [vmem:[%s4361 + $0xbc] sm:$0x1]
        %v4716 = vld [vmem:[%s4361 + $0xc0] sm:$0xf]
        %v4717 = vld [vmem:[%s4361 + $0xc4] sm:$0x1]
        %v4718 = vld [vmem:[%s4361 + $0xc8] sm:$0xf]
        %v4719 = vld [vmem:[%s4361 + $0xcc] sm:$0x1]
        %v4720 = vld [vmem:[%s4361 + $0xd0] sm:$0xf]
        %v4721 = vld [vmem:[%s4361 + $0xd4] sm:$0x1]
        %v4722 = vld [vmem:[%s4361 + $0xd8] sm:$0xf]
        %v4723 = vld [vmem:[%s4361 + $0xdc] sm:$0x1]
        %v4724 = vld [vmem:[%s4361 + $0xf0] sm:$0xf]
        %v4725 = vld [vmem:[%s4361 + $0xf4] sm:$0x1]
        %v4726 = vld [vmem:[%s4361 + $0xf8] sm:$0xf]
        %v4727 = vld [vmem:[%s4361 + $0xfc] sm:$0x1]
        %v4728 = vld [vmem:[%s4361 + $0x100] sm:$0xf]
        %v4729 = vld [vmem:[%s4361 + $0x104] sm:$0x1]
        %v4730 = vld [vmem:[%s4361 + $0x108] sm:$0xf]
        %v4731 = vld [vmem:[%s4361 + $0x10c] sm:$0x1]
        %v4732 = vld [vmem:[%s4361 + $0x110] sm:$0xf]
        %v4733 = vld [vmem:[%s4361 + $0x114] sm:$0x1]
        %v4734 = vld [vmem:[%s4361 + $0x118] sm:$0xf]
        %v4735 = vld [vmem:[%s4361 + $0x11c] sm:$0x1]
        %v4736 = vld [vmem:[%s4361 + $0x120] sm:$0xf]
        %v4737 = vld [vmem:[%s4361 + $0x124] sm:$0x1]
        %v4738 = vld [vmem:[%s4361 + $0x128] sm:$0xf]
        %v4739 = vld [vmem:[%s4361 + $0x12c] sm:$0x1]
        %v4741 = vshrl.u32 %v4676, 16
        %v4743 = vrot.slane %v4741, 4
        %v4744 = vshll.u32 %v4676, 16
        %v4746 = vrot.slane %v4744, 5
        %v4747 = vor.u32 %v4743, %v4746
        %v4748 = vrot.slane %v4747, 4
        %v4750 = vshll.u32 %v4677, 16
        %v4752 = vrot.slane %v4750, 5
        %v4753 = vsel %vm2984, %v4748, %v4752
        %v4755 = vshrl.u32 %v4678, 16
        %v4757 = vrot.slane %v4755, 4
        %v4758 = vshll.u32 %v4678, 16
        %v4760 = vrot.slane %v4758, 5
        %v4761 = vor.u32 %v4757, %v4760
        %v4762 = vrot.slane %v4761, 4
        %v4764 = vshll.u32 %v4679, 16
        %v4766 = vrot.slane %v4764, 5
        %v4767 = vsel %vm2984, %v4762, %v4766
        %v4769 = vshrl.u32 %v4680, 16
        %v4771 = vrot.slane %v4769, 4
        %v4772 = vshll.u32 %v4680, 16
        %v4774 = vrot.slane %v4772, 5
        %v4775 = vor.u32 %v4771, %v4774
        %v4776 = vrot.slane %v4775, 4
        %v4778 = vshll.u32 %v4681, 16
        %v4780 = vrot.slane %v4778, 5
        %v4781 = vsel %vm2984, %v4776, %v4780
        %v4783 = vshrl.u32 %v4682, 16
        %v4785 = vrot.slane %v4783, 4
        %v4786 = vshll.u32 %v4682, 16
        %v4788 = vrot.slane %v4786, 5
        %v4789 = vor.u32 %v4785, %v4788
        %v4790 = vrot.slane %v4789, 4
        %v4792 = vshll.u32 %v4683, 16
        %v4794 = vrot.slane %v4792, 5
        %v4795 = vsel %vm2984, %v4790, %v4794
        %v4797 = vshrl.u32 %v4684, 16
        %v4799 = vrot.slane %v4797, 4
        %v4800 = vshll.u32 %v4684, 16
        %v4802 = vrot.slane %v4800, 5
        %v4803 = vor.u32 %v4799, %v4802
        %v4804 = vrot.slane %v4803, 4
        %v4806 = vshll.u32 %v4685, 16
        %v4808 = vrot.slane %v4806, 5
        %v4809 = vsel %vm2984, %v4804, %v4808
        %v4811 = vshrl.u32 %v4686, 16
        %v4813 = vrot.slane %v4811, 4
        %v4814 = vshll.u32 %v4686, 16
        %v4816 = vrot.slane %v4814, 5
        %v4817 = vor.u32 %v4813, %v4816
        %v4818 = vrot.slane %v4817, 4
        %v4820 = vshll.u32 %v4687, 16
        %v4822 = vrot.slane %v4820, 5
        %v4823 = vsel %vm2984, %v4818, %v4822
        %v4825 = vshrl.u32 %v4688, 16
        %v4827 = vrot.slane %v4825, 4
        %v4828 = vshll.u32 %v4688, 16
        %v4830 = vrot.slane %v4828, 5
        %v4831 = vor.u32 %v4827, %v4830
        %v4832 = vrot.slane %v4831, 4
        %v4834 = vshll.u32 %v4689, 16
        %v4836 = vrot.slane %v4834, 5
        %v4837 = vsel %vm2984, %v4832, %v4836
        %v4839 = vshrl.u32 %v4690, 16
        %v4841 = vrot.slane %v4839, 4
        %v4842 = vshll.u32 %v4690, 16
        %v4844 = vrot.slane %v4842, 5
        %v4845 = vor.u32 %v4841, %v4844
        %v4846 = vrot.slane %v4845, 4
        %v4848 = vshll.u32 %v4691, 16
        %v4850 = vrot.slane %v4848, 5
        %v4851 = vsel %vm2984, %v4846, %v4850
        %v4853 = vshrl.u32 %v4692, 16
        %v4855 = vrot.slane %v4853, 4
        %v4856 = vshll.u32 %v4692, 16
        %v4858 = vrot.slane %v4856, 5
        %v4859 = vor.u32 %v4855, %v4858
        %v4860 = vrot.slane %v4859, 4
        %v4862 = vshll.u32 %v4693, 16
        %v4864 = vrot.slane %v4862, 5
        %v4865 = vsel %vm2984, %v4860, %v4864
        %v4867 = vshrl.u32 %v4694, 16
        %v4869 = vrot.slane %v4867, 4
        %v4870 = vshll.u32 %v4694, 16
        %v4872 = vrot.slane %v4870, 5
        %v4873 = vor.u32 %v4869, %v4872
        %v4874 = vrot.slane %v4873, 4
        %v4876 = vshll.u32 %v4695, 16
        %v4878 = vrot.slane %v4876, 5
        %v4879 = vsel %vm2984, %v4874, %v4878
        %v4881 = vshrl.u32 %v4696, 16
        %v4883 = vrot.slane %v4881, 4
        %v4884 = vshll.u32 %v4696, 16
        %v4886 = vrot.slane %v4884, 5
        %v4887 = vor.u32 %v4883, %v4886
        %v4888 = vrot.slane %v4887, 4
        %v4890 = vshll.u32 %v4697, 16
        %v4892 = vrot.slane %v4890, 5
        %v4893 = vsel %vm2984, %v4888, %v4892
        %v4895 = vshrl.u32 %v4698, 16
        %v4897 = vrot.slane %v4895, 4
        %v4898 = vshll.u32 %v4698, 16
        %v4900 = vrot.slane %v4898, 5
        %v4901 = vor.u32 %v4897, %v4900
        %v4902 = vrot.slane %v4901, 4
        %v4904 = vshll.u32 %v4699, 16
        %v4906 = vrot.slane %v4904, 5
        %v4907 = vsel %vm2984, %v4902, %v4906
        %v4909 = vshrl.u32 %v4700, 16
        %v4911 = vrot.slane %v4909, 4
        %v4912 = vshll.u32 %v4700, 16
        %v4914 = vrot.slane %v4912, 5
        %v4915 = vor.u32 %v4911, %v4914
        %v4916 = vrot.slane %v4915, 4
        %v4918 = vshll.u32 %v4701, 16
        %v4920 = vrot.slane %v4918, 5
        %v4921 = vsel %vm2984, %v4916, %v4920
        %v4923 = vshrl.u32 %v4702, 16
        %v4925 = vrot.slane %v4923, 4
        %v4926 = vshll.u32 %v4702, 16
        %v4928 = vrot.slane %v4926, 5
        %v4929 = vor.u32 %v4925, %v4928
        %v4930 = vrot.slane %v4929, 4
        %v4932 = vshll.u32 %v4703, 16
        %v4934 = vrot.slane %v4932, 5
        %v4935 = vsel %vm2984, %v4930, %v4934
        %v4937 = vshrl.u32 %v4704, 16
        %v4939 = vrot.slane %v4937, 4
        %v4940 = vshll.u32 %v4704, 16
        %v4942 = vrot.slane %v4940, 5
        %v4943 = vor.u32 %v4939, %v4942
        %v4944 = vrot.slane %v4943, 4
        %v4946 = vshll.u32 %v4705, 16
        %v4948 = vrot.slane %v4946, 5
        %v4949 = vsel %vm2984, %v4944, %v4948
        %v4951 = vshrl.u32 %v4706, 16
        %v4953 = vrot.slane %v4951, 4
        %v4954 = vshll.u32 %v4706, 16
        %v4956 = vrot.slane %v4954, 5
        %v4957 = vor.u32 %v4953, %v4956
        %v4958 = vrot.slane %v4957, 4
        %v4960 = vshll.u32 %v4707, 16
        %v4962 = vrot.slane %v4960, 5
        %v4963 = vsel %vm2984, %v4958, %v4962
        %v4965 = vshrl.u32 %v4708, 16
        %v4967 = vrot.slane %v4965, 4
        %v4968 = vshll.u32 %v4708, 16
        %v4970 = vrot.slane %v4968, 5
        %v4971 = vor.u32 %v4967, %v4970
        %v4972 = vrot.slane %v4971, 4
        %v4974 = vshll.u32 %v4709, 16
        %v4976 = vrot.slane %v4974, 5
        %v4977 = vsel %vm2984, %v4972, %v4976
        %v4979 = vshrl.u32 %v4710, 16
        %v4981 = vrot.slane %v4979, 4
        %v4982 = vshll.u32 %v4710, 16
        %v4984 = vrot.slane %v4982, 5
        %v4985 = vor.u32 %v4981, %v4984
        %v4986 = vrot.slane %v4985, 4
        %v4988 = vshll.u32 %v4711, 16
        %v4990 = vrot.slane %v4988, 5
        %v4991 = vsel %vm2984, %v4986, %v4990
        %v4993 = vshrl.u32 %v4712, 16
        %v4995 = vrot.slane %v4993, 4
        %v4996 = vshll.u32 %v4712, 16
        %v4998 = vrot.slane %v4996, 5
        %v4999 = vor.u32 %v4995, %v4998
        %v5000 = vrot.slane %v4999, 4
        %v5002 = vshll.u32 %v4713, 16
        %v5004 = vrot.slane %v5002, 5
        %v5005 = vsel %vm2984, %v5000, %v5004
        %v5007 = vshrl.u32 %v4714, 16
        %v5009 = vrot.slane %v5007, 4
        %v5010 = vshll.u32 %v4714, 16
        %v5012 = vrot.slane %v5010, 5
        %v5013 = vor.u32 %v5009, %v5012
        %v5014 = vrot.slane %v5013, 4
        %v5016 = vshll.u32 %v4715, 16
        %v5018 = vrot.slane %v5016, 5
        %v5019 = vsel %vm2984, %v5014, %v5018
        %v5021 = vshrl.u32 %v4716, 16
        %v5023 = vrot.slane %v5021, 4
        %v5024 = vshll.u32 %v4716, 16
        %v5026 = vrot.slane %v5024, 5
        %v5027 = vor.u32 %v5023, %v5026
        %v5028 = vrot.slane %v5027, 4
        %v5030 = vshll.u32 %v4717, 16
        %v5032 = vrot.slane %v5030, 5
        %v5033 = vsel %vm2984, %v5028, %v5032
        %v5035 = vshrl.u32 %v4718, 16
        %v5037 = vrot.slane %v5035, 4
        %v5038 = vshll.u32 %v4718, 16
        %v5040 = vrot.slane %v5038, 5
        %v5041 = vor.u32 %v5037, %v5040
        %v5042 = vrot.slane %v5041, 4
        %v5044 = vshll.u32 %v4719, 16
        %v5046 = vrot.slane %v5044, 5
        %v5047 = vsel %vm2984, %v5042, %v5046
        %v5049 = vshrl.u32 %v4720, 16
        %v5051 = vrot.slane %v5049, 4
        %v5052 = vshll.u32 %v4720, 16
        %v5054 = vrot.slane %v5052, 5
        %v5055 = vor.u32 %v5051, %v5054
        %v5056 = vrot.slane %v5055, 4
        %v5058 = vshll.u32 %v4721, 16
        %v5060 = vrot.slane %v5058, 5
        %v5061 = vsel %vm2984, %v5056, %v5060
        %v5063 = vshrl.u32 %v4722, 16
        %v5065 = vrot.slane %v5063, 4
        %v5066 = vshll.u32 %v4722, 16
        %v5068 = vrot.slane %v5066, 5
        %v5069 = vor.u32 %v5065, %v5068
        %v5070 = vrot.slane %v5069, 4
        %v5072 = vshll.u32 %v4723, 16
        %v5074 = vrot.slane %v5072, 5
        %v5075 = vsel %vm2984, %v5070, %v5074
        %v5077 = vshrl.u32 %v4724, 16
        %v5079 = vrot.slane %v5077, 4
        %v5080 = vshll.u32 %v4724, 16
        %v5082 = vrot.slane %v5080, 5
        %v5083 = vor.u32 %v5079, %v5082
        %v5084 = vrot.slane %v5083, 4
        %v5086 = vshll.u32 %v4725, 16
        %v5088 = vrot.slane %v5086, 5
        %v5089 = vsel %vm2984, %v5084, %v5088
        %v5091 = vshrl.u32 %v4726, 16
        %v5093 = vrot.slane %v5091, 4
        %v5094 = vshll.u32 %v4726, 16
        %v5096 = vrot.slane %v5094, 5
        %v5097 = vor.u32 %v5093, %v5096
        %v5098 = vrot.slane %v5097, 4
        %v5100 = vshll.u32 %v4727, 16
        %v5102 = vrot.slane %v5100, 5
        %v5103 = vsel %vm2984, %v5098, %v5102
        %v5105 = vshrl.u32 %v4728, 16
        %v5107 = vrot.slane %v5105, 4
        %v5108 = vshll.u32 %v4728, 16
        %v5110 = vrot.slane %v5108, 5
        %v5111 = vor.u32 %v5107, %v5110
        %v5112 = vrot.slane %v5111, 4
        %v5114 = vshll.u32 %v4729, 16
        %v5116 = vrot.slane %v5114, 5
        %v5117 = vsel %vm2984, %v5112, %v5116
        %v5119 = vshrl.u32 %v4730, 16
        %v5121 = vrot.slane %v5119, 4
        %v5122 = vshll.u32 %v4730, 16
        %v5124 = vrot.slane %v5122, 5
        %v5125 = vor.u32 %v5121, %v5124
        %v5126 = vrot.slane %v5125, 4
        %v5128 = vshll.u32 %v4731, 16
        %v5130 = vrot.slane %v5128, 5
        %v5131 = vsel %vm2984, %v5126, %v5130
        %v5133 = vshrl.u32 %v4732, 16
        %v5135 = vrot.slane %v5133, 4
        %v5136 = vshll.u32 %v4732, 16
        %v5138 = vrot.slane %v5136, 5
        %v5139 = vor.u32 %v5135, %v5138
        %v5140 = vrot.slane %v5139, 4
        %v5142 = vshll.u32 %v4733, 16
        %v5144 = vrot.slane %v5142, 5
        %v5145 = vsel %vm2984, %v5140, %v5144
        %v5147 = vshrl.u32 %v4734, 16
        %v5149 = vrot.slane %v5147, 4
        %v5150 = vshll.u32 %v4734, 16
        %v5152 = vrot.slane %v5150, 5
        %v5153 = vor.u32 %v5149, %v5152
        %v5154 = vrot.slane %v5153, 4
        %v5156 = vshll.u32 %v4735, 16
        %v5158 = vrot.slane %v5156, 5
        %v5159 = vsel %vm2984, %v5154, %v5158
        %v5161 = vshrl.u32 %v4736, 16
        %v5163 = vrot.slane %v5161, 4
        %v5164 = vshll.u32 %v4736, 16
        %v5166 = vrot.slane %v5164, 5
        %v5167 = vor.u32 %v5163, %v5166
        %v5168 = vrot.slane %v5167, 4
        %v5170 = vshll.u32 %v4737, 16
        %v5172 = vrot.slane %v5170, 5
        %v5173 = vsel %vm2984, %v5168, %v5172
        %v5175 = vshrl.u32 %v4738, 16
        %v5177 = vrot.slane %v5175, 4
        %v5178 = vshll.u32 %v4738, 16
        %v5180 = vrot.slane %v5178, 5
        %v5181 = vor.u32 %v5177, %v5180
        %v5182 = vrot.slane %v5181, 4
        %v5184 = vshll.u32 %v4739, 16
        %v5186 = vrot.slane %v5184, 5
        %v5187 = vsel %vm2984, %v5182, %v5186
        %s5188 = scalar_lea.vmem %s4, 256
        %v5189 = vld [vmem:[%s5188] sm:$0xf]
        %v5190 = vld [vmem:[%s5188 + $0x4] sm:$0xf]
        %v5191 = vld [vmem:[%s5188 + $0x8] sm:$0xf]
        %v5192 = vld [vmem:[%s5188 + $0xc] sm:$0xf]
        %v5193 = vld [vmem:[%s5188 + $0x10] sm:$0xf]
        %v5194 = vld [vmem:[%s5188 + $0x14] sm:$0xf]
        %v5195 = vld [vmem:[%s5188 + $0x18] sm:$0xf]
        %v5196 = vld [vmem:[%s5188 + $0x1c] sm:$0xf]
        %v5197 = vld [vmem:[%s5188 + $0x20] sm:$0xf]
        %v5198 = vld [vmem:[%s5188 + $0x24] sm:$0xf]
        %v5199 = vld [vmem:[%s5188 + $0x28] sm:$0xf]
        %v5200 = vld [vmem:[%s5188 + $0x2c] sm:$0xf]
        %v5201 = vld [vmem:[%s5188 + $0x30] sm:$0xf]
        %v5202 = vld [vmem:[%s5188 + $0x34] sm:$0xf]
        %v5203 = vld [vmem:[%s5188 + $0x38] sm:$0xf]
        %v5204 = vld [vmem:[%s5188 + $0x3c] sm:$0xf]
        %v5205 = vunpack.c.l.b16 %v4753
        %v5206 = vunpack.c.l.b16 %v4767
        %v5207 = vunpack.c.l.b16 %v4781
        %v5208 = vunpack.c.l.b16 %v4795
        %v5209 = vunpack.c.l.b16 %v4809
        %v5210 = vunpack.c.l.b16 %v4823
        %v5211 = vunpack.c.l.b16 %v4837
        %v5212 = vunpack.c.l.b16 %v4851
        %v5213 = vunpack.c.l.b16 %v4865
        %v5214 = vunpack.c.l.b16 %v4879
        %v5215 = vunpack.c.l.b16 %v4893
        %v5216 = vunpack.c.l.b16 %v4907
        %v5217 = vunpack.c.l.b16 %v4921
        %v5218 = vunpack.c.l.b16 %v4935
        %v5219 = vunpack.c.l.b16 %v4949
        %v5220 = vunpack.c.l.b16 %v4963
        %v5221 = vunpack.c.l.b16 %v4977
        %v5222 = vunpack.c.l.b16 %v4991
        %v5223 = vunpack.c.l.b16 %v5005
        %v5224 = vunpack.c.l.b16 %v5019
        %v5225 = vunpack.c.l.b16 %v5033
        %v5226 = vunpack.c.l.b16 %v5047
        %v5227 = vunpack.c.l.b16 %v5061
        %v5228 = vunpack.c.l.b16 %v5075
        %v5229 = vunpack.c.l.b16 %v5089
        %v5230 = vunpack.c.l.b16 %v5103
        %v5231 = vunpack.c.l.b16 %v5117
        %v5232 = vunpack.c.l.b16 %v5131
        %v5233 = vunpack.c.l.b16 %v5145
        %v5234 = vunpack.c.l.b16 %v5159
        %v5235 = vunpack.c.l.b16 %v5173
        %v5236 = vunpack.c.l.b16 %v5187
        %v5237 = vpack.c.b16 %v5206, %v5205
        %v5238 = vpack.c.b16 %v5208, %v5207
        %v5239 = vpack.c.b16 %v5210, %v5209
        %v5240 = vpack.c.b16 %v5212, %v5211
        %v5241 = vpack.c.b16 %v5214, %v5213
        %v5242 = vpack.c.b16 %v5216, %v5215
        %v5243 = vpack.c.b16 %v5218, %v5217
        %v5244 = vpack.c.b16 %v5220, %v5219
        %v5245 = vpack.c.b16 %v5222, %v5221
        %v5246 = vpack.c.b16 %v5224, %v5223
        %v5247 = vpack.c.b16 %v5226, %v5225
        %v5248 = vpack.c.b16 %v5228, %v5227
        %v5249 = vpack.c.b16 %v5230, %v5229
        %v5250 = vpack.c.b16 %v5232, %v5231
        %v5251 = vpack.c.b16 %v5234, %v5233
        %v5252 = vpack.c.b16 %v5236, %v5235
        %v5285 = vunpack.c.l.b16 %v5189
        %v5286 = vunpack.c.l.b16 %v5190
        %v5287 = vunpack.c.l.b16 %v5191
        %v5288 = vunpack.c.l.b16 %v5192
        %v5289 = vunpack.c.l.b16 %v5193
        %v5290 = vunpack.c.l.b16 %v5194
        %v5291 = vunpack.c.l.b16 %v5195
        %v5292 = vunpack.c.l.b16 %v5196
        %v5293 = vunpack.c.l.b16 %v5197
        %v5294 = vunpack.c.l.b16 %v5198
        %v5295 = vunpack.c.l.b16 %v5199
        %v5296 = vunpack.c.l.b16 %v5200
        %v5297 = vunpack.c.l.b16 %v5201
        %v5298 = vunpack.c.l.b16 %v5202
        %v5299 = vunpack.c.l.b16 %v5203
        %v5300 = vunpack.c.l.b16 %v5204
        %v5301 = vpack.c.b16 %v5286, %v5285
        %v5302 = vpack.c.b16 %v5288, %v5287
        %v5303 = vpack.c.b16 %v5290, %v5289
        %v5304 = vpack.c.b16 %v5292, %v5291
        %v5305 = vpack.c.b16 %v5294, %v5293
        %v5306 = vpack.c.b16 %v5296, %v5295
        %v5307 = vpack.c.b16 %v5298, %v5297
        %v5308 = vpack.c.b16 %v5300, %v5299
        %5317 = vmatpush.bf16.msra.mxu0 %v5308
        %5318 = vmatpush.bf16.msra.mxu0 %v5307
        %5319 = vmatpush.bf16.msra.mxu0 %v5306
        %5320 = vmatpush.bf16.msra.mxu0 %v5305
        %5321 = vmatpush.bf16.msra.mxu0 %v5304
        %5322 = vmatpush.bf16.msra.mxu0 %v5303
        %5323 = vmatpush.bf16.msra.mxu0 %v5302
        %5324 = vmatpush.bf16.msra.mxu0 %v5301
        %5325 = vmatmul.bf16.gmra.mxu0 %v5237
        %v5326 = vpop.f32.mrf.mxu0
        %v5327 = vadd.f32 0.0, %v5326
        %v5328 = vpop.f32.mrf.mxu0
        %v5329 = vadd.f32 0.0, %v5328
        %5330 = vmatmul.bf16.gmra.mxu0 %v5238
        %v5331 = vpop.f32.mrf.mxu0
        %v5332 = vadd.f32 0.0, %v5331
        %v5333 = vpop.f32.mrf.mxu0
        %v5334 = vadd.f32 0.0, %v5333
        %5335 = vmatmul.bf16.gmra.mxu0 %v5239
        %v5336 = vpop.f32.mrf.mxu0
        %v5337 = vadd.f32 0.0, %v5336
        %v5338 = vpop.f32.mrf.mxu0
        %v5339 = vadd.f32 0.0, %v5338
        %5340 = vmatmul.bf16.gmra.mxu0 %v5240
        %v5341 = vpop.f32.mrf.mxu0
        %v5342 = vadd.f32 0.0, %v5341
        %v5343 = vpop.f32.mrf.mxu0
        %v5344 = vadd.f32 0.0, %v5343
        %5345 = vmatmul.bf16.gmra.mxu0 %v5241
        %v5346 = vpop.f32.mrf.mxu0
        %v5347 = vadd.f32 0.0, %v5346
        %v5348 = vpop.f32.mrf.mxu0
        %v5349 = vadd.f32 0.0, %v5348
        %5350 = vmatmul.bf16.gmra.mxu0 %v5242
        %v5351 = vpop.f32.mrf.mxu0
        %v5352 = vadd.f32 0.0, %v5351
        %v5353 = vpop.f32.mrf.mxu0
        %v5354 = vadd.f32 0.0, %v5353
        %5355 = vmatmul.bf16.gmra.mxu0 %v5243
        %v5356 = vpop.f32.mrf.mxu0
        %v5357 = vadd.f32 0.0, %v5356
        %v5358 = vpop.f32.mrf.mxu0
        %v5359 = vadd.f32 0.0, %v5358
        %5360 = vmatmul.bf16.gmra.mxu0 %v5244
        %v5361 = vpop.f32.mrf.mxu0
        %v5362 = vadd.f32 0.0, %v5361
        %v5363 = vpop.f32.mrf.mxu0
        %v5364 = vadd.f32 0.0, %v5363
        %5365 = vmatmul.bf16.gmra.mxu0 %v5245
        %v5366 = vpop.f32.mrf.mxu0
        %v5367 = vadd.f32 0.0, %v5366
        %v5368 = vpop.f32.mrf.mxu0
        %v5369 = vadd.f32 0.0, %v5368
        %5370 = vmatmul.bf16.gmra.mxu0 %v5246
        %v5371 = vpop.f32.mrf.mxu0
        %v5372 = vadd.f32 0.0, %v5371
        %v5373 = vpop.f32.mrf.mxu0
        %v5374 = vadd.f32 0.0, %v5373
        %5375 = vmatmul.bf16.gmra.mxu0 %v5247
        %v5376 = vpop.f32.mrf.mxu0
        %v5377 = vadd.f32 0.0, %v5376
        %v5378 = vpop.f32.mrf.mxu0
        %v5379 = vadd.f32 0.0, %v5378
        %5380 = vmatmul.bf16.gmra.mxu0 %v5248
        %v5381 = vpop.f32.mrf.mxu0
        %v5382 = vadd.f32 0.0, %v5381
        %v5383 = vpop.f32.mrf.mxu0
        %v5384 = vadd.f32 0.0, %v5383
        %5385 = vmatmul.bf16.gmra.mxu0 %v5249
        %v5386 = vpop.f32.mrf.mxu0
        %v5387 = vadd.f32 0.0, %v5386
        %v5388 = vpop.f32.mrf.mxu0
        %v5389 = vadd.f32 0.0, %v5388
        %5390 = vmatmul.bf16.gmra.mxu0 %v5250
        %v5391 = vpop.f32.mrf.mxu0
        %v5392 = vadd.f32 0.0, %v5391
        %v5393 = vpop.f32.mrf.mxu0
        %v5394 = vadd.f32 0.0, %v5393
        %5395 = vmatmul.bf16.gmra.mxu0 %v5251
        %v5396 = vpop.f32.mrf.mxu0
        %v5397 = vadd.f32 0.0, %v5396
        %v5398 = vpop.f32.mrf.mxu0
        %v5399 = vadd.f32 0.0, %v5398
        %5400 = vmatmul.bf16.gmra.mxu0 %v5252
        %v5401 = vpop.f32.mrf.mxu0
        %v5402 = vadd.f32 0.0, %v5401
        %v5403 = vpop.f32.mrf.mxu0
        %v5404 = vadd.f32 0.0, %v5403
        %5405 = vdwg.mxu0
        %v5406 = vadd.f32 %v4644, %v5327
        %v5407 = vadd.f32 %v4645, %v5329
        %v5408 = vadd.f32 %v4646, %v5332
        %v5409 = vadd.f32 %v4647, %v5334
        %v5410 = vadd.f32 %v4648, %v5337
        %v5411 = vadd.f32 %v4649, %v5339
        %v5412 = vadd.f32 %v4650, %v5342
        %v5413 = vadd.f32 %v4651, %v5344
        %v5414 = vadd.f32 %v4652, %v5347
        %v5415 = vadd.f32 %v4653, %v5349
        %v5416 = vadd.f32 %v4654, %v5352
        %v5417 = vadd.f32 %v4655, %v5354
        %v5418 = vadd.f32 %v4656, %v5357
        %v5419 = vadd.f32 %v4657, %v5359
        %v5420 = vadd.f32 %v4658, %v5362
        %v5421 = vadd.f32 %v4659, %v5364
        %v5422 = vadd.f32 %v4660, %v5367
        %v5423 = vadd.f32 %v4661, %v5369
        %v5424 = vadd.f32 %v4662, %v5372
        %v5425 = vadd.f32 %v4663, %v5374
        %v5426 = vadd.f32 %v4664, %v5377
        %v5427 = vadd.f32 %v4665, %v5379
        %v5428 = vadd.f32 %v4666, %v5382
        %v5429 = vadd.f32 %v4667, %v5384
        %v5430 = vadd.f32 %v4668, %v5387
        %v5431 = vadd.f32 %v4669, %v5389
        %v5432 = vadd.f32 %v4670, %v5392
        %v5433 = vadd.f32 %v4671, %v5394
        %v5434 = vadd.f32 %v4672, %v5397
        %v5435 = vadd.f32 %v4673, %v5399
        %v5436 = vadd.f32 %v4674, %v5402
        %v5437 = vadd.f32 %v4675, %v5404
        %v5438 = vld [vmem:[%s4361] sm:$0xe]
        %v5439 = vld [vmem:[%s4361 + $0x8] sm:$0xe]
        %v5440 = vld [vmem:[%s4361 + $0x10] sm:$0xe]
        %v5441 = vld [vmem:[%s4361 + $0x18] sm:$0xe]
        %v5442 = vld [vmem:[%s4361 + $0x20] sm:$0xe]
        %v5443 = vld [vmem:[%s4361 + $0x28] sm:$0xe]
        %v5444 = vld [vmem:[%s4361 + $0x30] sm:$0xe]
        %v5445 = vld [vmem:[%s4361 + $0x38] sm:$0xe]
        %v5446 = vld [vmem:[%s4361 + $0x50] sm:$0xe]
        %v5447 = vld [vmem:[%s4361 + $0x58] sm:$0xe]
        %v5448 = vld [vmem:[%s4361 + $0x60] sm:$0xe]
        %v5449 = vld [vmem:[%s4361 + $0x68] sm:$0xe]
        %v5450 = vld [vmem:[%s4361 + $0x70] sm:$0xe]
        %v5451 = vld [vmem:[%s4361 + $0x78] sm:$0xe]
        %v5452 = vld [vmem:[%s4361 + $0x80] sm:$0xe]
        %v5453 = vld [vmem:[%s4361 + $0x88] sm:$0xe]
        %v5454 = vld [vmem:[%s4361 + $0xa0] sm:$0xe]
        %v5455 = vld [vmem:[%s4361 + $0xa8] sm:$0xe]
        %v5456 = vld [vmem:[%s4361 + $0xb0] sm:$0xe]
        %v5457 = vld [vmem:[%s4361 + $0xb8] sm:$0xe]
        %v5458 = vld [vmem:[%s4361 + $0xc0] sm:$0xe]
        %v5459 = vld [vmem:[%s4361 + $0xc8] sm:$0xe]
        %v5460 = vld [vmem:[%s4361 + $0xd0] sm:$0xe]
        %v5461 = vld [vmem:[%s4361 + $0xd8] sm:$0xe]
        %v5462 = vld [vmem:[%s4361 + $0xf0] sm:$0xe]
        %v5463 = vld [vmem:[%s4361 + $0xf8] sm:$0xe]
        %v5464 = vld [vmem:[%s4361 + $0x100] sm:$0xe]
        %v5465 = vld [vmem:[%s4361 + $0x108] sm:$0xe]
        %v5466 = vld [vmem:[%s4361 + $0x110] sm:$0xe]
        %v5467 = vld [vmem:[%s4361 + $0x118] sm:$0xe]
        %v5468 = vld [vmem:[%s4361 + $0x120] sm:$0xe]
        %v5469 = vld [vmem:[%s4361 + $0x128] sm:$0xe]
        %v5534 = vrot.slane %v5438, 5
        %v5535 = vrot.slane %v5534, 4
        %v5536 = vrot.slane %v4677, 5
        %v5537 = vsel %vm3982, %v5535, %v5536
        %v5538 = vrot.slane %v5439, 5
        %v5539 = vrot.slane %v5538, 4
        %v5540 = vrot.slane %v4679, 5
        %v5541 = vsel %vm3982, %v5539, %v5540
        %v5542 = vrot.slane %v5440, 5
        %v5543 = vrot.slane %v5542, 4
        %v5544 = vrot.slane %v4681, 5
        %v5545 = vsel %vm3982, %v5543, %v5544
        %v5546 = vrot.slane %v5441, 5
        %v5547 = vrot.slane %v5546, 4
        %v5548 = vrot.slane %v4683, 5
        %v5549 = vsel %vm3982, %v5547, %v5548
        %v5550 = vrot.slane %v5442, 5
        %v5551 = vrot.slane %v5550, 4
        %v5552 = vrot.slane %v4685, 5
        %v5553 = vsel %vm3982, %v5551, %v5552
        %v5554 = vrot.slane %v5443, 5
        %v5555 = vrot.slane %v5554, 4
        %v5556 = vrot.slane %v4687, 5
        %v5557 = vsel %vm3982, %v5555, %v5556
        %v5558 = vrot.slane %v5444, 5
        %v5559 = vrot.slane %v5558, 4
        %v5560 = vrot.slane %v4689, 5
        %v5561 = vsel %vm3982, %v5559, %v5560
        %v5562 = vrot.slane %v5445, 5
        %v5563 = vrot.slane %v5562, 4
        %v5564 = vrot.slane %v4691, 5
        %v5565 = vsel %vm3982, %v5563, %v5564
        %v5566 = vrot.slane %v5446, 5
        %v5567 = vrot.slane %v5566, 4
        %v5568 = vrot.slane %v4693, 5
        %v5569 = vsel %vm3982, %v5567, %v5568
        %v5570 = vrot.slane %v5447, 5
        %v5571 = vrot.slane %v5570, 4
        %v5572 = vrot.slane %v4695, 5
        %v5573 = vsel %vm3982, %v5571, %v5572
        %v5574 = vrot.slane %v5448, 5
        %v5575 = vrot.slane %v5574, 4
        %v5576 = vrot.slane %v4697, 5
        %v5577 = vsel %vm3982, %v5575, %v5576
        %v5578 = vrot.slane %v5449, 5
        %v5579 = vrot.slane %v5578, 4
        %v5580 = vrot.slane %v4699, 5
        %v5581 = vsel %vm3982, %v5579, %v5580
        %v5582 = vrot.slane %v5450, 5
        %v5583 = vrot.slane %v5582, 4
        %v5584 = vrot.slane %v4701, 5
        %v5585 = vsel %vm3982, %v5583, %v5584
        %v5586 = vrot.slane %v5451, 5
        %v5587 = vrot.slane %v5586, 4
        %v5588 = vrot.slane %v4703, 5
        %v5589 = vsel %vm3982, %v5587, %v5588
        %v5590 = vrot.slane %v5452, 5
        %v5591 = vrot.slane %v5590, 4
        %v5592 = vrot.slane %v4705, 5
        %v5593 = vsel %vm3982, %v5591, %v5592
        %v5594 = vrot.slane %v5453, 5
        %v5595 = vrot.slane %v5594, 4
        %v5596 = vrot.slane %v4707, 5
        %v5597 = vsel %vm3982, %v5595, %v5596
        %v5598 = vrot.slane %v5454, 5
        %v5599 = vrot.slane %v5598, 4
        %v5600 = vrot.slane %v4709, 5
        %v5601 = vsel %vm3982, %v5599, %v5600
        %v5602 = vrot.slane %v5455, 5
        %v5603 = vrot.slane %v5602, 4
        %v5604 = vrot.slane %v4711, 5
        %v5605 = vsel %vm3982, %v5603, %v5604
        %v5606 = vrot.slane %v5456, 5
        %v5607 = vrot.slane %v5606, 4
        %v5608 = vrot.slane %v4713, 5
        %v5609 = vsel %vm3982, %v5607, %v5608
        %v5610 = vrot.slane %v5457, 5
        %v5611 = vrot.slane %v5610, 4
        %v5612 = vrot.slane %v4715, 5
        %v5613 = vsel %vm3982, %v5611, %v5612
        %v5614 = vrot.slane %v5458, 5
        %v5615 = vrot.slane %v5614, 4
        %v5616 = vrot.slane %v4717, 5
        %v5617 = vsel %vm3982, %v5615, %v5616
        %v5618 = vrot.slane %v5459, 5
        %v5619 = vrot.slane %v5618, 4
        %v5620 = vrot.slane %v4719, 5
        %v5621 = vsel %vm3982, %v5619, %v5620
        %v5622 = vrot.slane %v5460, 5
        %v5623 = vrot.slane %v5622, 4
        %v5624 = vrot.slane %v4721, 5
        %v5625 = vsel %vm3982, %v5623, %v5624
        %v5626 = vrot.slane %v5461, 5
        %v5627 = vrot.slane %v5626, 4
        %v5628 = vrot.slane %v4723, 5
        %v5629 = vsel %vm3982, %v5627, %v5628
        %v5630 = vrot.slane %v5462, 5
        %v5631 = vrot.slane %v5630, 4
        %v5632 = vrot.slane %v4725, 5
        %v5633 = vsel %vm3982, %v5631, %v5632
        %v5634 = vrot.slane %v5463, 5
        %v5635 = vrot.slane %v5634, 4
        %v5636 = vrot.slane %v4727, 5
        %v5637 = vsel %vm3982, %v5635, %v5636
        %v5638 = vrot.slane %v5464, 5
        %v5639 = vrot.slane %v5638, 4
        %v5640 = vrot.slane %v4729, 5
        %v5641 = vsel %vm3982, %v5639, %v5640
        %v5642 = vrot.slane %v5465, 5
        %v5643 = vrot.slane %v5642, 4
        %v5644 = vrot.slane %v4731, 5
        %v5645 = vsel %vm3982, %v5643, %v5644
        %v5646 = vrot.slane %v5466, 5
        %v5647 = vrot.slane %v5646, 4
        %v5648 = vrot.slane %v4733, 5
        %v5649 = vsel %vm3982, %v5647, %v5648
        %v5650 = vrot.slane %v5467, 5
        %v5651 = vrot.slane %v5650, 4
        %v5652 = vrot.slane %v4735, 5
        %v5653 = vsel %vm3982, %v5651, %v5652
        %v5654 = vrot.slane %v5468, 5
        %v5655 = vrot.slane %v5654, 4
        %v5656 = vrot.slane %v4737, 5
        %v5657 = vsel %vm3982, %v5655, %v5656
        %v5658 = vrot.slane %v5469, 5
        %v5659 = vrot.slane %v5658, 4
        %v5660 = vrot.slane %v4739, 5
        %v5661 = vsel %vm3982, %v5659, %v5660
        %s5662 = scalar_lea.vmem %s4, 320
        %v5663 = vld [vmem:[%s5662] sm:$0xf]
        %v5664 = vld [vmem:[%s5662 + $0x4] sm:$0xf]
        %v5665 = vld [vmem:[%s5662 + $0x8] sm:$0xf]
        %v5666 = vld [vmem:[%s5662 + $0xc] sm:$0xf]
        %v5667 = vld [vmem:[%s5662 + $0x10] sm:$0xf]
        %v5668 = vld [vmem:[%s5662 + $0x14] sm:$0xf]
        %v5669 = vld [vmem:[%s5662 + $0x18] sm:$0xf]
        %v5670 = vld [vmem:[%s5662 + $0x1c] sm:$0xf]
        %v5671 = vld [vmem:[%s5662 + $0x20] sm:$0xf]
        %v5672 = vld [vmem:[%s5662 + $0x24] sm:$0xf]
        %v5673 = vld [vmem:[%s5662 + $0x28] sm:$0xf]
        %v5674 = vld [vmem:[%s5662 + $0x2c] sm:$0xf]
        %v5675 = vld [vmem:[%s5662 + $0x30] sm:$0xf]
        %v5676 = vld [vmem:[%s5662 + $0x34] sm:$0xf]
        %v5677 = vld [vmem:[%s5662 + $0x38] sm:$0xf]
        %v5678 = vld [vmem:[%s5662 + $0x3c] sm:$0xf]
        %v5679 = vunpack.c.l.b16 %v5537
        %v5680 = vunpack.c.l.b16 %v5541
        %v5681 = vunpack.c.l.b16 %v5545
        %v5682 = vunpack.c.l.b16 %v5549
        %v5683 = vunpack.c.l.b16 %v5553
        %v5684 = vunpack.c.l.b16 %v5557
        %v5685 = vunpack.c.l.b16 %v5561
        %v5686 = vunpack.c.l.b16 %v5565
        %v5687 = vunpack.c.l.b16 %v5569
        %v5688 = vunpack.c.l.b16 %v5573
        %v5689 = vunpack.c.l.b16 %v5577
        %v5690 = vunpack.c.l.b16 %v5581
        %v5691 = vunpack.c.l.b16 %v5585
        %v5692 = vunpack.c.l.b16 %v5589
        %v5693 = vunpack.c.l.b16 %v5593
        %v5694 = vunpack.c.l.b16 %v5597
        %v5695 = vunpack.c.l.b16 %v5601
        %v5696 = vunpack.c.l.b16 %v5605
        %v5697 = vunpack.c.l.b16 %v5609
        %v5698 = vunpack.c.l.b16 %v5613
        %v5699 = vunpack.c.l.b16 %v5617
        %v5700 = vunpack.c.l.b16 %v5621
        %v5701 = vunpack.c.l.b16 %v5625
        %v5702 = vunpack.c.l.b16 %v5629
        %v5703 = vunpack.c.l.b16 %v5633
        %v5704 = vunpack.c.l.b16 %v5637
        %v5705 = vunpack.c.l.b16 %v5641
        %v5706 = vunpack.c.l.b16 %v5645
        %v5707 = vunpack.c.l.b16 %v5649
        %v5708 = vunpack.c.l.b16 %v5653
        %v5709 = vunpack.c.l.b16 %v5657
        %v5710 = vunpack.c.l.b16 %v5661
        %v5711 = vpack.c.b16 %v5680, %v5679
        %v5712 = vpack.c.b16 %v5682, %v5681
        %v5713 = vpack.c.b16 %v5684, %v5683
        %v5714 = vpack.c.b16 %v5686, %v5685
        %v5715 = vpack.c.b16 %v5688, %v5687
        %v5716 = vpack.c.b16 %v5690, %v5689
        %v5717 = vpack.c.b16 %v5692, %v5691
        %v5718 = vpack.c.b16 %v5694, %v5693
        %v5719 = vpack.c.b16 %v5696, %v5695
        %v5720 = vpack.c.b16 %v5698, %v5697
        %v5721 = vpack.c.b16 %v5700, %v5699
        %v5722 = vpack.c.b16 %v5702, %v5701
        %v5723 = vpack.c.b16 %v5704, %v5703
        %v5724 = vpack.c.b16 %v5706, %v5705
        %v5725 = vpack.c.b16 %v5708, %v5707
        %v5726 = vpack.c.b16 %v5710, %v5709
        %v5759 = vunpack.c.l.b16 %v5663
        %v5760 = vunpack.c.l.b16 %v5664
        %v5761 = vunpack.c.l.b16 %v5665
        %v5762 = vunpack.c.l.b16 %v5666
        %v5763 = vunpack.c.l.b16 %v5667
        %v5764 = vunpack.c.l.b16 %v5668
        %v5765 = vunpack.c.l.b16 %v5669
        %v5766 = vunpack.c.l.b16 %v5670
        %v5767 = vunpack.c.l.b16 %v5671
        %v5768 = vunpack.c.l.b16 %v5672
        %v5769 = vunpack.c.l.b16 %v5673
        %v5770 = vunpack.c.l.b16 %v5674
        %v5771 = vunpack.c.l.b16 %v5675
        %v5772 = vunpack.c.l.b16 %v5676
        %v5773 = vunpack.c.l.b16 %v5677
        %v5774 = vunpack.c.l.b16 %v5678
        %v5775 = vpack.c.b16 %v5760, %v5759
        %v5776 = vpack.c.b16 %v5762, %v5761
        %v5777 = vpack.c.b16 %v5764, %v5763
        %v5778 = vpack.c.b16 %v5766, %v5765
        %v5779 = vpack.c.b16 %v5768, %v5767
        %v5780 = vpack.c.b16 %v5770, %v5769
        %v5781 = vpack.c.b16 %v5772, %v5771
        %v5782 = vpack.c.b16 %v5774, %v5773
        %5791 = vmatpush.bf16.msra.mxu0 %v5782
        %5792 = vmatpush.bf16.msra.mxu0 %v5781
        %5793 = vmatpush.bf16.msra.mxu0 %v5780
        %5794 = vmatpush.bf16.msra.mxu0 %v5779
        %5795 = vmatpush.bf16.msra.mxu0 %v5778
        %5796 = vmatpush.bf16.msra.mxu0 %v5777
        %5797 = vmatpush.bf16.msra.mxu0 %v5776
        %5798 = vmatpush.bf16.msra.mxu0 %v5775
        %5799 = vmatmul.bf16.gmra.mxu0 %v5711
        %v5800 = vpop.f32.mrf.mxu0
        %v5801 = vadd.f32 0.0, %v5800
        %v5802 = vpop.f32.mrf.mxu0
        %v5803 = vadd.f32 0.0, %v5802
        %5804 = vmatmul.bf16.gmra.mxu0 %v5712
        %v5805 = vpop.f32.mrf.mxu0
        %v5806 = vadd.f32 0.0, %v5805
        %v5807 = vpop.f32.mrf.mxu0
        %v5808 = vadd.f32 0.0, %v5807
        %5809 = vmatmul.bf16.gmra.mxu0 %v5713
        %v5810 = vpop.f32.mrf.mxu0
        %v5811 = vadd.f32 0.0, %v5810
        %v5812 = vpop.f32.mrf.mxu0
        %v5813 = vadd.f32 0.0, %v5812
        %5814 = vmatmul.bf16.gmra.mxu0 %v5714
        %v5815 = vpop.f32.mrf.mxu0
        %v5816 = vadd.f32 0.0, %v5815
        %v5817 = vpop.f32.mrf.mxu0
        %v5818 = vadd.f32 0.0, %v5817
        %5819 = vmatmul.bf16.gmra.mxu0 %v5715
        %v5820 = vpop.f32.mrf.mxu0
        %v5821 = vadd.f32 0.0, %v5820
        %v5822 = vpop.f32.mrf.mxu0
        %v5823 = vadd.f32 0.0, %v5822
        %5824 = vmatmul.bf16.gmra.mxu0 %v5716
        %v5825 = vpop.f32.mrf.mxu0
        %v5826 = vadd.f32 0.0, %v5825
        %v5827 = vpop.f32.mrf.mxu0
        %v5828 = vadd.f32 0.0, %v5827
        %5829 = vmatmul.bf16.gmra.mxu0 %v5717
        %v5830 = vpop.f32.mrf.mxu0
        %v5831 = vadd.f32 0.0, %v5830
        %v5832 = vpop.f32.mrf.mxu0
        %v5833 = vadd.f32 0.0, %v5832
        %5834 = vmatmul.bf16.gmra.mxu0 %v5718
        %v5835 = vpop.f32.mrf.mxu0
        %v5836 = vadd.f32 0.0, %v5835
        %v5837 = vpop.f32.mrf.mxu0
        %v5838 = vadd.f32 0.0, %v5837
        %5839 = vmatmul.bf16.gmra.mxu0 %v5719
        %v5840 = vpop.f32.mrf.mxu0
        %v5841 = vadd.f32 0.0, %v5840
        %v5842 = vpop.f32.mrf.mxu0
        %v5843 = vadd.f32 0.0, %v5842
        %5844 = vmatmul.bf16.gmra.mxu0 %v5720
        %v5845 = vpop.f32.mrf.mxu0
        %v5846 = vadd.f32 0.0, %v5845
        %v5847 = vpop.f32.mrf.mxu0
        %v5848 = vadd.f32 0.0, %v5847
        %5849 = vmatmul.bf16.gmra.mxu0 %v5721
        %v5850 = vpop.f32.mrf.mxu0
        %v5851 = vadd.f32 0.0, %v5850
        %v5852 = vpop.f32.mrf.mxu0
        %v5853 = vadd.f32 0.0, %v5852
        %5854 = vmatmul.bf16.gmra.mxu0 %v5722
        %v5855 = vpop.f32.mrf.mxu0
        %v5856 = vadd.f32 0.0, %v5855
        %v5857 = vpop.f32.mrf.mxu0
        %v5858 = vadd.f32 0.0, %v5857
        %5859 = vmatmul.bf16.gmra.mxu0 %v5723
        %v5860 = vpop.f32.mrf.mxu0
        %v5861 = vadd.f32 0.0, %v5860
        %v5862 = vpop.f32.mrf.mxu0
        %v5863 = vadd.f32 0.0, %v5862
        %5864 = vmatmul.bf16.gmra.mxu0 %v5724
        %v5865 = vpop.f32.mrf.mxu0
        %v5866 = vadd.f32 0.0, %v5865
        %v5867 = vpop.f32.mrf.mxu0
        %v5868 = vadd.f32 0.0, %v5867
        %5869 = vmatmul.bf16.gmra.mxu0 %v5725
        %v5870 = vpop.f32.mrf.mxu0
        %v5871 = vadd.f32 0.0, %v5870
        %v5872 = vpop.f32.mrf.mxu0
        %v5873 = vadd.f32 0.0, %v5872
        %5874 = vmatmul.bf16.gmra.mxu0 %v5726
        %v5875 = vpop.f32.mrf.mxu0
        %v5876 = vadd.f32 0.0, %v5875
        %v5877 = vpop.f32.mrf.mxu0
        %v5878 = vadd.f32 0.0, %v5877
        %5879 = vdwg.mxu0
        %v5880 = vadd.f32 %v5406, %v5801
        %v5881 = vadd.f32 %v5407, %v5803
        %v5882 = vadd.f32 %v5408, %v5806
        %v5883 = vadd.f32 %v5409, %v5808
        %v5884 = vadd.f32 %v5410, %v5811
        %v5885 = vadd.f32 %v5411, %v5813
        %v5886 = vadd.f32 %v5412, %v5816
        %v5887 = vadd.f32 %v5413, %v5818
        %v5888 = vadd.f32 %v5414, %v5821
        %v5889 = vadd.f32 %v5415, %v5823
        %v5890 = vadd.f32 %v5416, %v5826
        %v5891 = vadd.f32 %v5417, %v5828
        %v5892 = vadd.f32 %v5418, %v5831
        %v5893 = vadd.f32 %v5419, %v5833
        %v5894 = vadd.f32 %v5420, %v5836
        %v5895 = vadd.f32 %v5421, %v5838
        %v5896 = vadd.f32 %v5422, %v5841
        %v5897 = vadd.f32 %v5423, %v5843
        %v5898 = vadd.f32 %v5424, %v5846
        %v5899 = vadd.f32 %v5425, %v5848
        %v5900 = vadd.f32 %v5426, %v5851
        %v5901 = vadd.f32 %v5427, %v5853
        %v5902 = vadd.f32 %v5428, %v5856
        %v5903 = vadd.f32 %v5429, %v5858
        %v5904 = vadd.f32 %v5430, %v5861
        %v5905 = vadd.f32 %v5431, %v5863
        %v5906 = vadd.f32 %v5432, %v5866
        %v5907 = vadd.f32 %v5433, %v5868
        %v5908 = vadd.f32 %v5434, %v5871
        %v5909 = vadd.f32 %v5435, %v5873
        %v5910 = vadd.f32 %v5436, %v5876
        %v5911 = vadd.f32 %v5437, %v5878
        %s5912 = scalar_lea.vmem [#allocation2], 16
        %v5913 = vld [vmem:[%s5912] sm:$0xf]
        %v5914 = vld [vmem:[%s5912 + $0x8] sm:$0xf]
        %v5915 = vld [vmem:[%s5912 + $0x10] sm:$0xf]
        %v5916 = vld [vmem:[%s5912 + $0x18] sm:$0xf]
        %v5917 = vld [vmem:[%s5912 + $0x20] sm:$0xf]
        %v5918 = vld [vmem:[%s5912 + $0x28] sm:$0xf]
        %v5919 = vld [vmem:[%s5912 + $0x30] sm:$0xf]
        %v5920 = vld [vmem:[%s5912 + $0x38] sm:$0xf]
        %v5921 = vld [vmem:[%s5912 + $0x50] sm:$0xf]
        %v5922 = vld [vmem:[%s5912 + $0x58] sm:$0xf]
        %v5923 = vld [vmem:[%s5912 + $0x60] sm:$0xf]
        %v5924 = vld [vmem:[%s5912 + $0x68] sm:$0xf]
        %v5925 = vld [vmem:[%s5912 + $0x70] sm:$0xf]
        %v5926 = vld [vmem:[%s5912 + $0x78] sm:$0xf]
        %v5927 = vld [vmem:[%s5912 + $0x80] sm:$0xf]
        %v5928 = vld [vmem:[%s5912 + $0x88] sm:$0xf]
        %v5929 = vld [vmem:[%s5912 + $0xa0] sm:$0xf]
        %v5930 = vld [vmem:[%s5912 + $0xa8] sm:$0xf]
        %v5931 = vld [vmem:[%s5912 + $0xb0] sm:$0xf]
        %v5932 = vld [vmem:[%s5912 + $0xb8] sm:$0xf]
        %v5933 = vld [vmem:[%s5912 + $0xc0] sm:$0xf]
        %v5934 = vld [vmem:[%s5912 + $0xc8] sm:$0xf]
        %v5935 = vld [vmem:[%s5912 + $0xd0] sm:$0xf]
        %v5936 = vld [vmem:[%s5912 + $0xd8] sm:$0xf]
        %v5937 = vld [vmem:[%s5912 + $0xf0] sm:$0xf]
        %v5938 = vld [vmem:[%s5912 + $0xf8] sm:$0xf]
        %v5939 = vld [vmem:[%s5912 + $0x100] sm:$0xf]
        %v5940 = vld [vmem:[%s5912 + $0x108] sm:$0xf]
        %v5941 = vld [vmem:[%s5912 + $0x110] sm:$0xf]
        %v5942 = vld [vmem:[%s5912 + $0x118] sm:$0xf]
        %v5943 = vld [vmem:[%s5912 + $0x120] sm:$0xf]
        %v5944 = vld [vmem:[%s5912 + $0x128] sm:$0xf]
        %s5945 = scalar_lea.vmem %s4, 384
        %v5946 = vld [vmem:[%s5945] sm:$0xf]
        %v5947 = vld [vmem:[%s5945 + $0x4] sm:$0xf]
        %v5948 = vld [vmem:[%s5945 + $0x8] sm:$0xf]
        %v5949 = vld [vmem:[%s5945 + $0xc] sm:$0xf]
        %v5950 = vld [vmem:[%s5945 + $0x10] sm:$0xf]
        %v5951 = vld [vmem:[%s5945 + $0x14] sm:$0xf]
        %v5952 = vld [vmem:[%s5945 + $0x18] sm:$0xf]
        %v5953 = vld [vmem:[%s5945 + $0x1c] sm:$0xf]
        %v5954 = vld [vmem:[%s5945 + $0x20] sm:$0xf]
        %v5955 = vld [vmem:[%s5945 + $0x24] sm:$0xf]
        %v5956 = vld [vmem:[%s5945 + $0x28] sm:$0xf]
        %v5957 = vld [vmem:[%s5945 + $0x2c] sm:$0xf]
        %v5958 = vld [vmem:[%s5945 + $0x30] sm:$0xf]
        %v5959 = vld [vmem:[%s5945 + $0x34] sm:$0xf]
        %v5960 = vld [vmem:[%s5945 + $0x38] sm:$0xf]
        %v5961 = vld [vmem:[%s5945 + $0x3c] sm:$0xf]
        %v5994 = vunpack.c.l.b16 %v5913
        %v5995 = vunpack.c.l.b16 %v5914
        %v5996 = vunpack.c.l.b16 %v5915
        %v5997 = vunpack.c.l.b16 %v5916
        %v5998 = vunpack.c.l.b16 %v5917
        %v5999 = vunpack.c.l.b16 %v5918
        %v6000 = vunpack.c.l.b16 %v5919
        %v6001 = vunpack.c.l.b16 %v5920
        %v6002 = vunpack.c.l.b16 %v5921
        %v6003 = vunpack.c.l.b16 %v5922
        %v6004 = vunpack.c.l.b16 %v5923
        %v6005 = vunpack.c.l.b16 %v5924
        %v6006 = vunpack.c.l.b16 %v5925
        %v6007 = vunpack.c.l.b16 %v5926
        %v6008 = vunpack.c.l.b16 %v5927
        %v6009 = vunpack.c.l.b16 %v5928
        %v6010 = vunpack.c.l.b16 %v5929
        %v6011 = vunpack.c.l.b16 %v5930
        %v6012 = vunpack.c.l.b16 %v5931
        %v6013 = vunpack.c.l.b16 %v5932
        %v6014 = vunpack.c.l.b16 %v5933
        %v6015 = vunpack.c.l.b16 %v5934
        %v6016 = vunpack.c.l.b16 %v5935
        %v6017 = vunpack.c.l.b16 %v5936
        %v6018 = vunpack.c.l.b16 %v5937
        %v6019 = vunpack.c.l.b16 %v5938
        %v6020 = vunpack.c.l.b16 %v5939
        %v6021 = vunpack.c.l.b16 %v5940
        %v6022 = vunpack.c.l.b16 %v5941
        %v6023 = vunpack.c.l.b16 %v5942
        %v6024 = vunpack.c.l.b16 %v5943
        %v6025 = vunpack.c.l.b16 %v5944
        %v6026 = vpack.c.b16 %v5995, %v5994
        %v6027 = vpack.c.b16 %v5997, %v5996
        %v6028 = vpack.c.b16 %v5999, %v5998
        %v6029 = vpack.c.b16 %v6001, %v6000
        %v6030 = vpack.c.b16 %v6003, %v6002
        %v6031 = vpack.c.b16 %v6005, %v6004
        %v6032 = vpack.c.b16 %v6007, %v6006
        %v6033 = vpack.c.b16 %v6009, %v6008
        %v6034 = vpack.c.b16 %v6011, %v6010
        %v6035 = vpack.c.b16 %v6013, %v6012
        %v6036 = vpack.c.b16 %v6015, %v6014
        %v6037 = vpack.c.b16 %v6017, %v6016
        %v6038 = vpack.c.b16 %v6019, %v6018
        %v6039 = vpack.c.b16 %v6021, %v6020
        %v6040 = vpack.c.b16 %v6023, %v6022
        %v6041 = vpack.c.b16 %v6025, %v6024
        %v6074 = vunpack.c.l.b16 %v5946
        %v6075 = vunpack.c.l.b16 %v5947
        %v6076 = vunpack.c.l.b16 %v5948
        %v6077 = vunpack.c.l.b16 %v5949
        %v6078 = vunpack.c.l.b16 %v5950
        %v6079 = vunpack.c.l.b16 %v5951
        %v6080 = vunpack.c.l.b16 %v5952
        %v6081 = vunpack.c.l.b16 %v5953
        %v6082 = vunpack.c.l.b16 %v5954
        %v6083 = vunpack.c.l.b16 %v5955
        %v6084 = vunpack.c.l.b16 %v5956
        %v6085 = vunpack.c.l.b16 %v5957
        %v6086 = vunpack.c.l.b16 %v5958
        %v6087 = vunpack.c.l.b16 %v5959
        %v6088 = vunpack.c.l.b16 %v5960
        %v6089 = vunpack.c.l.b16 %v5961
        %v6090 = vpack.c.b16 %v6075, %v6074
        %v6091 = vpack.c.b16 %v6077, %v6076
        %v6092 = vpack.c.b16 %v6079, %v6078
        %v6093 = vpack.c.b16 %v6081, %v6080
        %v6094 = vpack.c.b16 %v6083, %v6082
        %v6095 = vpack.c.b16 %v6085, %v6084
        %v6096 = vpack.c.b16 %v6087, %v6086
        %v6097 = vpack.c.b16 %v6089, %v6088
        %6106 = vmatpush.bf16.msra.mxu0 %v6097
        %6107 = vmatpush.bf16.msra.mxu0 %v6096
        %6108 = vmatpush.bf16.msra.mxu0 %v6095
        %6109 = vmatpush.bf16.msra.mxu0 %v6094
        %6110 = vmatpush.bf16.msra.mxu0 %v6093
        %6111 = vmatpush.bf16.msra.mxu0 %v6092
        %6112 = vmatpush.bf16.msra.mxu0 %v6091
        %6113 = vmatpush.bf16.msra.mxu0 %v6090
        %6114 = vmatmul.bf16.gmra.mxu0 %v6026
        %v6115 = vpop.f32.mrf.mxu0
        %v6116 = vadd.f32 0.0, %v6115
        %v6117 = vpop.f32.mrf.mxu0
        %v6118 = vadd.f32 0.0, %v6117
        %6119 = vmatmul.bf16.gmra.mxu0 %v6027
        %v6120 = vpop.f32.mrf.mxu0
        %v6121 = vadd.f32 0.0, %v6120
        %v6122 = vpop.f32.mrf.mxu0
        %v6123 = vadd.f32 0.0, %v6122
        %6124 = vmatmul.bf16.gmra.mxu0 %v6028
        %v6125 = vpop.f32.mrf.mxu0
        %v6126 = vadd.f32 0.0, %v6125
        %v6127 = vpop.f32.mrf.mxu0
        %v6128 = vadd.f32 0.0, %v6127
        %6129 = vmatmul.bf16.gmra.mxu0 %v6029
        %v6130 = vpop.f32.mrf.mxu0
        %v6131 = vadd.f32 0.0, %v6130
        %v6132 = vpop.f32.mrf.mxu0
        %v6133 = vadd.f32 0.0, %v6132
        %6134 = vmatmul.bf16.gmra.mxu0 %v6030
        %v6135 = vpop.f32.mrf.mxu0
        %v6136 = vadd.f32 0.0, %v6135
        %v6137 = vpop.f32.mrf.mxu0
        %v6138 = vadd.f32 0.0, %v6137
        %6139 = vmatmul.bf16.gmra.mxu0 %v6031
        %v6140 = vpop.f32.mrf.mxu0
        %v6141 = vadd.f32 0.0, %v6140
        %v6142 = vpop.f32.mrf.mxu0
        %v6143 = vadd.f32 0.0, %v6142
        %6144 = vmatmul.bf16.gmra.mxu0 %v6032
        %v6145 = vpop.f32.mrf.mxu0
        %v6146 = vadd.f32 0.0, %v6145
        %v6147 = vpop.f32.mrf.mxu0
        %v6148 = vadd.f32 0.0, %v6147
        %6149 = vmatmul.bf16.gmra.mxu0 %v6033
        %v6150 = vpop.f32.mrf.mxu0
        %v6151 = vadd.f32 0.0, %v6150
        %v6152 = vpop.f32.mrf.mxu0
        %v6153 = vadd.f32 0.0, %v6152
        %6154 = vmatmul.bf16.gmra.mxu0 %v6034
        %v6155 = vpop.f32.mrf.mxu0
        %v6156 = vadd.f32 0.0, %v6155
        %v6157 = vpop.f32.mrf.mxu0
        %v6158 = vadd.f32 0.0, %v6157
        %6159 = vmatmul.bf16.gmra.mxu0 %v6035
        %v6160 = vpop.f32.mrf.mxu0
        %v6161 = vadd.f32 0.0, %v6160
        %v6162 = vpop.f32.mrf.mxu0
        %v6163 = vadd.f32 0.0, %v6162
        %6164 = vmatmul.bf16.gmra.mxu0 %v6036
        %v6165 = vpop.f32.mrf.mxu0
        %v6166 = vadd.f32 0.0, %v6165
        %v6167 = vpop.f32.mrf.mxu0
        %v6168 = vadd.f32 0.0, %v6167
        %6169 = vmatmul.bf16.gmra.mxu0 %v6037
        %v6170 = vpop.f32.mrf.mxu0
        %v6171 = vadd.f32 0.0, %v6170
        %v6172 = vpop.f32.mrf.mxu0
        %v6173 = vadd.f32 0.0, %v6172
        %6174 = vmatmul.bf16.gmra.mxu0 %v6038
        %v6175 = vpop.f32.mrf.mxu0
        %v6176 = vadd.f32 0.0, %v6175
        %v6177 = vpop.f32.mrf.mxu0
        %v6178 = vadd.f32 0.0, %v6177
        %6179 = vmatmul.bf16.gmra.mxu0 %v6039
        %v6180 = vpop.f32.mrf.mxu0
        %v6181 = vadd.f32 0.0, %v6180
        %v6182 = vpop.f32.mrf.mxu0
        %v6183 = vadd.f32 0.0, %v6182
        %6184 = vmatmul.bf16.gmra.mxu0 %v6040
        %v6185 = vpop.f32.mrf.mxu0
        %v6186 = vadd.f32 0.0, %v6185
        %v6187 = vpop.f32.mrf.mxu0
        %v6188 = vadd.f32 0.0, %v6187
        %6189 = vmatmul.bf16.gmra.mxu0 %v6041
        %v6190 = vpop.f32.mrf.mxu0
        %v6191 = vadd.f32 0.0, %v6190
        %v6192 = vpop.f32.mrf.mxu0
        %v6193 = vadd.f32 0.0, %v6192
        %6194 = vdwg.mxu0
        %v6195 = vadd.f32 %v5880, %v6116
        %v6196 = vadd.f32 %v5881, %v6118
        %v6197 = vadd.f32 %v5882, %v6121
        %v6198 = vadd.f32 %v5883, %v6123
        %v6199 = vadd.f32 %v5884, %v6126
        %v6200 = vadd.f32 %v5885, %v6128
        %v6201 = vadd.f32 %v5886, %v6131
        %v6202 = vadd.f32 %v5887, %v6133
        %v6203 = vadd.f32 %v5888, %v6136
        %v6204 = vadd.f32 %v5889, %v6138
        %v6205 = vadd.f32 %v5890, %v6141
        %v6206 = vadd.f32 %v5891, %v6143
        %v6207 = vadd.f32 %v5892, %v6146
        %v6208 = vadd.f32 %v5893, %v6148
        %v6209 = vadd.f32 %v5894, %v6151
        %v6210 = vadd.f32 %v5895, %v6153
        %v6211 = vadd.f32 %v5896, %v6156
        %v6212 = vadd.f32 %v5897, %v6158
        %v6213 = vadd.f32 %v5898, %v6161
        %v6214 = vadd.f32 %v5899, %v6163
        %v6215 = vadd.f32 %v5900, %v6166
        %v6216 = vadd.f32 %v5901, %v6168
        %v6217 = vadd.f32 %v5902, %v6171
        %v6218 = vadd.f32 %v5903, %v6173
        %v6219 = vadd.f32 %v5904, %v6176
        %v6220 = vadd.f32 %v5905, %v6178
        %v6221 = vadd.f32 %v5906, %v6181
        %v6222 = vadd.f32 %v5907, %v6183
        %v6223 = vadd.f32 %v5908, %v6186
        %v6224 = vadd.f32 %v5909, %v6188
        %v6225 = vadd.f32 %v5910, %v6191
        %v6226 = vadd.f32 %v5911, %v6193
        %v6227 = vld [vmem:[%s5912] sm:$0xf]
        %v6228 = vld [vmem:[%s5912 + $0x4] sm:$0x1]
        %v6229 = vld [vmem:[%s5912 + $0x8] sm:$0xf]
        %v6230 = vld [vmem:[%s5912 + $0xc] sm:$0x1]
        %v6231 = vld [vmem:[%s5912 + $0x10] sm:$0xf]
        %v6232 = vld [vmem:[%s5912 + $0x14] sm:$0x1]
        %v6233 = vld [vmem:[%s5912 + $0x18] sm:$0xf]
        %v6234 = vld [vmem:[%s5912 + $0x1c] sm:$0x1]
        %v6235 = vld [vmem:[%s5912 + $0x20] sm:$0xf]
        %v6236 = vld [vmem:[%s5912 + $0x24] sm:$0x1]
        %v6237 = vld [vmem:[%s5912 + $0x28] sm:$0xf]
        %v6238 = vld [vmem:[%s5912 + $0x2c] sm:$0x1]
        %v6239 = vld [vmem:[%s5912 + $0x30] sm:$0xf]
        %v6240 = vld [vmem:[%s5912 + $0x34] sm:$0x1]
        %v6241 = vld [vmem:[%s5912 + $0x38] sm:$0xf]
        %v6242 = vld [vmem:[%s5912 + $0x3c] sm:$0x1]
        %v6243 = vld [vmem:[%s5912 + $0x50] sm:$0xf]
        %v6244 = vld [vmem:[%s5912 + $0x54] sm:$0x1]
        %v6245 = vld [vmem:[%s5912 + $0x58] sm:$0xf]
        %v6246 = vld [vmem:[%s5912 + $0x5c] sm:$0x1]
        %v6247 = vld [vmem:[%s5912 + $0x60] sm:$0xf]
        %v6248 = vld [vmem:[%s5912 + $0x64] sm:$0x1]
        %v6249 = vld [vmem:[%s5912 + $0x68] sm:$0xf]
        %v6250 = vld [vmem:[%s5912 + $0x6c] sm:$0x1]
        %v6251 = vld [vmem:[%s5912 + $0x70] sm:$0xf]
        %v6252 = vld [vmem:[%s5912 + $0x74] sm:$0x1]
        %v6253 = vld [vmem:[%s5912 + $0x78] sm:$0xf]
        %v6254 = vld [vmem:[%s5912 + $0x7c] sm:$0x1]
        %v6255 = vld [vmem:[%s5912 + $0x80] sm:$0xf]
        %v6256 = vld [vmem:[%s5912 + $0x84] sm:$0x1]
        %v6257 = vld [vmem:[%s5912 + $0x88] sm:$0xf]
        %v6258 = vld [vmem:[%s5912 + $0x8c] sm:$0x1]
        %v6259 = vld [vmem:[%s5912 + $0xa0] sm:$0xf]
        %v6260 = vld [vmem:[%s5912 + $0xa4] sm:$0x1]
        %v6261 = vld [vmem:[%s5912 + $0xa8] sm:$0xf]
        %v6262 = vld [vmem:[%s5912 + $0xac] sm:$0x1]
        %v6263 = vld [vmem:[%s5912 + $0xb0] sm:$0xf]
        %v6264 = vld [vmem:[%s5912 + $0xb4] sm:$0x1]
        %v6265 = vld [vmem:[%s5912 + $0xb8] sm:$0xf]
        %v6266 = vld [vmem:[%s5912 + $0xbc] sm:$0x1]
        %v6267 = vld [vmem:[%s5912 + $0xc0] sm:$0xf]
        %v6268 = vld [vmem:[%s5912 + $0xc4] sm:$0x1]
        %v6269 = vld [vmem:[%s5912 + $0xc8] sm:$0xf]
        %v6270 = vld [vmem:[%s5912 + $0xcc] sm:$0x1]
        %v6271 = vld [vmem:[%s5912 + $0xd0] sm:$0xf]
        %v6272 = vld [vmem:[%s5912 + $0xd4] sm:$0x1]
        %v6273 = vld [vmem:[%s5912 + $0xd8] sm:$0xf]
        %v6274 = vld [vmem:[%s5912 + $0xdc] sm:$0x1]
        %v6275 = vld [vmem:[%s5912 + $0xf0] sm:$0xf]
        %v6276 = vld [vmem:[%s5912 + $0xf4] sm:$0x1]
        %v6277 = vld [vmem:[%s5912 + $0xf8] sm:$0xf]
        %v6278 = vld [vmem:[%s5912 + $0xfc] sm:$0x1]
        %v6279 = vld [vmem:[%s5912 + $0x100] sm:$0xf]
        %v6280 = vld [vmem:[%s5912 + $0x104] sm:$0x1]
        %v6281 = vld [vmem:[%s5912 + $0x108] sm:$0xf]
        %v6282 = vld [vmem:[%s5912 + $0x10c] sm:$0x1]
        %v6283 = vld [vmem:[%s5912 + $0x110] sm:$0xf]
        %v6284 = vld [vmem:[%s5912 + $0x114] sm:$0x1]
        %v6285 = vld [vmem:[%s5912 + $0x118] sm:$0xf]
        %v6286 = vld [vmem:[%s5912 + $0x11c] sm:$0x1]
        %v6287 = vld [vmem:[%s5912 + $0x120] sm:$0xf]
        %v6288 = vld [vmem:[%s5912 + $0x124] sm:$0x1]
        %v6289 = vld [vmem:[%s5912 + $0x128] sm:$0xf]
        %v6290 = vld [vmem:[%s5912 + $0x12c] sm:$0x1]
        %v6292 = vshrl.u32 %v6227, 16
        %v6294 = vrot.slane %v6292, 4
        %v6295 = vshll.u32 %v6227, 16
        %v6297 = vrot.slane %v6295, 5
        %v6298 = vor.u32 %v6294, %v6297
        %v6299 = vrot.slane %v6298, 4
        %v6301 = vshll.u32 %v6228, 16
        %v6303 = vrot.slane %v6301, 5
        %v6304 = vsel %vm2984, %v6299, %v6303
        %v6306 = vshrl.u32 %v6229, 16
        %v6308 = vrot.slane %v6306, 4
        %v6309 = vshll.u32 %v6229, 16
        %v6311 = vrot.slane %v6309, 5
        %v6312 = vor.u32 %v6308, %v6311
        %v6313 = vrot.slane %v6312, 4
        %v6315 = vshll.u32 %v6230, 16
        %v6317 = vrot.slane %v6315, 5
        %v6318 = vsel %vm2984, %v6313, %v6317
        %v6320 = vshrl.u32 %v6231, 16
        %v6322 = vrot.slane %v6320, 4
        %v6323 = vshll.u32 %v6231, 16
        %v6325 = vrot.slane %v6323, 5
        %v6326 = vor.u32 %v6322, %v6325
        %v6327 = vrot.slane %v6326, 4
        %v6329 = vshll.u32 %v6232, 16
        %v6331 = vrot.slane %v6329, 5
        %v6332 = vsel %vm2984, %v6327, %v6331
        %v6334 = vshrl.u32 %v6233, 16
        %v6336 = vrot.slane %v6334, 4
        %v6337 = vshll.u32 %v6233, 16
        %v6339 = vrot.slane %v6337, 5
        %v6340 = vor.u32 %v6336, %v6339
        %v6341 = vrot.slane %v6340, 4
        %v6343 = vshll.u32 %v6234, 16
        %v6345 = vrot.slane %v6343, 5
        %v6346 = vsel %vm2984, %v6341, %v6345
        %v6348 = vshrl.u32 %v6235, 16
        %v6350 = vrot.slane %v6348, 4
        %v6351 = vshll.u32 %v6235, 16
        %v6353 = vrot.slane %v6351, 5
        %v6354 = vor.u32 %v6350, %v6353
        %v6355 = vrot.slane %v6354, 4
        %v6357 = vshll.u32 %v6236, 16
        %v6359 = vrot.slane %v6357, 5
        %v6360 = vsel %vm2984, %v6355, %v6359
        %v6362 = vshrl.u32 %v6237, 16
        %v6364 = vrot.slane %v6362, 4
        %v6365 = vshll.u32 %v6237, 16
        %v6367 = vrot.slane %v6365, 5
        %v6368 = vor.u32 %v6364, %v6367
        %v6369 = vrot.slane %v6368, 4
        %v6371 = vshll.u32 %v6238, 16
        %v6373 = vrot.slane %v6371, 5
        %v6374 = vsel %vm2984, %v6369, %v6373
        %v6376 = vshrl.u32 %v6239, 16
        %v6378 = vrot.slane %v6376, 4
        %v6379 = vshll.u32 %v6239, 16
        %v6381 = vrot.slane %v6379, 5
        %v6382 = vor.u32 %v6378, %v6381
        %v6383 = vrot.slane %v6382, 4
        %v6385 = vshll.u32 %v6240, 16
        %v6387 = vrot.slane %v6385, 5
        %v6388 = vsel %vm2984, %v6383, %v6387
        %v6390 = vshrl.u32 %v6241, 16
        %v6392 = vrot.slane %v6390, 4
        %v6393 = vshll.u32 %v6241, 16
        %v6395 = vrot.slane %v6393, 5
        %v6396 = vor.u32 %v6392, %v6395
        %v6397 = vrot.slane %v6396, 4
        %v6399 = vshll.u32 %v6242, 16
        %v6401 = vrot.slane %v6399, 5
        %v6402 = vsel %vm2984, %v6397, %v6401
        %v6404 = vshrl.u32 %v6243, 16
        %v6406 = vrot.slane %v6404, 4
        %v6407 = vshll.u32 %v6243, 16
        %v6409 = vrot.slane %v6407, 5
        %v6410 = vor.u32 %v6406, %v6409
        %v6411 = vrot.slane %v6410, 4
        %v6413 = vshll.u32 %v6244, 16
        %v6415 = vrot.slane %v6413, 5
        %v6416 = vsel %vm2984, %v6411, %v6415
        %v6418 = vshrl.u32 %v6245, 16
        %v6420 = vrot.slane %v6418, 4
        %v6421 = vshll.u32 %v6245, 16
        %v6423 = vrot.slane %v6421, 5
        %v6424 = vor.u32 %v6420, %v6423
        %v6425 = vrot.slane %v6424, 4
        %v6427 = vshll.u32 %v6246, 16
        %v6429 = vrot.slane %v6427, 5
        %v6430 = vsel %vm2984, %v6425, %v6429
        %v6432 = vshrl.u32 %v6247, 16
        %v6434 = vrot.slane %v6432, 4
        %v6435 = vshll.u32 %v6247, 16
        %v6437 = vrot.slane %v6435, 5
        %v6438 = vor.u32 %v6434, %v6437
        %v6439 = vrot.slane %v6438, 4
        %v6441 = vshll.u32 %v6248, 16
        %v6443 = vrot.slane %v6441, 5
        %v6444 = vsel %vm2984, %v6439, %v6443
        %v6446 = vshrl.u32 %v6249, 16
        %v6448 = vrot.slane %v6446, 4
        %v6449 = vshll.u32 %v6249, 16
        %v6451 = vrot.slane %v6449, 5
        %v6452 = vor.u32 %v6448, %v6451
        %v6453 = vrot.slane %v6452, 4
        %v6455 = vshll.u32 %v6250, 16
        %v6457 = vrot.slane %v6455, 5
        %v6458 = vsel %vm2984, %v6453, %v6457
        %v6460 = vshrl.u32 %v6251, 16
        %v6462 = vrot.slane %v6460, 4
        %v6463 = vshll.u32 %v6251, 16
        %v6465 = vrot.slane %v6463, 5
        %v6466 = vor.u32 %v6462, %v6465
        %v6467 = vrot.slane %v6466, 4
        %v6469 = vshll.u32 %v6252, 16
        %v6471 = vrot.slane %v6469, 5
        %v6472 = vsel %vm2984, %v6467, %v6471
        %v6474 = vshrl.u32 %v6253, 16
        %v6476 = vrot.slane %v6474, 4
        %v6477 = vshll.u32 %v6253, 16
        %v6479 = vrot.slane %v6477, 5
        %v6480 = vor.u32 %v6476, %v6479
        %v6481 = vrot.slane %v6480, 4
        %v6483 = vshll.u32 %v6254, 16
        %v6485 = vrot.slane %v6483, 5
        %v6486 = vsel %vm2984, %v6481, %v6485
        %v6488 = vshrl.u32 %v6255, 16
        %v6490 = vrot.slane %v6488, 4
        %v6491 = vshll.u32 %v6255, 16
        %v6493 = vrot.slane %v6491, 5
        %v6494 = vor.u32 %v6490, %v6493
        %v6495 = vrot.slane %v6494, 4
        %v6497 = vshll.u32 %v6256, 16
        %v6499 = vrot.slane %v6497, 5
        %v6500 = vsel %vm2984, %v6495, %v6499
        %v6502 = vshrl.u32 %v6257, 16
        %v6504 = vrot.slane %v6502, 4
        %v6505 = vshll.u32 %v6257, 16
        %v6507 = vrot.slane %v6505, 5
        %v6508 = vor.u32 %v6504, %v6507
        %v6509 = vrot.slane %v6508, 4
        %v6511 = vshll.u32 %v6258, 16
        %v6513 = vrot.slane %v6511, 5
        %v6514 = vsel %vm2984, %v6509, %v6513
        %v6516 = vshrl.u32 %v6259, 16
        %v6518 = vrot.slane %v6516, 4
        %v6519 = vshll.u32 %v6259, 16
        %v6521 = vrot.slane %v6519, 5
        %v6522 = vor.u32 %v6518, %v6521
        %v6523 = vrot.slane %v6522, 4
        %v6525 = vshll.u32 %v6260, 16
        %v6527 = vrot.slane %v6525, 5
        %v6528 = vsel %vm2984, %v6523, %v6527
        %v6530 = vshrl.u32 %v6261, 16
        %v6532 = vrot.slane %v6530, 4
        %v6533 = vshll.u32 %v6261, 16
        %v6535 = vrot.slane %v6533, 5
        %v6536 = vor.u32 %v6532, %v6535
        %v6537 = vrot.slane %v6536, 4
        %v6539 = vshll.u32 %v6262, 16
        %v6541 = vrot.slane %v6539, 5
        %v6542 = vsel %vm2984, %v6537, %v6541
        %v6544 = vshrl.u32 %v6263, 16
        %v6546 = vrot.slane %v6544, 4
        %v6547 = vshll.u32 %v6263, 16
        %v6549 = vrot.slane %v6547, 5
        %v6550 = vor.u32 %v6546, %v6549
        %v6551 = vrot.slane %v6550, 4
        %v6553 = vshll.u32 %v6264, 16
        %v6555 = vrot.slane %v6553, 5
        %v6556 = vsel %vm2984, %v6551, %v6555
        %v6558 = vshrl.u32 %v6265, 16
        %v6560 = vrot.slane %v6558, 4
        %v6561 = vshll.u32 %v6265, 16
        %v6563 = vrot.slane %v6561, 5
        %v6564 = vor.u32 %v6560, %v6563
        %v6565 = vrot.slane %v6564, 4
        %v6567 = vshll.u32 %v6266, 16
        %v6569 = vrot.slane %v6567, 5
        %v6570 = vsel %vm2984, %v6565, %v6569
        %v6572 = vshrl.u32 %v6267, 16
        %v6574 = vrot.slane %v6572, 4
        %v6575 = vshll.u32 %v6267, 16
        %v6577 = vrot.slane %v6575, 5
        %v6578 = vor.u32 %v6574, %v6577
        %v6579 = vrot.slane %v6578, 4
        %v6581 = vshll.u32 %v6268, 16
        %v6583 = vrot.slane %v6581, 5
        %v6584 = vsel %vm2984, %v6579, %v6583
        %v6586 = vshrl.u32 %v6269, 16
        %v6588 = vrot.slane %v6586, 4
        %v6589 = vshll.u32 %v6269, 16
        %v6591 = vrot.slane %v6589, 5
        %v6592 = vor.u32 %v6588, %v6591
        %v6593 = vrot.slane %v6592, 4
        %v6595 = vshll.u32 %v6270, 16
        %v6597 = vrot.slane %v6595, 5
        %v6598 = vsel %vm2984, %v6593, %v6597
        %v6600 = vshrl.u32 %v6271, 16
        %v6602 = vrot.slane %v6600, 4
        %v6603 = vshll.u32 %v6271, 16
        %v6605 = vrot.slane %v6603, 5
        %v6606 = vor.u32 %v6602, %v6605
        %v6607 = vrot.slane %v6606, 4
        %v6609 = vshll.u32 %v6272, 16
        %v6611 = vrot.slane %v6609, 5
        %v6612 = vsel %vm2984, %v6607, %v6611
        %v6614 = vshrl.u32 %v6273, 16
        %v6616 = vrot.slane %v6614, 4
        %v6617 = vshll.u32 %v6273, 16
        %v6619 = vrot.slane %v6617, 5
        %v6620 = vor.u32 %v6616, %v6619
        %v6621 = vrot.slane %v6620, 4
        %v6623 = vshll.u32 %v6274, 16
        %v6625 = vrot.slane %v6623, 5
        %v6626 = vsel %vm2984, %v6621, %v6625
        %v6628 = vshrl.u32 %v6275, 16
        %v6630 = vrot.slane %v6628, 4
        %v6631 = vshll.u32 %v6275, 16
        %v6633 = vrot.slane %v6631, 5
        %v6634 = vor.u32 %v6630, %v6633
        %v6635 = vrot.slane %v6634, 4
        %v6637 = vshll.u32 %v6276, 16
        %v6639 = vrot.slane %v6637, 5
        %v6640 = vsel %vm2984, %v6635, %v6639
        %v6642 = vshrl.u32 %v6277, 16
        %v6644 = vrot.slane %v6642, 4
        %v6645 = vshll.u32 %v6277, 16
        %v6647 = vrot.slane %v6645, 5
        %v6648 = vor.u32 %v6644, %v6647
        %v6649 = vrot.slane %v6648, 4
        %v6651 = vshll.u32 %v6278, 16
        %v6653 = vrot.slane %v6651, 5
        %v6654 = vsel %vm2984, %v6649, %v6653
        %v6656 = vshrl.u32 %v6279, 16
        %v6658 = vrot.slane %v6656, 4
        %v6659 = vshll.u32 %v6279, 16
        %v6661 = vrot.slane %v6659, 5
        %v6662 = vor.u32 %v6658, %v6661
        %v6663 = vrot.slane %v6662, 4
        %v6665 = vshll.u32 %v6280, 16
        %v6667 = vrot.slane %v6665, 5
        %v6668 = vsel %vm2984, %v6663, %v6667
        %v6670 = vshrl.u32 %v6281, 16
        %v6672 = vrot.slane %v6670, 4
        %v6673 = vshll.u32 %v6281, 16
        %v6675 = vrot.slane %v6673, 5
        %v6676 = vor.u32 %v6672, %v6675
        %v6677 = vrot.slane %v6676, 4
        %v6679 = vshll.u32 %v6282, 16
        %v6681 = vrot.slane %v6679, 5
        %v6682 = vsel %vm2984, %v6677, %v6681
        %v6684 = vshrl.u32 %v6283, 16
        %v6686 = vrot.slane %v6684, 4
        %v6687 = vshll.u32 %v6283, 16
        %v6689 = vrot.slane %v6687, 5
        %v6690 = vor.u32 %v6686, %v6689
        %v6691 = vrot.slane %v6690, 4
        %v6693 = vshll.u32 %v6284, 16
        %v6695 = vrot.slane %v6693, 5
        %v6696 = vsel %vm2984, %v6691, %v6695
        %v6698 = vshrl.u32 %v6285, 16
        %v6700 = vrot.slane %v6698, 4
        %v6701 = vshll.u32 %v6285, 16
        %v6703 = vrot.slane %v6701, 5
        %v6704 = vor.u32 %v6700, %v6703
        %v6705 = vrot.slane %v6704, 4
        %v6707 = vshll.u32 %v6286, 16
        %v6709 = vrot.slane %v6707, 5
        %v6710 = vsel %vm2984, %v6705, %v6709
        %v6712 = vshrl.u32 %v6287, 16
        %v6714 = vrot.slane %v6712, 4
        %v6715 = vshll.u32 %v6287, 16
        %v6717 = vrot.slane %v6715, 5
        %v6718 = vor.u32 %v6714, %v6717
        %v6719 = vrot.slane %v6718, 4
        %v6721 = vshll.u32 %v6288, 16
        %v6723 = vrot.slane %v6721, 5
        %v6724 = vsel %vm2984, %v6719, %v6723
        %v6726 = vshrl.u32 %v6289, 16
        %v6728 = vrot.slane %v6726, 4
        %v6729 = vshll.u32 %v6289, 16
        %v6731 = vrot.slane %v6729, 5
        %v6732 = vor.u32 %v6728, %v6731
        %v6733 = vrot.slane %v6732, 4
        %v6735 = vshll.u32 %v6290, 16
        %v6737 = vrot.slane %v6735, 5
        %v6738 = vsel %vm2984, %v6733, %v6737
        %s6739 = scalar_lea.vmem %s4, 448
        %v6740 = vld [vmem:[%s6739] sm:$0xf]
        %v6741 = vld [vmem:[%s6739 + $0x4] sm:$0xf]
        %v6742 = vld [vmem:[%s6739 + $0x8] sm:$0xf]
        %v6743 = vld [vmem:[%s6739 + $0xc] sm:$0xf]
        %v6744 = vld [vmem:[%s6739 + $0x10] sm:$0xf]
        %v6745 = vld [vmem:[%s6739 + $0x14] sm:$0xf]
        %v6746 = vld [vmem:[%s6739 + $0x18] sm:$0xf]
        %v6747 = vld [vmem:[%s6739 + $0x1c] sm:$0xf]
        %v6748 = vld [vmem:[%s6739 + $0x20] sm:$0xf]
        %v6749 = vld [vmem:[%s6739 + $0x24] sm:$0xf]
        %v6750 = vld [vmem:[%s6739 + $0x28] sm:$0xf]
        %v6751 = vld [vmem:[%s6739 + $0x2c] sm:$0xf]
        %v6752 = vld [vmem:[%s6739 + $0x30] sm:$0xf]
        %v6753 = vld [vmem:[%s6739 + $0x34] sm:$0xf]
        %v6754 = vld [vmem:[%s6739 + $0x38] sm:$0xf]
        %v6755 = vld [vmem:[%s6739 + $0x3c] sm:$0xf]
        %v6756 = vunpack.c.l.b16 %v6304
        %v6757 = vunpack.c.l.b16 %v6318
        %v6758 = vunpack.c.l.b16 %v6332
        %v6759 = vunpack.c.l.b16 %v6346
        %v6760 = vunpack.c.l.b16 %v6360
        %v6761 = vunpack.c.l.b16 %v6374
        %v6762 = vunpack.c.l.b16 %v6388
        %v6763 = vunpack.c.l.b16 %v6402
        %v6764 = vunpack.c.l.b16 %v6416
        %v6765 = vunpack.c.l.b16 %v6430
        %v6766 = vunpack.c.l.b16 %v6444
        %v6767 = vunpack.c.l.b16 %v6458
        %v6768 = vunpack.c.l.b16 %v6472
        %v6769 = vunpack.c.l.b16 %v6486
        %v6770 = vunpack.c.l.b16 %v6500
        %v6771 = vunpack.c.l.b16 %v6514
        %v6772 = vunpack.c.l.b16 %v6528
        %v6773 = vunpack.c.l.b16 %v6542
        %v6774 = vunpack.c.l.b16 %v6556
        %v6775 = vunpack.c.l.b16 %v6570
        %v6776 = vunpack.c.l.b16 %v6584
        %v6777 = vunpack.c.l.b16 %v6598
        %v6778 = vunpack.c.l.b16 %v6612
        %v6779 = vunpack.c.l.b16 %v6626
        %v6780 = vunpack.c.l.b16 %v6640
        %v6781 = vunpack.c.l.b16 %v6654
        %v6782 = vunpack.c.l.b16 %v6668
        %v6783 = vunpack.c.l.b16 %v6682
        %v6784 = vunpack.c.l.b16 %v6696
        %v6785 = vunpack.c.l.b16 %v6710
        %v6786 = vunpack.c.l.b16 %v6724
        %v6787 = vunpack.c.l.b16 %v6738
        %v6788 = vpack.c.b16 %v6757, %v6756
        %v6789 = vpack.c.b16 %v6759, %v6758
        %v6790 = vpack.c.b16 %v6761, %v6760
        %v6791 = vpack.c.b16 %v6763, %v6762
        %v6792 = vpack.c.b16 %v6765, %v6764
        %v6793 = vpack.c.b16 %v6767, %v6766
        %v6794 = vpack.c.b16 %v6769, %v6768
        %v6795 = vpack.c.b16 %v6771, %v6770
        %v6796 = vpack.c.b16 %v6773, %v6772
        %v6797 = vpack.c.b16 %v6775, %v6774
        %v6798 = vpack.c.b16 %v6777, %v6776
        %v6799 = vpack.c.b16 %v6779, %v6778
        %v6800 = vpack.c.b16 %v6781, %v6780
        %v6801 = vpack.c.b16 %v6783, %v6782
        %v6802 = vpack.c.b16 %v6785, %v6784
        %v6803 = vpack.c.b16 %v6787, %v6786
        %v6836 = vunpack.c.l.b16 %v6740
        %v6837 = vunpack.c.l.b16 %v6741
        %v6838 = vunpack.c.l.b16 %v6742
        %v6839 = vunpack.c.l.b16 %v6743
        %v6840 = vunpack.c.l.b16 %v6744
        %v6841 = vunpack.c.l.b16 %v6745
        %v6842 = vunpack.c.l.b16 %v6746
        %v6843 = vunpack.c.l.b16 %v6747
        %v6844 = vunpack.c.l.b16 %v6748
        %v6845 = vunpack.c.l.b16 %v6749
        %v6846 = vunpack.c.l.b16 %v6750
        %v6847 = vunpack.c.l.b16 %v6751
        %v6848 = vunpack.c.l.b16 %v6752
        %v6849 = vunpack.c.l.b16 %v6753
        %v6850 = vunpack.c.l.b16 %v6754
        %v6851 = vunpack.c.l.b16 %v6755
        %v6852 = vpack.c.b16 %v6837, %v6836
        %v6853 = vpack.c.b16 %v6839, %v6838
        %v6854 = vpack.c.b16 %v6841, %v6840
        %v6855 = vpack.c.b16 %v6843, %v6842
        %v6856 = vpack.c.b16 %v6845, %v6844
        %v6857 = vpack.c.b16 %v6847, %v6846
        %v6858 = vpack.c.b16 %v6849, %v6848
        %v6859 = vpack.c.b16 %v6851, %v6850
        %6868 = vmatpush.bf16.msra.mxu0 %v6859
        %6869 = vmatpush.bf16.msra.mxu0 %v6858
        %6870 = vmatpush.bf16.msra.mxu0 %v6857
        %6871 = vmatpush.bf16.msra.mxu0 %v6856
        %6872 = vmatpush.bf16.msra.mxu0 %v6855
        %6873 = vmatpush.bf16.msra.mxu0 %v6854
        %6874 = vmatpush.bf16.msra.mxu0 %v6853
        %6875 = vmatpush.bf16.msra.mxu0 %v6852
        %6876 = vmatmul.bf16.gmra.mxu0 %v6788
        %v6877 = vpop.f32.mrf.mxu0
        %v6878 = vadd.f32 0.0, %v6877
        %v6879 = vpop.f32.mrf.mxu0
        %v6880 = vadd.f32 0.0, %v6879
        %6881 = vmatmul.bf16.gmra.mxu0 %v6789
        %v6882 = vpop.f32.mrf.mxu0
        %v6883 = vadd.f32 0.0, %v6882
        %v6884 = vpop.f32.mrf.mxu0
        %v6885 = vadd.f32 0.0, %v6884
        %6886 = vmatmul.bf16.gmra.mxu0 %v6790
        %v6887 = vpop.f32.mrf.mxu0
        %v6888 = vadd.f32 0.0, %v6887
        %v6889 = vpop.f32.mrf.mxu0
        %v6890 = vadd.f32 0.0, %v6889
        %6891 = vmatmul.bf16.gmra.mxu0 %v6791
        %v6892 = vpop.f32.mrf.mxu0
        %v6893 = vadd.f32 0.0, %v6892
        %v6894 = vpop.f32.mrf.mxu0
        %v6895 = vadd.f32 0.0, %v6894
        %6896 = vmatmul.bf16.gmra.mxu0 %v6792
        %v6897 = vpop.f32.mrf.mxu0
        %v6898 = vadd.f32 0.0, %v6897
        %v6899 = vpop.f32.mrf.mxu0
        %v6900 = vadd.f32 0.0, %v6899
        %6901 = vmatmul.bf16.gmra.mxu0 %v6793
        %v6902 = vpop.f32.mrf.mxu0
        %v6903 = vadd.f32 0.0, %v6902
        %v6904 = vpop.f32.mrf.mxu0
        %v6905 = vadd.f32 0.0, %v6904
        %6906 = vmatmul.bf16.gmra.mxu0 %v6794
        %v6907 = vpop.f32.mrf.mxu0
        %v6908 = vadd.f32 0.0, %v6907
        %v6909 = vpop.f32.mrf.mxu0
        %v6910 = vadd.f32 0.0, %v6909
        %6911 = vmatmul.bf16.gmra.mxu0 %v6795
        %v6912 = vpop.f32.mrf.mxu0
        %v6913 = vadd.f32 0.0, %v6912
        %v6914 = vpop.f32.mrf.mxu0
        %v6915 = vadd.f32 0.0, %v6914
        %6916 = vmatmul.bf16.gmra.mxu0 %v6796
        %v6917 = vpop.f32.mrf.mxu0
        %v6918 = vadd.f32 0.0, %v6917
        %v6919 = vpop.f32.mrf.mxu0
        %v6920 = vadd.f32 0.0, %v6919
        %6921 = vmatmul.bf16.gmra.mxu0 %v6797
        %v6922 = vpop.f32.mrf.mxu0
        %v6923 = vadd.f32 0.0, %v6922
        %v6924 = vpop.f32.mrf.mxu0
        %v6925 = vadd.f32 0.0, %v6924
        %6926 = vmatmul.bf16.gmra.mxu0 %v6798
        %v6927 = vpop.f32.mrf.mxu0
        %v6928 = vadd.f32 0.0, %v6927
        %v6929 = vpop.f32.mrf.mxu0
        %v6930 = vadd.f32 0.0, %v6929
        %6931 = vmatmul.bf16.gmra.mxu0 %v6799
        %v6932 = vpop.f32.mrf.mxu0
        %v6933 = vadd.f32 0.0, %v6932
        %v6934 = vpop.f32.mrf.mxu0
        %v6935 = vadd.f32 0.0, %v6934
        %6936 = vmatmul.bf16.gmra.mxu0 %v6800
        %v6937 = vpop.f32.mrf.mxu0
        %v6938 = vadd.f32 0.0, %v6937
        %v6939 = vpop.f32.mrf.mxu0
        %v6940 = vadd.f32 0.0, %v6939
        %6941 = vmatmul.bf16.gmra.mxu0 %v6801
        %v6942 = vpop.f32.mrf.mxu0
        %v6943 = vadd.f32 0.0, %v6942
        %v6944 = vpop.f32.mrf.mxu0
        %v6945 = vadd.f32 0.0, %v6944
        %6946 = vmatmul.bf16.gmra.mxu0 %v6802
        %v6947 = vpop.f32.mrf.mxu0
        %v6948 = vadd.f32 0.0, %v6947
        %v6949 = vpop.f32.mrf.mxu0
        %v6950 = vadd.f32 0.0, %v6949
        %6951 = vmatmul.bf16.gmra.mxu0 %v6803
        %v6952 = vpop.f32.mrf.mxu0
        %v6953 = vadd.f32 0.0, %v6952
        %v6954 = vpop.f32.mrf.mxu0
        %v6955 = vadd.f32 0.0, %v6954
        %6956 = vdwg.mxu0
        %v6957 = vadd.f32 %v6195, %v6878
        %v6958 = vadd.f32 %v6196, %v6880
        %v6959 = vadd.f32 %v6197, %v6883
        %v6960 = vadd.f32 %v6198, %v6885
        %v6961 = vadd.f32 %v6199, %v6888
        %v6962 = vadd.f32 %v6200, %v6890
        %v6963 = vadd.f32 %v6201, %v6893
        %v6964 = vadd.f32 %v6202, %v6895
        %v6965 = vadd.f32 %v6203, %v6898
        %v6966 = vadd.f32 %v6204, %v6900
        %v6967 = vadd.f32 %v6205, %v6903
        %v6968 = vadd.f32 %v6206, %v6905
        %v6969 = vadd.f32 %v6207, %v6908
        %v6970 = vadd.f32 %v6208, %v6910
        %v6971 = vadd.f32 %v6209, %v6913
        %v6972 = vadd.f32 %v6210, %v6915
        %v6973 = vadd.f32 %v6211, %v6918
        %v6974 = vadd.f32 %v6212, %v6920
        %v6975 = vadd.f32 %v6213, %v6923
        %v6976 = vadd.f32 %v6214, %v6925
        %v6977 = vadd.f32 %v6215, %v6928
        %v6978 = vadd.f32 %v6216, %v6930
        %v6979 = vadd.f32 %v6217, %v6933
        %v6980 = vadd.f32 %v6218, %v6935
        %v6981 = vadd.f32 %v6219, %v6938
        %v6982 = vadd.f32 %v6220, %v6940
        %v6983 = vadd.f32 %v6221, %v6943
        %v6984 = vadd.f32 %v6222, %v6945
        %v6985 = vadd.f32 %v6223, %v6948
        %v6986 = vadd.f32 %v6224, %v6950
        %v6987 = vadd.f32 %v6225, %v6953
        %v6988 = vadd.f32 %v6226, %v6955
        %v6989 = vld [vmem:[%s5912] sm:$0xe]
        %v6990 = vld [vmem:[%s5912 + $0x8] sm:$0xe]
        %v6991 = vld [vmem:[%s5912 + $0x10] sm:$0xe]
        %v6992 = vld [vmem:[%s5912 + $0x18] sm:$0xe]
        %v6993 = vld [vmem:[%s5912 + $0x20] sm:$0xe]
        %v6994 = vld [vmem:[%s5912 + $0x28] sm:$0xe]
        %v6995 = vld [vmem:[%s5912 + $0x30] sm:$0xe]
        %v6996 = vld [vmem:[%s5912 + $0x38] sm:$0xe]
        %v6997 = vld [vmem:[%s5912 + $0x50] sm:$0xe]
        %v6998 = vld [vmem:[%s5912 + $0x58] sm:$0xe]
        %v6999 = vld [vmem:[%s5912 + $0x60] sm:$0xe]
        %v7000 = vld [vmem:[%s5912 + $0x68] sm:$0xe]
        %v7001 = vld [vmem:[%s5912 + $0x70] sm:$0xe]
        %v7002 = vld [vmem:[%s5912 + $0x78] sm:$0xe]
        %v7003 = vld [vmem:[%s5912 + $0x80] sm:$0xe]
        %v7004 = vld [vmem:[%s5912 + $0x88] sm:$0xe]
        %v7005 = vld [vmem:[%s5912 + $0xa0] sm:$0xe]
        %v7006 = vld [vmem:[%s5912 + $0xa8] sm:$0xe]
        %v7007 = vld [vmem:[%s5912 + $0xb0] sm:$0xe]
        %v7008 = vld [vmem:[%s5912 + $0xb8] sm:$0xe]
        %v7009 = vld [vmem:[%s5912 + $0xc0] sm:$0xe]
        %v7010 = vld [vmem:[%s5912 + $0xc8] sm:$0xe]
        %v7011 = vld [vmem:[%s5912 + $0xd0] sm:$0xe]
        %v7012 = vld [vmem:[%s5912 + $0xd8] sm:$0xe]
        %v7013 = vld [vmem:[%s5912 + $0xf0] sm:$0xe]
        %v7014 = vld [vmem:[%s5912 + $0xf8] sm:$0xe]
        %v7015 = vld [vmem:[%s5912 + $0x100] sm:$0xe]
        %v7016 = vld [vmem:[%s5912 + $0x108] sm:$0xe]
        %v7017 = vld [vmem:[%s5912 + $0x110] sm:$0xe]
        %v7018 = vld [vmem:[%s5912 + $0x118] sm:$0xe]
        %v7019 = vld [vmem:[%s5912 + $0x120] sm:$0xe]
        %v7020 = vld [vmem:[%s5912 + $0x128] sm:$0xe]
        %v7085 = vrot.slane %v6989, 5
        %v7086 = vrot.slane %v7085, 4
        %v7087 = vrot.slane %v6228, 5
        %v7088 = vsel %vm3982, %v7086, %v7087
        %v7089 = vrot.slane %v6990, 5
        %v7090 = vrot.slane %v7089, 4
        %v7091 = vrot.slane %v6230, 5
        %v7092 = vsel %vm3982, %v7090, %v7091
        %v7093 = vrot.slane %v6991, 5
        %v7094 = vrot.slane %v7093, 4
        %v7095 = vrot.slane %v6232, 5
        %v7096 = vsel %vm3982, %v7094, %v7095
        %v7097 = vrot.slane %v6992, 5
        %v7098 = vrot.slane %v7097, 4
        %v7099 = vrot.slane %v6234, 5
        %v7100 = vsel %vm3982, %v7098, %v7099
        %v7101 = vrot.slane %v6993, 5
        %v7102 = vrot.slane %v7101, 4
        %v7103 = vrot.slane %v6236, 5
        %v7104 = vsel %vm3982, %v7102, %v7103
        %v7105 = vrot.slane %v6994, 5
        %v7106 = vrot.slane %v7105, 4
        %v7107 = vrot.slane %v6238, 5
        %v7108 = vsel %vm3982, %v7106, %v7107
        %v7109 = vrot.slane %v6995, 5
        %v7110 = vrot.slane %v7109, 4
        %v7111 = vrot.slane %v6240, 5
        %v7112 = vsel %vm3982, %v7110, %v7111
        %v7113 = vrot.slane %v6996, 5
        %v7114 = vrot.slane %v7113, 4
        %v7115 = vrot.slane %v6242, 5
        %v7116 = vsel %vm3982, %v7114, %v7115
        %v7117 = vrot.slane %v6997, 5
        %v7118 = vrot.slane %v7117, 4
        %v7119 = vrot.slane %v6244, 5
        %v7120 = vsel %vm3982, %v7118, %v7119
        %v7121 = vrot.slane %v6998, 5
        %v7122 = vrot.slane %v7121, 4
        %v7123 = vrot.slane %v6246, 5
        %v7124 = vsel %vm3982, %v7122, %v7123
        %v7125 = vrot.slane %v6999, 5
        %v7126 = vrot.slane %v7125, 4
        %v7127 = vrot.slane %v6248, 5
        %v7128 = vsel %vm3982, %v7126, %v7127
        %v7129 = vrot.slane %v7000, 5
        %v7130 = vrot.slane %v7129, 4
        %v7131 = vrot.slane %v6250, 5
        %v7132 = vsel %vm3982, %v7130, %v7131
        %v7133 = vrot.slane %v7001, 5
        %v7134 = vrot.slane %v7133, 4
        %v7135 = vrot.slane %v6252, 5
        %v7136 = vsel %vm3982, %v7134, %v7135
        %v7137 = vrot.slane %v7002, 5
        %v7138 = vrot.slane %v7137, 4
        %v7139 = vrot.slane %v6254, 5
        %v7140 = vsel %vm3982, %v7138, %v7139
        %v7141 = vrot.slane %v7003, 5
        %v7142 = vrot.slane %v7141, 4
        %v7143 = vrot.slane %v6256, 5
        %v7144 = vsel %vm3982, %v7142, %v7143
        %v7145 = vrot.slane %v7004, 5
        %v7146 = vrot.slane %v7145, 4
        %v7147 = vrot.slane %v6258, 5
        %v7148 = vsel %vm3982, %v7146, %v7147
        %v7149 = vrot.slane %v7005, 5
        %v7150 = vrot.slane %v7149, 4
        %v7151 = vrot.slane %v6260, 5
        %v7152 = vsel %vm3982, %v7150, %v7151
        %v7153 = vrot.slane %v7006, 5
        %v7154 = vrot.slane %v7153, 4
        %v7155 = vrot.slane %v6262, 5
        %v7156 = vsel %vm3982, %v7154, %v7155
        %v7157 = vrot.slane %v7007, 5
        %v7158 = vrot.slane %v7157, 4
        %v7159 = vrot.slane %v6264, 5
        %v7160 = vsel %vm3982, %v7158, %v7159
        %v7161 = vrot.slane %v7008, 5
        %v7162 = vrot.slane %v7161, 4
        %v7163 = vrot.slane %v6266, 5
        %v7164 = vsel %vm3982, %v7162, %v7163
        %v7165 = vrot.slane %v7009, 5
        %v7166 = vrot.slane %v7165, 4
        %v7167 = vrot.slane %v6268, 5
        %v7168 = vsel %vm3982, %v7166, %v7167
        %v7169 = vrot.slane %v7010, 5
        %v7170 = vrot.slane %v7169, 4
        %v7171 = vrot.slane %v6270, 5
        %v7172 = vsel %vm3982, %v7170, %v7171
        %v7173 = vrot.slane %v7011, 5
        %v7174 = vrot.slane %v7173, 4
        %v7175 = vrot.slane %v6272, 5
        %v7176 = vsel %vm3982, %v7174, %v7175
        %v7177 = vrot.slane %v7012, 5
        %v7178 = vrot.slane %v7177, 4
        %v7179 = vrot.slane %v6274, 5
        %v7180 = vsel %vm3982, %v7178, %v7179
        %v7181 = vrot.slane %v7013, 5
        %v7182 = vrot.slane %v7181, 4
        %v7183 = vrot.slane %v6276, 5
        %v7184 = vsel %vm3982, %v7182, %v7183
        %v7185 = vrot.slane %v7014, 5
        %v7186 = vrot.slane %v7185, 4
        %v7187 = vrot.slane %v6278, 5
        %v7188 = vsel %vm3982, %v7186, %v7187
        %v7189 = vrot.slane %v7015, 5
        %v7190 = vrot.slane %v7189, 4
        %v7191 = vrot.slane %v6280, 5
        %v7192 = vsel %vm3982, %v7190, %v7191
        %v7193 = vrot.slane %v7016, 5
        %v7194 = vrot.slane %v7193, 4
        %v7195 = vrot.slane %v6282, 5
        %v7196 = vsel %vm3982, %v7194, %v7195
        %v7197 = vrot.slane %v7017, 5
        %v7198 = vrot.slane %v7197, 4
        %v7199 = vrot.slane %v6284, 5
        %v7200 = vsel %vm3982, %v7198, %v7199
        %v7201 = vrot.slane %v7018, 5
        %v7202 = vrot.slane %v7201, 4
        %v7203 = vrot.slane %v6286, 5
        %v7204 = vsel %vm3982, %v7202, %v7203
        %v7205 = vrot.slane %v7019, 5
        %v7206 = vrot.slane %v7205, 4
        %v7207 = vrot.slane %v6288, 5
        %v7208 = vsel %vm3982, %v7206, %v7207
        %v7209 = vrot.slane %v7020, 5
        %v7210 = vrot.slane %v7209, 4
        %v7211 = vrot.slane %v6290, 5
        %v7212 = vsel %vm3982, %v7210, %v7211
        %s7213 = scalar_lea.vmem %s4, 512
        %v7214 = vld [vmem:[%s7213] sm:$0xf]
        %v7215 = vld [vmem:[%s7213 + $0x4] sm:$0xf]
        %v7216 = vld [vmem:[%s7213 + $0x8] sm:$0xf]
        %v7217 = vld [vmem:[%s7213 + $0xc] sm:$0xf]
        %v7218 = vld [vmem:[%s7213 + $0x10] sm:$0xf]
        %v7219 = vld [vmem:[%s7213 + $0x14] sm:$0xf]
        %v7220 = vld [vmem:[%s7213 + $0x18] sm:$0xf]
        %v7221 = vld [vmem:[%s7213 + $0x1c] sm:$0xf]
        %v7222 = vld [vmem:[%s7213 + $0x20] sm:$0xf]
        %v7223 = vld [vmem:[%s7213 + $0x24] sm:$0xf]
        %v7224 = vld [vmem:[%s7213 + $0x28] sm:$0xf]
        %v7225 = vld [vmem:[%s7213 + $0x2c] sm:$0xf]
        %v7226 = vld [vmem:[%s7213 + $0x30] sm:$0xf]
        %v7227 = vld [vmem:[%s7213 + $0x34] sm:$0xf]
        %v7228 = vld [vmem:[%s7213 + $0x38] sm:$0xf]
        %v7229 = vld [vmem:[%s7213 + $0x3c] sm:$0xf]
        %v7230 = vunpack.c.l.b16 %v7088
        %v7231 = vunpack.c.l.b16 %v7092
        %v7232 = vunpack.c.l.b16 %v7096
        %v7233 = vunpack.c.l.b16 %v7100
        %v7234 = vunpack.c.l.b16 %v7104
        %v7235 = vunpack.c.l.b16 %v7108
        %v7236 = vunpack.c.l.b16 %v7112
        %v7237 = vunpack.c.l.b16 %v7116
        %v7238 = vunpack.c.l.b16 %v7120
        %v7239 = vunpack.c.l.b16 %v7124
        %v7240 = vunpack.c.l.b16 %v7128
        %v7241 = vunpack.c.l.b16 %v7132
        %v7242 = vunpack.c.l.b16 %v7136
        %v7243 = vunpack.c.l.b16 %v7140
        %v7244 = vunpack.c.l.b16 %v7144
        %v7245 = vunpack.c.l.b16 %v7148
        %v7246 = vunpack.c.l.b16 %v7152
        %v7247 = vunpack.c.l.b16 %v7156
        %v7248 = vunpack.c.l.b16 %v7160
        %v7249 = vunpack.c.l.b16 %v7164
        %v7250 = vunpack.c.l.b16 %v7168
        %v7251 = vunpack.c.l.b16 %v7172
        %v7252 = vunpack.c.l.b16 %v7176
        %v7253 = vunpack.c.l.b16 %v7180
        %v7254 = vunpack.c.l.b16 %v7184
        %v7255 = vunpack.c.l.b16 %v7188
        %v7256 = vunpack.c.l.b16 %v7192
        %v7257 = vunpack.c.l.b16 %v7196
        %v7258 = vunpack.c.l.b16 %v7200
        %v7259 = vunpack.c.l.b16 %v7204
        %v7260 = vunpack.c.l.b16 %v7208
        %v7261 = vunpack.c.l.b16 %v7212
        %v7262 = vpack.c.b16 %v7231, %v7230
        %v7263 = vpack.c.b16 %v7233, %v7232
        %v7264 = vpack.c.b16 %v7235, %v7234
        %v7265 = vpack.c.b16 %v7237, %v7236
        %v7266 = vpack.c.b16 %v7239, %v7238
        %v7267 = vpack.c.b16 %v7241, %v7240
        %v7268 = vpack.c.b16 %v7243, %v7242
        %v7269 = vpack.c.b16 %v7245, %v7244
        %v7270 = vpack.c.b16 %v7247, %v7246
        %v7271 = vpack.c.b16 %v7249, %v7248
        %v7272 = vpack.c.b16 %v7251, %v7250
        %v7273 = vpack.c.b16 %v7253, %v7252
        %v7274 = vpack.c.b16 %v7255, %v7254
        %v7275 = vpack.c.b16 %v7257, %v7256
        %v7276 = vpack.c.b16 %v7259, %v7258
        %v7277 = vpack.c.b16 %v7261, %v7260
        %v7310 = vunpack.c.l.b16 %v7214
        %v7311 = vunpack.c.l.b16 %v7215
        %v7312 = vunpack.c.l.b16 %v7216
        %v7313 = vunpack.c.l.b16 %v7217
        %v7314 = vunpack.c.l.b16 %v7218
        %v7315 = vunpack.c.l.b16 %v7219
        %v7316 = vunpack.c.l.b16 %v7220
        %v7317 = vunpack.c.l.b16 %v7221
        %v7318 = vunpack.c.l.b16 %v7222
        %v7319 = vunpack.c.l.b16 %v7223
        %v7320 = vunpack.c.l.b16 %v7224
        %v7321 = vunpack.c.l.b16 %v7225
        %v7322 = vunpack.c.l.b16 %v7226
        %v7323 = vunpack.c.l.b16 %v7227
        %v7324 = vunpack.c.l.b16 %v7228
        %v7325 = vunpack.c.l.b16 %v7229
        %v7326 = vpack.c.b16 %v7311, %v7310
        %v7327 = vpack.c.b16 %v7313, %v7312
        %v7328 = vpack.c.b16 %v7315, %v7314
        %v7329 = vpack.c.b16 %v7317, %v7316
        %v7330 = vpack.c.b16 %v7319, %v7318
        %v7331 = vpack.c.b16 %v7321, %v7320
        %v7332 = vpack.c.b16 %v7323, %v7322
        %v7333 = vpack.c.b16 %v7325, %v7324
        %7342 = vmatpush.bf16.msra.mxu0 %v7333
        %7343 = vmatpush.bf16.msra.mxu0 %v7332
        %7344 = vmatpush.bf16.msra.mxu0 %v7331
        %7345 = vmatpush.bf16.msra.mxu0 %v7330
        %7346 = vmatpush.bf16.msra.mxu0 %v7329
        %7347 = vmatpush.bf16.msra.mxu0 %v7328
        %7348 = vmatpush.bf16.msra.mxu0 %v7327
        %7349 = vmatpush.bf16.msra.mxu0 %v7326
        %7350 = vmatmul.bf16.gmra.mxu0 %v7262
        %v7351 = vpop.f32.mrf.mxu0
        %v7352 = vadd.f32 0.0, %v7351
        %v7353 = vpop.f32.mrf.mxu0
        %v7354 = vadd.f32 0.0, %v7353
        %7355 = vmatmul.bf16.gmra.mxu0 %v7263
        %v7356 = vpop.f32.mrf.mxu0
        %v7357 = vadd.f32 0.0, %v7356
        %v7358 = vpop.f32.mrf.mxu0
        %v7359 = vadd.f32 0.0, %v7358
        %7360 = vmatmul.bf16.gmra.mxu0 %v7264
        %v7361 = vpop.f32.mrf.mxu0
        %v7362 = vadd.f32 0.0, %v7361
        %v7363 = vpop.f32.mrf.mxu0
        %v7364 = vadd.f32 0.0, %v7363
        %7365 = vmatmul.bf16.gmra.mxu0 %v7265
        %v7366 = vpop.f32.mrf.mxu0
        %v7367 = vadd.f32 0.0, %v7366
        %v7368 = vpop.f32.mrf.mxu0
        %v7369 = vadd.f32 0.0, %v7368
        %7370 = vmatmul.bf16.gmra.mxu0 %v7266
        %v7371 = vpop.f32.mrf.mxu0
        %v7372 = vadd.f32 0.0, %v7371
        %v7373 = vpop.f32.mrf.mxu0
        %v7374 = vadd.f32 0.0, %v7373
        %7375 = vmatmul.bf16.gmra.mxu0 %v7267
        %v7376 = vpop.f32.mrf.mxu0
        %v7377 = vadd.f32 0.0, %v7376
        %v7378 = vpop.f32.mrf.mxu0
        %v7379 = vadd.f32 0.0, %v7378
        %7380 = vmatmul.bf16.gmra.mxu0 %v7268
        %v7381 = vpop.f32.mrf.mxu0
        %v7382 = vadd.f32 0.0, %v7381
        %v7383 = vpop.f32.mrf.mxu0
        %v7384 = vadd.f32 0.0, %v7383
        %7385 = vmatmul.bf16.gmra.mxu0 %v7269
        %v7386 = vpop.f32.mrf.mxu0
        %v7387 = vadd.f32 0.0, %v7386
        %v7388 = vpop.f32.mrf.mxu0
        %v7389 = vadd.f32 0.0, %v7388
        %7390 = vmatmul.bf16.gmra.mxu0 %v7270
        %v7391 = vpop.f32.mrf.mxu0
        %v7392 = vadd.f32 0.0, %v7391
        %v7393 = vpop.f32.mrf.mxu0
        %v7394 = vadd.f32 0.0, %v7393
        %7395 = vmatmul.bf16.gmra.mxu0 %v7271
        %v7396 = vpop.f32.mrf.mxu0
        %v7397 = vadd.f32 0.0, %v7396
        %v7398 = vpop.f32.mrf.mxu0
        %v7399 = vadd.f32 0.0, %v7398
        %7400 = vmatmul.bf16.gmra.mxu0 %v7272
        %v7401 = vpop.f32.mrf.mxu0
        %v7402 = vadd.f32 0.0, %v7401
        %v7403 = vpop.f32.mrf.mxu0
        %v7404 = vadd.f32 0.0, %v7403
        %7405 = vmatmul.bf16.gmra.mxu0 %v7273
        %v7406 = vpop.f32.mrf.mxu0
        %v7407 = vadd.f32 0.0, %v7406
        %v7408 = vpop.f32.mrf.mxu0
        %v7409 = vadd.f32 0.0, %v7408
        %7410 = vmatmul.bf16.gmra.mxu0 %v7274
        %v7411 = vpop.f32.mrf.mxu0
        %v7412 = vadd.f32 0.0, %v7411
        %v7413 = vpop.f32.mrf.mxu0
        %v7414 = vadd.f32 0.0, %v7413
        %7415 = vmatmul.bf16.gmra.mxu0 %v7275
        %v7416 = vpop.f32.mrf.mxu0
        %v7417 = vadd.f32 0.0, %v7416
        %v7418 = vpop.f32.mrf.mxu0
        %v7419 = vadd.f32 0.0, %v7418
        %7420 = vmatmul.bf16.gmra.mxu0 %v7276
        %v7421 = vpop.f32.mrf.mxu0
        %v7422 = vadd.f32 0.0, %v7421
        %v7423 = vpop.f32.mrf.mxu0
        %v7424 = vadd.f32 0.0, %v7423
        %7425 = vmatmul.bf16.gmra.mxu0 %v7277
        %v7426 = vpop.f32.mrf.mxu0
        %v7427 = vadd.f32 0.0, %v7426
        %v7428 = vpop.f32.mrf.mxu0
        %v7429 = vadd.f32 0.0, %v7428
        %7430 = vdwg.mxu0
        %v7431 = vadd.f32 %v6957, %v7352
        %v7432 = vadd.f32 %v6958, %v7354
        %v7433 = vadd.f32 %v6959, %v7357
        %v7434 = vadd.f32 %v6960, %v7359
        %v7435 = vadd.f32 %v6961, %v7362
        %v7436 = vadd.f32 %v6962, %v7364
        %v7437 = vadd.f32 %v6963, %v7367
        %v7438 = vadd.f32 %v6964, %v7369
        %v7439 = vadd.f32 %v6965, %v7372
        %v7440 = vadd.f32 %v6966, %v7374
        %v7441 = vadd.f32 %v6967, %v7377
        %v7442 = vadd.f32 %v6968, %v7379
        %v7443 = vadd.f32 %v6969, %v7382
        %v7444 = vadd.f32 %v6970, %v7384
        %v7445 = vadd.f32 %v6971, %v7387
        %v7446 = vadd.f32 %v6972, %v7389
        %v7447 = vadd.f32 %v6973, %v7392
        %v7448 = vadd.f32 %v6974, %v7394
        %v7449 = vadd.f32 %v6975, %v7397
        %v7450 = vadd.f32 %v6976, %v7399
        %v7451 = vadd.f32 %v6977, %v7402
        %v7452 = vadd.f32 %v6978, %v7404
        %v7453 = vadd.f32 %v6979, %v7407
        %v7454 = vadd.f32 %v6980, %v7409
        %v7455 = vadd.f32 %v6981, %v7412
        %v7456 = vadd.f32 %v6982, %v7414
        %v7457 = vadd.f32 %v6983, %v7417
        %v7458 = vadd.f32 %v6984, %v7419
        %v7459 = vadd.f32 %v6985, %v7422
        %v7460 = vadd.f32 %v6986, %v7424
        %v7461 = vadd.f32 %v6987, %v7427
        %v7462 = vadd.f32 %v6988, %v7429
        %v7463 = vld [vmem:[%s8 + $0x1] sm:$0x1]
        %v7464 = vperm.slane %v7463, 0
        %v7465 = vadd.f32 %v7431, %v7464
        %v7466 = vadd.f32 %v7432, %v7464
        %v7467 = vadd.f32 %v7433, %v7464
        %v7468 = vadd.f32 %v7434, %v7464
        %v7469 = vadd.f32 %v7435, %v7464
        %v7470 = vadd.f32 %v7436, %v7464
        %v7471 = vadd.f32 %v7437, %v7464
        %v7472 = vadd.f32 %v7438, %v7464
        %v7473 = vadd.f32 %v7439, %v7464
        %v7474 = vadd.f32 %v7440, %v7464
        %v7475 = vadd.f32 %v7441, %v7464
        %v7476 = vadd.f32 %v7442, %v7464
        %v7477 = vadd.f32 %v7443, %v7464
        %v7478 = vadd.f32 %v7444, %v7464
        %v7479 = vadd.f32 %v7445, %v7464
        %v7480 = vadd.f32 %v7446, %v7464
        %v7481 = vadd.f32 %v7447, %v7464
        %v7482 = vadd.f32 %v7448, %v7464
        %v7483 = vadd.f32 %v7449, %v7464
        %v7484 = vadd.f32 %v7450, %v7464
        %v7485 = vadd.f32 %v7451, %v7464
        %v7486 = vadd.f32 %v7452, %v7464
        %v7487 = vadd.f32 %v7453, %v7464
        %v7488 = vadd.f32 %v7454, %v7464
        %v7489 = vadd.f32 %v7455, %v7464
        %v7490 = vadd.f32 %v7456, %v7464
        %v7491 = vadd.f32 %v7457, %v7464
        %v7492 = vadd.f32 %v7458, %v7464
        %v7493 = vadd.f32 %v7459, %v7464
        %v7494 = vadd.f32 %v7460, %v7464
        %v7495 = vadd.f32 %v7461, %v7464
        %v7496 = vadd.f32 %v7462, %v7464
        %v7497 = vadd.f32 %v7465, %v7466
        %v7498 = vadd.f32 %v7497, %v7467
        %v7499 = vadd.f32 %v7498, %v7468
        %v7500 = vadd.f32 %v7499, %v7469
        %v7501 = vadd.f32 %v7500, %v7470
        %v7502 = vadd.f32 %v7501, %v7471
        %v7503 = vadd.f32 %v7502, %v7472
        %v7504 = vrot.slane %v7503, 4
        %v7505 = vadd.f32 %v7503, %v7504
        %v7506 = vrot.slane %v7505, 2
        %v7507 = vadd.f32 %v7505, %v7506
        %v7508 = vrot.slane %v7507, 1
        %v7509 = vadd.f32 %v7507, %v7508
        %v7510 = vadd.f32 %v7473, %v7474
        %v7511 = vadd.f32 %v7510, %v7475
        %v7512 = vadd.f32 %v7511, %v7476
        %v7513 = vadd.f32 %v7512, %v7477
        %v7514 = vadd.f32 %v7513, %v7478
        %v7515 = vadd.f32 %v7514, %v7479
        %v7516 = vadd.f32 %v7515, %v7480
        %v7517 = vrot.slane %v7516, 4
        %v7518 = vadd.f32 %v7516, %v7517
        %v7519 = vrot.slane %v7518, 2
        %v7520 = vadd.f32 %v7518, %v7519
        %v7521 = vrot.slane %v7520, 1
        %v7522 = vadd.f32 %v7520, %v7521
        %v7523 = vadd.f32 %v7481, %v7482
        %v7524 = vadd.f32 %v7523, %v7483
        %v7525 = vadd.f32 %v7524, %v7484
        %v7526 = vadd.f32 %v7525, %v7485
        %v7527 = vadd.f32 %v7526, %v7486
        %v7528 = vadd.f32 %v7527, %v7487
        %v7529 = vadd.f32 %v7528, %v7488
        %v7530 = vrot.slane %v7529, 4
        %v7531 = vadd.f32 %v7529, %v7530
        %v7532 = vrot.slane %v7531, 2
        %v7533 = vadd.f32 %v7531, %v7532
        %v7534 = vrot.slane %v7533, 1
        %v7535 = vadd.f32 %v7533, %v7534
        %v7536 = vadd.f32 %v7489, %v7490
        %v7537 = vadd.f32 %v7536, %v7491
        %v7538 = vadd.f32 %v7537, %v7492
        %v7539 = vadd.f32 %v7538, %v7493
        %v7540 = vadd.f32 %v7539, %v7494
        %v7541 = vadd.f32 %v7540, %v7495
        %v7542 = vadd.f32 %v7541, %v7496
        %v7543 = vrot.slane %v7542, 4
        %v7544 = vadd.f32 %v7542, %v7543
        %v7545 = vrot.slane %v7544, 2
        %v7546 = vadd.f32 %v7544, %v7545
        %v7547 = vrot.slane %v7546, 1
        %v7548 = vadd.f32 %v7546, %v7547
        %v7549 = vrcp.pop 64.0
        %v7550 = vmul.f32 64.0, %v7549
        %v7551 = vsub.f32 1.0, %v7550
        %v7552 = vmul.f32 %v7549, %v7551
        %v7553 = vadd.f32 %v7549, %v7552
        %vm7554 = vweird.f32 %v7549
        %v7555 = vsel %vm7554, %v7549, %v7553
        %v7556 = vmul.f32 %v7509, %v7555
        %v7557 = vmul.f32 %v7522, %v7555
        %v7558 = vmul.f32 %v7535, %v7555
        %v7559 = vmul.f32 %v7548, %v7555
        %v7560 = vpack.c.bf16 %v7556, %v7556
        %v7561 = vpack.c.bf16 %v7557, %v7557
        %v7562 = vpack.c.bf16 %v7558, %v7558
        %v7563 = vpack.c.bf16 %v7559, %v7559
        %v7564 = vld [vmem:[%s6] sm:$0xf]
        %v7565 = vld [vmem:[%s6 + $0x4] sm:$0xf]
        %v7566 = vld [vmem:[%s6 + $0x8] sm:$0xf]
        %v7567 = vld [vmem:[%s6 + $0xc] sm:$0xf]
        %v7568 = vld [vmem:[%s6 + $0x10] sm:$0xf]
        %v7569 = vld [vmem:[%s6 + $0x14] sm:$0xf]
        %v7570 = vld [vmem:[%s6 + $0x18] sm:$0xf]
        %v7571 = vld [vmem:[%s6 + $0x1c] sm:$0xf]
        %v7572 = vld [vmem:[%s6 + $0x20] sm:$0xf]
        %v7573 = vld [vmem:[%s6 + $0x24] sm:$0xf]
        %v7574 = vld [vmem:[%s6 + $0x28] sm:$0xf]
        %v7575 = vld [vmem:[%s6 + $0x2c] sm:$0xf]
        %v7576 = vld [vmem:[%s6 + $0x30] sm:$0xf]
        %v7577 = vld [vmem:[%s6 + $0x34] sm:$0xf]
        %v7578 = vld [vmem:[%s6 + $0x38] sm:$0xf]
        %v7579 = vld [vmem:[%s6 + $0x3c] sm:$0xf]
        %v7580 = vld [vmem:[%s8 + $0x3] sm:$0x1]
        %v7581 = vperm.slane %v7580, 0
        %v7586 = vunpack.c.l.b16 %v7560
        %v7587 = vunpack.c.l.b16 %v7561
        %v7588 = vunpack.c.l.b16 %v7562
        %v7589 = vunpack.c.l.b16 %v7563
        %vm7590 = vcmask 1041409
        %v7591 = vsel %vm7590, %v7587, %v7586
        %vm7592 = vcmask 1042434
        %v7593 = vsel %vm7592, %v7588, %v7591
        %vm7594 = vcmask 1043459
        %v7595 = vsel %vm7594, %v7589, %v7593
        %v7596 = vpack.c.b16 %v7595, %v7595
        %v7614 = vunpack.c.l.b16 %v7564
        %v7615 = vunpack.c.l.b16 %v7565
        %v7616 = vunpack.c.l.b16 %v7566
        %v7617 = vunpack.c.l.b16 %v7567
        %v7618 = vunpack.c.l.b16 %v7568
        %v7619 = vunpack.c.l.b16 %v7569
        %v7620 = vunpack.c.l.b16 %v7570
        %v7621 = vunpack.c.l.b16 %v7571
        %v7622 = vunpack.c.l.b16 %v7572
        %v7623 = vunpack.c.l.b16 %v7573
        %v7624 = vunpack.c.l.b16 %v7574
        %v7625 = vunpack.c.l.b16 %v7575
        %v7626 = vunpack.c.l.b16 %v7576
        %v7627 = vunpack.c.l.b16 %v7577
        %v7628 = vunpack.c.l.b16 %v7578
        %v7629 = vunpack.c.l.b16 %v7579
        %v7630 = vpack.c.b16 %v7615, %v7614
        %v7631 = vpack.c.b16 %v7617, %v7616
        %v7632 = vpack.c.b16 %v7619, %v7618
        %v7633 = vpack.c.b16 %v7621, %v7620
        %v7634 = vpack.c.b16 %v7623, %v7622
        %v7635 = vpack.c.b16 %v7625, %v7624
        %v7636 = vpack.c.b16 %v7627, %v7626
        %v7637 = vpack.c.b16 %v7629, %v7628
        %7646 = vmatpush.bf16.msra.mxu0 %v7637
        %7647 = vmatpush.bf16.msra.mxu0 %v7636
        %7648 = vmatpush.bf16.msra.mxu0 %v7635
        %7649 = vmatpush.bf16.msra.mxu0 %v7634
        %7650 = vmatpush.bf16.msra.mxu0 %v7633
        %7651 = vmatpush.bf16.msra.mxu0 %v7632
        %7652 = vmatpush.bf16.msra.mxu0 %v7631
        %7653 = vmatpush.bf16.msra.mxu0 %v7630
        %7654 = vmatmul.bf16.gmra.mxu0 %v7596
        %v7655 = vpop.f32.mrf.mxu0
        %v7656 = vadd.f32 %v7581, %v7655
        %v7657 = vpop.f32.mrf.mxu0
        %7658 = vdwg.mxu0
        %v7659 = vmax.f32 %v7656, 0.0
        %v7660 = vpack.c.bf16 %v7659, %v7659
        %v7661 = vld [vmem:[%s7] sm:$0xf]
        %v7662 = vld [vmem:[%s8 + $0x4] sm:$0x1]
        %v7663 = vperm.slane %v7662, 0
        %vm7664 = vcmask 64512
        %v7666 = vsel %vm7664, %v7660, 0
        %v7669 = vsel %vm1090, %v7661, 0
        %7671 = vmatpush.bf16.msra.mxu0 0
        %7672 = vmatpush.bf16.msra.mxu0 0
        %7673 = vmatpush.bf16.msra.mxu0 0
        %7674 = vmatpush.bf16.msra.mxu0 0
        %7675 = vmatpush.bf16.msra.mxu0 0
        %7676 = vmatpush.bf16.msra.mxu0 0
        %7677 = vmatpush.bf16.msra.mxu0 0
        %7678 = vmatpush.bf16.msra.mxu0 %v7669
        %7679 = vmatmul.bf16.gmra.mxu0 %v7666
        %v7680 = vpop.f32.mrf.mxu0
        %v7681 = vadd.f32 %v7663, %v7680
        %v7682 = vpop.f32.mrf.mxu0
        %7683 = vdwg.mxu0
        %v7684 = vxor.u32 %v7681, 2147483648
        %v7685 = vmul.f32 %v7684, 1.442695
        %v7686 = vpow.pop %v7685
        %v7687 = vadd.f32 %v7686, 1.0
        %v7688 = vrcp.pop %v7687
        %v7689 = vmul.f32 %v7687, %v7688
        %v7690 = vsub.f32 1.0, %v7689
        %v7691 = vmul.f32 %v7688, %v7690
        %v7692 = vadd.f32 %v7688, %v7691
        %vm7693 = vweird.f32 %v7687
        %vm7694 = vweird.f32 %v7688
        %vm7695 = vmor %vm7693, %vm7694
        %v7696 = vsel %vm7695, %v7688, %v7692
        %v7697 = vand.u32 2147483647, %v7687
        %vm7698 = vcmp.eq.f32.partialorder %v7697, 8.507059e+37
        %v7699 = vand.u32 %v7687, 2147483648
        %v7700 = vor.u32 1.1754944e-38, %v7699
        %v7701 = vsel %vm7698, %v7700, %v7696
        %v7702 = vmul.f32 1.0, %v7701
        %v7704 = vrot.slane %v7702, 1
        %v7705 = vrot.slane %v7702, 2
        %v7706 = vrot.slane %v7702, 3
        %v7707 = vperm.slane %v7702, 0
        %v7708 = vperm.slane %v7704, 0
        %v7709 = vperm.slane %v7705, 0
        %v7710 = vperm.slane %v7706, 0
        %v7715 = vmul.f32 %v7465, %v7707
        %v7716 = vmul.f32 %v7466, %v7707
        %v7717 = vmul.f32 %v7467, %v7707
        %v7718 = vmul.f32 %v7468, %v7707
        %v7719 = vmul.f32 %v7469, %v7707
        %v7720 = vmul.f32 %v7470, %v7707
        %v7721 = vmul.f32 %v7471, %v7707
        %v7722 = vmul.f32 %v7472, %v7707
        %v7723 = vmul.f32 %v7473, %v7708
        %v7724 = vmul.f32 %v7474, %v7708
        %v7725 = vmul.f32 %v7475, %v7708
        %v7726 = vmul.f32 %v7476, %v7708
        %v7727 = vmul.f32 %v7477, %v7708
        %v7728 = vmul.f32 %v7478, %v7708
        %v7729 = vmul.f32 %v7479, %v7708
        %v7730 = vmul.f32 %v7480, %v7708
        %v7731 = vmul.f32 %v7481, %v7709
        %v7732 = vmul.f32 %v7482, %v7709
        %v7733 = vmul.f32 %v7483, %v7709
        %v7734 = vmul.f32 %v7484, %v7709
        %v7735 = vmul.f32 %v7485, %v7709
        %v7736 = vmul.f32 %v7486, %v7709
        %v7737 = vmul.f32 %v7487, %v7709
        %v7738 = vmul.f32 %v7488, %v7709
        %v7739 = vmul.f32 %v7489, %v7710
        %v7740 = vmul.f32 %v7490, %v7710
        %v7741 = vmul.f32 %v7491, %v7710
        %v7742 = vmul.f32 %v7492, %v7710
        %v7743 = vmul.f32 %v7493, %v7710
        %v7744 = vmul.f32 %v7494, %v7710
        %v7745 = vmul.f32 %v7495, %v7710
        %v7746 = vmul.f32 %v7496, %v7710
        %v7747 = vld [vmem:[%s359] sm:$0xf]
        %v7748 = vld [vmem:[%s359 + $0x4] sm:$0xf]
        %v7749 = vld [vmem:[%s359 + $0x8] sm:$0xf]
        %v7750 = vld [vmem:[%s359 + $0xc] sm:$0xf]
        %v7751 = vld [vmem:[%s359 + $0x10] sm:$0xf]
        %v7752 = vld [vmem:[%s359 + $0x14] sm:$0xf]
        %v7753 = vld [vmem:[%s359 + $0x18] sm:$0xf]
        %v7754 = vld [vmem:[%s359 + $0x1c] sm:$0xf]
        %v7755 = vld [vmem:[%s359 + $0x20] sm:$0xf]
        %v7756 = vld [vmem:[%s359 + $0x24] sm:$0xf]
        %v7757 = vld [vmem:[%s359 + $0x28] sm:$0xf]
        %v7758 = vld [vmem:[%s359 + $0x2c] sm:$0xf]
        %v7759 = vld [vmem:[%s359 + $0x30] sm:$0xf]
        %v7760 = vld [vmem:[%s359 + $0x34] sm:$0xf]
        %v7761 = vld [vmem:[%s359 + $0x38] sm:$0xf]
        %v7762 = vld [vmem:[%s359 + $0x3c] sm:$0xf]
        %v7763 = vld [vmem:[%s359 + $0x40] sm:$0xf]
        %v7764 = vld [vmem:[%s359 + $0x44] sm:$0xf]
        %v7765 = vld [vmem:[%s359 + $0x48] sm:$0xf]
        %v7766 = vld [vmem:[%s359 + $0x4c] sm:$0xf]
        %v7767 = vld [vmem:[%s359 + $0x50] sm:$0xf]
        %v7768 = vld [vmem:[%s359 + $0x54] sm:$0xf]
        %v7769 = vld [vmem:[%s359 + $0x58] sm:$0xf]
        %v7770 = vld [vmem:[%s359 + $0x5c] sm:$0xf]
        %v7771 = vld [vmem:[%s359 + $0x60] sm:$0xf]
        %v7772 = vld [vmem:[%s359 + $0x64] sm:$0xf]
        %v7773 = vld [vmem:[%s359 + $0x68] sm:$0xf]
        %v7774 = vld [vmem:[%s359 + $0x6c] sm:$0xf]
        %v7775 = vld [vmem:[%s359 + $0x70] sm:$0xf]
        %v7776 = vld [vmem:[%s359 + $0x74] sm:$0xf]
        %v7777 = vld [vmem:[%s359 + $0x78] sm:$0xf]
        %v7778 = vld [vmem:[%s359 + $0x7c] sm:$0xf]
        %v7779 = vld [vmem:[%s5] sm:$0xf]
        %v7780 = vld [vmem:[%s8 + $0x2] sm:$0x1]
        %v7781 = vperm.slane %v7780, 0
        %v7814 = vunpack.c.l.b16 %v7747
        %v7815 = vunpack.c.l.b16 %v7748
        %v7816 = vunpack.c.l.b16 %v7749
        %v7817 = vunpack.c.l.b16 %v7750
        %v7818 = vunpack.c.l.b16 %v7751
        %v7819 = vunpack.c.l.b16 %v7752
        %v7820 = vunpack.c.l.b16 %v7753
        %v7821 = vunpack.c.l.b16 %v7754
        %v7822 = vunpack.c.l.b16 %v7755
        %v7823 = vunpack.c.l.b16 %v7756
        %v7824 = vunpack.c.l.b16 %v7757
        %v7825 = vunpack.c.l.b16 %v7758
        %v7826 = vunpack.c.l.b16 %v7759
        %v7827 = vunpack.c.l.b16 %v7760
        %v7828 = vunpack.c.l.b16 %v7761
        %v7829 = vunpack.c.l.b16 %v7762
        %v7830 = vunpack.c.l.b16 %v7763
        %v7831 = vunpack.c.l.b16 %v7764
        %v7832 = vunpack.c.l.b16 %v7765
        %v7833 = vunpack.c.l.b16 %v7766
        %v7834 = vunpack.c.l.b16 %v7767
        %v7835 = vunpack.c.l.b16 %v7768
        %v7836 = vunpack.c.l.b16 %v7769
        %v7837 = vunpack.c.l.b16 %v7770
        %v7838 = vunpack.c.l.b16 %v7771
        %v7839 = vunpack.c.l.b16 %v7772
        %v7840 = vunpack.c.l.b16 %v7773
        %v7841 = vunpack.c.l.b16 %v7774
        %v7842 = vunpack.c.l.b16 %v7775
        %v7843 = vunpack.c.l.b16 %v7776
        %v7844 = vunpack.c.l.b16 %v7777
        %v7845 = vunpack.c.l.b16 %v7778
        %v7846 = vpack.c.b16 %v7815, %v7814
        %v7847 = vpack.c.b16 %v7817, %v7816
        %v7848 = vpack.c.b16 %v7819, %v7818
        %v7849 = vpack.c.b16 %v7821, %v7820
        %v7850 = vpack.c.b16 %v7823, %v7822
        %v7851 = vpack.c.b16 %v7825, %v7824
        %v7852 = vpack.c.b16 %v7827, %v7826
        %v7853 = vpack.c.b16 %v7829, %v7828
        %v7854 = vpack.c.b16 %v7831, %v7830
        %v7855 = vpack.c.b16 %v7833, %v7832
        %v7856 = vpack.c.b16 %v7835, %v7834
        %v7857 = vpack.c.b16 %v7837, %v7836
        %v7858 = vpack.c.b16 %v7839, %v7838
        %v7859 = vpack.c.b16 %v7841, %v7840
        %v7860 = vpack.c.b16 %v7843, %v7842
        %v7861 = vpack.c.b16 %v7845, %v7844
        %v7863 = vsel %vm7664, %v7846, 0
        %v7866 = vsel %vm7664, %v7847, 0
        %v7869 = vsel %vm7664, %v7848, 0
        %v7872 = vsel %vm7664, %v7849, 0
        %v7875 = vsel %vm7664, %v7850, 0
        %v7878 = vsel %vm7664, %v7851, 0
        %v7881 = vsel %vm7664, %v7852, 0
        %v7884 = vsel %vm7664, %v7853, 0
        %v7887 = vsel %vm7664, %v7854, 0
        %v7890 = vsel %vm7664, %v7855, 0
        %v7893 = vsel %vm7664, %v7856, 0
        %v7896 = vsel %vm7664, %v7857, 0
        %v7899 = vsel %vm7664, %v7858, 0
        %v7902 = vsel %vm7664, %v7859, 0
        %v7905 = vsel %vm7664, %v7860, 0
        %v7908 = vsel %vm7664, %v7861, 0
        %v7911 = vsel %vm1090, %v7779, 0
        %7913 = vmatpush.bf16.msra.mxu0 0
        %7914 = vmatpush.bf16.msra.mxu0 0
        %7915 = vmatpush.bf16.msra.mxu0 0
        %7916 = vmatpush.bf16.msra.mxu0 0
        %7917 = vmatpush.bf16.msra.mxu0 0
        %7918 = vmatpush.bf16.msra.mxu0 0
        %7919 = vmatpush.bf16.msra.mxu0 0
        %7920 = vmatpush.bf16.msra.mxu0 %v7911
        %7921 = vmatmul.bf16.gmra.mxu0 %v7863
        %v7922 = vpop.f32.mrf.mxu0
        %v7923 = vadd.f32 %v7781, %v7922
        %v7924 = vpop.f32.mrf.mxu0
        %v7925 = vadd.f32 %v7781, %v7924
        %7926 = vmatmul.bf16.gmra.mxu0 %v7866
        %v7927 = vpop.f32.mrf.mxu0
        %v7928 = vadd.f32 %v7781, %v7927
        %v7929 = vpop.f32.mrf.mxu0
        %v7930 = vadd.f32 %v7781, %v7929
        %7931 = vmatmul.bf16.gmra.mxu0 %v7869
        %v7932 = vpop.f32.mrf.mxu0
        %v7933 = vadd.f32 %v7781, %v7932
        %v7934 = vpop.f32.mrf.mxu0
        %v7935 = vadd.f32 %v7781, %v7934
        %7936 = vmatmul.bf16.gmra.mxu0 %v7872
        %v7937 = vpop.f32.mrf.mxu0
        %v7938 = vadd.f32 %v7781, %v7937
        %v7939 = vpop.f32.mrf.mxu0
        %v7940 = vadd.f32 %v7781, %v7939
        %7941 = vmatmul.bf16.gmra.mxu0 %v7875
        %v7942 = vpop.f32.mrf.mxu0
        %v7943 = vadd.f32 %v7781, %v7942
        %v7944 = vpop.f32.mrf.mxu0
        %v7945 = vadd.f32 %v7781, %v7944
        %7946 = vmatmul.bf16.gmra.mxu0 %v7878
        %v7947 = vpop.f32.mrf.mxu0
        %v7948 = vadd.f32 %v7781, %v7947
        %v7949 = vpop.f32.mrf.mxu0
        %v7950 = vadd.f32 %v7781, %v7949
        %7951 = vmatmul.bf16.gmra.mxu0 %v7881
        %v7952 = vpop.f32.mrf.mxu0
        %v7953 = vadd.f32 %v7781, %v7952
        %v7954 = vpop.f32.mrf.mxu0
        %v7955 = vadd.f32 %v7781, %v7954
        %7956 = vmatmul.bf16.gmra.mxu0 %v7884
        %v7957 = vpop.f32.mrf.mxu0
        %v7958 = vadd.f32 %v7781, %v7957
        %v7959 = vpop.f32.mrf.mxu0
        %v7960 = vadd.f32 %v7781, %v7959
        %7961 = vmatmul.bf16.gmra.mxu0 %v7887
        %v7962 = vpop.f32.mrf.mxu0
        %v7963 = vadd.f32 %v7781, %v7962
        %v7964 = vpop.f32.mrf.mxu0
        %v7965 = vadd.f32 %v7781, %v7964
        %7966 = vmatmul.bf16.gmra.mxu0 %v7890
        %v7967 = vpop.f32.mrf.mxu0
        %v7968 = vadd.f32 %v7781, %v7967
        %v7969 = vpop.f32.mrf.mxu0
        %v7970 = vadd.f32 %v7781, %v7969
        %7971 = vmatmul.bf16.gmra.mxu0 %v7893
        %v7972 = vpop.f32.mrf.mxu0
        %v7973 = vadd.f32 %v7781, %v7972
        %v7974 = vpop.f32.mrf.mxu0
        %v7975 = vadd.f32 %v7781, %v7974
        %7976 = vmatmul.bf16.gmra.mxu0 %v7896
        %v7977 = vpop.f32.mrf.mxu0
        %v7978 = vadd.f32 %v7781, %v7977
        %v7979 = vpop.f32.mrf.mxu0
        %v7980 = vadd.f32 %v7781, %v7979
        %7981 = vmatmul.bf16.gmra.mxu0 %v7899
        %v7982 = vpop.f32.mrf.mxu0
        %v7983 = vadd.f32 %v7781, %v7982
        %v7984 = vpop.f32.mrf.mxu0
        %v7985 = vadd.f32 %v7781, %v7984
        %7986 = vmatmul.bf16.gmra.mxu0 %v7902
        %v7987 = vpop.f32.mrf.mxu0
        %v7988 = vadd.f32 %v7781, %v7987
        %v7989 = vpop.f32.mrf.mxu0
        %v7990 = vadd.f32 %v7781, %v7989
        %7991 = vmatmul.bf16.gmra.mxu0 %v7905
        %v7992 = vpop.f32.mrf.mxu0
        %v7993 = vadd.f32 %v7781, %v7992
        %v7994 = vpop.f32.mrf.mxu0
        %v7995 = vadd.f32 %v7781, %v7994
        %7996 = vmatmul.bf16.gmra.mxu0 %v7908
        %v7997 = vpop.f32.mrf.mxu0
        %v7998 = vadd.f32 %v7781, %v7997
        %v7999 = vpop.f32.mrf.mxu0
        %v8000 = vadd.f32 %v7781, %v7999
        %8001 = vdwg.mxu0
        %v8002 = vadd.f32 %v7715, %v7923
        %v8003 = vadd.f32 %v7716, %v7925
        %v8004 = vadd.f32 %v7717, %v7928
        %v8005 = vadd.f32 %v7718, %v7930
        %v8006 = vadd.f32 %v7719, %v7933
        %v8007 = vadd.f32 %v7720, %v7935
        %v8008 = vadd.f32 %v7721, %v7938
        %v8009 = vadd.f32 %v7722, %v7940
        %v8010 = vadd.f32 %v7723, %v7943
        %v8011 = vadd.f32 %v7724, %v7945
        %v8012 = vadd.f32 %v7725, %v7948
        %v8013 = vadd.f32 %v7726, %v7950
        %v8014 = vadd.f32 %v7727, %v7953
        %v8015 = vadd.f32 %v7728, %v7955
        %v8016 = vadd.f32 %v7729, %v7958
        %v8017 = vadd.f32 %v7730, %v7960
        %v8018 = vadd.f32 %v7731, %v7963
        %v8019 = vadd.f32 %v7732, %v7965
        %v8020 = vadd.f32 %v7733, %v7968
        %v8021 = vadd.f32 %v7734, %v7970
        %v8022 = vadd.f32 %v7735, %v7973
        %v8023 = vadd.f32 %v7736, %v7975
        %v8024 = vadd.f32 %v7737, %v7978
        %v8025 = vadd.f32 %v7738, %v7980
        %v8026 = vadd.f32 %v7739, %v7983
        %v8027 = vadd.f32 %v7740, %v7985
        %v8028 = vadd.f32 %v7741, %v7988
        %v8029 = vadd.f32 %v7742, %v7990
        %v8030 = vadd.f32 %v7743, %v7993
        %v8031 = vadd.f32 %v7744, %v7995
        %v8032 = vadd.f32 %v7745, %v7998
        %v8033 = vadd.f32 %v7746, %v8000
        %v8034 = vmax.f32 %v8002, 0.0
        %v8035 = vmax.f32 %v8003, 0.0
        %v8036 = vmax.f32 %v8004, 0.0
        %v8037 = vmax.f32 %v8005, 0.0
        %v8038 = vmax.f32 %v8006, 0.0
        %v8039 = vmax.f32 %v8007, 0.0
        %v8040 = vmax.f32 %v8008, 0.0
        %v8041 = vmax.f32 %v8009, 0.0
        %v8042 = vmax.f32 %v8010, 0.0
        %v8043 = vmax.f32 %v8011, 0.0
        %v8044 = vmax.f32 %v8012, 0.0
        %v8045 = vmax.f32 %v8013, 0.0
        %v8046 = vmax.f32 %v8014, 0.0
        %v8047 = vmax.f32 %v8015, 0.0
        %v8048 = vmax.f32 %v8016, 0.0
        %v8049 = vmax.f32 %v8017, 0.0
        %v8050 = vmax.f32 %v8018, 0.0
        %v8051 = vmax.f32 %v8019, 0.0
        %v8052 = vmax.f32 %v8020, 0.0
        %v8053 = vmax.f32 %v8021, 0.0
        %v8054 = vmax.f32 %v8022, 0.0
        %v8055 = vmax.f32 %v8023, 0.0
        %v8056 = vmax.f32 %v8024, 0.0
        %v8057 = vmax.f32 %v8025, 0.0
        %v8058 = vmax.f32 %v8026, 0.0
        %v8059 = vmax.f32 %v8027, 0.0
        %v8060 = vmax.f32 %v8028, 0.0
        %v8061 = vmax.f32 %v8029, 0.0
        %v8062 = vmax.f32 %v8030, 0.0
        %v8063 = vmax.f32 %v8031, 0.0
        %v8064 = vmax.f32 %v8032, 0.0
        %v8065 = vmax.f32 %v8033, 0.0
        %8066 = vst [vmem:[%s346] sm:$0xff] %v8034
        %8067 = vst [vmem:[%s346 + $0x8] sm:$0xff] %v8035
        %8068 = vst [vmem:[%s346 + $0x10] sm:$0xff] %v8036
        %8069 = vst [vmem:[%s346 + $0x18] sm:$0xff] %v8037
        %8070 = vst [vmem:[%s346 + $0x20] sm:$0xff] %v8038
        %8071 = vst [vmem:[%s346 + $0x28] sm:$0xff] %v8039
        %8072 = vst [vmem:[%s346 + $0x30] sm:$0xff] %v8040
        %8073 = vst [vmem:[%s346 + $0x38] sm:$0xff] %v8041
        %8074 = vst [vmem:[%s346 + $0x40] sm:$0xff] %v8042
        %8075 = vst [vmem:[%s346 + $0x48] sm:$0xff] %v8043
        %8076 = vst [vmem:[%s346 + $0x50] sm:$0xff] %v8044
        %8077 = vst [vmem:[%s346 + $0x58] sm:$0xff] %v8045
        %8078 = vst [vmem:[%s346 + $0x60] sm:$0xff] %v8046
        %8079 = vst [vmem:[%s346 + $0x68] sm:$0xff] %v8047
        %8080 = vst [vmem:[%s346 + $0x70] sm:$0xff] %v8048
        %8081 = vst [vmem:[%s346 + $0x78] sm:$0xff] %v8049
        %8082 = vst [vmem:[%s346 + $0x80] sm:$0xff] %v8050
        %8083 = vst [vmem:[%s346 + $0x88] sm:$0xff] %v8051
        %8084 = vst [vmem:[%s346 + $0x90] sm:$0xff] %v8052
        %8085 = vst [vmem:[%s346 + $0x98] sm:$0xff] %v8053
        %8086 = vst [vmem:[%s346 + $0xa0] sm:$0xff] %v8054
        %8087 = vst [vmem:[%s346 + $0xa8] sm:$0xff] %v8055
        %8088 = vst [vmem:[%s346 + $0xb0] sm:$0xff] %v8056
        %8089 = vst [vmem:[%s346 + $0xb8] sm:$0xff] %v8057
        %8090 = vst [vmem:[%s346 + $0xc0] sm:$0xff] %v8058
        %8091 = vst [vmem:[%s346 + $0xc8] sm:$0xff] %v8059
        %8092 = vst [vmem:[%s346 + $0xd0] sm:$0xff] %v8060
        %8093 = vst [vmem:[%s346 + $0xd8] sm:$0xff] %v8061
        %8094 = vst [vmem:[%s346 + $0xe0] sm:$0xff] %v8062
        %8095 = vst [vmem:[%s346 + $0xe8] sm:$0xff] %v8063
        %8096 = vst [vmem:[%s346 + $0xf0] sm:$0xff] %v8064
        %8097 = vst [vmem:[%s346 + $0xf8] sm:$0xff] %v8065
        %s8098 = sand.u32 %s230, 1
        %s8099 = scalar_lea.sflag [#allocation4], %s8098
        %s8100 = sand.u32 %s230, 1
        %s8101 = smul.addr %s8100, 256
        %s8102 = scalar_lea.vmem [#allocation3], %s8101
        // Predicated region
        $region57: #{tpu_custom_call.1} parent=55 // pred_check
          %p8103 = pneg %p240
        $region58: #{tpu_custom_call.1} parent=55 // pred_check_branch
          %8105 = sbr.rel (%p8103) target = $region60
        $region59: #{tpu_custom_call.1} parent=55 // pred_region
          %s8106 = smul.u32 4, %s23
          %8108 = vsyncadd %s8099, 0
          %s8109 = smul.addr %s8106, 8
          %s8110 = smul.addr %s8109, 8
          %s8111 = scalar_lea.hbm %s9, %s8110
          %s8112 = sshll.u32 %s8102, 4
          %s8113 = int_to_ptr.vmem [resolvable:$true] %s8112
          %s8114 = sshll.u32 %s8111, 4
          %s8115 = int_to_ptr.hbm [resolvable:$true] %s8114
          %8120 = dma.vmem_to_hbm [thread:$0]  %s8113, 4096, %s8115, %s8099, 128, 128, 8
        $region60: #{tpu_custom_call.1} parent=55 // pred_fallthru
          _
      $region56: #{tpu_custom_call.1} parent=5 // pred_fallthru
        _
      %p8121 = scmp.le.s32.totalorder 2, %s18
      // Predicated region
      $region61: #{tpu_custom_call.1} parent=5 // pred_check
        %p8122 = pneg %p8121
      $region62: #{tpu_custom_call.1} parent=5 // pred_check_branch
        %8124 = sbr.rel (%p8122) target = $region64
      $region63: #{tpu_custom_call.1} parent=5 // pred_region
        %s8125 = ssub.s32 %s18, 2
        // Predicated region
        $region65: #{tpu_custom_call.1} parent=63 // pred_check
          %p8126 = pneg %p246
        $region66: #{tpu_custom_call.1} parent=63 // pred_check_branch
          %8128 = sbr.rel (%p8126) target = $region68
        $region67: #{tpu_custom_call.1} parent=63 // pred_region
          %s8129 = sand.u32 %s231, 1
          %s8130 = scalar_lea.sflag [#allocation4], %s8129
          %s8131 = sand.u32 %s231, 1
          %s8132 = smul.addr %s8131, 256
          %s8133 = scalar_lea.vmem [#allocation3], %s8132
          %8135 = dma.done %s8130, 4096
        $region68: #{tpu_custom_call.1} parent=63 // pred_fallthru
          _
      $region64: #{tpu_custom_call.1} parent=5 // pred_fallthru
        _
    $region6: #{tpu_custom_call.1} parent=1 // loop_footer
      %s22 = sadd.s32 1, %s18
    $region7: #{tpu_custom_call.1} parent=1 // loop_footer_branch
      %17 = sbr.rel target = $region3
    $region8: #{tpu_custom_call.1} parent=1 // loop_exit
      _
    %8136 = vsyncpa [#allocation4], 1
    %s8137 = scalar_lea.sflag [#allocation4], 1
    %8138 = vsyncpa %s8137, 1

</llo_original>
